<compile_context>
chip_gen: v7x
topology: tpu7x:2x2x1
jax: 0.10.0
libtpu: 0.0.40
codegen_flags: <defaults>
</compile_context>

<pallas_src>
import jax
import jax.numpy as jnp
from jax.experimental import pallas as pl
from jax.experimental.pallas import tpu as pltpu

CELL_IN = 3432     # raw cell-feature width (unpadded; Mosaic masks the ragged K tile)
DRUG_IN = 256
H1_PAD = 640       # 516 -> 640 (zero-padded output columns are inert)
EMB = 128
H3_PAD = 128       # 64  -> 128
OUT_PAD = 128      # 1   -> 128 lane-dense output; column 0 is the prediction


def _relu(x):
    return jnp.maximum(x, 0.0)


def _round_up(x, m):
    return (x + m - 1) // m * m


# -----------------------------------------------------------------------------
# Generation-aware tiling knobs (v5e/v6e: 128 MiB VMEM, 1 TC; v7x: 64 MiB, 2 TC)
# -----------------------------------------------------------------------------
def _vmem_capacity_bytes():
    try:
        info = pltpu.get_tpu_info()
        for name in ("vmem_capacity_bytes", "vmem_size_bytes", "vmem_bytes"):
            v = getattr(info, name, None)
            if v:
                return int(v)
    except Exception:
        pass
    return 64 * 1024 * 1024            # conservative default (v7x per-TC VMEM)


_VMEM_BYTES = _vmem_capacity_bytes()
if _VMEM_BYTES >= 100 * 1024 * 1024:   # v5e / v6e: 128 MiB VMEM, single TensorCore
    _TB_MAX = 1536
    _VMEM_LIMIT = 96 * 1024 * 1024
    _SPLIT_TWO_CORES = False
else:                                  # v7x: 64 MiB per-TC VMEM, two TCs share the grid
    _TB_MAX = 1024
    _VMEM_LIMIT = 56 * 1024 * 1024
    _SPLIT_TWO_CORES = True


def _pick_tb(B):
    """Batch-tile size: <= _TB_MAX, a multiple of 16 whenever it does not cover
    the whole batch, and split into >= 2 tiles on v7x so both TCs get work."""
    if B > _TB_MAX:
        return _TB_MAX
    if _SPLIT_TWO_CORES and B >= 256:
        half = _round_up((B + 1) // 2, 16)
        if half < B:
            return half
    return B                            # single full-batch tile (block == full dims)


def _probe_buffered_one():
    """pl.Buffered(1) single-buffers the constant-index weight blocks (halves
    their VMEM footprint).  Probe at construction time so an older JAX without
    the pipeline_mode kwarg falls back cleanly to default double-buffering."""
    if not hasattr(pl, "Buffered"):
        return None
    for ctor in (lambda: pl.Buffered(1), lambda: pl.Buffered(buffer_count=1)):
        try:
            b = ctor()
            pl.BlockSpec((8, 128), lambda i: (0, 0), pipeline_mode=b)
            return b
        except Exception:
            continue
    return None


_BUFFERED_ONE = _probe_buffered_one()


# -----------------------------------------------------------------------------
# Kernel
# -----------------------------------------------------------------------------
def tabtab_kernel(cell_ref, drug_ref,
                  cw1_ref, cb1_ref, cw2_ref, cb2_ref, cw3_ref, cb3_ref,
                  dw1_ref, db1_ref, dw2_ref, db2_ref,
                  fw1c_ref, fw1d_ref, fb1_ref, fw2_ref, fb2_ref,
                  fw3_ref, fb3_ref,
                  out_ref):
    bf16 = jnp.bfloat16

    def dense_relu(x, w_ref, b_ref):
        # bf16 x bf16 on the MXU, f32 accumulation, f32 bias.
        y = jnp.dot(x, w_ref[...], preferred_element_type=jnp.float32) + b_ref[...]
        return _relu(y)

    # Cast the f32 HBM activation streams to bf16 on-chip (VPU, hidden under MXU).
    c = cell_ref[...].astype(bf16)          # (TB, 3432)
    d = drug_ref[...].astype(bf16)          # (TB, 256)

    # cell branch: 3432 -> 640(pad of 516) -> 256 -> 128
    c = dense_relu(c, cw1_ref, cb1_ref).astype(bf16)
    c = dense_relu(c, cw2_ref, cb2_ref).astype(bf16)
    c = dense_relu(c, cw3_ref, cb3_ref).astype(bf16)

    # drug branch: 256 -> 128 -> 128
    d = dense_relu(d, dw1_ref, db1_ref).astype(bf16)
    d = dense_relu(d, dw2_ref, db2_ref).astype(bf16)

    # torch.cat([cell_emb, drug_emb], 1) + reshape + first fcn Linear, fused as
    # two MXU pushes into one accumulator (no concat / cross-lane copy).
    # TODO(synk): torch `print(concat)` debug side-effect is intentionally omitted.
    h = _relu(jnp.dot(c, fw1c_ref[...], preferred_element_type=jnp.float32)
              + jnp.dot(d, fw1d_ref[...], preferred_element_type=jnp.float32)
              + fb1_ref[...]).astype(bf16)

    # fcn tail: 128 -> 128(pad of 64) -> 128(pad of 1), ReLU after each Linear
    h = dense_relu(h, fw2_ref, fb2_ref).astype(bf16)
    y = dense_relu(h, fw3_ref, fb3_ref)      # (TB, 128) f32; column 0 = prediction

    out_ref[...] = y.astype(out_ref.dtype)   # bf16 lane-dense writeback


# -----------------------------------------------------------------------------
# Parameters
# -----------------------------------------------------------------------------
_LAYER_DIMS = [
    # cell branch
    (3432, 516), (516, 256), (256, 128),
    # drug branch
    (256, 128), (128, 128),
    # fcn head
    (2 * 128, 128), (128, 64), (64, 1),
]


def init_params(key):
    """PyTorch-Linear-style init: U(-1/sqrt(fan_in), 1/sqrt(fan_in)).
    Weights stored transposed as (in, out) so y = x @ W + b."""
    params = []
    for (din, dout) in _LAYER_DIMS:
        key, kw, kb = jax.random.split(key, 3)
        bound = 1.0 / float(din) ** 0.5
        w = jax.random.uniform(kw, (din, dout), jnp.float32, -bound, bound)
        b = jax.random.uniform(kb, (1, dout), jnp.float32, -bound, bound)
        params += [w, b]
    return params


def prepare_params(params):
    """Pad output dims to 128-multiples, split fw1, cast weights to bf16
    (biases stay f32).  The cell-input contraction dim stays at 3432."""
    (cw1, cb1, cw2, cb2, cw3, cb3,
     dw1, db1, dw2, db2,
     fw1, fb1, fw2, fb2, fw3, fb3) = params
    bf16 = jnp.bfloat16

    def pad2(x, rows, cols):
        return jnp.pad(x, ((0, rows - x.shape[0]), (0, cols - x.shape[1])))

    def pad_cols(x, cols):
        return jnp.pad(x, ((0, 0), (0, cols - x.shape[1])))

    cw1p = pad_cols(cw1, H1_PAD).astype(bf16)      # (3432, 640)
    cb1p = pad_cols(cb1, H1_PAD)                   # (1, 640) f32
    cw2p = pad2(cw2, H1_PAD, 256).astype(bf16)     # (640, 256)
    cw3p = cw3.astype(bf16)                        # (256, 128)
    dw1p = dw1.astype(bf16)                        # (256, 128)
    dw2p = dw2.astype(bf16)                        # (128, 128)
    fw1c = fw1[:EMB, :].astype(bf16)               # acts on cell embedding
    fw1d = fw1[EMB:, :].astype(bf16)               # acts on drug embedding
    fw2p = pad_cols(fw2, H3_PAD).astype(bf16)      # (128, 128)
    fb2p = pad_cols(fb2, H3_PAD)
    fw3p = pad2(fw3, H3_PAD, OUT_PAD).astype(bf16) # (128, 128)
    fb3p = pad_cols(fb3, OUT_PAD)

    return [cw1p, cb1p, cw2p, cb2, cw3p, cb3,
            dw1p, db1, dw2p, db2,
            fw1c, fw1d, fb1, fw2p, fb2p, fw3p, fb3p]


# -----------------------------------------------------------------------------
# Wrapper
# -----------------------------------------------------------------------------
@jax.jit
def tabtab_forward(cell, drug, *pp):
    """cell: (B, 1, 3432) f32, drug: (B, 1, 256) f32; pp = prepare_params(params)."""
    B = cell.shape[0]
    # Free metadata reshapes; no wrapper-side cast/pad pass (kernel casts on-chip).
    cell2 = cell.reshape(B, cell.shape[-1])
    drug2 = drug.reshape(B, drug.shape[-1])

    TB = _pick_tb(B)
    grid = (pl.cdiv(B, TB),)            # no batch padding; last tile may be ragged

    def row_spec(cols):
        return pl.BlockSpec((TB, cols), lambda i: (i, 0))

    def const_spec(arr):                # whole weight VMEM-resident, DMA'd once
        if _BUFFERED_ONE is not None:
            return pl.BlockSpec(arr.shape, lambda i: (0, 0),
                                pipeline_mode=_BUFFERED_ONE)
        return pl.BlockSpec(arr.shape, lambda i: (0, 0))

    in_specs = [row_spec(CELL_IN), row_spec(DRUG_IN)] + [const_spec(p) for p in pp]

    y = pl.pallas_call(
        tabtab_kernel,
        out_shape=jax.ShapeDtypeStruct((B, OUT_PAD), jnp.bfloat16),
        grid=grid,
        in_specs=in_specs,
        out_specs=row_spec(OUT_PAD),
        compiler_params=pltpu.CompilerParams(
            dimension_semantics=("parallel",),     # shards batch tiles across TCs on v7x
            vmem_limit_bytes=_VMEM_LIMIT,
        ),
    )(cell2, drug2, *pp)

    # Column 0 of the lane-dense bf16 output is y_pred; matches y_pred.reshape(B).
    return y[:, 0].astype(jnp.float32)


# -----------------------------------------------------------------------------
# References (for sanity checks)
# -----------------------------------------------------------------------------
def _reference_forward_f32(cell, drug, params):
    """Plain-JAX f32 mirror of the PyTorch forward (unpadded)."""
    B = cell.shape[0]
    c = cell.reshape(B, -1)
    d = drug.reshape(B, -1)
    (cw1, cb1, cw2, cb2, cw3, cb3,
     dw1, db1, dw2, db2,
     fw1, fb1, fw2, fb2, fw3, fb3) = params
    r = _relu
    c = r(c @ cw1 + cb1); c = r(c @ cw2 + cb2); c = r(c @ cw3 + cb3)
    d = r(d @ dw1 + db1); d = r(d @ dw2 + db2)
    h = jnp.concatenate([c, d], axis=-1)
    h = r(h @ fw1 + fb1); h = r(h @ fw2 + fb2); y = r(h @ fw3 + fb3)
    return y.reshape(B)


def _reference_forward_prepared(cell, drug, pp):
    """Plain-JAX mirror of the kernel's exact numerics (bf16 weights/activations,
    bf16 output rounding)."""
    (cw1, cb1, cw2, cb2, cw3, cb3,
     dw1, db1, dw2, db2,
     fw1c, fw1d, fb1, fw2, fb2, fw3, fb3) = pp
    bf16 = jnp.bfloat16
    B = cell.shape[0]
    c = cell.reshape(B, -1).astype(bf16)
    d = drug.reshape(B, -1).astype(bf16)

    def lin(x, w, b):
        return _relu(jnp.dot(x, w, preferred_element_type=jnp.float32) + b)

    c = lin(c, cw1, cb1).astype(bf16)
    c = lin(c, cw2, cb2).astype(bf16)
    c = lin(c, cw3, cb3).astype(bf16)
    d = lin(d, dw1, db1).astype(bf16)
    d = lin(d, dw2, db2).astype(bf16)
    h = _relu(jnp.dot(c, fw1c, preferred_element_type=jnp.float32)
              + jnp.dot(d, fw1d, preferred_element_type=jnp.float32) + fb1).astype(bf16)
    h = lin(h, fw2, fb2).astype(bf16)
    y = lin(h, fw3, fb3).astype(bf16)       # kernel stores bf16
    return y[:, 0].astype(jnp.float32)


if __name__ == "__main__":
    key = jax.random.PRNGKey(0)
    kp, kc, kd = jax.random.split(key, 3)

    params = init_params(kp)
    pp = prepare_params(params)

    B = 2
    cell = jax.random.normal(kc, (B, 1, 3432), jnp.float32)   # (batch, branch=1, 3432)
    drug = jax.random.normal(kd, (B, 1, 256), jnp.float32)    # (batch, branch=1, 256)

    y = tabtab_forward(cell, drug, *pp)
    y = jax.block_until_ready(y)

    # Tight check vs an exact-numerics (bf16 weights + bf16 output) JAX reference.
    y_ref_bf16 = _reference_forward_prepared(cell, drug, pp)
    # Loose check vs the true f32 PyTorch-equivalent reference (bf16 quantization noise).
    y_ref_f32 = _reference_forward_f32(cell, drug, params)

    assert y.shape == (B,), y.shape
    assert jnp.allclose(y, y_ref_bf16, atol=1e-2, rtol=1e-2), (y, y_ref_bf16)
    assert jnp.allclose(y, y_ref_f32, atol=8e-2, rtol=1e-1), (y, y_ref_f32)

    print("KERNEL_OK")
</pallas_src>

<mosaic_0001>
module attributes {stable_mosaic.version = 11 : i64} {
  func.func @tabtab_kernel(%arg0: i32, %arg1: memref<2x3432xf32, #tpu.memory_space<vmem>>, %arg2: memref<2x256xf32, #tpu.memory_space<vmem>>, %arg3: memref<3432x640xbf16, #tpu.memory_space<vmem>>, %arg4: memref<1x640xf32, #tpu.memory_space<vmem>>, %arg5: memref<640x256xbf16, #tpu.memory_space<vmem>>, %arg6: memref<1x256xf32, #tpu.memory_space<vmem>>, %arg7: memref<256x128xbf16, #tpu.memory_space<vmem>>, %arg8: memref<1x128xf32, #tpu.memory_space<vmem>>, %arg9: memref<256x128xbf16, #tpu.memory_space<vmem>>, %arg10: memref<1x128xf32, #tpu.memory_space<vmem>>, %arg11: memref<128x128xbf16, #tpu.memory_space<vmem>>, %arg12: memref<1x128xf32, #tpu.memory_space<vmem>>, %arg13: memref<128x128xbf16, #tpu.memory_space<vmem>>, %arg14: memref<128x128xbf16, #tpu.memory_space<vmem>>, %arg15: memref<1x128xf32, #tpu.memory_space<vmem>>, %arg16: memref<128x128xbf16, #tpu.memory_space<vmem>>, %arg17: memref<1x128xf32, #tpu.memory_space<vmem>>, %arg18: memref<128x128xbf16, #tpu.memory_space<vmem>>, %arg19: memref<1x128xf32, #tpu.memory_space<vmem>>, %arg20: memref<2x128xbf16, #tpu.memory_space<vmem>>) attributes {dimension_semantics = [#tpu.dimension_semantics<parallel>], iteration_bounds = array<i64: 1>, scalar_prefetch = 0 : i64, scratch_operands = 0 : i64, tpu.core_type = #tpu.core_type<tc>, window_params = [{transform_indices = @transform_0, window_bounds = array<i64: 2, 3432>}, {transform_indices = @transform_1, window_bounds = array<i64: 2, 256>}, {pipeline_mode = #tpu.pipeline_mode<synchronous>, transform_indices = @transform_2, window_bounds = array<i64: 3432, 640>}, {pipeline_mode = #tpu.pipeline_mode<synchronous>, transform_indices = @transform_3, window_bounds = array<i64: 1, 640>}, {pipeline_mode = #tpu.pipeline_mode<synchronous>, transform_indices = @transform_4, window_bounds = array<i64: 640, 256>}, {pipeline_mode = #tpu.pipeline_mode<synchronous>, transform_indices = @transform_5, window_bounds = array<i64: 1, 256>}, {pipeline_mode = #tpu.pipeline_mode<synchronous>, transform_indices = @transform_6, window_bounds = array<i64: 256, 128>}, {pipeline_mode = #tpu.pipeline_mode<synchronous>, transform_indices = @transform_7, window_bounds = array<i64: 1, 128>}, {pipeline_mode = #tpu.pipeline_mode<synchronous>, transform_indices = @transform_8, window_bounds = array<i64: 256, 128>}, {pipeline_mode = #tpu.pipeline_mode<synchronous>, transform_indices = @transform_9, window_bounds = array<i64: 1, 128>}, {pipeline_mode = #tpu.pipeline_mode<synchronous>, transform_indices = @transform_10, window_bounds = array<i64: 128, 128>}, {pipeline_mode = #tpu.pipeline_mode<synchronous>, transform_indices = @transform_11, window_bounds = array<i64: 1, 128>}, {pipeline_mode = #tpu.pipeline_mode<synchronous>, transform_indices = @transform_12, window_bounds = array<i64: 128, 128>}, {pipeline_mode = #tpu.pipeline_mode<synchronous>, transform_indices = @transform_13, window_bounds = array<i64: 128, 128>}, {pipeline_mode = #tpu.pipeline_mode<synchronous>, transform_indices = @transform_14, window_bounds = array<i64: 1, 128>}, {pipeline_mode = #tpu.pipeline_mode<synchronous>, transform_indices = @transform_15, window_bounds = array<i64: 128, 128>}, {pipeline_mode = #tpu.pipeline_mode<synchronous>, transform_indices = @transform_16, window_bounds = array<i64: 1, 128>}, {pipeline_mode = #tpu.pipeline_mode<synchronous>, transform_indices = @transform_17, window_bounds = array<i64: 128, 128>}, {pipeline_mode = #tpu.pipeline_mode<synchronous>, transform_indices = @transform_18, window_bounds = array<i64: 1, 128>}, {transform_indices = @transform_19, window_bounds = array<i64: 2, 128>}]} {
    %c0 = arith.constant 0 : index
    %c0_0 = arith.constant 0 : index
    %0 = vector.load %arg1[%c0, %c0_0] : memref<2x3432xf32, #tpu.memory_space<vmem>>, vector<2x3432xf32>
    %1 = arith.truncf %0 : vector<2x3432xf32> to vector<2x3432xbf16>
    %c0_1 = arith.constant 0 : index
    %c0_2 = arith.constant 0 : index
    %2 = vector.load %arg2[%c0_1, %c0_2] : memref<2x256xf32, #tpu.memory_space<vmem>>, vector<2x256xf32>
    %3 = arith.truncf %2 : vector<2x256xf32> to vector<2x256xbf16>
    %c0_3 = arith.constant 0 : index
    %c0_4 = arith.constant 0 : index
    %4 = vector.load %arg3[%c0_3, %c0_4] : memref<3432x640xbf16, #tpu.memory_space<vmem>>, vector<3432x640xbf16>
    %cst = arith.constant dense<0.000000e+00> : vector<2x640xf32>
    %5 = tpu.matmul %1, %4, %cst {dimension_numbers = #tpu.dot_dimension_numbers<[1], [0], [0], [1], [0, 0, 1, 1], [], []>} : vector<2x3432xbf16>, vector<3432x640xbf16>, vector<2x640xf32> -> vector<2x640xf32>
    %c0_5 = arith.constant 0 : index
    %c0_6 = arith.constant 0 : index
    %6 = vector.load %arg4[%c0_5, %c0_6] : memref<1x640xf32, #tpu.memory_space<vmem>>, vector<1x640xf32>
    %7 = vector.broadcast %6 : vector<1x640xf32> to vector<2x640xf32>
    %8 = arith.addf %5, %7 : vector<2x640xf32>
    %cst_7 = arith.constant 0.000000e+00 : f32
    %9 = vector.broadcast %cst_7 : f32 to vector<2x640xf32>
    %10 = arith.maximumf %8, %9 : vector<2x640xf32>
    %11 = arith.truncf %10 : vector<2x640xf32> to vector<2x640xbf16>
    %c0_8 = arith.constant 0 : index
    %c0_9 = arith.constant 0 : index
    %12 = vector.load %arg5[%c0_8, %c0_9] : memref<640x256xbf16, #tpu.memory_space<vmem>>, vector<640x256xbf16>
    %cst_10 = arith.constant dense<0.000000e+00> : vector<2x256xf32>
    %13 = tpu.matmul %11, %12, %cst_10 {dimension_numbers = #tpu.dot_dimension_numbers<[1], [0], [0], [1], [0, 0, 1, 1], [], []>} : vector<2x640xbf16>, vector<640x256xbf16>, vector<2x256xf32> -> vector<2x256xf32>
    %c0_11 = arith.constant 0 : index
    %c0_12 = arith.constant 0 : index
    %14 = vector.load %arg6[%c0_11, %c0_12] : memref<1x256xf32, #tpu.memory_space<vmem>>, vector<1x256xf32>
    %15 = vector.broadcast %14 : vector<1x256xf32> to vector<2x256xf32>
    %16 = arith.addf %13, %15 : vector<2x256xf32>
    %cst_13 = arith.constant 0.000000e+00 : f32
    %17 = vector.broadcast %cst_13 : f32 to vector<2x256xf32>
    %18 = arith.maximumf %16, %17 : vector<2x256xf32>
    %19 = arith.truncf %18 : vector<2x256xf32> to vector<2x256xbf16>
    %c0_14 = arith.constant 0 : index
    %c0_15 = arith.constant 0 : index
    %20 = vector.load %arg7[%c0_14, %c0_15] : memref<256x128xbf16, #tpu.memory_space<vmem>>, vector<256x128xbf16>
    %cst_16 = arith.constant dense<0.000000e+00> : vector<2x128xf32>
    %21 = tpu.matmul %19, %20, %cst_16 {dimension_numbers = #tpu.dot_dimension_numbers<[1], [0], [0], [1], [0, 0, 1, 1], [], []>} : vector<2x256xbf16>, vector<256x128xbf16>, vector<2x128xf32> -> vector<2x128xf32>
    %c0_17 = arith.constant 0 : index
    %c0_18 = arith.constant 0 : index
    %22 = vector.load %arg8[%c0_17, %c0_18] : memref<1x128xf32, #tpu.memory_space<vmem>>, vector<1x128xf32>
    %23 = vector.broadcast %22 : vector<1x128xf32> to vector<2x128xf32>
    %24 = arith.addf %21, %23 : vector<2x128xf32>
    %cst_19 = arith.constant 0.000000e+00 : f32
    %25 = vector.broadcast %cst_19 : f32 to vector<2x128xf32>
    %26 = arith.maximumf %24, %25 : vector<2x128xf32>
    %27 = arith.truncf %26 : vector<2x128xf32> to vector<2x128xbf16>
    %c0_20 = arith.constant 0 : index
    %c0_21 = arith.constant 0 : index
    %28 = vector.load %arg9[%c0_20, %c0_21] : memref<256x128xbf16, #tpu.memory_space<vmem>>, vector<256x128xbf16>
    %cst_22 = arith.constant dense<0.000000e+00> : vector<2x128xf32>
    %29 = tpu.matmul %3, %28, %cst_22 {dimension_numbers = #tpu.dot_dimension_numbers<[1], [0], [0], [1], [0, 0, 1, 1], [], []>} : vector<2x256xbf16>, vector<256x128xbf16>, vector<2x128xf32> -> vector<2x128xf32>
    %c0_23 = arith.constant 0 : index
    %c0_24 = arith.constant 0 : index
    %30 = vector.load %arg10[%c0_23, %c0_24] : memref<1x128xf32, #tpu.memory_space<vmem>>, vector<1x128xf32>
    %31 = vector.broadcast %30 : vector<1x128xf32> to vector<2x128xf32>
    %32 = arith.addf %29, %31 : vector<2x128xf32>
    %cst_25 = arith.constant 0.000000e+00 : f32
    %33 = vector.broadcast %cst_25 : f32 to vector<2x128xf32>
    %34 = arith.maximumf %32, %33 : vector<2x128xf32>
    %35 = arith.truncf %34 : vector<2x128xf32> to vector<2x128xbf16>
    %c0_26 = arith.constant 0 : index
    %c0_27 = arith.constant 0 : index
    %36 = vector.load %arg11[%c0_26, %c0_27] : memref<128x128xbf16, #tpu.memory_space<vmem>>, vector<128x128xbf16>
    %cst_28 = arith.constant dense<0.000000e+00> : vector<2x128xf32>
    %37 = tpu.matmul %35, %36, %cst_28 {dimension_numbers = #tpu.dot_dimension_numbers<[1], [0], [0], [1], [0, 0, 1, 1], [], []>} : vector<2x128xbf16>, vector<128x128xbf16>, vector<2x128xf32> -> vector<2x128xf32>
    %c0_29 = arith.constant 0 : index
    %c0_30 = arith.constant 0 : index
    %38 = vector.load %arg12[%c0_29, %c0_30] : memref<1x128xf32, #tpu.memory_space<vmem>>, vector<1x128xf32>
    %39 = vector.broadcast %38 : vector<1x128xf32> to vector<2x128xf32>
    %40 = arith.addf %37, %39 : vector<2x128xf32>
    %cst_31 = arith.constant 0.000000e+00 : f32
    %41 = vector.broadcast %cst_31 : f32 to vector<2x128xf32>
    %42 = arith.maximumf %40, %41 : vector<2x128xf32>
    %43 = arith.truncf %42 : vector<2x128xf32> to vector<2x128xbf16>
    %c0_32 = arith.constant 0 : index
    %c0_33 = arith.constant 0 : index
    %44 = vector.load %arg13[%c0_32, %c0_33] : memref<128x128xbf16, #tpu.memory_space<vmem>>, vector<128x128xbf16>
    %cst_34 = arith.constant dense<0.000000e+00> : vector<2x128xf32>
    %45 = tpu.matmul %27, %44, %cst_34 {dimension_numbers = #tpu.dot_dimension_numbers<[1], [0], [0], [1], [0, 0, 1, 1], [], []>} : vector<2x128xbf16>, vector<128x128xbf16>, vector<2x128xf32> -> vector<2x128xf32>
    %c0_35 = arith.constant 0 : index
    %c0_36 = arith.constant 0 : index
    %46 = vector.load %arg14[%c0_35, %c0_36] : memref<128x128xbf16, #tpu.memory_space<vmem>>, vector<128x128xbf16>
    %cst_37 = arith.constant dense<0.000000e+00> : vector<2x128xf32>
    %47 = tpu.matmul %43, %46, %cst_37 {dimension_numbers = #tpu.dot_dimension_numbers<[1], [0], [0], [1], [0, 0, 1, 1], [], []>} : vector<2x128xbf16>, vector<128x128xbf16>, vector<2x128xf32> -> vector<2x128xf32>
    %48 = arith.addf %45, %47 : vector<2x128xf32>
    %c0_38 = arith.constant 0 : index
    %c0_39 = arith.constant 0 : index
    %49 = vector.load %arg15[%c0_38, %c0_39] : memref<1x128xf32, #tpu.memory_space<vmem>>, vector<1x128xf32>
    %50 = vector.broadcast %49 : vector<1x128xf32> to vector<2x128xf32>
    %51 = arith.addf %48, %50 : vector<2x128xf32>
    %cst_40 = arith.constant 0.000000e+00 : f32
    %52 = vector.broadcast %cst_40 : f32 to vector<2x128xf32>
    %53 = arith.maximumf %51, %52 : vector<2x128xf32>
    %54 = arith.truncf %53 : vector<2x128xf32> to vector<2x128xbf16>
    %c0_41 = arith.constant 0 : index
    %c0_42 = arith.constant 0 : index
    %55 = vector.load %arg16[%c0_41, %c0_42] : memref<128x128xbf16, #tpu.memory_space<vmem>>, vector<128x128xbf16>
    %cst_43 = arith.constant dense<0.000000e+00> : vector<2x128xf32>
    %56 = tpu.matmul %54, %55, %cst_43 {dimension_numbers = #tpu.dot_dimension_numbers<[1], [0], [0], [1], [0, 0, 1, 1], [], []>} : vector<2x128xbf16>, vector<128x128xbf16>, vector<2x128xf32> -> vector<2x128xf32>
    %c0_44 = arith.constant 0 : index
    %c0_45 = arith.constant 0 : index
    %57 = vector.load %arg17[%c0_44, %c0_45] : memref<1x128xf32, #tpu.memory_space<vmem>>, vector<1x128xf32>
    %58 = vector.broadcast %57 : vector<1x128xf32> to vector<2x128xf32>
    %59 = arith.addf %56, %58 : vector<2x128xf32>
    %cst_46 = arith.constant 0.000000e+00 : f32
    %60 = vector.broadcast %cst_46 : f32 to vector<2x128xf32>
    %61 = arith.maximumf %59, %60 : vector<2x128xf32>
    %62 = arith.truncf %61 : vector<2x128xf32> to vector<2x128xbf16>
    %c0_47 = arith.constant 0 : index
    %c0_48 = arith.constant 0 : index
    %63 = vector.load %arg18[%c0_47, %c0_48] : memref<128x128xbf16, #tpu.memory_space<vmem>>, vector<128x128xbf16>
    %cst_49 = arith.constant dense<0.000000e+00> : vector<2x128xf32>
    %64 = tpu.matmul %62, %63, %cst_49 {dimension_numbers = #tpu.dot_dimension_numbers<[1], [0], [0], [1], [0, 0, 1, 1], [], []>} : vector<2x128xbf16>, vector<128x128xbf16>, vector<2x128xf32> -> vector<2x128xf32>
    %c0_50 = arith.constant 0 : index
    %c0_51 = arith.constant 0 : index
    %65 = vector.load %arg19[%c0_50, %c0_51] : memref<1x128xf32, #tpu.memory_space<vmem>>, vector<1x128xf32>
    %66 = vector.broadcast %65 : vector<1x128xf32> to vector<2x128xf32>
    %67 = arith.addf %64, %66 : vector<2x128xf32>
    %cst_52 = arith.constant 0.000000e+00 : f32
    %68 = vector.broadcast %cst_52 : f32 to vector<2x128xf32>
    %69 = arith.maximumf %67, %68 : vector<2x128xf32>
    %70 = arith.truncf %69 : vector<2x128xf32> to vector<2x128xbf16>
    %c0_53 = arith.constant 0 : index
    %c0_54 = arith.constant 0 : index
    %71 = vector.load %arg20[%c0_53, %c0_54] : memref<2x128xbf16, #tpu.memory_space<vmem>>, vector<2x128xbf16>
    tpu.vector_store %arg20[%c0_53, %c0_54], %70 {strides = array<i32>} : memref<2x128xbf16, #tpu.memory_space<vmem>>, vector<2x128xbf16>,
    return
  }
  func.func @transform_0(%arg0: i32) -> (i32, i32) {
    %c0_i32 = arith.constant 0 : i32
    %c0_i32_0 = arith.constant 0 : i32
    return %arg0, %c0_i32 : i32, i32
  }
  func.func @transform_1(%arg0: i32) -> (i32, i32) {
    %c0_i32 = arith.constant 0 : i32
    %c0_i32_0 = arith.constant 0 : i32
    return %arg0, %c0_i32 : i32, i32
  }
  func.func @transform_2(%arg0: i32) -> (i32, i32) {
    %c0_i32 = arith.constant 0 : i32
    %c0_i32_0 = arith.constant 0 : i32
    %c0_i32_1 = arith.constant 0 : i32
    return %c0_i32, %c0_i32_0 : i32, i32
  }
  func.func @transform_3(%arg0: i32) -> (i32, i32) {
    %c0_i32 = arith.constant 0 : i32
    %c0_i32_0 = arith.constant 0 : i32
    %c0_i32_1 = arith.constant 0 : i32
    return %c0_i32, %c0_i32_0 : i32, i32
  }
  func.func @transform_4(%arg0: i32) -> (i32, i32) {
    %c0_i32 = arith.constant 0 : i32
    %c0_i32_0 = arith.constant 0 : i32
    %c0_i32_1 = arith.constant 0 : i32
    return %c0_i32, %c0_i32_0 : i32, i32
  }
  func.func @transform_5(%arg0: i32) -> (i32, i32) {
    %c0_i32 = arith.constant 0 : i32
    %c0_i32_0 = arith.constant 0 : i32
    %c0_i32_1 = arith.constant 0 : i32
    return %c0_i32, %c0_i32_0 : i32, i32
  }
  func.func @transform_6(%arg0: i32) -> (i32, i32) {
    %c0_i32 = arith.constant 0 : i32
    %c0_i32_0 = arith.constant 0 : i32
    %c0_i32_1 = arith.constant 0 : i32
    return %c0_i32, %c0_i32_0 : i32, i32
  }
  func.func @transform_7(%arg0: i32) -> (i32, i32) {
    %c0_i32 = arith.constant 0 : i32
    %c0_i32_0 = arith.constant 0 : i32
    %c0_i32_1 = arith.constant 0 : i32
    return %c0_i32, %c0_i32_0 : i32, i32
  }
  func.func @transform_8(%arg0: i32) -> (i32, i32) {
    %c0_i32 = arith.constant 0 : i32
    %c0_i32_0 = arith.constant 0 : i32
    %c0_i32_1 = arith.constant 0 : i32
    return %c0_i32, %c0_i32_0 : i32, i32
  }
  func.func @transform_9(%arg0: i32) -> (i32, i32) {
    %c0_i32 = arith.constant 0 : i32
    %c0_i32_0 = arith.constant 0 : i32
    %c0_i32_1 = arith.constant 0 : i32
    return %c0_i32, %c0_i32_0 : i32, i32
  }
  func.func @transform_10(%arg0: i32) -> (i32, i32) {
    %c0_i32 = arith.constant 0 : i32
    %c0_i32_0 = arith.constant 0 : i32
    %c0_i32_1 = arith.constant 0 : i32
    return %c0_i32, %c0_i32_0 : i32, i32
  }
  func.func @transform_11(%arg0: i32) -> (i32, i32) {
    %c0_i32 = arith.constant 0 : i32
    %c0_i32_0 = arith.constant 0 : i32
    %c0_i32_1 = arith.constant 0 : i32
    return %c0_i32, %c0_i32_0 : i32, i32
  }
  func.func @transform_12(%arg0: i32) -> (i32, i32) {
    %c0_i32 = arith.constant 0 : i32
    %c0_i32_0 = arith.constant 0 : i32
    %c0_i32_1 = arith.constant 0 : i32
    return %c0_i32, %c0_i32_0 : i32, i32
  }
  func.func @transform_13(%arg0: i32) -> (i32, i32) {
    %c0_i32 = arith.constant 0 : i32
    %c0_i32_0 = arith.constant 0 : i32
    %c0_i32_1 = arith.constant 0 : i32
    return %c0_i32, %c0_i32_0 : i32, i32
  }
  func.func @transform_14(%arg0: i32) -> (i32, i32) {
    %c0_i32 = arith.constant 0 : i32
    %c0_i32_0 = arith.constant 0 : i32
    %c0_i32_1 = arith.constant 0 : i32
    return %c0_i32, %c0_i32_0 : i32, i32
  }
  func.func @transform_15(%arg0: i32) -> (i32, i32) {
    %c0_i32 = arith.constant 0 : i32
    %c0_i32_0 = arith.constant 0 : i32
    %c0_i32_1 = arith.constant 0 : i32
    return %c0_i32, %c0_i32_0 : i32, i32
  }
  func.func @transform_16(%arg0: i32) -> (i32, i32) {
    %c0_i32 = arith.constant 0 : i32
    %c0_i32_0 = arith.constant 0 : i32
    %c0_i32_1 = arith.constant 0 : i32
    return %c0_i32, %c0_i32_0 : i32, i32
  }
  func.func @transform_17(%arg0: i32) -> (i32, i32) {
    %c0_i32 = arith.constant 0 : i32
    %c0_i32_0 = arith.constant 0 : i32
    %c0_i32_1 = arith.constant 0 : i32
    return %c0_i32, %c0_i32_0 : i32, i32
  }
  func.func @transform_18(%arg0: i32) -> (i32, i32) {
    %c0_i32 = arith.constant 0 : i32
    %c0_i32_0 = arith.constant 0 : i32
    %c0_i32_1 = arith.constant 0 : i32
    return %c0_i32, %c0_i32_0 : i32, i32
  }
  func.func @transform_19(%arg0: i32) -> (i32, i32) {
    %c0_i32 = arith.constant 0 : i32
    %c0_i32_0 = arith.constant 0 : i32
    return %arg0, %c0_i32 : i32, i32
  }
}

</mosaic_0001>

<llo_original>
// kernel: tabtab_forward.1
$region0: #{tabtab_forward.1}
  #allocation0 [shape = 'u32[]', space=smem, size = 0x4, offset = 0x4, fixed_abs, tag = 'smem constant byte address 0x4 - core index']
  #allocation1 [shape = 'u32[144,128]{1,0:T(1,128)}', space=vmem, size = 0x12000, scoped, tag = 'internal scratch']
  %s0 = inlined_call_operand.vmem [shape: f32[2,3432], index: 0, kind: input, shape index: {}]
  %s1 = inlined_call_operand.vmem [shape: f32[2,256], index: 1, kind: input, shape index: {}]
  %s2 = inlined_call_operand.hbm [shape: bf16[3432,640], index: 2, kind: input, shape index: {}]
  %s3 = inlined_call_operand.hbm [shape: f32[1,640], index: 3, kind: input, shape index: {}]
  %s4 = inlined_call_operand.hbm [shape: bf16[640,256], index: 4, kind: input, shape index: {}]
  %s5 = inlined_call_operand.hbm [shape: f32[1,256], index: 5, kind: input, shape index: {}]
  %s6 = inlined_call_operand.hbm [shape: bf16[256,128], index: 6, kind: input, shape index: {}]
  %s7 = inlined_call_operand.hbm [shape: f32[1,128], index: 7, kind: input, shape index: {}]
  %s8 = inlined_call_operand.hbm [shape: bf16[256,128], index: 8, kind: input, shape index: {}]
  %s9 = inlined_call_operand.hbm [shape: f32[1,128], index: 9, kind: input, shape index: {}]
  %s10 = inlined_call_operand.hbm [shape: bf16[128,128], index: 10, kind: input, shape index: {}]
  %s11 = inlined_call_operand.hbm [shape: f32[1,128], index: 11, kind: input, shape index: {}]
  %s12 = inlined_call_operand.hbm [shape: bf16[128,128], index: 12, kind: input, shape index: {}]
  %s13 = inlined_call_operand.hbm [shape: bf16[128,128], index: 13, kind: input, shape index: {}]
  %s14 = inlined_call_operand.hbm [shape: f32[1,128], index: 14, kind: input, shape index: {}]
  %s15 = inlined_call_operand.hbm [shape: bf16[128,128], index: 15, kind: input, shape index: {}]
  %s16 = inlined_call_operand.hbm [shape: f32[1,128], index: 16, kind: input, shape index: {}]
  %s17 = inlined_call_operand.hbm [shape: bf16[128,128], index: 17, kind: input, shape index: {}]
  %s18 = inlined_call_operand.hbm [shape: f32[1,128], index: 18, kind: input, shape index: {}]
  %s19 = inlined_call_operand.vmem [shape: bf16[2,128], index: 19, kind: output, shape index: {}]
  %s20 = sld [smem:[#allocation0]]
  $region154: #{tabtab_forward.1} parent=0
    _
  %s22 = ssub.s32 1, %s20
  %s23 = scalar_select 0, %s22, %s20
  $region1: #{tabtab_forward.1} parent=0
    #allocation2 [shape = 'u8[4392960]{0}', space=vmem, size = 0x430800, scoped, tag = 'input window, operand 2, single buffered']
    #allocation3 [shape = 's32[1]{0}', space=sflag, size = 0x4, scoped, tag = 'scoped memory for tabtab_forward.1']
    #allocation4 [shape = 'u8[2560]{0}', space=vmem, size = 0xc00, scoped, tag = 'input window, operand 3, single buffered']
    #allocation5 [shape = 's32[1]{0}', space=sflag, size = 0x4, scoped, tag = 'scoped memory for tabtab_forward.1']
    #allocation6 [shape = 'u8[327680]{0}', space=vmem, size = 0x50000, scoped, tag = 'input window, operand 4, single buffered']
    #allocation7 [shape = 'u8[1024]{0}', space=vmem, size = 0x400, scoped, tag = 'input window, operand 5, single buffered']
    #allocation8 [shape = 's32[1]{0}', space=sflag, size = 0x4, scoped, tag = 'scoped memory for tabtab_forward.1']
    #allocation9 [shape = 'u8[65536]{0}', space=vmem, size = 0x10000, scoped, tag = 'input window, operand 6, single buffered']
    #allocation10 [shape = 'u8[512]{0}', space=vmem, size = 0x400, scoped, tag = 'input window, operand 7, single buffered']
    #allocation11 [shape = 's32[1]{0}', space=sflag, size = 0x4, scoped, tag = 'scoped memory for tabtab_forward.1']
    #allocation12 [shape = 'u8[65536]{0}', space=vmem, size = 0x10000, scoped, tag = 'input window, operand 8, single buffered']
    #allocation13 [shape = 'u8[512]{0}', space=vmem, size = 0x400, scoped, tag = 'input window, operand 9, single buffered']
    #allocation14 [shape = 's32[1]{0}', space=sflag, size = 0x4, scoped, tag = 'scoped memory for tabtab_forward.1']
    #allocation15 [shape = 'u8[32768]{0}', space=vmem, size = 0x8000, scoped, tag = 'input window, operand 10, single buffered']
    #allocation16 [shape = 'u8[512]{0}', space=vmem, size = 0x400, scoped, tag = 'input window, operand 11, single buffered']
    #allocation17 [shape = 's32[1]{0}', space=sflag, size = 0x4, scoped, tag = 'scoped memory for tabtab_forward.1']
    #allocation18 [shape = 'u8[32768]{0}', space=vmem, size = 0x8000, scoped, tag = 'input window, operand 12, single buffered']
    #allocation19 [shape = 'u8[32768]{0}', space=vmem, size = 0x8000, scoped, tag = 'input window, operand 13, single buffered']
    #allocation20 [shape = 's32[1]{0}', space=sflag, size = 0x4, scoped, tag = 'scoped memory for tabtab_forward.1']
    #allocation21 [shape = 'u8[512]{0}', space=vmem, size = 0x400, scoped, tag = 'input window, operand 14, single buffered']
    #allocation22 [shape = 'u8[32768]{0}', space=vmem, size = 0x8000, scoped, tag = 'input window, operand 15, single buffered']
    #allocation23 [shape = 's32[1]{0}', space=sflag, size = 0x4, scoped, tag = 'scoped memory for tabtab_forward.1']
    #allocation24 [shape = 'u8[512]{0}', space=vmem, size = 0x400, scoped, tag = 'input window, operand 16, single buffered']
    #allocation25 [shape = 'u8[32768]{0}', space=vmem, size = 0x8000, scoped, tag = 'input window, operand 17, single buffered']
    #allocation26 [shape = 's32[1]{0}', space=sflag, size = 0x4, scoped, tag = 'scoped memory for tabtab_forward.1']
    #allocation27 [shape = 'u8[512]{0}', space=vmem, size = 0x400, scoped, tag = 'input window, operand 18, single buffered']
    %24 = vsyncpa [#allocation3], 0
    %25 = vsyncpa [#allocation5], 0
    %26 = vsyncpa [#allocation8], 0
    %27 = vsyncpa [#allocation11], 0
    %28 = vsyncpa [#allocation14], 0
    %29 = vsyncpa [#allocation17], 0
    %30 = vsyncpa [#allocation20], 0
    %31 = vsyncpa [#allocation23], 0
    %32 = vsyncpa [#allocation26], 0
    // Predicated region
    $region2: #{tabtab_forward.1} parent=1 // pred_check
      _
    $region3: #{tabtab_forward.1} parent=1 // pred_check_branch
      %34 = sbr.rel (0) target = $region5
    $region4: #{tabtab_forward.1} parent=1 // pred_region
      _
    $region5: #{tabtab_forward.1} parent=1 // pred_fallthru
      _
    // Predicated region
    $region6: #{tabtab_forward.1} parent=1 // pred_check
      _
    $region7: #{tabtab_forward.1} parent=1 // pred_check_branch
      %36 = sbr.rel (0) target = $region9
    $region8: #{tabtab_forward.1} parent=1 // pred_region
      _
    $region9: #{tabtab_forward.1} parent=1 // pred_fallthru
      _
    // Predicated region
    $region10: #{tabtab_forward.1} parent=1 // pred_check
      _
    $region11: #{tabtab_forward.1} parent=1 // pred_check_branch
      %38 = sbr.rel (0) target = $region13
    $region12: #{tabtab_forward.1} parent=1 // pred_region
      %s40 = ssub.s32 137280, 137280
      %41 = vsyncadd [#allocation3], %s40
      %s42 = sshll.u32 [#allocation2], 4
      %s43 = int_to_ptr.vmem [resolvable:$true] %s42
      %48 = dma.hbm_to_vmem [thread:$0]  %s2, 137280, %s43, [#allocation3], 320, 320, 20
    $region13: #{tabtab_forward.1} parent=1 // pred_fallthru
      _
    // Predicated region
    $region14: #{tabtab_forward.1} parent=1 // pred_check
      _
    $region15: #{tabtab_forward.1} parent=1 // pred_check_branch
      %50 = sbr.rel (0) target = $region17
    $region16: #{tabtab_forward.1} parent=1 // pred_region
      %s52 = ssub.s32 80, 80
      %53 = vsyncadd [#allocation5], %s52
      %s55 = sshll.u32 [#allocation4], 4
      %s56 = int_to_ptr.vmem [resolvable:$true] %s55
      %58 = dma.hbm_to_vmem [thread:$0]  %s3, 80, %s56, [#allocation5]
    $region17: #{tabtab_forward.1} parent=1 // pred_fallthru
      _
    // Predicated region
    $region18: #{tabtab_forward.1} parent=1 // pred_check
      _
    $region19: #{tabtab_forward.1} parent=1 // pred_check_branch
      %60 = sbr.rel (0) target = $region21
    $region20: #{tabtab_forward.1} parent=1 // pred_region
      %s62 = ssub.s32 10240, 10240
      %63 = vsyncadd [#allocation5], %s62
      %s64 = sshll.u32 [#allocation6], 4
      %s65 = int_to_ptr.vmem [resolvable:$true] %s64
      %70 = dma.hbm_to_vmem [thread:$0]  %s4, 10240, %s65, [#allocation5], 128, 128, 8
    $region21: #{tabtab_forward.1} parent=1 // pred_fallthru
      _
    // Predicated region
    $region22: #{tabtab_forward.1} parent=1 // pred_check
      _
    $region23: #{tabtab_forward.1} parent=1 // pred_check_branch
      %72 = sbr.rel (0) target = $region25
    $region24: #{tabtab_forward.1} parent=1 // pred_region
      %s74 = ssub.s32 32, 32
      %75 = vsyncadd [#allocation8], %s74
      %s77 = sshll.u32 [#allocation7], 4
      %s78 = int_to_ptr.vmem [resolvable:$true] %s77
      %80 = dma.hbm_to_vmem [thread:$0]  %s5, 32, %s78, [#allocation8]
    $region25: #{tabtab_forward.1} parent=1 // pred_fallthru
      _
    // Predicated region
    $region26: #{tabtab_forward.1} parent=1 // pred_check
      _
    $region27: #{tabtab_forward.1} parent=1 // pred_check_branch
      %82 = sbr.rel (0) target = $region29
    $region28: #{tabtab_forward.1} parent=1 // pred_region
      %s84 = ssub.s32 2048, 2048
      %85 = vsyncadd [#allocation8], %s84
      %s86 = sshll.u32 [#allocation9], 4
      %s87 = int_to_ptr.vmem [resolvable:$true] %s86
      %92 = dma.hbm_to_vmem [thread:$0]  %s6, 2048, %s87, [#allocation8], 64, 64, 4
    $region29: #{tabtab_forward.1} parent=1 // pred_fallthru
      _
    // Predicated region
    $region30: #{tabtab_forward.1} parent=1 // pred_check
      _
    $region31: #{tabtab_forward.1} parent=1 // pred_check_branch
      %94 = sbr.rel (0) target = $region33
    $region32: #{tabtab_forward.1} parent=1 // pred_region
      %s96 = ssub.s32 16, 16
      %97 = vsyncadd [#allocation11], %s96
      %s99 = sshll.u32 [#allocation10], 4
      %s100 = int_to_ptr.vmem [resolvable:$true] %s99
      %102 = dma.hbm_to_vmem [thread:$0]  %s7, 16, %s100, [#allocation11]
    $region33: #{tabtab_forward.1} parent=1 // pred_fallthru
      _
    // Predicated region
    $region34: #{tabtab_forward.1} parent=1 // pred_check
      _
    $region35: #{tabtab_forward.1} parent=1 // pred_check_branch
      %104 = sbr.rel (0) target = $region37
    $region36: #{tabtab_forward.1} parent=1 // pred_region
      %s106 = ssub.s32 2048, 2048
      %107 = vsyncadd [#allocation11], %s106
      %s108 = sshll.u32 [#allocation12], 4
      %s109 = int_to_ptr.vmem [resolvable:$true] %s108
      %114 = dma.hbm_to_vmem [thread:$0]  %s8, 2048, %s109, [#allocation11], 64, 64, 4
    $region37: #{tabtab_forward.1} parent=1 // pred_fallthru
      _
    // Predicated region
    $region38: #{tabtab_forward.1} parent=1 // pred_check
      _
    $region39: #{tabtab_forward.1} parent=1 // pred_check_branch
      %116 = sbr.rel (0) target = $region41
    $region40: #{tabtab_forward.1} parent=1 // pred_region
      %s118 = ssub.s32 16, 16
      %119 = vsyncadd [#allocation14], %s118
      %s121 = sshll.u32 [#allocation13], 4
      %s122 = int_to_ptr.vmem [resolvable:$true] %s121
      %124 = dma.hbm_to_vmem [thread:$0]  %s9, 16, %s122, [#allocation14]
    $region41: #{tabtab_forward.1} parent=1 // pred_fallthru
      _
    // Predicated region
    $region42: #{tabtab_forward.1} parent=1 // pred_check
      _
    $region43: #{tabtab_forward.1} parent=1 // pred_check_branch
      %126 = sbr.rel (0) target = $region45
    $region44: #{tabtab_forward.1} parent=1 // pred_region
      %s128 = ssub.s32 1024, 1024
      %129 = vsyncadd [#allocation14], %s128
      %s130 = sshll.u32 [#allocation15], 4
      %s131 = int_to_ptr.vmem [resolvable:$true] %s130
      %136 = dma.hbm_to_vmem [thread:$0]  %s10, 1024, %s131, [#allocation14], 64, 64, 4
    $region45: #{tabtab_forward.1} parent=1 // pred_fallthru
      _
    // Predicated region
    $region46: #{tabtab_forward.1} parent=1 // pred_check
      _
    $region47: #{tabtab_forward.1} parent=1 // pred_check_branch
      %138 = sbr.rel (0) target = $region49
    $region48: #{tabtab_forward.1} parent=1 // pred_region
      %s140 = ssub.s32 16, 16
      %141 = vsyncadd [#allocation17], %s140
      %s143 = sshll.u32 [#allocation16], 4
      %s144 = int_to_ptr.vmem [resolvable:$true] %s143
      %146 = dma.hbm_to_vmem [thread:$0]  %s11, 16, %s144, [#allocation17]
    $region49: #{tabtab_forward.1} parent=1 // pred_fallthru
      _
    // Predicated region
    $region50: #{tabtab_forward.1} parent=1 // pred_check
      _
    $region51: #{tabtab_forward.1} parent=1 // pred_check_branch
      %148 = sbr.rel (0) target = $region53
    $region52: #{tabtab_forward.1} parent=1 // pred_region
      %s150 = ssub.s32 1024, 1024
      %151 = vsyncadd [#allocation17], %s150
      %s152 = sshll.u32 [#allocation18], 4
      %s153 = int_to_ptr.vmem [resolvable:$true] %s152
      %158 = dma.hbm_to_vmem [thread:$0]  %s12, 1024, %s153, [#allocation17], 64, 64, 4
    $region53: #{tabtab_forward.1} parent=1 // pred_fallthru
      _
    // Predicated region
    $region54: #{tabtab_forward.1} parent=1 // pred_check
      _
    $region55: #{tabtab_forward.1} parent=1 // pred_check_branch
      %160 = sbr.rel (0) target = $region57
    $region56: #{tabtab_forward.1} parent=1 // pred_region
      %s162 = ssub.s32 1024, 1024
      %163 = vsyncadd [#allocation20], %s162
      %s164 = sshll.u32 [#allocation19], 4
      %s165 = int_to_ptr.vmem [resolvable:$true] %s164
      %170 = dma.hbm_to_vmem [thread:$0]  %s13, 1024, %s165, [#allocation20], 64, 64, 4
    $region57: #{tabtab_forward.1} parent=1 // pred_fallthru
      _
    // Predicated region
    $region58: #{tabtab_forward.1} parent=1 // pred_check
      _
    $region59: #{tabtab_forward.1} parent=1 // pred_check_branch
      %172 = sbr.rel (0) target = $region61
    $region60: #{tabtab_forward.1} parent=1 // pred_region
      %s174 = ssub.s32 16, 16
      %175 = vsyncadd [#allocation20], %s174
      %s177 = sshll.u32 [#allocation21], 4
      %s178 = int_to_ptr.vmem [resolvable:$true] %s177
      %180 = dma.hbm_to_vmem [thread:$0]  %s14, 16, %s178, [#allocation20]
    $region61: #{tabtab_forward.1} parent=1 // pred_fallthru
      _
    // Predicated region
    $region62: #{tabtab_forward.1} parent=1 // pred_check
      _
    $region63: #{tabtab_forward.1} parent=1 // pred_check_branch
      %182 = sbr.rel (0) target = $region65
    $region64: #{tabtab_forward.1} parent=1 // pred_region
      %s184 = ssub.s32 1024, 1024
      %185 = vsyncadd [#allocation23], %s184
      %s186 = sshll.u32 [#allocation22], 4
      %s187 = int_to_ptr.vmem [resolvable:$true] %s186
      %192 = dma.hbm_to_vmem [thread:$0]  %s15, 1024, %s187, [#allocation23], 64, 64, 4
    $region65: #{tabtab_forward.1} parent=1 // pred_fallthru
      _
    // Predicated region
    $region66: #{tabtab_forward.1} parent=1 // pred_check
      _
    $region67: #{tabtab_forward.1} parent=1 // pred_check_branch
      %194 = sbr.rel (0) target = $region69
    $region68: #{tabtab_forward.1} parent=1 // pred_region
      %s196 = ssub.s32 16, 16
      %197 = vsyncadd [#allocation23], %s196
      %s199 = sshll.u32 [#allocation24], 4
      %s200 = int_to_ptr.vmem [resolvable:$true] %s199
      %202 = dma.hbm_to_vmem [thread:$0]  %s16, 16, %s200, [#allocation23]
    $region69: #{tabtab_forward.1} parent=1 // pred_fallthru
      _
    // Predicated region
    $region70: #{tabtab_forward.1} parent=1 // pred_check
      _
    $region71: #{tabtab_forward.1} parent=1 // pred_check_branch
      %204 = sbr.rel (0) target = $region73
    $region72: #{tabtab_forward.1} parent=1 // pred_region
      %s206 = ssub.s32 1024, 1024
      %207 = vsyncadd [#allocation26], %s206
      %s208 = sshll.u32 [#allocation25], 4
      %s209 = int_to_ptr.vmem [resolvable:$true] %s208
      %214 = dma.hbm_to_vmem [thread:$0]  %s17, 1024, %s209, [#allocation26], 64, 64, 4
    $region73: #{tabtab_forward.1} parent=1 // pred_fallthru
      _
    // Predicated region
    $region74: #{tabtab_forward.1} parent=1 // pred_check
      _
    $region75: #{tabtab_forward.1} parent=1 // pred_check_branch
      %216 = sbr.rel (0) target = $region77
    $region76: #{tabtab_forward.1} parent=1 // pred_region
      %s218 = ssub.s32 16, 16
      %219 = vsyncadd [#allocation26], %s218
      %s221 = sshll.u32 [#allocation27], 4
      %s222 = int_to_ptr.vmem [resolvable:$true] %s221
      %224 = dma.hbm_to_vmem [thread:$0]  %s18, 16, %s222, [#allocation26]
    $region77: #{tabtab_forward.1} parent=1 // pred_fallthru
      _
    // Predicated region
    $region78: #{tabtab_forward.1} parent=1 // pred_check
      _
    $region79: #{tabtab_forward.1} parent=1 // pred_check_branch
      %226 = sbr.rel (0) target = $region81
    $region80: #{tabtab_forward.1} parent=1 // pred_region
      %227 = dma.done [#allocation3], 137280
    $region81: #{tabtab_forward.1} parent=1 // pred_fallthru
      _
    // Predicated region
    $region82: #{tabtab_forward.1} parent=1 // pred_check
      _
    $region83: #{tabtab_forward.1} parent=1 // pred_check_branch
      %229 = sbr.rel (0) target = $region85
    $region84: #{tabtab_forward.1} parent=1 // pred_region
      %230 = dma.done [#allocation5], 80
    $region85: #{tabtab_forward.1} parent=1 // pred_fallthru
      _
    // Predicated region
    $region86: #{tabtab_forward.1} parent=1 // pred_check
      _
    $region87: #{tabtab_forward.1} parent=1 // pred_check_branch
      %232 = sbr.rel (0) target = $region89
    $region88: #{tabtab_forward.1} parent=1 // pred_region
      %233 = dma.done [#allocation5], 10240
    $region89: #{tabtab_forward.1} parent=1 // pred_fallthru
      _
    // Predicated region
    $region90: #{tabtab_forward.1} parent=1 // pred_check
      _
    $region91: #{tabtab_forward.1} parent=1 // pred_check_branch
      %235 = sbr.rel (0) target = $region93
    $region92: #{tabtab_forward.1} parent=1 // pred_region
      %236 = dma.done [#allocation8], 32
    $region93: #{tabtab_forward.1} parent=1 // pred_fallthru
      _
    // Predicated region
    $region94: #{tabtab_forward.1} parent=1 // pred_check
      _
    $region95: #{tabtab_forward.1} parent=1 // pred_check_branch
      %238 = sbr.rel (0) target = $region97
    $region96: #{tabtab_forward.1} parent=1 // pred_region
      %239 = dma.done [#allocation8], 2048
    $region97: #{tabtab_forward.1} parent=1 // pred_fallthru
      _
    // Predicated region
    $region98: #{tabtab_forward.1} parent=1 // pred_check
      _
    $region99: #{tabtab_forward.1} parent=1 // pred_check_branch
      %241 = sbr.rel (0) target = $region101
    $region100: #{tabtab_forward.1} parent=1 // pred_region
      %242 = dma.done [#allocation11], 16
    $region101: #{tabtab_forward.1} parent=1 // pred_fallthru
      _
    // Predicated region
    $region102: #{tabtab_forward.1} parent=1 // pred_check
      _
    $region103: #{tabtab_forward.1} parent=1 // pred_check_branch
      %244 = sbr.rel (0) target = $region105
    $region104: #{tabtab_forward.1} parent=1 // pred_region
      %245 = dma.done [#allocation11], 2048
    $region105: #{tabtab_forward.1} parent=1 // pred_fallthru
      _
    // Predicated region
    $region106: #{tabtab_forward.1} parent=1 // pred_check
      _
    $region107: #{tabtab_forward.1} parent=1 // pred_check_branch
      %247 = sbr.rel (0) target = $region109
    $region108: #{tabtab_forward.1} parent=1 // pred_region
      %248 = dma.done [#allocation14], 16
    $region109: #{tabtab_forward.1} parent=1 // pred_fallthru
      _
    // Predicated region
    $region110: #{tabtab_forward.1} parent=1 // pred_check
      _
    $region111: #{tabtab_forward.1} parent=1 // pred_check_branch
      %250 = sbr.rel (0) target = $region113
    $region112: #{tabtab_forward.1} parent=1 // pred_region
      %251 = dma.done [#allocation14], 1024
    $region113: #{tabtab_forward.1} parent=1 // pred_fallthru
      _
    // Predicated region
    $region114: #{tabtab_forward.1} parent=1 // pred_check
      _
    $region115: #{tabtab_forward.1} parent=1 // pred_check_branch
      %253 = sbr.rel (0) target = $region117
    $region116: #{tabtab_forward.1} parent=1 // pred_region
      %254 = dma.done [#allocation17], 16
    $region117: #{tabtab_forward.1} parent=1 // pred_fallthru
      _
    // Predicated region
    $region118: #{tabtab_forward.1} parent=1 // pred_check
      _
    $region119: #{tabtab_forward.1} parent=1 // pred_check_branch
      %256 = sbr.rel (0) target = $region121
    $region120: #{tabtab_forward.1} parent=1 // pred_region
      %257 = dma.done [#allocation17], 1024
    $region121: #{tabtab_forward.1} parent=1 // pred_fallthru
      _
    // Predicated region
    $region122: #{tabtab_forward.1} parent=1 // pred_check
      _
    $region123: #{tabtab_forward.1} parent=1 // pred_check_branch
      %259 = sbr.rel (0) target = $region125
    $region124: #{tabtab_forward.1} parent=1 // pred_region
      %260 = dma.done [#allocation20], 1024
    $region125: #{tabtab_forward.1} parent=1 // pred_fallthru
      _
    // Predicated region
    $region126: #{tabtab_forward.1} parent=1 // pred_check
      _
    $region127: #{tabtab_forward.1} parent=1 // pred_check_branch
      %262 = sbr.rel (0) target = $region129
    $region128: #{tabtab_forward.1} parent=1 // pred_region
      %263 = dma.done [#allocation20], 16
    $region129: #{tabtab_forward.1} parent=1 // pred_fallthru
      _
    // Predicated region
    $region130: #{tabtab_forward.1} parent=1 // pred_check
      _
    $region131: #{tabtab_forward.1} parent=1 // pred_check_branch
      %265 = sbr.rel (0) target = $region133
    $region132: #{tabtab_forward.1} parent=1 // pred_region
      %266 = dma.done [#allocation23], 1024
    $region133: #{tabtab_forward.1} parent=1 // pred_fallthru
      _
    // Predicated region
    $region134: #{tabtab_forward.1} parent=1 // pred_check
      _
    $region135: #{tabtab_forward.1} parent=1 // pred_check_branch
      %268 = sbr.rel (0) target = $region137
    $region136: #{tabtab_forward.1} parent=1 // pred_region
      %269 = dma.done [#allocation23], 16
    $region137: #{tabtab_forward.1} parent=1 // pred_fallthru
      _
    // Predicated region
    $region138: #{tabtab_forward.1} parent=1 // pred_check
      _
    $region139: #{tabtab_forward.1} parent=1 // pred_check_branch
      %271 = sbr.rel (0) target = $region141
    $region140: #{tabtab_forward.1} parent=1 // pred_region
      %272 = dma.done [#allocation26], 1024
    $region141: #{tabtab_forward.1} parent=1 // pred_fallthru
      _
    // Predicated region
    $region142: #{tabtab_forward.1} parent=1 // pred_check
      _
    $region143: #{tabtab_forward.1} parent=1 // pred_check_branch
      %274 = sbr.rel (0) target = $region145
    $region144: #{tabtab_forward.1} parent=1 // pred_region
      %275 = dma.done [#allocation26], 16
    $region145: #{tabtab_forward.1} parent=1 // pred_fallthru
      _
    %v277 = vld [vmem:[%s0] sm:$0xff]
    %v278 = vld [vmem:[%s0 + $0x8] sm:$0xff]
    %v279 = vld [vmem:[%s0 + $0x10] sm:$0xff]
    %v280 = vld [vmem:[%s0 + $0x18] sm:$0xff]
    %v281 = vld [vmem:[%s0 + $0x20] sm:$0xff]
    %v282 = vld [vmem:[%s0 + $0x28] sm:$0xff]
    %v283 = vld [vmem:[%s0 + $0x30] sm:$0x3f]
    %v291 = vcombine.high %v277, %v277
    %v293 = vunpack.c.l.s4 1983009808
    %v294 = vunpack.c.0.s8 %v293
    %v295 = vlaneseq
    %v296 = vshrl.u32 %v295, 7
    %v297 = vsub.s32 %v294, %v296
    %v298 = vrot.slane %v277, %v297
    %v300 = vunpack.c.l.s4 1983009808
    %v301 = vunpack.c.0.s8 %v300
    %v302 = vlaneseq
    %v303 = vshrl.u32 %v302, 7
    %v304 = vsub.s32 %v301, %v303
    %v305 = vrot.slane %v291, %v304
    %v306 = vcombine.high %v298, %v298
    %v307 = vcombine.high %v305, %v305
    %v308 = vcombine.high %v278, %v278
    %v310 = vunpack.c.l.s4 1983009808
    %v311 = vunpack.c.0.s8 %v310
    %v312 = vlaneseq
    %v313 = vshrl.u32 %v312, 7
    %v314 = vsub.s32 %v311, %v313
    %v315 = vrot.slane %v278, %v314
    %v317 = vunpack.c.l.s4 1983009808
    %v318 = vunpack.c.0.s8 %v317
    %v319 = vlaneseq
    %v320 = vshrl.u32 %v319, 7
    %v321 = vsub.s32 %v318, %v320
    %v322 = vrot.slane %v308, %v321
    %v323 = vcombine.high %v315, %v315
    %v324 = vcombine.high %v322, %v322
    %v325 = vcombine.high %v279, %v279
    %v327 = vunpack.c.l.s4 1983009808
    %v328 = vunpack.c.0.s8 %v327
    %v329 = vlaneseq
    %v330 = vshrl.u32 %v329, 7
    %v331 = vsub.s32 %v328, %v330
    %v332 = vrot.slane %v279, %v331
    %v334 = vunpack.c.l.s4 1983009808
    %v335 = vunpack.c.0.s8 %v334
    %v336 = vlaneseq
    %v337 = vshrl.u32 %v336, 7
    %v338 = vsub.s32 %v335, %v337
    %v339 = vrot.slane %v325, %v338
    %v340 = vcombine.high %v332, %v332
    %v341 = vcombine.high %v339, %v339
    %v342 = vcombine.high %v280, %v280
    %v344 = vunpack.c.l.s4 1983009808
    %v345 = vunpack.c.0.s8 %v344
    %v346 = vlaneseq
    %v347 = vshrl.u32 %v346, 7
    %v348 = vsub.s32 %v345, %v347
    %v349 = vrot.slane %v280, %v348
    %v351 = vunpack.c.l.s4 1983009808
    %v352 = vunpack.c.0.s8 %v351
    %v353 = vlaneseq
    %v354 = vshrl.u32 %v353, 7
    %v355 = vsub.s32 %v352, %v354
    %v356 = vrot.slane %v342, %v355
    %v357 = vcombine.high %v349, %v349
    %v358 = vcombine.high %v356, %v356
    %v359 = vcombine.high %v281, %v281
    %v361 = vunpack.c.l.s4 1983009808
    %v362 = vunpack.c.0.s8 %v361
    %v363 = vlaneseq
    %v364 = vshrl.u32 %v363, 7
    %v365 = vsub.s32 %v362, %v364
    %v366 = vrot.slane %v281, %v365
    %v368 = vunpack.c.l.s4 1983009808
    %v369 = vunpack.c.0.s8 %v368
    %v370 = vlaneseq
    %v371 = vshrl.u32 %v370, 7
    %v372 = vsub.s32 %v369, %v371
    %v373 = vrot.slane %v359, %v372
    %v374 = vcombine.high %v366, %v366
    %v375 = vcombine.high %v373, %v373
    %v376 = vcombine.high %v282, %v282
    %v378 = vunpack.c.l.s4 1983009808
    %v379 = vunpack.c.0.s8 %v378
    %v380 = vlaneseq
    %v381 = vshrl.u32 %v380, 7
    %v382 = vsub.s32 %v379, %v381
    %v383 = vrot.slane %v282, %v382
    %v385 = vunpack.c.l.s4 1983009808
    %v386 = vunpack.c.0.s8 %v385
    %v387 = vlaneseq
    %v388 = vshrl.u32 %v387, 7
    %v389 = vsub.s32 %v386, %v388
    %v390 = vrot.slane %v376, %v389
    %v391 = vcombine.high %v383, %v383
    %v392 = vcombine.high %v390, %v390
    %v393 = vcombine.high %v283, %v283
    %v395 = vunpack.c.l.s4 1983009808
    %v396 = vunpack.c.0.s8 %v395
    %v397 = vlaneseq
    %v398 = vshrl.u32 %v397, 7
    %v399 = vsub.s32 %v396, %v398
    %v400 = vrot.slane %v283, %v399
    %v402 = vunpack.c.l.s4 1983009808
    %v403 = vunpack.c.0.s8 %v402
    %v404 = vlaneseq
    %v405 = vshrl.u32 %v404, 7
    %v406 = vsub.s32 %v403, %v405
    %v407 = vrot.slane %v393, %v406
    %v408 = vcombine.high %v400, %v400
    %v436 = vpack.c.bf16 %v298, %v298
    %v437 = vpack.c.bf16 %v306, %v306
    %v438 = vpack.c.bf16 %v305, %v305
    %v439 = vpack.c.bf16 %v307, %v307
    %v440 = vpack.c.bf16 %v315, %v315
    %v441 = vpack.c.bf16 %v323, %v323
    %v442 = vpack.c.bf16 %v322, %v322
    %v443 = vpack.c.bf16 %v324, %v324
    %v444 = vpack.c.bf16 %v332, %v332
    %v445 = vpack.c.bf16 %v340, %v340
    %v446 = vpack.c.bf16 %v339, %v339
    %v447 = vpack.c.bf16 %v341, %v341
    %v448 = vpack.c.bf16 %v349, %v349
    %v449 = vpack.c.bf16 %v357, %v357
    %v450 = vpack.c.bf16 %v356, %v356
    %v451 = vpack.c.bf16 %v358, %v358
    %v452 = vpack.c.bf16 %v366, %v366
    %v453 = vpack.c.bf16 %v374, %v374
    %v454 = vpack.c.bf16 %v373, %v373
    %v455 = vpack.c.bf16 %v375, %v375
    %v456 = vpack.c.bf16 %v383, %v383
    %v457 = vpack.c.bf16 %v391, %v391
    %v458 = vpack.c.bf16 %v390, %v390
    %v459 = vpack.c.bf16 %v392, %v392
    %v460 = vpack.c.bf16 %v400, %v400
    %v461 = vpack.c.bf16 %v408, %v408
    %v462 = vpack.c.bf16 %v407, %v407
    %v463 = vld [vmem:[%s1] sm:$0xf]
    %v466 = vunpack.c.l.s4 1983009808
    %v467 = vunpack.c.0.s8 %v466
    %v468 = vlaneseq
    %v469 = vshrl.u32 %v468, 7
    %v470 = vsub.s32 %v467, %v469
    %v471 = vrot.slane %v463, %v470
    %v472 = vcombine.high %v471, %v471
    %v475 = vpack.c.bf16 %v471, %v471
    %v476 = vpack.c.bf16 %v472, %v472
    %v477 = vld [vmem:[#allocation2] sm:$0xff]
    %v478 = vld [vmem:[#allocation2 + $0x8] sm:$0xff]
    %v479 = vld [vmem:[#allocation2 + $0x10] sm:$0xf]
    %v480 = vld [vmem:[#allocation2 + $0x14] sm:$0xff]
    %v481 = vld [vmem:[#allocation2 + $0x1c] sm:$0xff]
    %v482 = vld [vmem:[#allocation2 + $0x24] sm:$0xf]
    %v483 = vld [vmem:[#allocation2 + $0x28] sm:$0xff]
    %v484 = vld [vmem:[#allocation2 + $0x30] sm:$0xff]
    %v485 = vld [vmem:[#allocation2 + $0x38] sm:$0xf]
    %v486 = vld [vmem:[#allocation2 + $0x3c] sm:$0xff]
    %v487 = vld [vmem:[#allocation2 + $0x44] sm:$0xff]
    %v488 = vld [vmem:[#allocation2 + $0x4c] sm:$0xf]
    %v489 = vld [vmem:[#allocation2 + $0x50] sm:$0xff]
    %v490 = vld [vmem:[#allocation2 + $0x58] sm:$0xff]
    %v491 = vld [vmem:[#allocation2 + $0x60] sm:$0xf]
    %v492 = vld [vmem:[#allocation2 + $0x64] sm:$0xff]
    %v493 = vld [vmem:[#allocation2 + $0x6c] sm:$0xff]
    %v494 = vld [vmem:[#allocation2 + $0x74] sm:$0xf]
    %v495 = vld [vmem:[#allocation2 + $0x78] sm:$0xff]
    %v496 = vld [vmem:[#allocation2 + $0x80] sm:$0xff]
    %v497 = vld [vmem:[#allocation2 + $0x88] sm:$0xf]
    %v498 = vld [vmem:[#allocation2 + $0x8c] sm:$0xff]
    %v499 = vld [vmem:[#allocation2 + $0x94] sm:$0xff]
    %v500 = vld [vmem:[#allocation2 + $0x9c] sm:$0xf]
    %v501 = vld [vmem:[#allocation2 + $0xa0] sm:$0xff]
    %v502 = vld [vmem:[#allocation2 + $0xa8] sm:$0xff]
    %v503 = vld [vmem:[#allocation2 + $0xb0] sm:$0xf]
    %v504 = vld [vmem:[#allocation2 + $0xb4] sm:$0xff]
    %v505 = vld [vmem:[#allocation2 + $0xbc] sm:$0xff]
    %v506 = vld [vmem:[#allocation2 + $0xc4] sm:$0xf]
    %v507 = vld [vmem:[#allocation2 + $0xc8] sm:$0xff]
    %v508 = vld [vmem:[#allocation2 + $0xd0] sm:$0xff]
    %v509 = vld [vmem:[#allocation2 + $0xd8] sm:$0xf]
    %v510 = vld [vmem:[#allocation2 + $0xdc] sm:$0xff]
    %v511 = vld [vmem:[#allocation2 + $0xe4] sm:$0xff]
    %v512 = vld [vmem:[#allocation2 + $0xec] sm:$0xf]
    %v513 = vld [vmem:[#allocation2 + $0xf0] sm:$0xff]
    %v514 = vld [vmem:[#allocation2 + $0xf8] sm:$0xff]
    %v515 = vld [vmem:[#allocation2 + $0x100] sm:$0xf]
    %v516 = vld [vmem:[#allocation2 + $0x104] sm:$0xff]
    %v517 = vld [vmem:[#allocation2 + $0x10c] sm:$0xff]
    %v518 = vld [vmem:[#allocation2 + $0x114] sm:$0xf]
    %v519 = vld [vmem:[#allocation2 + $0x118] sm:$0xff]
    %v520 = vld [vmem:[#allocation2 + $0x120] sm:$0xff]
    %v521 = vld [vmem:[#allocation2 + $0x128] sm:$0xf]
    %v522 = vld [vmem:[#allocation2 + $0x12c] sm:$0xff]
    %v523 = vld [vmem:[#allocation2 + $0x134] sm:$0xff]
    %v524 = vld [vmem:[#allocation2 + $0x13c] sm:$0xf]
    %v525 = vld [vmem:[#allocation2 + $0x140] sm:$0xff]
    %v526 = vld [vmem:[#allocation2 + $0x148] sm:$0xff]
    %v527 = vld [vmem:[#allocation2 + $0x150] sm:$0xf]
    %v528 = vld [vmem:[#allocation2 + $0x154] sm:$0xff]
    %v529 = vld [vmem:[#allocation2 + $0x15c] sm:$0xff]
    %v530 = vld [vmem:[#allocation2 + $0x164] sm:$0xf]
    %v531 = vld [vmem:[#allocation2 + $0x168] sm:$0xff]
    %v532 = vld [vmem:[#allocation2 + $0x170] sm:$0xff]
    %v533 = vld [vmem:[#allocation2 + $0x178] sm:$0xf]
    %v534 = vld [vmem:[#allocation2 + $0x17c] sm:$0xff]
    %v535 = vld [vmem:[#allocation2 + $0x184] sm:$0xff]
    %v536 = vld [vmem:[#allocation2 + $0x18c] sm:$0xf]
    %v537 = vld [vmem:[#allocation2 + $0x190] sm:$0xff]
    %v538 = vld [vmem:[#allocation2 + $0x198] sm:$0xff]
    %v539 = vld [vmem:[#allocation2 + $0x1a0] sm:$0xf]
    %v540 = vld [vmem:[#allocation2 + $0x1a4] sm:$0xff]
    %v541 = vld [vmem:[#allocation2 + $0x1ac] sm:$0xff]
    %v542 = vld [vmem:[#allocation2 + $0x1b4] sm:$0xf]
    %v543 = vld [vmem:[#allocation2 + $0x1b8] sm:$0xff]
    %v544 = vld [vmem:[#allocation2 + $0x1c0] sm:$0xff]
    %v545 = vld [vmem:[#allocation2 + $0x1c8] sm:$0xf]
    %v546 = vld [vmem:[#allocation2 + $0x1cc] sm:$0xff]
    %v547 = vld [vmem:[#allocation2 + $0x1d4] sm:$0xff]
    %v548 = vld [vmem:[#allocation2 + $0x1dc] sm:$0xf]
    %v549 = vld [vmem:[#allocation2 + $0x1e0] sm:$0xff]
    %v550 = vld [vmem:[#allocation2 + $0x1e8] sm:$0xff]
    %v551 = vld [vmem:[#allocation2 + $0x1f0] sm:$0xf]
    %v552 = vld [vmem:[#allocation2 + $0x1f4] sm:$0xff]
    %v553 = vld [vmem:[#allocation2 + $0x1fc] sm:$0xff]
    %v554 = vld [vmem:[#allocation2 + $0x204] sm:$0xf]
    %v555 = vld [vmem:[#allocation2 + $0x208] sm:$0xff]
    %v556 = vld [vmem:[#allocation2 + $0x210] sm:$0xff]
    %v557 = vld [vmem:[#allocation2 + $0x218] sm:$0xf]
    %v558 = vld [vmem:[#allocation2 + $0x21c] sm:$0xff]
    %v559 = vld [vmem:[#allocation2 + $0x224] sm:$0xff]
    %v560 = vld [vmem:[#allocation2 + $0x22c] sm:$0xf]
    %v561 = vld [vmem:[#allocation2 + $0x230] sm:$0xff]
    %v562 = vld [vmem:[#allocation2 + $0x238] sm:$0xff]
    %v563 = vld [vmem:[#allocation2 + $0x240] sm:$0xf]
    %v564 = vld [vmem:[#allocation2 + $0x244] sm:$0xff]
    %v565 = vld [vmem:[#allocation2 + $0x24c] sm:$0xff]
    %v566 = vld [vmem:[#allocation2 + $0x254] sm:$0xf]
    %v567 = vld [vmem:[#allocation2 + $0x258] sm:$0xff]
    %v568 = vld [vmem:[#allocation2 + $0x260] sm:$0xff]
    %v569 = vld [vmem:[#allocation2 + $0x268] sm:$0xf]
    %v570 = vld [vmem:[#allocation2 + $0x26c] sm:$0xff]
    %v571 = vld [vmem:[#allocation2 + $0x274] sm:$0xff]
    %v572 = vld [vmem:[#allocation2 + $0x27c] sm:$0xf]
    %v573 = vld [vmem:[#allocation2 + $0x280] sm:$0xff]
    %v574 = vld [vmem:[#allocation2 + $0x288] sm:$0xff]
    %v575 = vld [vmem:[#allocation2 + $0x290] sm:$0xf]
    %v576 = vld [vmem:[#allocation2 + $0x294] sm:$0xff]
    %v577 = vld [vmem:[#allocation2 + $0x29c] sm:$0xff]
    %v578 = vld [vmem:[#allocation2 + $0x2a4] sm:$0xf]
    %v579 = vld [vmem:[#allocation2 + $0x2a8] sm:$0xff]
    %v580 = vld [vmem:[#allocation2 + $0x2b0] sm:$0xff]
    %v581 = vld [vmem:[#allocation2 + $0x2b8] sm:$0xf]
    %v582 = vld [vmem:[#allocation2 + $0x2bc] sm:$0xff]
    %v583 = vld [vmem:[#allocation2 + $0x2c4] sm:$0xff]
    %v584 = vld [vmem:[#allocation2 + $0x2cc] sm:$0xf]
    %v585 = vld [vmem:[#allocation2 + $0x2d0] sm:$0xff]
    %v586 = vld [vmem:[#allocation2 + $0x2d8] sm:$0xff]
    %v587 = vld [vmem:[#allocation2 + $0x2e0] sm:$0xf]
    %v588 = vld [vmem:[#allocation2 + $0x2e4] sm:$0xff]
    %v589 = vld [vmem:[#allocation2 + $0x2ec] sm:$0xff]
    %v590 = vld [vmem:[#allocation2 + $0x2f4] sm:$0xf]
    %v591 = vld [vmem:[#allocation2 + $0x2f8] sm:$0xff]
    %v592 = vld [vmem:[#allocation2 + $0x300] sm:$0xff]
    %v593 = vld [vmem:[#allocation2 + $0x308] sm:$0xf]
    %v594 = vld [vmem:[#allocation2 + $0x30c] sm:$0xff]
    %v595 = vld [vmem:[#allocation2 + $0x314] sm:$0xff]
    %v596 = vld [vmem:[#allocation2 + $0x31c] sm:$0xf]
    %v597 = vld [vmem:[#allocation2 + $0x320] sm:$0xff]
    %v598 = vld [vmem:[#allocation2 + $0x328] sm:$0xff]
    %v599 = vld [vmem:[#allocation2 + $0x330] sm:$0xf]
    %v600 = vld [vmem:[#allocation2 + $0x334] sm:$0xff]
    %v601 = vld [vmem:[#allocation2 + $0x33c] sm:$0xff]
    %v602 = vld [vmem:[#allocation2 + $0x344] sm:$0xf]
    %v603 = vld [vmem:[#allocation2 + $0x348] sm:$0xff]
    %v604 = vld [vmem:[#allocation2 + $0x350] sm:$0xff]
    %v605 = vld [vmem:[#allocation2 + $0x358] sm:$0xf]
    %v606 = vld [vmem:[#allocation2 + $0x35c] sm:$0xff]
    %v607 = vld [vmem:[#allocation2 + $0x364] sm:$0xff]
    %v608 = vld [vmem:[#allocation2 + $0x36c] sm:$0xf]
    %v609 = vld [vmem:[#allocation2 + $0x370] sm:$0xff]
    %v610 = vld [vmem:[#allocation2 + $0x378] sm:$0xff]
    %v611 = vld [vmem:[#allocation2 + $0x380] sm:$0xf]
    %v612 = vld [vmem:[#allocation2 + $0x384] sm:$0xff]
    %v613 = vld [vmem:[#allocation2 + $0x38c] sm:$0xff]
    %v614 = vld [vmem:[#allocation2 + $0x394] sm:$0xf]
    %v615 = vld [vmem:[#allocation2 + $0x398] sm:$0xff]
    %v616 = vld [vmem:[#allocation2 + $0x3a0] sm:$0xff]
    %v617 = vld [vmem:[#allocation2 + $0x3a8] sm:$0xf]
    %v618 = vld [vmem:[#allocation2 + $0x3ac] sm:$0xff]
    %v619 = vld [vmem:[#allocation2 + $0x3b4] sm:$0xff]
    %v620 = vld [vmem:[#allocation2 + $0x3bc] sm:$0xf]
    %v621 = vld [vmem:[#allocation2 + $0x3c0] sm:$0xff]
    %v622 = vld [vmem:[#allocation2 + $0x3c8] sm:$0xff]
    %v623 = vld [vmem:[#allocation2 + $0x3d0] sm:$0xf]
    %v624 = vld [vmem:[#allocation2 + $0x3d4] sm:$0xff]
    %v625 = vld [vmem:[#allocation2 + $0x3dc] sm:$0xff]
    %v626 = vld [vmem:[#allocation2 + $0x3e4] sm:$0xf]
    %v627 = vld [vmem:[#allocation2 + $0x3e8] sm:$0xff]
    %v628 = vld [vmem:[#allocation2 + $0x3f0] sm:$0xff]
    %v629 = vld [vmem:[#allocation2 + $0x3f8] sm:$0xf]
    %v630 = vld [vmem:[#allocation2 + $0x3fc] sm:$0xff]
    %v631 = vld [vmem:[#allocation2 + $0x404] sm:$0xff]
    %v632 = vld [vmem:[#allocation2 + $0x40c] sm:$0xf]
    %v633 = vld [vmem:[#allocation2 + $0x410] sm:$0xff]
    %v634 = vld [vmem:[#allocation2 + $0x418] sm:$0xff]
    %v635 = vld [vmem:[#allocation2 + $0x420] sm:$0xf]
    %v636 = vld [vmem:[#allocation2 + $0x424] sm:$0xff]
    %v637 = vld [vmem:[#allocation2 + $0x42c] sm:$0xff]
    %v638 = vld [vmem:[#allocation2 + $0x434] sm:$0xf]
    %v639 = vld [vmem:[#allocation2 + $0x438] sm:$0xff]
    %v640 = vld [vmem:[#allocation2 + $0x440] sm:$0xff]
    %v641 = vld [vmem:[#allocation2 + $0x448] sm:$0xf]
    %v642 = vld [vmem:[#allocation2 + $0x44c] sm:$0xff]
    %v643 = vld [vmem:[#allocation2 + $0x454] sm:$0xff]
    %v644 = vld [vmem:[#allocation2 + $0x45c] sm:$0xf]
    %v645 = vld [vmem:[#allocation2 + $0x460] sm:$0xff]
    %v646 = vld [vmem:[#allocation2 + $0x468] sm:$0xff]
    %v647 = vld [vmem:[#allocation2 + $0x470] sm:$0xf]
    %v648 = vld [vmem:[#allocation2 + $0x474] sm:$0xff]
    %v649 = vld [vmem:[#allocation2 + $0x47c] sm:$0xff]
    %v650 = vld [vmem:[#allocation2 + $0x484] sm:$0xf]
    %v651 = vld [vmem:[#allocation2 + $0x488] sm:$0xff]
    %v652 = vld [vmem:[#allocation2 + $0x490] sm:$0xff]
    %v653 = vld [vmem:[#allocation2 + $0x498] sm:$0xf]
    %v654 = vld [vmem:[#allocation2 + $0x49c] sm:$0xff]
    %v655 = vld [vmem:[#allocation2 + $0x4a4] sm:$0xff]
    %v656 = vld [vmem:[#allocation2 + $0x4ac] sm:$0xf]
    %v657 = vld [vmem:[#allocation2 + $0x4b0] sm:$0xff]
    %v658 = vld [vmem:[#allocation2 + $0x4b8] sm:$0xff]
    %v659 = vld [vmem:[#allocation2 + $0x4c0] sm:$0xf]
    %v660 = vld [vmem:[#allocation2 + $0x4c4] sm:$0xff]
    %v661 = vld [vmem:[#allocation2 + $0x4cc] sm:$0xff]
    %v662 = vld [vmem:[#allocation2 + $0x4d4] sm:$0xf]
    %v663 = vld [vmem:[#allocation2 + $0x4d8] sm:$0xff]
    %v664 = vld [vmem:[#allocation2 + $0x4e0] sm:$0xff]
    %v665 = vld [vmem:[#allocation2 + $0x4e8] sm:$0xf]
    %v666 = vld [vmem:[#allocation2 + $0x4ec] sm:$0xff]
    %v667 = vld [vmem:[#allocation2 + $0x4f4] sm:$0xff]
    %v668 = vld [vmem:[#allocation2 + $0x4fc] sm:$0xf]
    %v669 = vld [vmem:[#allocation2 + $0x500] sm:$0xff]
    %v670 = vld [vmem:[#allocation2 + $0x508] sm:$0xff]
    %v671 = vld [vmem:[#allocation2 + $0x510] sm:$0xf]
    %v672 = vld [vmem:[#allocation2 + $0x514] sm:$0xff]
    %v673 = vld [vmem:[#allocation2 + $0x51c] sm:$0xff]
    %v674 = vld [vmem:[#allocation2 + $0x524] sm:$0xf]
    %v675 = vld [vmem:[#allocation2 + $0x528] sm:$0xff]
    %v676 = vld [vmem:[#allocation2 + $0x530] sm:$0xff]
    %v677 = vld [vmem:[#allocation2 + $0x538] sm:$0xf]
    %v678 = vld [vmem:[#allocation2 + $0x53c] sm:$0xff]
    %v679 = vld [vmem:[#allocation2 + $0x544] sm:$0xff]
    %v680 = vld [vmem:[#allocation2 + $0x54c] sm:$0xf]
    %v681 = vld [vmem:[#allocation2 + $0x550] sm:$0xff]
    %v682 = vld [vmem:[#allocation2 + $0x558] sm:$0xff]
    %v683 = vld [vmem:[#allocation2 + $0x560] sm:$0xf]
    %v684 = vld [vmem:[#allocation2 + $0x564] sm:$0xff]
    %v685 = vld [vmem:[#allocation2 + $0x56c] sm:$0xff]
    %v686 = vld [vmem:[#allocation2 + $0x574] sm:$0xf]
    %v687 = vld [vmem:[#allocation2 + $0x578] sm:$0xff]
    %v688 = vld [vmem:[#allocation2 + $0x580] sm:$0xff]
    %v689 = vld [vmem:[#allocation2 + $0x588] sm:$0xf]
    %v690 = vld [vmem:[#allocation2 + $0x58c] sm:$0xff]
    %v691 = vld [vmem:[#allocation2 + $0x594] sm:$0xff]
    %v692 = vld [vmem:[#allocation2 + $0x59c] sm:$0xf]
    %v693 = vld [vmem:[#allocation2 + $0x5a0] sm:$0xff]
    %v694 = vld [vmem:[#allocation2 + $0x5a8] sm:$0xff]
    %v695 = vld [vmem:[#allocation2 + $0x5b0] sm:$0xf]
    %v696 = vld [vmem:[#allocation2 + $0x5b4] sm:$0xff]
    %v697 = vld [vmem:[#allocation2 + $0x5bc] sm:$0xff]
    %v698 = vld [vmem:[#allocation2 + $0x5c4] sm:$0xf]
    %v699 = vld [vmem:[#allocation2 + $0x5c8] sm:$0xff]
    %v700 = vld [vmem:[#allocation2 + $0x5d0] sm:$0xff]
    %v701 = vld [vmem:[#allocation2 + $0x5d8] sm:$0xf]
    %v702 = vld [vmem:[#allocation2 + $0x5dc] sm:$0xff]
    %v703 = vld [vmem:[#allocation2 + $0x5e4] sm:$0xff]
    %v704 = vld [vmem:[#allocation2 + $0x5ec] sm:$0xf]
    %v705 = vld [vmem:[#allocation2 + $0x5f0] sm:$0xff]
    %v706 = vld [vmem:[#allocation2 + $0x5f8] sm:$0xff]
    %v707 = vld [vmem:[#allocation2 + $0x600] sm:$0xf]
    %v708 = vld [vmem:[#allocation2 + $0x604] sm:$0xff]
    %v709 = vld [vmem:[#allocation2 + $0x60c] sm:$0xff]
    %v710 = vld [vmem:[#allocation2 + $0x614] sm:$0xf]
    %v711 = vld [vmem:[#allocation2 + $0x618] sm:$0xff]
    %v712 = vld [vmem:[#allocation2 + $0x620] sm:$0xff]
    %v713 = vld [vmem:[#allocation2 + $0x628] sm:$0xf]
    %v714 = vld [vmem:[#allocation2 + $0x62c] sm:$0xff]
    %v715 = vld [vmem:[#allocation2 + $0x634] sm:$0xff]
    %v716 = vld [vmem:[#allocation2 + $0x63c] sm:$0xf]
    %v717 = vld [vmem:[#allocation2 + $0x640] sm:$0xff]
    %v718 = vld [vmem:[#allocation2 + $0x648] sm:$0xff]
    %v719 = vld [vmem:[#allocation2 + $0x650] sm:$0xf]
    %v720 = vld [vmem:[#allocation2 + $0x654] sm:$0xff]
    %v721 = vld [vmem:[#allocation2 + $0x65c] sm:$0xff]
    %v722 = vld [vmem:[#allocation2 + $0x664] sm:$0xf]
    %v723 = vld [vmem:[#allocation2 + $0x668] sm:$0xff]
    %v724 = vld [vmem:[#allocation2 + $0x670] sm:$0xff]
    %v725 = vld [vmem:[#allocation2 + $0x678] sm:$0xf]
    %v726 = vld [vmem:[#allocation2 + $0x67c] sm:$0xff]
    %v727 = vld [vmem:[#allocation2 + $0x684] sm:$0xff]
    %v728 = vld [vmem:[#allocation2 + $0x68c] sm:$0xf]
    %v729 = vld [vmem:[#allocation2 + $0x690] sm:$0xff]
    %v730 = vld [vmem:[#allocation2 + $0x698] sm:$0xff]
    %v731 = vld [vmem:[#allocation2 + $0x6a0] sm:$0xf]
    %v732 = vld [vmem:[#allocation2 + $0x6a4] sm:$0xff]
    %v733 = vld [vmem:[#allocation2 + $0x6ac] sm:$0xff]
    %v734 = vld [vmem:[#allocation2 + $0x6b4] sm:$0xf]
    %v735 = vld [vmem:[#allocation2 + $0x6b8] sm:$0xff]
    %v736 = vld [vmem:[#allocation2 + $0x6c0] sm:$0xff]
    %v737 = vld [vmem:[#allocation2 + $0x6c8] sm:$0xf]
    %v738 = vld [vmem:[#allocation2 + $0x6cc] sm:$0xff]
    %v739 = vld [vmem:[#allocation2 + $0x6d4] sm:$0xff]
    %v740 = vld [vmem:[#allocation2 + $0x6dc] sm:$0xf]
    %v741 = vld [vmem:[#allocation2 + $0x6e0] sm:$0xff]
    %v742 = vld [vmem:[#allocation2 + $0x6e8] sm:$0xff]
    %v743 = vld [vmem:[#allocation2 + $0x6f0] sm:$0xf]
    %v744 = vld [vmem:[#allocation2 + $0x6f4] sm:$0xff]
    %v745 = vld [vmem:[#allocation2 + $0x6fc] sm:$0xff]
    %v746 = vld [vmem:[#allocation2 + $0x704] sm:$0xf]
    %v747 = vld [vmem:[#allocation2 + $0x708] sm:$0xff]
    %v748 = vld [vmem:[#allocation2 + $0x710] sm:$0xff]
    %v749 = vld [vmem:[#allocation2 + $0x718] sm:$0xf]
    %v750 = vld [vmem:[#allocation2 + $0x71c] sm:$0xff]
    %v751 = vld [vmem:[#allocation2 + $0x724] sm:$0xff]
    %v752 = vld [vmem:[#allocation2 + $0x72c] sm:$0xf]
    %v753 = vld [vmem:[#allocation2 + $0x730] sm:$0xff]
    %v754 = vld [vmem:[#allocation2 + $0x738] sm:$0xff]
    %v755 = vld [vmem:[#allocation2 + $0x740] sm:$0xf]
    %v756 = vld [vmem:[#allocation2 + $0x744] sm:$0xff]
    %v757 = vld [vmem:[#allocation2 + $0x74c] sm:$0xff]
    %v758 = vld [vmem:[#allocation2 + $0x754] sm:$0xf]
    %v759 = vld [vmem:[#allocation2 + $0x758] sm:$0xff]
    %v760 = vld [vmem:[#allocation2 + $0x760] sm:$0xff]
    %v761 = vld [vmem:[#allocation2 + $0x768] sm:$0xf]
    %v762 = vld [vmem:[#allocation2 + $0x76c] sm:$0xff]
    %v763 = vld [vmem:[#allocation2 + $0x774] sm:$0xff]
    %v764 = vld [vmem:[#allocation2 + $0x77c] sm:$0xf]
    %v765 = vld [vmem:[#allocation2 + $0x780] sm:$0xff]
    %v766 = vld [vmem:[#allocation2 + $0x788] sm:$0xff]
    %v767 = vld [vmem:[#allocation2 + $0x790] sm:$0xf]
    %v768 = vld [vmem:[#allocation2 + $0x794] sm:$0xff]
    %v769 = vld [vmem:[#allocation2 + $0x79c] sm:$0xff]
    %v770 = vld [vmem:[#allocation2 + $0x7a4] sm:$0xf]
    %v771 = vld [vmem:[#allocation2 + $0x7a8] sm:$0xff]
    %v772 = vld [vmem:[#allocation2 + $0x7b0] sm:$0xff]
    %v773 = vld [vmem:[#allocation2 + $0x7b8] sm:$0xf]
    %v774 = vld [vmem:[#allocation2 + $0x7bc] sm:$0xff]
    %v775 = vld [vmem:[#allocation2 + $0x7c4] sm:$0xff]
    %v776 = vld [vmem:[#allocation2 + $0x7cc] sm:$0xf]
    %v777 = vld [vmem:[#allocation2 + $0x7d0] sm:$0xff]
    %v778 = vld [vmem:[#allocation2 + $0x7d8] sm:$0xff]
    %v779 = vld [vmem:[#allocation2 + $0x7e0] sm:$0xf]
    %v780 = vld [vmem:[#allocation2 + $0x7e4] sm:$0xff]
    %v781 = vld [vmem:[#allocation2 + $0x7ec] sm:$0xff]
    %v782 = vld [vmem:[#allocation2 + $0x7f4] sm:$0xf]
    %v783 = vld [vmem:[#allocation2 + $0x7f8] sm:$0xff]
    %v784 = vld [vmem:[#allocation2 + $0x800] sm:$0xff]
    %v785 = vld [vmem:[#allocation2 + $0x808] sm:$0xf]
    %v786 = vld [vmem:[#allocation2 + $0x80c] sm:$0xff]
    %v787 = vld [vmem:[#allocation2 + $0x814] sm:$0xff]
    %v788 = vld [vmem:[#allocation2 + $0x81c] sm:$0xf]
    %v789 = vld [vmem:[#allocation2 + $0x820] sm:$0xff]
    %v790 = vld [vmem:[#allocation2 + $0x828] sm:$0xff]
    %v791 = vld [vmem:[#allocation2 + $0x830] sm:$0xf]
    %v792 = vld [vmem:[#allocation2 + $0x834] sm:$0xff]
    %v793 = vld [vmem:[#allocation2 + $0x83c] sm:$0xff]
    %v794 = vld [vmem:[#allocation2 + $0x844] sm:$0xf]
    %v795 = vld [vmem:[#allocation2 + $0x848] sm:$0xff]
    %v796 = vld [vmem:[#allocation2 + $0x850] sm:$0xff]
    %v797 = vld [vmem:[#allocation2 + $0x858] sm:$0xf]
    %v798 = vld [vmem:[#allocation2 + $0x85c] sm:$0xff]
    %v799 = vld [vmem:[#allocation2 + $0x864] sm:$0xff]
    %v800 = vld [vmem:[#allocation2 + $0x86c] sm:$0xf]
    %v801 = vld [vmem:[#allocation2 + $0x870] sm:$0xff]
    %v802 = vld [vmem:[#allocation2 + $0x878] sm:$0xff]
    %v803 = vld [vmem:[#allocation2 + $0x880] sm:$0xf]
    %v804 = vld [vmem:[#allocation2 + $0x884] sm:$0xff]
    %v805 = vld [vmem:[#allocation2 + $0x88c] sm:$0xff]
    %v806 = vld [vmem:[#allocation2 + $0x894] sm:$0xf]
    %v807 = vld [vmem:[#allocation2 + $0x898] sm:$0xff]
    %v808 = vld [vmem:[#allocation2 + $0x8a0] sm:$0xff]
    %v809 = vld [vmem:[#allocation2 + $0x8a8] sm:$0xf]
    %v810 = vld [vmem:[#allocation2 + $0x8ac] sm:$0xff]
    %v811 = vld [vmem:[#allocation2 + $0x8b4] sm:$0xff]
    %v812 = vld [vmem:[#allocation2 + $0x8bc] sm:$0xf]
    %v813 = vld [vmem:[#allocation2 + $0x8c0] sm:$0xff]
    %v814 = vld [vmem:[#allocation2 + $0x8c8] sm:$0xff]
    %v815 = vld [vmem:[#allocation2 + $0x8d0] sm:$0xf]
    %v816 = vld [vmem:[#allocation2 + $0x8d4] sm:$0xff]
    %v817 = vld [vmem:[#allocation2 + $0x8dc] sm:$0xff]
    %v818 = vld [vmem:[#allocation2 + $0x8e4] sm:$0xf]
    %v819 = vld [vmem:[#allocation2 + $0x8e8] sm:$0xff]
    %v820 = vld [vmem:[#allocation2 + $0x8f0] sm:$0xff]
    %v821 = vld [vmem:[#allocation2 + $0x8f8] sm:$0xf]
    %v822 = vld [vmem:[#allocation2 + $0x8fc] sm:$0xff]
    %v823 = vld [vmem:[#allocation2 + $0x904] sm:$0xff]
    %v824 = vld [vmem:[#allocation2 + $0x90c] sm:$0xf]
    %v825 = vld [vmem:[#allocation2 + $0x910] sm:$0xff]
    %v826 = vld [vmem:[#allocation2 + $0x918] sm:$0xff]
    %v827 = vld [vmem:[#allocation2 + $0x920] sm:$0xf]
    %v828 = vld [vmem:[#allocation2 + $0x924] sm:$0xff]
    %v829 = vld [vmem:[#allocation2 + $0x92c] sm:$0xff]
    %v830 = vld [vmem:[#allocation2 + $0x934] sm:$0xf]
    %v831 = vld [vmem:[#allocation2 + $0x938] sm:$0xff]
    %v832 = vld [vmem:[#allocation2 + $0x940] sm:$0xff]
    %v833 = vld [vmem:[#allocation2 + $0x948] sm:$0xf]
    %v834 = vld [vmem:[#allocation2 + $0x94c] sm:$0xff]
    %v835 = vld [vmem:[#allocation2 + $0x954] sm:$0xff]
    %v836 = vld [vmem:[#allocation2 + $0x95c] sm:$0xf]
    %v837 = vld [vmem:[#allocation2 + $0x960] sm:$0xff]
    %v838 = vld [vmem:[#allocation2 + $0x968] sm:$0xff]
    %v839 = vld [vmem:[#allocation2 + $0x970] sm:$0xf]
    %v840 = vld [vmem:[#allocation2 + $0x974] sm:$0xff]
    %v841 = vld [vmem:[#allocation2 + $0x97c] sm:$0xff]
    %v842 = vld [vmem:[#allocation2 + $0x984] sm:$0xf]
    %v843 = vld [vmem:[#allocation2 + $0x988] sm:$0xff]
    %v844 = vld [vmem:[#allocation2 + $0x990] sm:$0xff]
    %v845 = vld [vmem:[#allocation2 + $0x998] sm:$0xf]
    %v846 = vld [vmem:[#allocation2 + $0x99c] sm:$0xff]
    %v847 = vld [vmem:[#allocation2 + $0x9a4] sm:$0xff]
    %v848 = vld [vmem:[#allocation2 + $0x9ac] sm:$0xf]
    %v849 = vld [vmem:[#allocation2 + $0x9b0] sm:$0xff]
    %v850 = vld [vmem:[#allocation2 + $0x9b8] sm:$0xff]
    %v851 = vld [vmem:[#allocation2 + $0x9c0] sm:$0xf]
    %v852 = vld [vmem:[#allocation2 + $0x9c4] sm:$0xff]
    %v853 = vld [vmem:[#allocation2 + $0x9cc] sm:$0xff]
    %v854 = vld [vmem:[#allocation2 + $0x9d4] sm:$0xf]
    %v855 = vld [vmem:[#allocation2 + $0x9d8] sm:$0xff]
    %v856 = vld [vmem:[#allocation2 + $0x9e0] sm:$0xff]
    %v857 = vld [vmem:[#allocation2 + $0x9e8] sm:$0xf]
    %v858 = vld [vmem:[#allocation2 + $0x9ec] sm:$0xff]
    %v859 = vld [vmem:[#allocation2 + $0x9f4] sm:$0xff]
    %v860 = vld [vmem:[#allocation2 + $0x9fc] sm:$0xf]
    %v861 = vld [vmem:[#allocation2 + $0xa00] sm:$0xff]
    %v862 = vld [vmem:[#allocation2 + $0xa08] sm:$0xff]
    %v863 = vld [vmem:[#allocation2 + $0xa10] sm:$0xf]
    %v864 = vld [vmem:[#allocation2 + $0xa14] sm:$0xff]
    %v865 = vld [vmem:[#allocation2 + $0xa1c] sm:$0xff]
    %v866 = vld [vmem:[#allocation2 + $0xa24] sm:$0xf]
    %v867 = vld [vmem:[#allocation2 + $0xa28] sm:$0xff]
    %v868 = vld [vmem:[#allocation2 + $0xa30] sm:$0xff]
    %v869 = vld [vmem:[#allocation2 + $0xa38] sm:$0xf]
    %v870 = vld [vmem:[#allocation2 + $0xa3c] sm:$0xff]
    %v871 = vld [vmem:[#allocation2 + $0xa44] sm:$0xff]
    %v872 = vld [vmem:[#allocation2 + $0xa4c] sm:$0xf]
    %v873 = vld [vmem:[#allocation2 + $0xa50] sm:$0xff]
    %v874 = vld [vmem:[#allocation2 + $0xa58] sm:$0xff]
    %v875 = vld [vmem:[#allocation2 + $0xa60] sm:$0xf]
    %v876 = vld [vmem:[#allocation2 + $0xa64] sm:$0xff]
    %v877 = vld [vmem:[#allocation2 + $0xa6c] sm:$0xff]
    %v878 = vld [vmem:[#allocation2 + $0xa74] sm:$0xf]
    %v879 = vld [vmem:[#allocation2 + $0xa78] sm:$0xff]
    %v880 = vld [vmem:[#allocation2 + $0xa80] sm:$0xff]
    %v881 = vld [vmem:[#allocation2 + $0xa88] sm:$0xf]
    %v882 = vld [vmem:[#allocation2 + $0xa8c] sm:$0xff]
    %v883 = vld [vmem:[#allocation2 + $0xa94] sm:$0xff]
    %v884 = vld [vmem:[#allocation2 + $0xa9c] sm:$0xf]
    %v885 = vld [vmem:[#allocation2 + $0xaa0] sm:$0xff]
    %v886 = vld [vmem:[#allocation2 + $0xaa8] sm:$0xff]
    %v887 = vld [vmem:[#allocation2 + $0xab0] sm:$0xf]
    %v888 = vld [vmem:[#allocation2 + $0xab4] sm:$0xff]
    %v889 = vld [vmem:[#allocation2 + $0xabc] sm:$0xff]
    %v890 = vld [vmem:[#allocation2 + $0xac4] sm:$0xf]
    %v891 = vld [vmem:[#allocation2 + $0xac8] sm:$0xff]
    %v892 = vld [vmem:[#allocation2 + $0xad0] sm:$0xff]
    %v893 = vld [vmem:[#allocation2 + $0xad8] sm:$0xf]
    %v894 = vld [vmem:[#allocation2 + $0xadc] sm:$0xff]
    %v895 = vld [vmem:[#allocation2 + $0xae4] sm:$0xff]
    %v896 = vld [vmem:[#allocation2 + $0xaec] sm:$0xf]
    %v897 = vld [vmem:[#allocation2 + $0xaf0] sm:$0xff]
    %v898 = vld [vmem:[#allocation2 + $0xaf8] sm:$0xff]
    %v899 = vld [vmem:[#allocation2 + $0xb00] sm:$0xf]
    %v900 = vld [vmem:[#allocation2 + $0xb04] sm:$0xff]
    %v901 = vld [vmem:[#allocation2 + $0xb0c] sm:$0xff]
    %v902 = vld [vmem:[#allocation2 + $0xb14] sm:$0xf]
    %v903 = vld [vmem:[#allocation2 + $0xb18] sm:$0xff]
    %v904 = vld [vmem:[#allocation2 + $0xb20] sm:$0xff]
    %v905 = vld [vmem:[#allocation2 + $0xb28] sm:$0xf]
    %v906 = vld [vmem:[#allocation2 + $0xb2c] sm:$0xff]
    %v907 = vld [vmem:[#allocation2 + $0xb34] sm:$0xff]
    %v908 = vld [vmem:[#allocation2 + $0xb3c] sm:$0xf]
    %v909 = vld [vmem:[#allocation2 + $0xb40] sm:$0xff]
    %v910 = vld [vmem:[#allocation2 + $0xb48] sm:$0xff]
    %v911 = vld [vmem:[#allocation2 + $0xb50] sm:$0xf]
    %v912 = vld [vmem:[#allocation2 + $0xb54] sm:$0xff]
    %v913 = vld [vmem:[#allocation2 + $0xb5c] sm:$0xff]
    %v914 = vld [vmem:[#allocation2 + $0xb64] sm:$0xf]
    %v915 = vld [vmem:[#allocation2 + $0xb68] sm:$0xff]
    %v916 = vld [vmem:[#allocation2 + $0xb70] sm:$0xff]
    %v917 = vld [vmem:[#allocation2 + $0xb78] sm:$0xf]
    %v918 = vld [vmem:[#allocation2 + $0xb7c] sm:$0xff]
    %v919 = vld [vmem:[#allocation2 + $0xb84] sm:$0xff]
    %v920 = vld [vmem:[#allocation2 + $0xb8c] sm:$0xf]
    %v921 = vld [vmem:[#allocation2 + $0xb90] sm:$0xff]
    %v922 = vld [vmem:[#allocation2 + $0xb98] sm:$0xff]
    %v923 = vld [vmem:[#allocation2 + $0xba0] sm:$0xf]
    %v924 = vld [vmem:[#allocation2 + $0xba4] sm:$0xff]
    %v925 = vld [vmem:[#allocation2 + $0xbac] sm:$0xff]
    %v926 = vld [vmem:[#allocation2 + $0xbb4] sm:$0xf]
    %v927 = vld [vmem:[#allocation2 + $0xbb8] sm:$0xff]
    %v928 = vld [vmem:[#allocation2 + $0xbc0] sm:$0xff]
    %v929 = vld [vmem:[#allocation2 + $0xbc8] sm:$0xf]
    %v930 = vld [vmem:[#allocation2 + $0xbcc] sm:$0xff]
    %v931 = vld [vmem:[#allocation2 + $0xbd4] sm:$0xff]
    %v932 = vld [vmem:[#allocation2 + $0xbdc] sm:$0xf]
    %v933 = vld [vmem:[#allocation2 + $0xbe0] sm:$0xff]
    %v934 = vld [vmem:[#allocation2 + $0xbe8] sm:$0xff]
    %v935 = vld [vmem:[#allocation2 + $0xbf0] sm:$0xf]
    %v936 = vld [vmem:[#allocation2 + $0xbf4] sm:$0xff]
    %v937 = vld [vmem:[#allocation2 + $0xbfc] sm:$0xff]
    %v938 = vld [vmem:[#allocation2 + $0xc04] sm:$0xf]
    %v939 = vld [vmem:[#allocation2 + $0xc08] sm:$0xff]
    %v940 = vld [vmem:[#allocation2 + $0xc10] sm:$0xff]
    %v941 = vld [vmem:[#allocation2 + $0xc18] sm:$0xf]
    %v942 = vld [vmem:[#allocation2 + $0xc1c] sm:$0xff]
    %v943 = vld [vmem:[#allocation2 + $0xc24] sm:$0xff]
    %v944 = vld [vmem:[#allocation2 + $0xc2c] sm:$0xf]
    %v945 = vld [vmem:[#allocation2 + $0xc30] sm:$0xff]
    %v946 = vld [vmem:[#allocation2 + $0xc38] sm:$0xff]
    %v947 = vld [vmem:[#allocation2 + $0xc40] sm:$0xf]
    %v948 = vld [vmem:[#allocation2 + $0xc44] sm:$0xff]
    %v949 = vld [vmem:[#allocation2 + $0xc4c] sm:$0xff]
    %v950 = vld [vmem:[#allocation2 + $0xc54] sm:$0xf]
    %v951 = vld [vmem:[#allocation2 + $0xc58] sm:$0xff]
    %v952 = vld [vmem:[#allocation2 + $0xc60] sm:$0xff]
    %v953 = vld [vmem:[#allocation2 + $0xc68] sm:$0xf]
    %v954 = vld [vmem:[#allocation2 + $0xc6c] sm:$0xff]
    %v955 = vld [vmem:[#allocation2 + $0xc74] sm:$0xff]
    %v956 = vld [vmem:[#allocation2 + $0xc7c] sm:$0xf]
    %v957 = vld [vmem:[#allocation2 + $0xc80] sm:$0xff]
    %v958 = vld [vmem:[#allocation2 + $0xc88] sm:$0xff]
    %v959 = vld [vmem:[#allocation2 + $0xc90] sm:$0xf]
    %v960 = vld [vmem:[#allocation2 + $0xc94] sm:$0xff]
    %v961 = vld [vmem:[#allocation2 + $0xc9c] sm:$0xff]
    %v962 = vld [vmem:[#allocation2 + $0xca4] sm:$0xf]
    %v963 = vld [vmem:[#allocation2 + $0xca8] sm:$0xff]
    %v964 = vld [vmem:[#allocation2 + $0xcb0] sm:$0xff]
    %v965 = vld [vmem:[#allocation2 + $0xcb8] sm:$0xf]
    %v966 = vld [vmem:[#allocation2 + $0xcbc] sm:$0xff]
    %v967 = vld [vmem:[#allocation2 + $0xcc4] sm:$0xff]
    %v968 = vld [vmem:[#allocation2 + $0xccc] sm:$0xf]
    %v969 = vld [vmem:[#allocation2 + $0xcd0] sm:$0xff]
    %v970 = vld [vmem:[#allocation2 + $0xcd8] sm:$0xff]
    %v971 = vld [vmem:[#allocation2 + $0xce0] sm:$0xf]
    %v972 = vld [vmem:[#allocation2 + $0xce4] sm:$0xff]
    %v973 = vld [vmem:[#allocation2 + $0xcec] sm:$0xff]
    %v974 = vld [vmem:[#allocation2 + $0xcf4] sm:$0xf]
    %v975 = vld [vmem:[#allocation2 + $0xcf8] sm:$0xff]
    %v976 = vld [vmem:[#allocation2 + $0xd00] sm:$0xff]
    %v977 = vld [vmem:[#allocation2 + $0xd08] sm:$0xf]
    %v978 = vld [vmem:[#allocation2 + $0xd0c] sm:$0xff]
    %v979 = vld [vmem:[#allocation2 + $0xd14] sm:$0xff]
    %v980 = vld [vmem:[#allocation2 + $0xd1c] sm:$0xf]
    %v981 = vld [vmem:[#allocation2 + $0xd20] sm:$0xff]
    %v982 = vld [vmem:[#allocation2 + $0xd28] sm:$0xff]
    %v983 = vld [vmem:[#allocation2 + $0xd30] sm:$0xf]
    %v984 = vld [vmem:[#allocation2 + $0xd34] sm:$0xff]
    %v985 = vld [vmem:[#allocation2 + $0xd3c] sm:$0xff]
    %v986 = vld [vmem:[#allocation2 + $0xd44] sm:$0xf]
    %v987 = vld [vmem:[#allocation2 + $0xd48] sm:$0xff]
    %v988 = vld [vmem:[#allocation2 + $0xd50] sm:$0xff]
    %v989 = vld [vmem:[#allocation2 + $0xd58] sm:$0xf]
    %v990 = vld [vmem:[#allocation2 + $0xd5c] sm:$0xff]
    %v991 = vld [vmem:[#allocation2 + $0xd64] sm:$0xff]
    %v992 = vld [vmem:[#allocation2 + $0xd6c] sm:$0xf]
    %v993 = vld [vmem:[#allocation2 + $0xd70] sm:$0xff]
    %v994 = vld [vmem:[#allocation2 + $0xd78] sm:$0xff]
    %v995 = vld [vmem:[#allocation2 + $0xd80] sm:$0xf]
    %v996 = vld [vmem:[#allocation2 + $0xd84] sm:$0xff]
    %v997 = vld [vmem:[#allocation2 + $0xd8c] sm:$0xff]
    %v998 = vld [vmem:[#allocation2 + $0xd94] sm:$0xf]
    %v999 = vld [vmem:[#allocation2 + $0xd98] sm:$0xff]
    %v1000 = vld [vmem:[#allocation2 + $0xda0] sm:$0xff]
    %v1001 = vld [vmem:[#allocation2 + $0xda8] sm:$0xf]
    %v1002 = vld [vmem:[#allocation2 + $0xdac] sm:$0xff]
    %v1003 = vld [vmem:[#allocation2 + $0xdb4] sm:$0xff]
    %v1004 = vld [vmem:[#allocation2 + $0xdbc] sm:$0xf]
    %v1005 = vld [vmem:[#allocation2 + $0xdc0] sm:$0xff]
    %v1006 = vld [vmem:[#allocation2 + $0xdc8] sm:$0xff]
    %v1007 = vld [vmem:[#allocation2 + $0xdd0] sm:$0xf]
    %v1008 = vld [vmem:[#allocation2 + $0xdd4] sm:$0xff]
    %v1009 = vld [vmem:[#allocation2 + $0xddc] sm:$0xff]
    %v1010 = vld [vmem:[#allocation2 + $0xde4] sm:$0xf]
    %v1011 = vld [vmem:[#allocation2 + $0xde8] sm:$0xff]
    %v1012 = vld [vmem:[#allocation2 + $0xdf0] sm:$0xff]
    %v1013 = vld [vmem:[#allocation2 + $0xdf8] sm:$0xf]
    %v1014 = vld [vmem:[#allocation2 + $0xdfc] sm:$0xff]
    %v1015 = vld [vmem:[#allocation2 + $0xe04] sm:$0xff]
    %v1016 = vld [vmem:[#allocation2 + $0xe0c] sm:$0xf]
    %v1017 = vld [vmem:[#allocation2 + $0xe10] sm:$0xff]
    %v1018 = vld [vmem:[#allocation2 + $0xe18] sm:$0xff]
    %v1019 = vld [vmem:[#allocation2 + $0xe20] sm:$0xf]
    %v1020 = vld [vmem:[#allocation2 + $0xe24] sm:$0xff]
    %v1021 = vld [vmem:[#allocation2 + $0xe2c] sm:$0xff]
    %v1022 = vld [vmem:[#allocation2 + $0xe34] sm:$0xf]
    %v1023 = vld [vmem:[#allocation2 + $0xe38] sm:$0xff]
    %v1024 = vld [vmem:[#allocation2 + $0xe40] sm:$0xff]
    %v1025 = vld [vmem:[#allocation2 + $0xe48] sm:$0xf]
    %v1026 = vld [vmem:[#allocation2 + $0xe4c] sm:$0xff]
    %v1027 = vld [vmem:[#allocation2 + $0xe54] sm:$0xff]
    %v1028 = vld [vmem:[#allocation2 + $0xe5c] sm:$0xf]
    %v1029 = vld [vmem:[#allocation2 + $0xe60] sm:$0xff]
    %v1030 = vld [vmem:[#allocation2 + $0xe68] sm:$0xff]
    %v1031 = vld [vmem:[#allocation2 + $0xe70] sm:$0xf]
    %v1032 = vld [vmem:[#allocation2 + $0xe74] sm:$0xff]
    %v1033 = vld [vmem:[#allocation2 + $0xe7c] sm:$0xff]
    %v1034 = vld [vmem:[#allocation2 + $0xe84] sm:$0xf]
    %v1035 = vld [vmem:[#allocation2 + $0xe88] sm:$0xff]
    %v1036 = vld [vmem:[#allocation2 + $0xe90] sm:$0xff]
    %v1037 = vld [vmem:[#allocation2 + $0xe98] sm:$0xf]
    %v1038 = vld [vmem:[#allocation2 + $0xe9c] sm:$0xff]
    %v1039 = vld [vmem:[#allocation2 + $0xea4] sm:$0xff]
    %v1040 = vld [vmem:[#allocation2 + $0xeac] sm:$0xf]
    %v1041 = vld [vmem:[#allocation2 + $0xeb0] sm:$0xff]
    %v1042 = vld [vmem:[#allocation2 + $0xeb8] sm:$0xff]
    %v1043 = vld [vmem:[#allocation2 + $0xec0] sm:$0xf]
    %v1044 = vld [vmem:[#allocation2 + $0xec4] sm:$0xff]
    %v1045 = vld [vmem:[#allocation2 + $0xecc] sm:$0xff]
    %v1046 = vld [vmem:[#allocation2 + $0xed4] sm:$0xf]
    %v1047 = vld [vmem:[#allocation2 + $0xed8] sm:$0xff]
    %v1048 = vld [vmem:[#allocation2 + $0xee0] sm:$0xff]
    %v1049 = vld [vmem:[#allocation2 + $0xee8] sm:$0xf]
    %v1050 = vld [vmem:[#allocation2 + $0xeec] sm:$0xff]
    %v1051 = vld [vmem:[#allocation2 + $0xef4] sm:$0xff]
    %v1052 = vld [vmem:[#allocation2 + $0xefc] sm:$0xf]
    %v1053 = vld [vmem:[#allocation2 + $0xf00] sm:$0xff]
    %v1054 = vld [vmem:[#allocation2 + $0xf08] sm:$0xff]
    %v1055 = vld [vmem:[#allocation2 + $0xf10] sm:$0xf]
    %v1056 = vld [vmem:[#allocation2 + $0xf14] sm:$0xff]
    %v1057 = vld [vmem:[#allocation2 + $0xf1c] sm:$0xff]
    %v1058 = vld [vmem:[#allocation2 + $0xf24] sm:$0xf]
    %v1059 = vld [vmem:[#allocation2 + $0xf28] sm:$0xff]
    %v1060 = vld [vmem:[#allocation2 + $0xf30] sm:$0xff]
    %v1061 = vld [vmem:[#allocation2 + $0xf38] sm:$0xf]
    %v1062 = vld [vmem:[#allocation2 + $0xf3c] sm:$0xff]
    %v1063 = vld [vmem:[#allocation2 + $0xf44] sm:$0xff]
    %v1064 = vld [vmem:[#allocation2 + $0xf4c] sm:$0xf]
    %v1065 = vld [vmem:[#allocation2 + $0xf50] sm:$0xff]
    %v1066 = vld [vmem:[#allocation2 + $0xf58] sm:$0xff]
    %v1067 = vld [vmem:[#allocation2 + $0xf60] sm:$0xf]
    %v1068 = vld [vmem:[#allocation2 + $0xf64] sm:$0xff]
    %v1069 = vld [vmem:[#allocation2 + $0xf6c] sm:$0xff]
    %v1070 = vld [vmem:[#allocation2 + $0xf74] sm:$0xf]
    %v1071 = vld [vmem:[#allocation2 + $0xf78] sm:$0xff]
    %v1072 = vld [vmem:[#allocation2 + $0xf80] sm:$0xff]
    %v1073 = vld [vmem:[#allocation2 + $0xf88] sm:$0xf]
    %v1074 = vld [vmem:[#allocation2 + $0xf8c] sm:$0xff]
    %v1075 = vld [vmem:[#allocation2 + $0xf94] sm:$0xff]
    %v1076 = vld [vmem:[#allocation2 + $0xf9c] sm:$0xf]
    %v1077 = vld [vmem:[#allocation2 + $0xfa0] sm:$0xff]
    %v1078 = vld [vmem:[#allocation2 + $0xfa8] sm:$0xff]
    %v1079 = vld [vmem:[#allocation2 + $0xfb0] sm:$0xf]
    %v1080 = vld [vmem:[#allocation2 + $0xfb4] sm:$0xff]
    %v1081 = vld [vmem:[#allocation2 + $0xfbc] sm:$0xff]
    %v1082 = vld [vmem:[#allocation2 + $0xfc4] sm:$0xf]
    %v1083 = vld [vmem:[#allocation2 + $0xfc8] sm:$0xff]
    %v1084 = vld [vmem:[#allocation2 + $0xfd0] sm:$0xff]
    %v1085 = vld [vmem:[#allocation2 + $0xfd8] sm:$0xf]
    %v1086 = vld [vmem:[#allocation2 + $0xfdc] sm:$0xff]
    %v1087 = vld [vmem:[#allocation2 + $0xfe4] sm:$0xff]
    %v1088 = vld [vmem:[#allocation2 + $0xfec] sm:$0xf]
    %v1089 = vld [vmem:[#allocation2 + $0xff0] sm:$0xff]
    %v1090 = vld [vmem:[#allocation2 + $0xff8] sm:$0xff]
    %v1091 = vld [vmem:[#allocation2 + $0x1000] sm:$0xf]
    %v1092 = vld [vmem:[#allocation2 + $0x1004] sm:$0xff]
    %v1093 = vld [vmem:[#allocation2 + $0x100c] sm:$0xff]
    %v1094 = vld [vmem:[#allocation2 + $0x1014] sm:$0xf]
    %v1095 = vld [vmem:[#allocation2 + $0x1018] sm:$0xff]
    %v1096 = vld [vmem:[#allocation2 + $0x1020] sm:$0xff]
    %v1097 = vld [vmem:[#allocation2 + $0x1028] sm:$0xf]
    %v1098 = vld [vmem:[#allocation2 + $0x102c] sm:$0xff]
    %v1099 = vld [vmem:[#allocation2 + $0x1034] sm:$0xff]
    %v1100 = vld [vmem:[#allocation2 + $0x103c] sm:$0xf]
    %v1101 = vld [vmem:[#allocation2 + $0x1040] sm:$0xff]
    %v1102 = vld [vmem:[#allocation2 + $0x1048] sm:$0xff]
    %v1103 = vld [vmem:[#allocation2 + $0x1050] sm:$0xf]
    %v1104 = vld [vmem:[#allocation2 + $0x1054] sm:$0xff]
    %v1105 = vld [vmem:[#allocation2 + $0x105c] sm:$0xff]
    %v1106 = vld [vmem:[#allocation2 + $0x1064] sm:$0xf]
    %v1107 = vld [vmem:[#allocation2 + $0x1068] sm:$0xff]
    %v1108 = vld [vmem:[#allocation2 + $0x1070] sm:$0xff]
    %v1109 = vld [vmem:[#allocation2 + $0x1078] sm:$0xf]
    %v1110 = vld [vmem:[#allocation2 + $0x107c] sm:$0xff]
    %v1111 = vld [vmem:[#allocation2 + $0x1084] sm:$0xff]
    %v1112 = vld [vmem:[#allocation2 + $0x108c] sm:$0xf]
    %v1113 = vld [vmem:[#allocation2 + $0x1090] sm:$0xff]
    %v1114 = vld [vmem:[#allocation2 + $0x1098] sm:$0xff]
    %v1115 = vld [vmem:[#allocation2 + $0x10a0] sm:$0xf]
    %v1116 = vld [vmem:[#allocation2 + $0x10a4] sm:$0xff]
    %v1117 = vld [vmem:[#allocation2 + $0x10ac] sm:$0xff]
    %v1118 = vld [vmem:[#allocation2 + $0x10b4] sm:$0xf]
    %v1119 = vld [vmem:[#allocation2 + $0x10b8] sm:$0xff]
    %v1120 = vld [vmem:[#allocation2 + $0x10c0] sm:$0xff]
    %v1121 = vld [vmem:[#allocation2 + $0x10c8] sm:$0xf]
    %v1122 = vld [vmem:[#allocation2 + $0x10cc] sm:$0xff]
    %v1123 = vld [vmem:[#allocation2 + $0x10d4] sm:$0xff]
    %v1124 = vld [vmem:[#allocation2 + $0x10dc] sm:$0xf]
    %v1125 = vld [vmem:[#allocation2 + $0x10e0] sm:$0xff]
    %v1126 = vld [vmem:[#allocation2 + $0x10e8] sm:$0xff]
    %v1127 = vld [vmem:[#allocation2 + $0x10f0] sm:$0xf]
    %v1128 = vld [vmem:[#allocation2 + $0x10f4] sm:$0xff]
    %v1129 = vld [vmem:[#allocation2 + $0x10fc] sm:$0xff]
    %v1130 = vld [vmem:[#allocation2 + $0x1104] sm:$0xf]
    %v1131 = vld [vmem:[#allocation2 + $0x1108] sm:$0xff]
    %v1132 = vld [vmem:[#allocation2 + $0x1110] sm:$0xff]
    %v1133 = vld [vmem:[#allocation2 + $0x1118] sm:$0xf]
    %v1134 = vld [vmem:[#allocation2 + $0x111c] sm:$0xff]
    %v1135 = vld [vmem:[#allocation2 + $0x1124] sm:$0xff]
    %v1136 = vld [vmem:[#allocation2 + $0x112c] sm:$0xf]
    %v1137 = vld [vmem:[#allocation2 + $0x1130] sm:$0xff]
    %v1138 = vld [vmem:[#allocation2 + $0x1138] sm:$0xff]
    %v1139 = vld [vmem:[#allocation2 + $0x1140] sm:$0xf]
    %v1140 = vld [vmem:[#allocation2 + $0x1144] sm:$0xff]
    %v1141 = vld [vmem:[#allocation2 + $0x114c] sm:$0xff]
    %v1142 = vld [vmem:[#allocation2 + $0x1154] sm:$0xf]
    %v1143 = vld [vmem:[#allocation2 + $0x1158] sm:$0xff]
    %v1144 = vld [vmem:[#allocation2 + $0x1160] sm:$0xff]
    %v1145 = vld [vmem:[#allocation2 + $0x1168] sm:$0xf]
    %v1146 = vld [vmem:[#allocation2 + $0x116c] sm:$0xff]
    %v1147 = vld [vmem:[#allocation2 + $0x1174] sm:$0xff]
    %v1148 = vld [vmem:[#allocation2 + $0x117c] sm:$0xf]
    %v1149 = vld [vmem:[#allocation2 + $0x1180] sm:$0xff]
    %v1150 = vld [vmem:[#allocation2 + $0x1188] sm:$0xff]
    %v1151 = vld [vmem:[#allocation2 + $0x1190] sm:$0xf]
    %v1152 = vld [vmem:[#allocation2 + $0x1194] sm:$0xff]
    %v1153 = vld [vmem:[#allocation2 + $0x119c] sm:$0xff]
    %v1154 = vld [vmem:[#allocation2 + $0x11a4] sm:$0xf]
    %v1155 = vld [vmem:[#allocation2 + $0x11a8] sm:$0xff]
    %v1156 = vld [vmem:[#allocation2 + $0x11b0] sm:$0xff]
    %v1157 = vld [vmem:[#allocation2 + $0x11b8] sm:$0xf]
    %v1158 = vld [vmem:[#allocation2 + $0x11bc] sm:$0xff]
    %v1159 = vld [vmem:[#allocation2 + $0x11c4] sm:$0xff]
    %v1160 = vld [vmem:[#allocation2 + $0x11cc] sm:$0xf]
    %v1161 = vld [vmem:[#allocation2 + $0x11d0] sm:$0xff]
    %v1162 = vld [vmem:[#allocation2 + $0x11d8] sm:$0xff]
    %v1163 = vld [vmem:[#allocation2 + $0x11e0] sm:$0xf]
    %v1164 = vld [vmem:[#allocation2 + $0x11e4] sm:$0xff]
    %v1165 = vld [vmem:[#allocation2 + $0x11ec] sm:$0xff]
    %v1166 = vld [vmem:[#allocation2 + $0x11f4] sm:$0xf]
    %v1167 = vld [vmem:[#allocation2 + $0x11f8] sm:$0xff]
    %v1168 = vld [vmem:[#allocation2 + $0x1200] sm:$0xff]
    %v1169 = vld [vmem:[#allocation2 + $0x1208] sm:$0xf]
    %v1170 = vld [vmem:[#allocation2 + $0x120c] sm:$0xff]
    %v1171 = vld [vmem:[#allocation2 + $0x1214] sm:$0xff]
    %v1172 = vld [vmem:[#allocation2 + $0x121c] sm:$0xf]
    %v1173 = vld [vmem:[#allocation2 + $0x1220] sm:$0xff]
    %v1174 = vld [vmem:[#allocation2 + $0x1228] sm:$0xff]
    %v1175 = vld [vmem:[#allocation2 + $0x1230] sm:$0xf]
    %v1176 = vld [vmem:[#allocation2 + $0x1234] sm:$0xff]
    %v1177 = vld [vmem:[#allocation2 + $0x123c] sm:$0xff]
    %v1178 = vld [vmem:[#allocation2 + $0x1244] sm:$0xf]
    %v1179 = vld [vmem:[#allocation2 + $0x1248] sm:$0xff]
    %v1180 = vld [vmem:[#allocation2 + $0x1250] sm:$0xff]
    %v1181 = vld [vmem:[#allocation2 + $0x1258] sm:$0xf]
    %v1182 = vld [vmem:[#allocation2 + $0x125c] sm:$0xff]
    %v1183 = vld [vmem:[#allocation2 + $0x1264] sm:$0xff]
    %v1184 = vld [vmem:[#allocation2 + $0x126c] sm:$0xf]
    %v1185 = vld [vmem:[#allocation2 + $0x1270] sm:$0xff]
    %v1186 = vld [vmem:[#allocation2 + $0x1278] sm:$0xff]
    %v1187 = vld [vmem:[#allocation2 + $0x1280] sm:$0xf]
    %v1188 = vld [vmem:[#allocation2 + $0x1284] sm:$0xff]
    %v1189 = vld [vmem:[#allocation2 + $0x128c] sm:$0xff]
    %v1190 = vld [vmem:[#allocation2 + $0x1294] sm:$0xf]
    %v1191 = vld [vmem:[#allocation2 + $0x1298] sm:$0xff]
    %v1192 = vld [vmem:[#allocation2 + $0x12a0] sm:$0xff]
    %v1193 = vld [vmem:[#allocation2 + $0x12a8] sm:$0xf]
    %v1194 = vld [vmem:[#allocation2 + $0x12ac] sm:$0xff]
    %v1195 = vld [vmem:[#allocation2 + $0x12b4] sm:$0xff]
    %v1196 = vld [vmem:[#allocation2 + $0x12bc] sm:$0xf]
    %v1197 = vld [vmem:[#allocation2 + $0x12c0] sm:$0xff]
    %v1198 = vld [vmem:[#allocation2 + $0x12c8] sm:$0xff]
    %v1199 = vld [vmem:[#allocation2 + $0x12d0] sm:$0xf]
    %v1200 = vld [vmem:[#allocation2 + $0x12d4] sm:$0xff]
    %v1201 = vld [vmem:[#allocation2 + $0x12dc] sm:$0xff]
    %v1202 = vld [vmem:[#allocation2 + $0x12e4] sm:$0xf]
    %v1203 = vld [vmem:[#allocation2 + $0x12e8] sm:$0xff]
    %v1204 = vld [vmem:[#allocation2 + $0x12f0] sm:$0xff]
    %v1205 = vld [vmem:[#allocation2 + $0x12f8] sm:$0xf]
    %v1206 = vld [vmem:[#allocation2 + $0x12fc] sm:$0xff]
    %v1207 = vld [vmem:[#allocation2 + $0x1304] sm:$0xff]
    %v1208 = vld [vmem:[#allocation2 + $0x130c] sm:$0xf]
    %v1209 = vld [vmem:[#allocation2 + $0x1310] sm:$0xff]
    %v1210 = vld [vmem:[#allocation2 + $0x1318] sm:$0xff]
    %v1211 = vld [vmem:[#allocation2 + $0x1320] sm:$0xf]
    %v1212 = vld [vmem:[#allocation2 + $0x1324] sm:$0xff]
    %v1213 = vld [vmem:[#allocation2 + $0x132c] sm:$0xff]
    %v1214 = vld [vmem:[#allocation2 + $0x1334] sm:$0xf]
    %v1215 = vld [vmem:[#allocation2 + $0x1338] sm:$0xff]
    %v1216 = vld [vmem:[#allocation2 + $0x1340] sm:$0xff]
    %v1217 = vld [vmem:[#allocation2 + $0x1348] sm:$0xf]
    %v1218 = vld [vmem:[#allocation2 + $0x134c] sm:$0xff]
    %v1219 = vld [vmem:[#allocation2 + $0x1354] sm:$0xff]
    %v1220 = vld [vmem:[#allocation2 + $0x135c] sm:$0xf]
    %v1221 = vld [vmem:[#allocation2 + $0x1360] sm:$0xff]
    %v1222 = vld [vmem:[#allocation2 + $0x1368] sm:$0xff]
    %v1223 = vld [vmem:[#allocation2 + $0x1370] sm:$0xf]
    %v1224 = vld [vmem:[#allocation2 + $0x1374] sm:$0xff]
    %v1225 = vld [vmem:[#allocation2 + $0x137c] sm:$0xff]
    %v1226 = vld [vmem:[#allocation2 + $0x1384] sm:$0xf]
    %v1227 = vld [vmem:[#allocation2 + $0x1388] sm:$0xff]
    %v1228 = vld [vmem:[#allocation2 + $0x1390] sm:$0xff]
    %v1229 = vld [vmem:[#allocation2 + $0x1398] sm:$0xf]
    %v1230 = vld [vmem:[#allocation2 + $0x139c] sm:$0xff]
    %v1231 = vld [vmem:[#allocation2 + $0x13a4] sm:$0xff]
    %v1232 = vld [vmem:[#allocation2 + $0x13ac] sm:$0xf]
    %v1233 = vld [vmem:[#allocation2 + $0x13b0] sm:$0xff]
    %v1234 = vld [vmem:[#allocation2 + $0x13b8] sm:$0xff]
    %v1235 = vld [vmem:[#allocation2 + $0x13c0] sm:$0xf]
    %v1236 = vld [vmem:[#allocation2 + $0x13c4] sm:$0xff]
    %v1237 = vld [vmem:[#allocation2 + $0x13cc] sm:$0xff]
    %v1238 = vld [vmem:[#allocation2 + $0x13d4] sm:$0xf]
    %v1239 = vld [vmem:[#allocation2 + $0x13d8] sm:$0xff]
    %v1240 = vld [vmem:[#allocation2 + $0x13e0] sm:$0xff]
    %v1241 = vld [vmem:[#allocation2 + $0x13e8] sm:$0xf]
    %v1242 = vld [vmem:[#allocation2 + $0x13ec] sm:$0xff]
    %v1243 = vld [vmem:[#allocation2 + $0x13f4] sm:$0xff]
    %v1244 = vld [vmem:[#allocation2 + $0x13fc] sm:$0xf]
    %v1245 = vld [vmem:[#allocation2 + $0x1400] sm:$0xff]
    %v1246 = vld [vmem:[#allocation2 + $0x1408] sm:$0xff]
    %v1247 = vld [vmem:[#allocation2 + $0x1410] sm:$0xf]
    %v1248 = vld [vmem:[#allocation2 + $0x1414] sm:$0xff]
    %v1249 = vld [vmem:[#allocation2 + $0x141c] sm:$0xff]
    %v1250 = vld [vmem:[#allocation2 + $0x1424] sm:$0xf]
    %v1251 = vld [vmem:[#allocation2 + $0x1428] sm:$0xff]
    %v1252 = vld [vmem:[#allocation2 + $0x1430] sm:$0xff]
    %v1253 = vld [vmem:[#allocation2 + $0x1438] sm:$0xf]
    %v1254 = vld [vmem:[#allocation2 + $0x143c] sm:$0xff]
    %v1255 = vld [vmem:[#allocation2 + $0x1444] sm:$0xff]
    %v1256 = vld [vmem:[#allocation2 + $0x144c] sm:$0xf]
    %v1257 = vld [vmem:[#allocation2 + $0x1450] sm:$0xff]
    %v1258 = vld [vmem:[#allocation2 + $0x1458] sm:$0xff]
    %v1259 = vld [vmem:[#allocation2 + $0x1460] sm:$0xf]
    %v1260 = vld [vmem:[#allocation2 + $0x1464] sm:$0xff]
    %v1261 = vld [vmem:[#allocation2 + $0x146c] sm:$0xff]
    %v1262 = vld [vmem:[#allocation2 + $0x1474] sm:$0xf]
    %v1263 = vld [vmem:[#allocation2 + $0x1478] sm:$0xff]
    %v1264 = vld [vmem:[#allocation2 + $0x1480] sm:$0xff]
    %v1265 = vld [vmem:[#allocation2 + $0x1488] sm:$0xf]
    %v1266 = vld [vmem:[#allocation2 + $0x148c] sm:$0xff]
    %v1267 = vld [vmem:[#allocation2 + $0x1494] sm:$0xff]
    %v1268 = vld [vmem:[#allocation2 + $0x149c] sm:$0xf]
    %v1269 = vld [vmem:[#allocation2 + $0x14a0] sm:$0xff]
    %v1270 = vld [vmem:[#allocation2 + $0x14a8] sm:$0xff]
    %v1271 = vld [vmem:[#allocation2 + $0x14b0] sm:$0xf]
    %v1272 = vld [vmem:[#allocation2 + $0x14b4] sm:$0xff]
    %v1273 = vld [vmem:[#allocation2 + $0x14bc] sm:$0xff]
    %v1274 = vld [vmem:[#allocation2 + $0x14c4] sm:$0xf]
    %v1275 = vld [vmem:[#allocation2 + $0x14c8] sm:$0xff]
    %v1276 = vld [vmem:[#allocation2 + $0x14d0] sm:$0xff]
    %v1277 = vld [vmem:[#allocation2 + $0x14d8] sm:$0xf]
    %v1278 = vld [vmem:[#allocation2 + $0x14dc] sm:$0xff]
    %v1279 = vld [vmem:[#allocation2 + $0x14e4] sm:$0xff]
    %v1280 = vld [vmem:[#allocation2 + $0x14ec] sm:$0xf]
    %v1281 = vld [vmem:[#allocation2 + $0x14f0] sm:$0xff]
    %v1282 = vld [vmem:[#allocation2 + $0x14f8] sm:$0xff]
    %v1283 = vld [vmem:[#allocation2 + $0x1500] sm:$0xf]
    %v1284 = vld [vmem:[#allocation2 + $0x1504] sm:$0xff]
    %v1285 = vld [vmem:[#allocation2 + $0x150c] sm:$0xff]
    %v1286 = vld [vmem:[#allocation2 + $0x1514] sm:$0xf]
    %v1287 = vld [vmem:[#allocation2 + $0x1518] sm:$0xff]
    %v1288 = vld [vmem:[#allocation2 + $0x1520] sm:$0xff]
    %v1289 = vld [vmem:[#allocation2 + $0x1528] sm:$0xf]
    %v1290 = vld [vmem:[#allocation2 + $0x152c] sm:$0xff]
    %v1291 = vld [vmem:[#allocation2 + $0x1534] sm:$0xff]
    %v1292 = vld [vmem:[#allocation2 + $0x153c] sm:$0xf]
    %v1293 = vld [vmem:[#allocation2 + $0x1540] sm:$0xff]
    %v1294 = vld [vmem:[#allocation2 + $0x1548] sm:$0xff]
    %v1295 = vld [vmem:[#allocation2 + $0x1550] sm:$0xf]
    %v1296 = vld [vmem:[#allocation2 + $0x1554] sm:$0xff]
    %v1297 = vld [vmem:[#allocation2 + $0x155c] sm:$0xff]
    %v1298 = vld [vmem:[#allocation2 + $0x1564] sm:$0xf]
    %v1299 = vld [vmem:[#allocation2 + $0x1568] sm:$0xff]
    %v1300 = vld [vmem:[#allocation2 + $0x1570] sm:$0xff]
    %v1301 = vld [vmem:[#allocation2 + $0x1578] sm:$0xf]
    %v1302 = vld [vmem:[#allocation2 + $0x157c] sm:$0xff]
    %v1303 = vld [vmem:[#allocation2 + $0x1584] sm:$0xff]
    %v1304 = vld [vmem:[#allocation2 + $0x158c] sm:$0xf]
    %v1305 = vld [vmem:[#allocation2 + $0x1590] sm:$0xff]
    %v1306 = vld [vmem:[#allocation2 + $0x1598] sm:$0xff]
    %v1307 = vld [vmem:[#allocation2 + $0x15a0] sm:$0xf]
    %v1308 = vld [vmem:[#allocation2 + $0x15a4] sm:$0xff]
    %v1309 = vld [vmem:[#allocation2 + $0x15ac] sm:$0xff]
    %v1310 = vld [vmem:[#allocation2 + $0x15b4] sm:$0xf]
    %v1311 = vld [vmem:[#allocation2 + $0x15b8] sm:$0xff]
    %v1312 = vld [vmem:[#allocation2 + $0x15c0] sm:$0xff]
    %v1313 = vld [vmem:[#allocation2 + $0x15c8] sm:$0xf]
    %v1314 = vld [vmem:[#allocation2 + $0x15cc] sm:$0xff]
    %v1315 = vld [vmem:[#allocation2 + $0x15d4] sm:$0xff]
    %v1316 = vld [vmem:[#allocation2 + $0x15dc] sm:$0xf]
    %v1317 = vld [vmem:[#allocation2 + $0x15e0] sm:$0xff]
    %v1318 = vld [vmem:[#allocation2 + $0x15e8] sm:$0xff]
    %v1319 = vld [vmem:[#allocation2 + $0x15f0] sm:$0xf]
    %v1320 = vld [vmem:[#allocation2 + $0x15f4] sm:$0xff]
    %v1321 = vld [vmem:[#allocation2 + $0x15fc] sm:$0xff]
    %v1322 = vld [vmem:[#allocation2 + $0x1604] sm:$0xf]
    %v1323 = vld [vmem:[#allocation2 + $0x1608] sm:$0xff]
    %v1324 = vld [vmem:[#allocation2 + $0x1610] sm:$0xff]
    %v1325 = vld [vmem:[#allocation2 + $0x1618] sm:$0xf]
    %v1326 = vld [vmem:[#allocation2 + $0x161c] sm:$0xff]
    %v1327 = vld [vmem:[#allocation2 + $0x1624] sm:$0xff]
    %v1328 = vld [vmem:[#allocation2 + $0x162c] sm:$0xf]
    %v1329 = vld [vmem:[#allocation2 + $0x1630] sm:$0xff]
    %v1330 = vld [vmem:[#allocation2 + $0x1638] sm:$0xff]
    %v1331 = vld [vmem:[#allocation2 + $0x1640] sm:$0xf]
    %v1332 = vld [vmem:[#allocation2 + $0x1644] sm:$0xff]
    %v1333 = vld [vmem:[#allocation2 + $0x164c] sm:$0xff]
    %v1334 = vld [vmem:[#allocation2 + $0x1654] sm:$0xf]
    %v1335 = vld [vmem:[#allocation2 + $0x1658] sm:$0xff]
    %v1336 = vld [vmem:[#allocation2 + $0x1660] sm:$0xff]
    %v1337 = vld [vmem:[#allocation2 + $0x1668] sm:$0xf]
    %v1338 = vld [vmem:[#allocation2 + $0x166c] sm:$0xff]
    %v1339 = vld [vmem:[#allocation2 + $0x1674] sm:$0xff]
    %v1340 = vld [vmem:[#allocation2 + $0x167c] sm:$0xf]
    %v1341 = vld [vmem:[#allocation2 + $0x1680] sm:$0xff]
    %v1342 = vld [vmem:[#allocation2 + $0x1688] sm:$0xff]
    %v1343 = vld [vmem:[#allocation2 + $0x1690] sm:$0xf]
    %v1344 = vld [vmem:[#allocation2 + $0x1694] sm:$0xff]
    %v1345 = vld [vmem:[#allocation2 + $0x169c] sm:$0xff]
    %v1346 = vld [vmem:[#allocation2 + $0x16a4] sm:$0xf]
    %v1347 = vld [vmem:[#allocation2 + $0x16a8] sm:$0xff]
    %v1348 = vld [vmem:[#allocation2 + $0x16b0] sm:$0xff]
    %v1349 = vld [vmem:[#allocation2 + $0x16b8] sm:$0xf]
    %v1350 = vld [vmem:[#allocation2 + $0x16bc] sm:$0xff]
    %v1351 = vld [vmem:[#allocation2 + $0x16c4] sm:$0xff]
    %v1352 = vld [vmem:[#allocation2 + $0x16cc] sm:$0xf]
    %v1353 = vld [vmem:[#allocation2 + $0x16d0] sm:$0xff]
    %v1354 = vld [vmem:[#allocation2 + $0x16d8] sm:$0xff]
    %v1355 = vld [vmem:[#allocation2 + $0x16e0] sm:$0xf]
    %v1356 = vld [vmem:[#allocation2 + $0x16e4] sm:$0xff]
    %v1357 = vld [vmem:[#allocation2 + $0x16ec] sm:$0xff]
    %v1358 = vld [vmem:[#allocation2 + $0x16f4] sm:$0xf]
    %v1359 = vld [vmem:[#allocation2 + $0x16f8] sm:$0xff]
    %v1360 = vld [vmem:[#allocation2 + $0x1700] sm:$0xff]
    %v1361 = vld [vmem:[#allocation2 + $0x1708] sm:$0xf]
    %v1362 = vld [vmem:[#allocation2 + $0x170c] sm:$0xff]
    %v1363 = vld [vmem:[#allocation2 + $0x1714] sm:$0xff]
    %v1364 = vld [vmem:[#allocation2 + $0x171c] sm:$0xf]
    %v1365 = vld [vmem:[#allocation2 + $0x1720] sm:$0xff]
    %v1366 = vld [vmem:[#allocation2 + $0x1728] sm:$0xff]
    %v1367 = vld [vmem:[#allocation2 + $0x1730] sm:$0xf]
    %v1368 = vld [vmem:[#allocation2 + $0x1734] sm:$0xff]
    %v1369 = vld [vmem:[#allocation2 + $0x173c] sm:$0xff]
    %v1370 = vld [vmem:[#allocation2 + $0x1744] sm:$0xf]
    %v1371 = vld [vmem:[#allocation2 + $0x1748] sm:$0xff]
    %v1372 = vld [vmem:[#allocation2 + $0x1750] sm:$0xff]
    %v1373 = vld [vmem:[#allocation2 + $0x1758] sm:$0xf]
    %v1374 = vld [vmem:[#allocation2 + $0x175c] sm:$0xff]
    %v1375 = vld [vmem:[#allocation2 + $0x1764] sm:$0xff]
    %v1376 = vld [vmem:[#allocation2 + $0x176c] sm:$0xf]
    %v1377 = vld [vmem:[#allocation2 + $0x1770] sm:$0xff]
    %v1378 = vld [vmem:[#allocation2 + $0x1778] sm:$0xff]
    %v1379 = vld [vmem:[#allocation2 + $0x1780] sm:$0xf]
    %v1380 = vld [vmem:[#allocation2 + $0x1784] sm:$0xff]
    %v1381 = vld [vmem:[#allocation2 + $0x178c] sm:$0xff]
    %v1382 = vld [vmem:[#allocation2 + $0x1794] sm:$0xf]
    %v1383 = vld [vmem:[#allocation2 + $0x1798] sm:$0xff]
    %v1384 = vld [vmem:[#allocation2 + $0x17a0] sm:$0xff]
    %v1385 = vld [vmem:[#allocation2 + $0x17a8] sm:$0xf]
    %v1386 = vld [vmem:[#allocation2 + $0x17ac] sm:$0xff]
    %v1387 = vld [vmem:[#allocation2 + $0x17b4] sm:$0xff]
    %v1388 = vld [vmem:[#allocation2 + $0x17bc] sm:$0xf]
    %v1389 = vld [vmem:[#allocation2 + $0x17c0] sm:$0xff]
    %v1390 = vld [vmem:[#allocation2 + $0x17c8] sm:$0xff]
    %v1391 = vld [vmem:[#allocation2 + $0x17d0] sm:$0xf]
    %v1392 = vld [vmem:[#allocation2 + $0x17d4] sm:$0xff]
    %v1393 = vld [vmem:[#allocation2 + $0x17dc] sm:$0xff]
    %v1394 = vld [vmem:[#allocation2 + $0x17e4] sm:$0xf]
    %v1395 = vld [vmem:[#allocation2 + $0x17e8] sm:$0xff]
    %v1396 = vld [vmem:[#allocation2 + $0x17f0] sm:$0xff]
    %v1397 = vld [vmem:[#allocation2 + $0x17f8] sm:$0xf]
    %v1398 = vld [vmem:[#allocation2 + $0x17fc] sm:$0xff]
    %v1399 = vld [vmem:[#allocation2 + $0x1804] sm:$0xff]
    %v1400 = vld [vmem:[#allocation2 + $0x180c] sm:$0xf]
    %v1401 = vld [vmem:[#allocation2 + $0x1810] sm:$0xff]
    %v1402 = vld [vmem:[#allocation2 + $0x1818] sm:$0xff]
    %v1403 = vld [vmem:[#allocation2 + $0x1820] sm:$0xf]
    %v1404 = vld [vmem:[#allocation2 + $0x1824] sm:$0xff]
    %v1405 = vld [vmem:[#allocation2 + $0x182c] sm:$0xff]
    %v1406 = vld [vmem:[#allocation2 + $0x1834] sm:$0xf]
    %v1407 = vld [vmem:[#allocation2 + $0x1838] sm:$0xff]
    %v1408 = vld [vmem:[#allocation2 + $0x1840] sm:$0xff]
    %v1409 = vld [vmem:[#allocation2 + $0x1848] sm:$0xf]
    %v1410 = vld [vmem:[#allocation2 + $0x184c] sm:$0xff]
    %v1411 = vld [vmem:[#allocation2 + $0x1854] sm:$0xff]
    %v1412 = vld [vmem:[#allocation2 + $0x185c] sm:$0xf]
    %v1413 = vld [vmem:[#allocation2 + $0x1860] sm:$0xff]
    %v1414 = vld [vmem:[#allocation2 + $0x1868] sm:$0xff]
    %v1415 = vld [vmem:[#allocation2 + $0x1870] sm:$0xf]
    %v1416 = vld [vmem:[#allocation2 + $0x1874] sm:$0xff]
    %v1417 = vld [vmem:[#allocation2 + $0x187c] sm:$0xff]
    %v1418 = vld [vmem:[#allocation2 + $0x1884] sm:$0xf]
    %v1419 = vld [vmem:[#allocation2 + $0x1888] sm:$0xff]
    %v1420 = vld [vmem:[#allocation2 + $0x1890] sm:$0xff]
    %v1421 = vld [vmem:[#allocation2 + $0x1898] sm:$0xf]
    %v1422 = vld [vmem:[#allocation2 + $0x189c] sm:$0xff]
    %v1423 = vld [vmem:[#allocation2 + $0x18a4] sm:$0xff]
    %v1424 = vld [vmem:[#allocation2 + $0x18ac] sm:$0xf]
    %v1425 = vld [vmem:[#allocation2 + $0x18b0] sm:$0xff]
    %v1426 = vld [vmem:[#allocation2 + $0x18b8] sm:$0xff]
    %v1427 = vld [vmem:[#allocation2 + $0x18c0] sm:$0xf]
    %v1428 = vld [vmem:[#allocation2 + $0x18c4] sm:$0xff]
    %v1429 = vld [vmem:[#allocation2 + $0x18cc] sm:$0xff]
    %v1430 = vld [vmem:[#allocation2 + $0x18d4] sm:$0xf]
    %v1431 = vld [vmem:[#allocation2 + $0x18d8] sm:$0xff]
    %v1432 = vld [vmem:[#allocation2 + $0x18e0] sm:$0xff]
    %v1433 = vld [vmem:[#allocation2 + $0x18e8] sm:$0xf]
    %v1434 = vld [vmem:[#allocation2 + $0x18ec] sm:$0xff]
    %v1435 = vld [vmem:[#allocation2 + $0x18f4] sm:$0xff]
    %v1436 = vld [vmem:[#allocation2 + $0x18fc] sm:$0xf]
    %v1437 = vld [vmem:[#allocation2 + $0x1900] sm:$0xff]
    %v1438 = vld [vmem:[#allocation2 + $0x1908] sm:$0xff]
    %v1439 = vld [vmem:[#allocation2 + $0x1910] sm:$0xf]
    %v1440 = vld [vmem:[#allocation2 + $0x1914] sm:$0xff]
    %v1441 = vld [vmem:[#allocation2 + $0x191c] sm:$0xff]
    %v1442 = vld [vmem:[#allocation2 + $0x1924] sm:$0xf]
    %v1443 = vld [vmem:[#allocation2 + $0x1928] sm:$0xff]
    %v1444 = vld [vmem:[#allocation2 + $0x1930] sm:$0xff]
    %v1445 = vld [vmem:[#allocation2 + $0x1938] sm:$0xf]
    %v1446 = vld [vmem:[#allocation2 + $0x193c] sm:$0xff]
    %v1447 = vld [vmem:[#allocation2 + $0x1944] sm:$0xff]
    %v1448 = vld [vmem:[#allocation2 + $0x194c] sm:$0xf]
    %v1449 = vld [vmem:[#allocation2 + $0x1950] sm:$0xff]
    %v1450 = vld [vmem:[#allocation2 + $0x1958] sm:$0xff]
    %v1451 = vld [vmem:[#allocation2 + $0x1960] sm:$0xf]
    %v1452 = vld [vmem:[#allocation2 + $0x1964] sm:$0xff]
    %v1453 = vld [vmem:[#allocation2 + $0x196c] sm:$0xff]
    %v1454 = vld [vmem:[#allocation2 + $0x1974] sm:$0xf]
    %v1455 = vld [vmem:[#allocation2 + $0x1978] sm:$0xff]
    %v1456 = vld [vmem:[#allocation2 + $0x1980] sm:$0xff]
    %v1457 = vld [vmem:[#allocation2 + $0x1988] sm:$0xf]
    %v1458 = vld [vmem:[#allocation2 + $0x198c] sm:$0xff]
    %v1459 = vld [vmem:[#allocation2 + $0x1994] sm:$0xff]
    %v1460 = vld [vmem:[#allocation2 + $0x199c] sm:$0xf]
    %v1461 = vld [vmem:[#allocation2 + $0x19a0] sm:$0xff]
    %v1462 = vld [vmem:[#allocation2 + $0x19a8] sm:$0xff]
    %v1463 = vld [vmem:[#allocation2 + $0x19b0] sm:$0xf]
    %v1464 = vld [vmem:[#allocation2 + $0x19b4] sm:$0xff]
    %v1465 = vld [vmem:[#allocation2 + $0x19bc] sm:$0xff]
    %v1466 = vld [vmem:[#allocation2 + $0x19c4] sm:$0xf]
    %v1467 = vld [vmem:[#allocation2 + $0x19c8] sm:$0xff]
    %v1468 = vld [vmem:[#allocation2 + $0x19d0] sm:$0xff]
    %v1469 = vld [vmem:[#allocation2 + $0x19d8] sm:$0xf]
    %v1470 = vld [vmem:[#allocation2 + $0x19dc] sm:$0xff]
    %v1471 = vld [vmem:[#allocation2 + $0x19e4] sm:$0xff]
    %v1472 = vld [vmem:[#allocation2 + $0x19ec] sm:$0xf]
    %v1473 = vld [vmem:[#allocation2 + $0x19f0] sm:$0xff]
    %v1474 = vld [vmem:[#allocation2 + $0x19f8] sm:$0xff]
    %v1475 = vld [vmem:[#allocation2 + $0x1a00] sm:$0xf]
    %v1476 = vld [vmem:[#allocation2 + $0x1a04] sm:$0xff]
    %v1477 = vld [vmem:[#allocation2 + $0x1a0c] sm:$0xff]
    %v1478 = vld [vmem:[#allocation2 + $0x1a14] sm:$0xf]
    %v1479 = vld [vmem:[#allocation2 + $0x1a18] sm:$0xff]
    %v1480 = vld [vmem:[#allocation2 + $0x1a20] sm:$0xff]
    %v1481 = vld [vmem:[#allocation2 + $0x1a28] sm:$0xf]
    %v1482 = vld [vmem:[#allocation2 + $0x1a2c] sm:$0xff]
    %v1483 = vld [vmem:[#allocation2 + $0x1a34] sm:$0xff]
    %v1484 = vld [vmem:[#allocation2 + $0x1a3c] sm:$0xf]
    %v1485 = vld [vmem:[#allocation2 + $0x1a40] sm:$0xff]
    %v1486 = vld [vmem:[#allocation2 + $0x1a48] sm:$0xff]
    %v1487 = vld [vmem:[#allocation2 + $0x1a50] sm:$0xf]
    %v1488 = vld [vmem:[#allocation2 + $0x1a54] sm:$0xff]
    %v1489 = vld [vmem:[#allocation2 + $0x1a5c] sm:$0xff]
    %v1490 = vld [vmem:[#allocation2 + $0x1a64] sm:$0xf]
    %v1491 = vld [vmem:[#allocation2 + $0x1a68] sm:$0xff]
    %v1492 = vld [vmem:[#allocation2 + $0x1a70] sm:$0xff]
    %v1493 = vld [vmem:[#allocation2 + $0x1a78] sm:$0xf]
    %v1494 = vld [vmem:[#allocation2 + $0x1a7c] sm:$0xff]
    %v1495 = vld [vmem:[#allocation2 + $0x1a84] sm:$0xff]
    %v1496 = vld [vmem:[#allocation2 + $0x1a8c] sm:$0xf]
    %v1497 = vld [vmem:[#allocation2 + $0x1a90] sm:$0xff]
    %v1498 = vld [vmem:[#allocation2 + $0x1a98] sm:$0xff]
    %v1499 = vld [vmem:[#allocation2 + $0x1aa0] sm:$0xf]
    %v1500 = vld [vmem:[#allocation2 + $0x1aa4] sm:$0xff]
    %v1501 = vld [vmem:[#allocation2 + $0x1aac] sm:$0xff]
    %v1502 = vld [vmem:[#allocation2 + $0x1ab4] sm:$0xf]
    %v1503 = vld [vmem:[#allocation2 + $0x1ab8] sm:$0xff]
    %v1504 = vld [vmem:[#allocation2 + $0x1ac0] sm:$0xff]
    %v1505 = vld [vmem:[#allocation2 + $0x1ac8] sm:$0xf]
    %v1506 = vld [vmem:[#allocation2 + $0x1acc] sm:$0xff]
    %v1507 = vld [vmem:[#allocation2 + $0x1ad4] sm:$0xff]
    %v1508 = vld [vmem:[#allocation2 + $0x1adc] sm:$0xf]
    %v1509 = vld [vmem:[#allocation2 + $0x1ae0] sm:$0xff]
    %v1510 = vld [vmem:[#allocation2 + $0x1ae8] sm:$0xff]
    %v1511 = vld [vmem:[#allocation2 + $0x1af0] sm:$0xf]
    %v1512 = vld [vmem:[#allocation2 + $0x1af4] sm:$0xff]
    %v1513 = vld [vmem:[#allocation2 + $0x1afc] sm:$0xff]
    %v1514 = vld [vmem:[#allocation2 + $0x1b04] sm:$0xf]
    %v1515 = vld [vmem:[#allocation2 + $0x1b08] sm:$0xff]
    %v1516 = vld [vmem:[#allocation2 + $0x1b10] sm:$0xff]
    %v1517 = vld [vmem:[#allocation2 + $0x1b18] sm:$0xf]
    %v1518 = vld [vmem:[#allocation2 + $0x1b1c] sm:$0xff]
    %v1519 = vld [vmem:[#allocation2 + $0x1b24] sm:$0xff]
    %v1520 = vld [vmem:[#allocation2 + $0x1b2c] sm:$0xf]
    %v1521 = vld [vmem:[#allocation2 + $0x1b30] sm:$0xff]
    %v1522 = vld [vmem:[#allocation2 + $0x1b38] sm:$0xff]
    %v1523 = vld [vmem:[#allocation2 + $0x1b40] sm:$0xf]
    %v1524 = vld [vmem:[#allocation2 + $0x1b44] sm:$0xff]
    %v1525 = vld [vmem:[#allocation2 + $0x1b4c] sm:$0xff]
    %v1526 = vld [vmem:[#allocation2 + $0x1b54] sm:$0xf]
    %v1527 = vld [vmem:[#allocation2 + $0x1b58] sm:$0xff]
    %v1528 = vld [vmem:[#allocation2 + $0x1b60] sm:$0xff]
    %v1529 = vld [vmem:[#allocation2 + $0x1b68] sm:$0xf]
    %v1530 = vld [vmem:[#allocation2 + $0x1b6c] sm:$0xff]
    %v1531 = vld [vmem:[#allocation2 + $0x1b74] sm:$0xff]
    %v1532 = vld [vmem:[#allocation2 + $0x1b7c] sm:$0xf]
    %v1533 = vld [vmem:[#allocation2 + $0x1b80] sm:$0xff]
    %v1534 = vld [vmem:[#allocation2 + $0x1b88] sm:$0xff]
    %v1535 = vld [vmem:[#allocation2 + $0x1b90] sm:$0xf]
    %v1536 = vld [vmem:[#allocation2 + $0x1b94] sm:$0xff]
    %v1537 = vld [vmem:[#allocation2 + $0x1b9c] sm:$0xff]
    %v1538 = vld [vmem:[#allocation2 + $0x1ba4] sm:$0xf]
    %v1539 = vld [vmem:[#allocation2 + $0x1ba8] sm:$0xff]
    %v1540 = vld [vmem:[#allocation2 + $0x1bb0] sm:$0xff]
    %v1541 = vld [vmem:[#allocation2 + $0x1bb8] sm:$0xf]
    %v1542 = vld [vmem:[#allocation2 + $0x1bbc] sm:$0xff]
    %v1543 = vld [vmem:[#allocation2 + $0x1bc4] sm:$0xff]
    %v1544 = vld [vmem:[#allocation2 + $0x1bcc] sm:$0xf]
    %v1545 = vld [vmem:[#allocation2 + $0x1bd0] sm:$0xff]
    %v1546 = vld [vmem:[#allocation2 + $0x1bd8] sm:$0xff]
    %v1547 = vld [vmem:[#allocation2 + $0x1be0] sm:$0xf]
    %v1548 = vld [vmem:[#allocation2 + $0x1be4] sm:$0xff]
    %v1549 = vld [vmem:[#allocation2 + $0x1bec] sm:$0xff]
    %v1550 = vld [vmem:[#allocation2 + $0x1bf4] sm:$0xf]
    %v1551 = vld [vmem:[#allocation2 + $0x1bf8] sm:$0xff]
    %v1552 = vld [vmem:[#allocation2 + $0x1c00] sm:$0xff]
    %v1553 = vld [vmem:[#allocation2 + $0x1c08] sm:$0xf]
    %v1554 = vld [vmem:[#allocation2 + $0x1c0c] sm:$0xff]
    %v1555 = vld [vmem:[#allocation2 + $0x1c14] sm:$0xff]
    %v1556 = vld [vmem:[#allocation2 + $0x1c1c] sm:$0xf]
    %v1557 = vld [vmem:[#allocation2 + $0x1c20] sm:$0xff]
    %v1558 = vld [vmem:[#allocation2 + $0x1c28] sm:$0xff]
    %v1559 = vld [vmem:[#allocation2 + $0x1c30] sm:$0xf]
    %v1560 = vld [vmem:[#allocation2 + $0x1c34] sm:$0xff]
    %v1561 = vld [vmem:[#allocation2 + $0x1c3c] sm:$0xff]
    %v1562 = vld [vmem:[#allocation2 + $0x1c44] sm:$0xf]
    %v1563 = vld [vmem:[#allocation2 + $0x1c48] sm:$0xff]
    %v1564 = vld [vmem:[#allocation2 + $0x1c50] sm:$0xff]
    %v1565 = vld [vmem:[#allocation2 + $0x1c58] sm:$0xf]
    %v1566 = vld [vmem:[#allocation2 + $0x1c5c] sm:$0xff]
    %v1567 = vld [vmem:[#allocation2 + $0x1c64] sm:$0xff]
    %v1568 = vld [vmem:[#allocation2 + $0x1c6c] sm:$0xf]
    %v1569 = vld [vmem:[#allocation2 + $0x1c70] sm:$0xff]
    %v1570 = vld [vmem:[#allocation2 + $0x1c78] sm:$0xff]
    %v1571 = vld [vmem:[#allocation2 + $0x1c80] sm:$0xf]
    %v1572 = vld [vmem:[#allocation2 + $0x1c84] sm:$0xff]
    %v1573 = vld [vmem:[#allocation2 + $0x1c8c] sm:$0xff]
    %v1574 = vld [vmem:[#allocation2 + $0x1c94] sm:$0xf]
    %v1575 = vld [vmem:[#allocation2 + $0x1c98] sm:$0xff]
    %v1576 = vld [vmem:[#allocation2 + $0x1ca0] sm:$0xff]
    %v1577 = vld [vmem:[#allocation2 + $0x1ca8] sm:$0xf]
    %v1578 = vld [vmem:[#allocation2 + $0x1cac] sm:$0xff]
    %v1579 = vld [vmem:[#allocation2 + $0x1cb4] sm:$0xff]
    %v1580 = vld [vmem:[#allocation2 + $0x1cbc] sm:$0xf]
    %v1581 = vld [vmem:[#allocation2 + $0x1cc0] sm:$0xff]
    %v1582 = vld [vmem:[#allocation2 + $0x1cc8] sm:$0xff]
    %v1583 = vld [vmem:[#allocation2 + $0x1cd0] sm:$0xf]
    %v1584 = vld [vmem:[#allocation2 + $0x1cd4] sm:$0xff]
    %v1585 = vld [vmem:[#allocation2 + $0x1cdc] sm:$0xff]
    %v1586 = vld [vmem:[#allocation2 + $0x1ce4] sm:$0xf]
    %v1587 = vld [vmem:[#allocation2 + $0x1ce8] sm:$0xff]
    %v1588 = vld [vmem:[#allocation2 + $0x1cf0] sm:$0xff]
    %v1589 = vld [vmem:[#allocation2 + $0x1cf8] sm:$0xf]
    %v1590 = vld [vmem:[#allocation2 + $0x1cfc] sm:$0xff]
    %v1591 = vld [vmem:[#allocation2 + $0x1d04] sm:$0xff]
    %v1592 = vld [vmem:[#allocation2 + $0x1d0c] sm:$0xf]
    %v1593 = vld [vmem:[#allocation2 + $0x1d10] sm:$0xff]
    %v1594 = vld [vmem:[#allocation2 + $0x1d18] sm:$0xff]
    %v1595 = vld [vmem:[#allocation2 + $0x1d20] sm:$0xf]
    %v1596 = vld [vmem:[#allocation2 + $0x1d24] sm:$0xff]
    %v1597 = vld [vmem:[#allocation2 + $0x1d2c] sm:$0xff]
    %v1598 = vld [vmem:[#allocation2 + $0x1d34] sm:$0xf]
    %v1599 = vld [vmem:[#allocation2 + $0x1d38] sm:$0xff]
    %v1600 = vld [vmem:[#allocation2 + $0x1d40] sm:$0xff]
    %v1601 = vld [vmem:[#allocation2 + $0x1d48] sm:$0xf]
    %v1602 = vld [vmem:[#allocation2 + $0x1d4c] sm:$0xff]
    %v1603 = vld [vmem:[#allocation2 + $0x1d54] sm:$0xff]
    %v1604 = vld [vmem:[#allocation2 + $0x1d5c] sm:$0xf]
    %v1605 = vld [vmem:[#allocation2 + $0x1d60] sm:$0xff]
    %v1606 = vld [vmem:[#allocation2 + $0x1d68] sm:$0xff]
    %v1607 = vld [vmem:[#allocation2 + $0x1d70] sm:$0xf]
    %v1608 = vld [vmem:[#allocation2 + $0x1d74] sm:$0xff]
    %v1609 = vld [vmem:[#allocation2 + $0x1d7c] sm:$0xff]
    %v1610 = vld [vmem:[#allocation2 + $0x1d84] sm:$0xf]
    %v1611 = vld [vmem:[#allocation2 + $0x1d88] sm:$0xff]
    %v1612 = vld [vmem:[#allocation2 + $0x1d90] sm:$0xff]
    %v1613 = vld [vmem:[#allocation2 + $0x1d98] sm:$0xf]
    %v1614 = vld [vmem:[#allocation2 + $0x1d9c] sm:$0xff]
    %v1615 = vld [vmem:[#allocation2 + $0x1da4] sm:$0xff]
    %v1616 = vld [vmem:[#allocation2 + $0x1dac] sm:$0xf]
    %v1617 = vld [vmem:[#allocation2 + $0x1db0] sm:$0xff]
    %v1618 = vld [vmem:[#allocation2 + $0x1db8] sm:$0xff]
    %v1619 = vld [vmem:[#allocation2 + $0x1dc0] sm:$0xf]
    %v1620 = vld [vmem:[#allocation2 + $0x1dc4] sm:$0xff]
    %v1621 = vld [vmem:[#allocation2 + $0x1dcc] sm:$0xff]
    %v1622 = vld [vmem:[#allocation2 + $0x1dd4] sm:$0xf]
    %v1623 = vld [vmem:[#allocation2 + $0x1dd8] sm:$0xff]
    %v1624 = vld [vmem:[#allocation2 + $0x1de0] sm:$0xff]
    %v1625 = vld [vmem:[#allocation2 + $0x1de8] sm:$0xf]
    %v1626 = vld [vmem:[#allocation2 + $0x1dec] sm:$0xff]
    %v1627 = vld [vmem:[#allocation2 + $0x1df4] sm:$0xff]
    %v1628 = vld [vmem:[#allocation2 + $0x1dfc] sm:$0xf]
    %v1629 = vld [vmem:[#allocation2 + $0x1e00] sm:$0xff]
    %v1630 = vld [vmem:[#allocation2 + $0x1e08] sm:$0xff]
    %v1631 = vld [vmem:[#allocation2 + $0x1e10] sm:$0xf]
    %v1632 = vld [vmem:[#allocation2 + $0x1e14] sm:$0xff]
    %v1633 = vld [vmem:[#allocation2 + $0x1e1c] sm:$0xff]
    %v1634 = vld [vmem:[#allocation2 + $0x1e24] sm:$0xf]
    %v1635 = vld [vmem:[#allocation2 + $0x1e28] sm:$0xff]
    %v1636 = vld [vmem:[#allocation2 + $0x1e30] sm:$0xff]
    %v1637 = vld [vmem:[#allocation2 + $0x1e38] sm:$0xf]
    %v1638 = vld [vmem:[#allocation2 + $0x1e3c] sm:$0xff]
    %v1639 = vld [vmem:[#allocation2 + $0x1e44] sm:$0xff]
    %v1640 = vld [vmem:[#allocation2 + $0x1e4c] sm:$0xf]
    %v1641 = vld [vmem:[#allocation2 + $0x1e50] sm:$0xff]
    %v1642 = vld [vmem:[#allocation2 + $0x1e58] sm:$0xff]
    %v1643 = vld [vmem:[#allocation2 + $0x1e60] sm:$0xf]
    %v1644 = vld [vmem:[#allocation2 + $0x1e64] sm:$0xff]
    %v1645 = vld [vmem:[#allocation2 + $0x1e6c] sm:$0xff]
    %v1646 = vld [vmem:[#allocation2 + $0x1e74] sm:$0xf]
    %v1647 = vld [vmem:[#allocation2 + $0x1e78] sm:$0xff]
    %v1648 = vld [vmem:[#allocation2 + $0x1e80] sm:$0xff]
    %v1649 = vld [vmem:[#allocation2 + $0x1e88] sm:$0xf]
    %v1650 = vld [vmem:[#allocation2 + $0x1e8c] sm:$0xff]
    %v1651 = vld [vmem:[#allocation2 + $0x1e94] sm:$0xff]
    %v1652 = vld [vmem:[#allocation2 + $0x1e9c] sm:$0xf]
    %v1653 = vld [vmem:[#allocation2 + $0x1ea0] sm:$0xff]
    %v1654 = vld [vmem:[#allocation2 + $0x1ea8] sm:$0xff]
    %v1655 = vld [vmem:[#allocation2 + $0x1eb0] sm:$0xf]
    %v1656 = vld [vmem:[#allocation2 + $0x1eb4] sm:$0xff]
    %v1657 = vld [vmem:[#allocation2 + $0x1ebc] sm:$0xff]
    %v1658 = vld [vmem:[#allocation2 + $0x1ec4] sm:$0xf]
    %v1659 = vld [vmem:[#allocation2 + $0x1ec8] sm:$0xff]
    %v1660 = vld [vmem:[#allocation2 + $0x1ed0] sm:$0xff]
    %v1661 = vld [vmem:[#allocation2 + $0x1ed8] sm:$0xf]
    %v1662 = vld [vmem:[#allocation2 + $0x1edc] sm:$0xff]
    %v1663 = vld [vmem:[#allocation2 + $0x1ee4] sm:$0xff]
    %v1664 = vld [vmem:[#allocation2 + $0x1eec] sm:$0xf]
    %v1665 = vld [vmem:[#allocation2 + $0x1ef0] sm:$0xff]
    %v1666 = vld [vmem:[#allocation2 + $0x1ef8] sm:$0xff]
    %v1667 = vld [vmem:[#allocation2 + $0x1f00] sm:$0xf]
    %v1668 = vld [vmem:[#allocation2 + $0x1f04] sm:$0xff]
    %v1669 = vld [vmem:[#allocation2 + $0x1f0c] sm:$0xff]
    %v1670 = vld [vmem:[#allocation2 + $0x1f14] sm:$0xf]
    %v1671 = vld [vmem:[#allocation2 + $0x1f18] sm:$0xff]
    %v1672 = vld [vmem:[#allocation2 + $0x1f20] sm:$0xff]
    %v1673 = vld [vmem:[#allocation2 + $0x1f28] sm:$0xf]
    %v1674 = vld [vmem:[#allocation2 + $0x1f2c] sm:$0xff]
    %v1675 = vld [vmem:[#allocation2 + $0x1f34] sm:$0xff]
    %v1676 = vld [vmem:[#allocation2 + $0x1f3c] sm:$0xf]
    %v1677 = vld [vmem:[#allocation2 + $0x1f40] sm:$0xff]
    %v1678 = vld [vmem:[#allocation2 + $0x1f48] sm:$0xff]
    %v1679 = vld [vmem:[#allocation2 + $0x1f50] sm:$0xf]
    %v1680 = vld [vmem:[#allocation2 + $0x1f54] sm:$0xff]
    %v1681 = vld [vmem:[#allocation2 + $0x1f5c] sm:$0xff]
    %v1682 = vld [vmem:[#allocation2 + $0x1f64] sm:$0xf]
    %v1683 = vld [vmem:[#allocation2 + $0x1f68] sm:$0xff]
    %v1684 = vld [vmem:[#allocation2 + $0x1f70] sm:$0xff]
    %v1685 = vld [vmem:[#allocation2 + $0x1f78] sm:$0xf]
    %v1686 = vld [vmem:[#allocation2 + $0x1f7c] sm:$0xff]
    %v1687 = vld [vmem:[#allocation2 + $0x1f84] sm:$0xff]
    %v1688 = vld [vmem:[#allocation2 + $0x1f8c] sm:$0xf]
    %v1689 = vld [vmem:[#allocation2 + $0x1f90] sm:$0xff]
    %v1690 = vld [vmem:[#allocation2 + $0x1f98] sm:$0xff]
    %v1691 = vld [vmem:[#allocation2 + $0x1fa0] sm:$0xf]
    %v1692 = vld [vmem:[#allocation2 + $0x1fa4] sm:$0xff]
    %v1693 = vld [vmem:[#allocation2 + $0x1fac] sm:$0xff]
    %v1694 = vld [vmem:[#allocation2 + $0x1fb4] sm:$0xf]
    %v1695 = vld [vmem:[#allocation2 + $0x1fb8] sm:$0xff]
    %v1696 = vld [vmem:[#allocation2 + $0x1fc0] sm:$0xff]
    %v1697 = vld [vmem:[#allocation2 + $0x1fc8] sm:$0xf]
    %v1698 = vld [vmem:[#allocation2 + $0x1fcc] sm:$0xff]
    %v1699 = vld [vmem:[#allocation2 + $0x1fd4] sm:$0xff]
    %v1700 = vld [vmem:[#allocation2 + $0x1fdc] sm:$0xf]
    %v1701 = vld [vmem:[#allocation2 + $0x1fe0] sm:$0xff]
    %v1702 = vld [vmem:[#allocation2 + $0x1fe8] sm:$0xff]
    %v1703 = vld [vmem:[#allocation2 + $0x1ff0] sm:$0xf]
    %v1704 = vld [vmem:[#allocation2 + $0x1ff4] sm:$0xff]
    %v1705 = vld [vmem:[#allocation2 + $0x1ffc] sm:$0xff]
    %v1706 = vld [vmem:[#allocation2 + $0x2004] sm:$0xf]
    %v1707 = vld [vmem:[#allocation2 + $0x2008] sm:$0xff]
    %v1708 = vld [vmem:[#allocation2 + $0x2010] sm:$0xff]
    %v1709 = vld [vmem:[#allocation2 + $0x2018] sm:$0xf]
    %v1710 = vld [vmem:[#allocation2 + $0x201c] sm:$0xff]
    %v1711 = vld [vmem:[#allocation2 + $0x2024] sm:$0xff]
    %v1712 = vld [vmem:[#allocation2 + $0x202c] sm:$0xf]
    %v1713 = vld [vmem:[#allocation2 + $0x2030] sm:$0xff]
    %v1714 = vld [vmem:[#allocation2 + $0x2038] sm:$0xff]
    %v1715 = vld [vmem:[#allocation2 + $0x2040] sm:$0xf]
    %v1716 = vld [vmem:[#allocation2 + $0x2044] sm:$0xff]
    %v1717 = vld [vmem:[#allocation2 + $0x204c] sm:$0xff]
    %v1718 = vld [vmem:[#allocation2 + $0x2054] sm:$0xf]
    %v1719 = vld [vmem:[#allocation2 + $0x2058] sm:$0xff]
    %v1720 = vld [vmem:[#allocation2 + $0x2060] sm:$0xff]
    %v1721 = vld [vmem:[#allocation2 + $0x2068] sm:$0xf]
    %v1722 = vld [vmem:[#allocation2 + $0x206c] sm:$0xff]
    %v1723 = vld [vmem:[#allocation2 + $0x2074] sm:$0xff]
    %v1724 = vld [vmem:[#allocation2 + $0x207c] sm:$0xf]
    %v1725 = vld [vmem:[#allocation2 + $0x2080] sm:$0xff]
    %v1726 = vld [vmem:[#allocation2 + $0x2088] sm:$0xff]
    %v1727 = vld [vmem:[#allocation2 + $0x2090] sm:$0xf]
    %v1728 = vld [vmem:[#allocation2 + $0x2094] sm:$0xff]
    %v1729 = vld [vmem:[#allocation2 + $0x209c] sm:$0xff]
    %v1730 = vld [vmem:[#allocation2 + $0x20a4] sm:$0xf]
    %v1731 = vld [vmem:[#allocation2 + $0x20a8] sm:$0xff]
    %v1732 = vld [vmem:[#allocation2 + $0x20b0] sm:$0xff]
    %v1733 = vld [vmem:[#allocation2 + $0x20b8] sm:$0xf]
    %v1734 = vld [vmem:[#allocation2 + $0x20bc] sm:$0xff]
    %v1735 = vld [vmem:[#allocation2 + $0x20c4] sm:$0xff]
    %v1736 = vld [vmem:[#allocation2 + $0x20cc] sm:$0xf]
    %v1737 = vld [vmem:[#allocation2 + $0x20d0] sm:$0xff]
    %v1738 = vld [vmem:[#allocation2 + $0x20d8] sm:$0xff]
    %v1739 = vld [vmem:[#allocation2 + $0x20e0] sm:$0xf]
    %v1740 = vld [vmem:[#allocation2 + $0x20e4] sm:$0xff]
    %v1741 = vld [vmem:[#allocation2 + $0x20ec] sm:$0xff]
    %v1742 = vld [vmem:[#allocation2 + $0x20f4] sm:$0xf]
    %v1743 = vld [vmem:[#allocation2 + $0x20f8] sm:$0xff]
    %v1744 = vld [vmem:[#allocation2 + $0x2100] sm:$0xff]
    %v1745 = vld [vmem:[#allocation2 + $0x2108] sm:$0xf]
    %v1746 = vld [vmem:[#allocation2 + $0x210c] sm:$0xff]
    %v1747 = vld [vmem:[#allocation2 + $0x2114] sm:$0xff]
    %v1748 = vld [vmem:[#allocation2 + $0x211c] sm:$0xf]
    %v1749 = vld [vmem:[#allocation2 + $0x2120] sm:$0xff]
    %v1750 = vld [vmem:[#allocation2 + $0x2128] sm:$0xff]
    %v1751 = vld [vmem:[#allocation2 + $0x2130] sm:$0xf]
    %v1752 = vld [vmem:[#allocation2 + $0x2134] sm:$0xff]
    %v1753 = vld [vmem:[#allocation2 + $0x213c] sm:$0xff]
    %v1754 = vld [vmem:[#allocation2 + $0x2144] sm:$0xf]
    %v1755 = vld [vmem:[#allocation2 + $0x2148] sm:$0xff]
    %v1756 = vld [vmem:[#allocation2 + $0x2150] sm:$0xff]
    %v1757 = vld [vmem:[#allocation2 + $0x2158] sm:$0xf]
    %v1758 = vld [vmem:[#allocation2 + $0x215c] sm:$0xff]
    %v1759 = vld [vmem:[#allocation2 + $0x2164] sm:$0xff]
    %v1760 = vld [vmem:[#allocation2 + $0x216c] sm:$0xf]
    %v1761 = vld [vmem:[#allocation2 + $0x2170] sm:$0xff]
    %v1762 = vld [vmem:[#allocation2 + $0x2178] sm:$0xff]
    %v1763 = vld [vmem:[#allocation2 + $0x2180] sm:$0xf]
    %v1764 = vld [vmem:[#allocation4] sm:$0x1f]
    %v1766 = vlaneseq
    %v1767 = vshrl.u32 %v1766, 7
    %v1768 = vsub.s32 0, %v1767
    %v1769 = vrot.slane %v1764, %v1768
    %v1770 = vlaneseq
    %v1771 = vshrl.u32 %v1770, 7
    %v1772 = vsub.s32 1, %v1771
    %v1773 = vrot.slane %v1764, %v1772
    %v1774 = vlaneseq
    %v1775 = vshrl.u32 %v1774, 7
    %v1776 = vsub.s32 2, %v1775
    %v1777 = vrot.slane %v1764, %v1776
    %v1778 = vlaneseq
    %v1779 = vshrl.u32 %v1778, 7
    %v1780 = vsub.s32 3, %v1779
    %v1781 = vrot.slane %v1764, %v1780
    %v1782 = vlaneseq
    %v1783 = vshrl.u32 %v1782, 7
    %v1784 = vsub.s32 4, %v1783
    %v1785 = vrot.slane %v1764, %v1784
    %v3078 = vunpack.c.l.b16 %v477
    %v3079 = vunpack.c.h.b16 %v477
    %v3080 = vunpack.c.l.b16 %v478
    %v3081 = vunpack.c.h.b16 %v478
    %v3082 = vunpack.c.l.b16 %v479
    %v3083 = vunpack.c.l.b16 %v480
    %v3084 = vunpack.c.h.b16 %v480
    %v3085 = vunpack.c.l.b16 %v481
    %v3086 = vunpack.c.h.b16 %v481
    %v3087 = vunpack.c.l.b16 %v482
    %v3088 = vunpack.c.l.b16 %v483
    %v3089 = vunpack.c.h.b16 %v483
    %v3090 = vunpack.c.l.b16 %v484
    %v3091 = vunpack.c.h.b16 %v484
    %v3092 = vunpack.c.l.b16 %v485
    %v3093 = vunpack.c.l.b16 %v486
    %v3094 = vunpack.c.h.b16 %v486
    %v3095 = vunpack.c.l.b16 %v487
    %v3096 = vunpack.c.h.b16 %v487
    %v3097 = vunpack.c.l.b16 %v488
    %v3098 = vunpack.c.l.b16 %v489
    %v3099 = vunpack.c.h.b16 %v489
    %v3100 = vunpack.c.l.b16 %v490
    %v3101 = vunpack.c.h.b16 %v490
    %v3102 = vunpack.c.l.b16 %v491
    %v3103 = vunpack.c.l.b16 %v492
    %v3104 = vunpack.c.h.b16 %v492
    %v3105 = vunpack.c.l.b16 %v493
    %v3106 = vunpack.c.h.b16 %v493
    %v3107 = vunpack.c.l.b16 %v494
    %v3108 = vunpack.c.l.b16 %v495
    %v3109 = vunpack.c.h.b16 %v495
    %v3110 = vunpack.c.l.b16 %v496
    %v3111 = vunpack.c.h.b16 %v496
    %v3112 = vunpack.c.l.b16 %v497
    %v3113 = vunpack.c.l.b16 %v498
    %v3114 = vunpack.c.h.b16 %v498
    %v3115 = vunpack.c.l.b16 %v499
    %v3116 = vunpack.c.h.b16 %v499
    %v3117 = vunpack.c.l.b16 %v500
    %v3118 = vunpack.c.l.b16 %v501
    %v3119 = vunpack.c.h.b16 %v501
    %v3120 = vunpack.c.l.b16 %v502
    %v3121 = vunpack.c.h.b16 %v502
    %v3122 = vunpack.c.l.b16 %v503
    %v3123 = vunpack.c.l.b16 %v504
    %v3124 = vunpack.c.h.b16 %v504
    %v3125 = vunpack.c.l.b16 %v505
    %v3126 = vunpack.c.h.b16 %v505
    %v3127 = vunpack.c.l.b16 %v506
    %v3128 = vunpack.c.l.b16 %v507
    %v3129 = vunpack.c.h.b16 %v507
    %v3130 = vunpack.c.l.b16 %v508
    %v3131 = vunpack.c.h.b16 %v508
    %v3132 = vunpack.c.l.b16 %v509
    %v3133 = vunpack.c.l.b16 %v510
    %v3134 = vunpack.c.h.b16 %v510
    %v3135 = vunpack.c.l.b16 %v511
    %v3136 = vunpack.c.h.b16 %v511
    %v3137 = vunpack.c.l.b16 %v512
    %v3138 = vunpack.c.l.b16 %v513
    %v3139 = vunpack.c.h.b16 %v513
    %v3140 = vunpack.c.l.b16 %v514
    %v3141 = vunpack.c.h.b16 %v514
    %v3142 = vunpack.c.l.b16 %v515
    %v3143 = vunpack.c.l.b16 %v516
    %v3144 = vunpack.c.h.b16 %v516
    %v3145 = vunpack.c.l.b16 %v517
    %v3146 = vunpack.c.h.b16 %v517
    %v3147 = vunpack.c.l.b16 %v518
    %v3148 = vunpack.c.l.b16 %v519
    %v3149 = vunpack.c.h.b16 %v519
    %v3150 = vunpack.c.l.b16 %v520
    %v3151 = vunpack.c.h.b16 %v520
    %v3152 = vunpack.c.l.b16 %v521
    %v3153 = vunpack.c.l.b16 %v522
    %v3154 = vunpack.c.h.b16 %v522
    %v3155 = vunpack.c.l.b16 %v523
    %v3156 = vunpack.c.h.b16 %v523
    %v3157 = vunpack.c.l.b16 %v524
    %v3158 = vunpack.c.l.b16 %v525
    %v3159 = vunpack.c.h.b16 %v525
    %v3160 = vunpack.c.l.b16 %v526
    %v3161 = vunpack.c.h.b16 %v526
    %v3162 = vunpack.c.l.b16 %v527
    %v3163 = vunpack.c.l.b16 %v528
    %v3164 = vunpack.c.h.b16 %v528
    %v3165 = vunpack.c.l.b16 %v529
    %v3166 = vunpack.c.h.b16 %v529
    %v3167 = vunpack.c.l.b16 %v530
    %v3168 = vunpack.c.l.b16 %v531
    %v3169 = vunpack.c.h.b16 %v531
    %v3170 = vunpack.c.l.b16 %v532
    %v3171 = vunpack.c.h.b16 %v532
    %v3172 = vunpack.c.l.b16 %v533
    %v3173 = vunpack.c.l.b16 %v534
    %v3174 = vunpack.c.h.b16 %v534
    %v3175 = vunpack.c.l.b16 %v535
    %v3176 = vunpack.c.h.b16 %v535
    %v3177 = vunpack.c.l.b16 %v536
    %v3178 = vunpack.c.l.b16 %v537
    %v3179 = vunpack.c.h.b16 %v537
    %v3180 = vunpack.c.l.b16 %v538
    %v3181 = vunpack.c.h.b16 %v538
    %v3182 = vunpack.c.l.b16 %v539
    %v3183 = vunpack.c.l.b16 %v540
    %v3184 = vunpack.c.h.b16 %v540
    %v3185 = vunpack.c.l.b16 %v541
    %v3186 = vunpack.c.h.b16 %v541
    %v3187 = vunpack.c.l.b16 %v542
    %v3188 = vunpack.c.l.b16 %v543
    %v3189 = vunpack.c.h.b16 %v543
    %v3190 = vunpack.c.l.b16 %v544
    %v3191 = vunpack.c.h.b16 %v544
    %v3192 = vunpack.c.l.b16 %v545
    %v3193 = vunpack.c.l.b16 %v546
    %v3194 = vunpack.c.h.b16 %v546
    %v3195 = vunpack.c.l.b16 %v547
    %v3196 = vunpack.c.h.b16 %v547
    %v3197 = vunpack.c.l.b16 %v548
    %v3198 = vunpack.c.l.b16 %v549
    %v3199 = vunpack.c.h.b16 %v549
    %v3200 = vunpack.c.l.b16 %v550
    %v3201 = vunpack.c.h.b16 %v550
    %v3202 = vunpack.c.l.b16 %v551
    %v3203 = vunpack.c.l.b16 %v552
    %v3204 = vunpack.c.h.b16 %v552
    %v3205 = vunpack.c.l.b16 %v553
    %v3206 = vunpack.c.h.b16 %v553
    %v3207 = vunpack.c.l.b16 %v554
    %v3208 = vunpack.c.l.b16 %v555
    %v3209 = vunpack.c.h.b16 %v555
    %v3210 = vunpack.c.l.b16 %v556
    %v3211 = vunpack.c.h.b16 %v556
    %v3212 = vunpack.c.l.b16 %v557
    %v3213 = vunpack.c.l.b16 %v558
    %v3214 = vunpack.c.h.b16 %v558
    %v3215 = vunpack.c.l.b16 %v559
    %v3216 = vunpack.c.h.b16 %v559
    %v3217 = vunpack.c.l.b16 %v560
    %v3218 = vunpack.c.l.b16 %v561
    %v3219 = vunpack.c.h.b16 %v561
    %v3220 = vunpack.c.l.b16 %v562
    %v3221 = vunpack.c.h.b16 %v562
    %v3222 = vunpack.c.l.b16 %v563
    %v3223 = vunpack.c.l.b16 %v564
    %v3224 = vunpack.c.h.b16 %v564
    %v3225 = vunpack.c.l.b16 %v565
    %v3226 = vunpack.c.h.b16 %v565
    %v3227 = vunpack.c.l.b16 %v566
    %v3228 = vunpack.c.l.b16 %v567
    %v3229 = vunpack.c.h.b16 %v567
    %v3230 = vunpack.c.l.b16 %v568
    %v3231 = vunpack.c.h.b16 %v568
    %v3232 = vunpack.c.l.b16 %v569
    %v3233 = vunpack.c.l.b16 %v570
    %v3234 = vunpack.c.h.b16 %v570
    %v3235 = vunpack.c.l.b16 %v571
    %v3236 = vunpack.c.h.b16 %v571
    %v3237 = vunpack.c.l.b16 %v572
    %v3238 = vunpack.c.l.b16 %v573
    %v3239 = vunpack.c.h.b16 %v573
    %v3240 = vunpack.c.l.b16 %v574
    %v3241 = vunpack.c.h.b16 %v574
    %v3242 = vunpack.c.l.b16 %v575
    %v3243 = vunpack.c.l.b16 %v576
    %v3244 = vunpack.c.h.b16 %v576
    %v3245 = vunpack.c.l.b16 %v577
    %v3246 = vunpack.c.h.b16 %v577
    %v3247 = vunpack.c.l.b16 %v578
    %v3248 = vunpack.c.l.b16 %v579
    %v3249 = vunpack.c.h.b16 %v579
    %v3250 = vunpack.c.l.b16 %v580
    %v3251 = vunpack.c.h.b16 %v580
    %v3252 = vunpack.c.l.b16 %v581
    %v3253 = vunpack.c.l.b16 %v582
    %v3254 = vunpack.c.h.b16 %v582
    %v3255 = vunpack.c.l.b16 %v583
    %v3256 = vunpack.c.h.b16 %v583
    %v3257 = vunpack.c.l.b16 %v584
    %v3258 = vunpack.c.l.b16 %v585
    %v3259 = vunpack.c.h.b16 %v585
    %v3260 = vunpack.c.l.b16 %v586
    %v3261 = vunpack.c.h.b16 %v586
    %v3262 = vunpack.c.l.b16 %v587
    %v3263 = vunpack.c.l.b16 %v588
    %v3264 = vunpack.c.h.b16 %v588
    %v3265 = vunpack.c.l.b16 %v589
    %v3266 = vunpack.c.h.b16 %v589
    %v3267 = vunpack.c.l.b16 %v590
    %v3268 = vunpack.c.l.b16 %v591
    %v3269 = vunpack.c.h.b16 %v591
    %v3270 = vunpack.c.l.b16 %v592
    %v3271 = vunpack.c.h.b16 %v592
    %v3272 = vunpack.c.l.b16 %v593
    %v3273 = vunpack.c.l.b16 %v594
    %v3274 = vunpack.c.h.b16 %v594
    %v3275 = vunpack.c.l.b16 %v595
    %v3276 = vunpack.c.h.b16 %v595
    %v3277 = vunpack.c.l.b16 %v596
    %v3278 = vunpack.c.l.b16 %v597
    %v3279 = vunpack.c.h.b16 %v597
    %v3280 = vunpack.c.l.b16 %v598
    %v3281 = vunpack.c.h.b16 %v598
    %v3282 = vunpack.c.l.b16 %v599
    %v3283 = vunpack.c.l.b16 %v600
    %v3284 = vunpack.c.h.b16 %v600
    %v3285 = vunpack.c.l.b16 %v601
    %v3286 = vunpack.c.h.b16 %v601
    %v3287 = vunpack.c.l.b16 %v602
    %v3288 = vunpack.c.l.b16 %v603
    %v3289 = vunpack.c.h.b16 %v603
    %v3290 = vunpack.c.l.b16 %v604
    %v3291 = vunpack.c.h.b16 %v604
    %v3292 = vunpack.c.l.b16 %v605
    %v3293 = vunpack.c.l.b16 %v606
    %v3294 = vunpack.c.h.b16 %v606
    %v3295 = vunpack.c.l.b16 %v607
    %v3296 = vunpack.c.h.b16 %v607
    %v3297 = vunpack.c.l.b16 %v608
    %v3298 = vunpack.c.l.b16 %v609
    %v3299 = vunpack.c.h.b16 %v609
    %v3300 = vunpack.c.l.b16 %v610
    %v3301 = vunpack.c.h.b16 %v610
    %v3302 = vunpack.c.l.b16 %v611
    %v3303 = vunpack.c.l.b16 %v612
    %v3304 = vunpack.c.h.b16 %v612
    %v3305 = vunpack.c.l.b16 %v613
    %v3306 = vunpack.c.h.b16 %v613
    %v3307 = vunpack.c.l.b16 %v614
    %v3308 = vunpack.c.l.b16 %v615
    %v3309 = vunpack.c.h.b16 %v615
    %v3310 = vunpack.c.l.b16 %v616
    %v3311 = vunpack.c.h.b16 %v616
    %v3312 = vunpack.c.l.b16 %v617
    %v3313 = vunpack.c.l.b16 %v618
    %v3314 = vunpack.c.h.b16 %v618
    %v3315 = vunpack.c.l.b16 %v619
    %v3316 = vunpack.c.h.b16 %v619
    %v3317 = vunpack.c.l.b16 %v620
    %v3318 = vunpack.c.l.b16 %v621
    %v3319 = vunpack.c.h.b16 %v621
    %v3320 = vunpack.c.l.b16 %v622
    %v3321 = vunpack.c.h.b16 %v622
    %v3322 = vunpack.c.l.b16 %v623
    %v3323 = vunpack.c.l.b16 %v624
    %v3324 = vunpack.c.h.b16 %v624
    %v3325 = vunpack.c.l.b16 %v625
    %v3326 = vunpack.c.h.b16 %v625
    %v3327 = vunpack.c.l.b16 %v626
    %v3328 = vunpack.c.l.b16 %v627
    %v3329 = vunpack.c.h.b16 %v627
    %v3330 = vunpack.c.l.b16 %v628
    %v3331 = vunpack.c.h.b16 %v628
    %v3332 = vunpack.c.l.b16 %v629
    %v3333 = vunpack.c.l.b16 %v630
    %v3334 = vunpack.c.h.b16 %v630
    %v3335 = vunpack.c.l.b16 %v631
    %v3336 = vunpack.c.h.b16 %v631
    %v3337 = vunpack.c.l.b16 %v632
    %v3338 = vunpack.c.l.b16 %v633
    %v3339 = vunpack.c.h.b16 %v633
    %v3340 = vunpack.c.l.b16 %v634
    %v3341 = vunpack.c.h.b16 %v634
    %v3342 = vunpack.c.l.b16 %v635
    %v3343 = vunpack.c.l.b16 %v636
    %v3344 = vunpack.c.h.b16 %v636
    %v3345 = vunpack.c.l.b16 %v637
    %v3346 = vunpack.c.h.b16 %v637
    %v3347 = vunpack.c.l.b16 %v638
    %v3348 = vunpack.c.l.b16 %v639
    %v3349 = vunpack.c.h.b16 %v639
    %v3350 = vunpack.c.l.b16 %v640
    %v3351 = vunpack.c.h.b16 %v640
    %v3352 = vunpack.c.l.b16 %v641
    %v3353 = vunpack.c.l.b16 %v642
    %v3354 = vunpack.c.h.b16 %v642
    %v3355 = vunpack.c.l.b16 %v643
    %v3356 = vunpack.c.h.b16 %v643
    %v3357 = vunpack.c.l.b16 %v644
    %v3358 = vunpack.c.l.b16 %v645
    %v3359 = vunpack.c.h.b16 %v645
    %v3360 = vunpack.c.l.b16 %v646
    %v3361 = vunpack.c.h.b16 %v646
    %v3362 = vunpack.c.l.b16 %v647
    %v3363 = vunpack.c.l.b16 %v648
    %v3364 = vunpack.c.h.b16 %v648
    %v3365 = vunpack.c.l.b16 %v649
    %v3366 = vunpack.c.h.b16 %v649
    %v3367 = vunpack.c.l.b16 %v650
    %v3368 = vunpack.c.l.b16 %v651
    %v3369 = vunpack.c.h.b16 %v651
    %v3370 = vunpack.c.l.b16 %v652
    %v3371 = vunpack.c.h.b16 %v652
    %v3372 = vunpack.c.l.b16 %v653
    %v3373 = vunpack.c.l.b16 %v654
    %v3374 = vunpack.c.h.b16 %v654
    %v3375 = vunpack.c.l.b16 %v655
    %v3376 = vunpack.c.h.b16 %v655
    %v3377 = vunpack.c.l.b16 %v656
    %v3378 = vunpack.c.l.b16 %v657
    %v3379 = vunpack.c.h.b16 %v657
    %v3380 = vunpack.c.l.b16 %v658
    %v3381 = vunpack.c.h.b16 %v658
    %v3382 = vunpack.c.l.b16 %v659
    %v3383 = vunpack.c.l.b16 %v660
    %v3384 = vunpack.c.h.b16 %v660
    %v3385 = vunpack.c.l.b16 %v661
    %v3386 = vunpack.c.h.b16 %v661
    %v3387 = vunpack.c.l.b16 %v662
    %v3388 = vunpack.c.l.b16 %v663
    %v3389 = vunpack.c.h.b16 %v663
    %v3390 = vunpack.c.l.b16 %v664
    %v3391 = vunpack.c.h.b16 %v664
    %v3392 = vunpack.c.l.b16 %v665
    %v3393 = vunpack.c.l.b16 %v666
    %v3394 = vunpack.c.h.b16 %v666
    %v3395 = vunpack.c.l.b16 %v667
    %v3396 = vunpack.c.h.b16 %v667
    %v3397 = vunpack.c.l.b16 %v668
    %v3398 = vunpack.c.l.b16 %v669
    %v3399 = vunpack.c.h.b16 %v669
    %v3400 = vunpack.c.l.b16 %v670
    %v3401 = vunpack.c.h.b16 %v670
    %v3402 = vunpack.c.l.b16 %v671
    %v3403 = vunpack.c.l.b16 %v672
    %v3404 = vunpack.c.h.b16 %v672
    %v3405 = vunpack.c.l.b16 %v673
    %v3406 = vunpack.c.h.b16 %v673
    %v3407 = vunpack.c.l.b16 %v674
    %v3408 = vunpack.c.l.b16 %v675
    %v3409 = vunpack.c.h.b16 %v675
    %v3410 = vunpack.c.l.b16 %v676
    %v3411 = vunpack.c.h.b16 %v676
    %v3412 = vunpack.c.l.b16 %v677
    %v3413 = vunpack.c.l.b16 %v678
    %v3414 = vunpack.c.h.b16 %v678
    %v3415 = vunpack.c.l.b16 %v679
    %v3416 = vunpack.c.h.b16 %v679
    %v3417 = vunpack.c.l.b16 %v680
    %v3418 = vunpack.c.l.b16 %v681
    %v3419 = vunpack.c.h.b16 %v681
    %v3420 = vunpack.c.l.b16 %v682
    %v3421 = vunpack.c.h.b16 %v682
    %v3422 = vunpack.c.l.b16 %v683
    %v3423 = vunpack.c.l.b16 %v684
    %v3424 = vunpack.c.h.b16 %v684
    %v3425 = vunpack.c.l.b16 %v685
    %v3426 = vunpack.c.h.b16 %v685
    %v3427 = vunpack.c.l.b16 %v686
    %v3428 = vunpack.c.l.b16 %v687
    %v3429 = vunpack.c.h.b16 %v687
    %v3430 = vunpack.c.l.b16 %v688
    %v3431 = vunpack.c.h.b16 %v688
    %v3432 = vunpack.c.l.b16 %v689
    %v3433 = vunpack.c.l.b16 %v690
    %v3434 = vunpack.c.h.b16 %v690
    %v3435 = vunpack.c.l.b16 %v691
    %v3436 = vunpack.c.h.b16 %v691
    %v3437 = vunpack.c.l.b16 %v692
    %v3438 = vunpack.c.l.b16 %v693
    %v3439 = vunpack.c.h.b16 %v693
    %v3440 = vunpack.c.l.b16 %v694
    %v3441 = vunpack.c.h.b16 %v694
    %v3442 = vunpack.c.l.b16 %v695
    %v3443 = vunpack.c.l.b16 %v696
    %v3444 = vunpack.c.h.b16 %v696
    %v3445 = vunpack.c.l.b16 %v697
    %v3446 = vunpack.c.h.b16 %v697
    %v3447 = vunpack.c.l.b16 %v698
    %v3448 = vunpack.c.l.b16 %v699
    %v3449 = vunpack.c.h.b16 %v699
    %v3450 = vunpack.c.l.b16 %v700
    %v3451 = vunpack.c.h.b16 %v700
    %v3452 = vunpack.c.l.b16 %v701
    %v3453 = vunpack.c.l.b16 %v702
    %v3454 = vunpack.c.h.b16 %v702
    %v3455 = vunpack.c.l.b16 %v703
    %v3456 = vunpack.c.h.b16 %v703
    %v3457 = vunpack.c.l.b16 %v704
    %v3458 = vunpack.c.l.b16 %v705
    %v3459 = vunpack.c.h.b16 %v705
    %v3460 = vunpack.c.l.b16 %v706
    %v3461 = vunpack.c.h.b16 %v706
    %v3462 = vunpack.c.l.b16 %v707
    %v3463 = vunpack.c.l.b16 %v708
    %v3464 = vunpack.c.h.b16 %v708
    %v3465 = vunpack.c.l.b16 %v709
    %v3466 = vunpack.c.h.b16 %v709
    %v3467 = vunpack.c.l.b16 %v710
    %v3468 = vunpack.c.l.b16 %v711
    %v3469 = vunpack.c.h.b16 %v711
    %v3470 = vunpack.c.l.b16 %v712
    %v3471 = vunpack.c.h.b16 %v712
    %v3472 = vunpack.c.l.b16 %v713
    %v3473 = vunpack.c.l.b16 %v714
    %v3474 = vunpack.c.h.b16 %v714
    %v3475 = vunpack.c.l.b16 %v715
    %v3476 = vunpack.c.h.b16 %v715
    %v3477 = vunpack.c.l.b16 %v716
    %v3478 = vunpack.c.l.b16 %v717
    %v3479 = vunpack.c.h.b16 %v717
    %v3480 = vunpack.c.l.b16 %v718
    %v3481 = vunpack.c.h.b16 %v718
    %v3482 = vunpack.c.l.b16 %v719
    %v3483 = vunpack.c.l.b16 %v720
    %v3484 = vunpack.c.h.b16 %v720
    %v3485 = vunpack.c.l.b16 %v721
    %v3486 = vunpack.c.h.b16 %v721
    %v3487 = vunpack.c.l.b16 %v722
    %v3488 = vunpack.c.l.b16 %v723
    %v3489 = vunpack.c.h.b16 %v723
    %v3490 = vunpack.c.l.b16 %v724
    %v3491 = vunpack.c.h.b16 %v724
    %v3492 = vunpack.c.l.b16 %v725
    %v3493 = vunpack.c.l.b16 %v726
    %v3494 = vunpack.c.h.b16 %v726
    %v3495 = vunpack.c.l.b16 %v727
    %v3496 = vunpack.c.h.b16 %v727
    %v3497 = vunpack.c.l.b16 %v728
    %v3498 = vunpack.c.l.b16 %v729
    %v3499 = vunpack.c.h.b16 %v729
    %v3500 = vunpack.c.l.b16 %v730
    %v3501 = vunpack.c.h.b16 %v730
    %v3502 = vunpack.c.l.b16 %v731
    %v3503 = vunpack.c.l.b16 %v732
    %v3504 = vunpack.c.h.b16 %v732
    %v3505 = vunpack.c.l.b16 %v733
    %v3506 = vunpack.c.h.b16 %v733
    %v3507 = vunpack.c.l.b16 %v734
    %v3508 = vunpack.c.l.b16 %v735
    %v3509 = vunpack.c.h.b16 %v735
    %v3510 = vunpack.c.l.b16 %v736
    %v3511 = vunpack.c.h.b16 %v736
    %v3512 = vunpack.c.l.b16 %v737
    %v3513 = vunpack.c.l.b16 %v738
    %v3514 = vunpack.c.h.b16 %v738
    %v3515 = vunpack.c.l.b16 %v739
    %v3516 = vunpack.c.h.b16 %v739
    %v3517 = vunpack.c.l.b16 %v740
    %v3518 = vunpack.c.l.b16 %v741
    %v3519 = vunpack.c.h.b16 %v741
    %v3520 = vunpack.c.l.b16 %v742
    %v3521 = vunpack.c.h.b16 %v742
    %v3522 = vunpack.c.l.b16 %v743
    %v3523 = vunpack.c.l.b16 %v744
    %v3524 = vunpack.c.h.b16 %v744
    %v3525 = vunpack.c.l.b16 %v745
    %v3526 = vunpack.c.h.b16 %v745
    %v3527 = vunpack.c.l.b16 %v746
    %v3528 = vunpack.c.l.b16 %v747
    %v3529 = vunpack.c.h.b16 %v747
    %v3530 = vunpack.c.l.b16 %v748
    %v3531 = vunpack.c.h.b16 %v748
    %v3532 = vunpack.c.l.b16 %v749
    %v3533 = vunpack.c.l.b16 %v750
    %v3534 = vunpack.c.h.b16 %v750
    %v3535 = vunpack.c.l.b16 %v751
    %v3536 = vunpack.c.h.b16 %v751
    %v3537 = vunpack.c.l.b16 %v752
    %v3538 = vunpack.c.l.b16 %v753
    %v3539 = vunpack.c.h.b16 %v753
    %v3540 = vunpack.c.l.b16 %v754
    %v3541 = vunpack.c.h.b16 %v754
    %v3542 = vunpack.c.l.b16 %v755
    %v3543 = vunpack.c.l.b16 %v756
    %v3544 = vunpack.c.h.b16 %v756
    %v3545 = vunpack.c.l.b16 %v757
    %v3546 = vunpack.c.h.b16 %v757
    %v3547 = vunpack.c.l.b16 %v758
    %v3548 = vunpack.c.l.b16 %v759
    %v3549 = vunpack.c.h.b16 %v759
    %v3550 = vunpack.c.l.b16 %v760
    %v3551 = vunpack.c.h.b16 %v760
    %v3552 = vunpack.c.l.b16 %v761
    %v3553 = vunpack.c.l.b16 %v762
    %v3554 = vunpack.c.h.b16 %v762
    %v3555 = vunpack.c.l.b16 %v763
    %v3556 = vunpack.c.h.b16 %v763
    %v3557 = vunpack.c.l.b16 %v764
    %v3558 = vunpack.c.l.b16 %v765
    %v3559 = vunpack.c.h.b16 %v765
    %v3560 = vunpack.c.l.b16 %v766
    %v3561 = vunpack.c.h.b16 %v766
    %v3562 = vunpack.c.l.b16 %v767
    %v3563 = vunpack.c.l.b16 %v768
    %v3564 = vunpack.c.h.b16 %v768
    %v3565 = vunpack.c.l.b16 %v769
    %v3566 = vunpack.c.h.b16 %v769
    %v3567 = vunpack.c.l.b16 %v770
    %v3568 = vunpack.c.l.b16 %v771
    %v3569 = vunpack.c.h.b16 %v771
    %v3570 = vunpack.c.l.b16 %v772
    %v3571 = vunpack.c.h.b16 %v772
    %v3572 = vunpack.c.l.b16 %v773
    %v3573 = vunpack.c.l.b16 %v774
    %v3574 = vunpack.c.h.b16 %v774
    %v3575 = vunpack.c.l.b16 %v775
    %v3576 = vunpack.c.h.b16 %v775
    %v3577 = vunpack.c.l.b16 %v776
    %v3578 = vunpack.c.l.b16 %v777
    %v3579 = vunpack.c.h.b16 %v777
    %v3580 = vunpack.c.l.b16 %v778
    %v3581 = vunpack.c.h.b16 %v778
    %v3582 = vunpack.c.l.b16 %v779
    %v3583 = vunpack.c.l.b16 %v780
    %v3584 = vunpack.c.h.b16 %v780
    %v3585 = vunpack.c.l.b16 %v781
    %v3586 = vunpack.c.h.b16 %v781
    %v3587 = vunpack.c.l.b16 %v782
    %v3588 = vunpack.c.l.b16 %v783
    %v3589 = vunpack.c.h.b16 %v783
    %v3590 = vunpack.c.l.b16 %v784
    %v3591 = vunpack.c.h.b16 %v784
    %v3592 = vunpack.c.l.b16 %v785
    %v3593 = vunpack.c.l.b16 %v786
    %v3594 = vunpack.c.h.b16 %v786
    %v3595 = vunpack.c.l.b16 %v787
    %v3596 = vunpack.c.h.b16 %v787
    %v3597 = vunpack.c.l.b16 %v788
    %v3598 = vunpack.c.l.b16 %v789
    %v3599 = vunpack.c.h.b16 %v789
    %v3600 = vunpack.c.l.b16 %v790
    %v3601 = vunpack.c.h.b16 %v790
    %v3602 = vunpack.c.l.b16 %v791
    %v3603 = vunpack.c.l.b16 %v792
    %v3604 = vunpack.c.h.b16 %v792
    %v3605 = vunpack.c.l.b16 %v793
    %v3606 = vunpack.c.h.b16 %v793
    %v3607 = vunpack.c.l.b16 %v794
    %v3608 = vunpack.c.l.b16 %v795
    %v3609 = vunpack.c.h.b16 %v795
    %v3610 = vunpack.c.l.b16 %v796
    %v3611 = vunpack.c.h.b16 %v796
    %v3612 = vunpack.c.l.b16 %v797
    %v3613 = vunpack.c.l.b16 %v798
    %v3614 = vunpack.c.h.b16 %v798
    %v3615 = vunpack.c.l.b16 %v799
    %v3616 = vunpack.c.h.b16 %v799
    %v3617 = vunpack.c.l.b16 %v800
    %v3618 = vunpack.c.l.b16 %v801
    %v3619 = vunpack.c.h.b16 %v801
    %v3620 = vunpack.c.l.b16 %v802
    %v3621 = vunpack.c.h.b16 %v802
    %v3622 = vunpack.c.l.b16 %v803
    %v3623 = vunpack.c.l.b16 %v804
    %v3624 = vunpack.c.h.b16 %v804
    %v3625 = vunpack.c.l.b16 %v805
    %v3626 = vunpack.c.h.b16 %v805
    %v3627 = vunpack.c.l.b16 %v806
    %v3628 = vunpack.c.l.b16 %v807
    %v3629 = vunpack.c.h.b16 %v807
    %v3630 = vunpack.c.l.b16 %v808
    %v3631 = vunpack.c.h.b16 %v808
    %v3632 = vunpack.c.l.b16 %v809
    %v3633 = vunpack.c.l.b16 %v810
    %v3634 = vunpack.c.h.b16 %v810
    %v3635 = vunpack.c.l.b16 %v811
    %v3636 = vunpack.c.h.b16 %v811
    %v3637 = vunpack.c.l.b16 %v812
    %v3638 = vunpack.c.l.b16 %v813
    %v3639 = vunpack.c.h.b16 %v813
    %v3640 = vunpack.c.l.b16 %v814
    %v3641 = vunpack.c.h.b16 %v814
    %v3642 = vunpack.c.l.b16 %v815
    %v3643 = vunpack.c.l.b16 %v816
    %v3644 = vunpack.c.h.b16 %v816
    %v3645 = vunpack.c.l.b16 %v817
    %v3646 = vunpack.c.h.b16 %v817
    %v3647 = vunpack.c.l.b16 %v818
    %v3648 = vunpack.c.l.b16 %v819
    %v3649 = vunpack.c.h.b16 %v819
    %v3650 = vunpack.c.l.b16 %v820
    %v3651 = vunpack.c.h.b16 %v820
    %v3652 = vunpack.c.l.b16 %v821
    %v3653 = vunpack.c.l.b16 %v822
    %v3654 = vunpack.c.h.b16 %v822
    %v3655 = vunpack.c.l.b16 %v823
    %v3656 = vunpack.c.h.b16 %v823
    %v3657 = vunpack.c.l.b16 %v824
    %v3658 = vunpack.c.l.b16 %v825
    %v3659 = vunpack.c.h.b16 %v825
    %v3660 = vunpack.c.l.b16 %v826
    %v3661 = vunpack.c.h.b16 %v826
    %v3662 = vunpack.c.l.b16 %v827
    %v3663 = vunpack.c.l.b16 %v828
    %v3664 = vunpack.c.h.b16 %v828
    %v3665 = vunpack.c.l.b16 %v829
    %v3666 = vunpack.c.h.b16 %v829
    %v3667 = vunpack.c.l.b16 %v830
    %v3668 = vunpack.c.l.b16 %v831
    %v3669 = vunpack.c.h.b16 %v831
    %v3670 = vunpack.c.l.b16 %v832
    %v3671 = vunpack.c.h.b16 %v832
    %v3672 = vunpack.c.l.b16 %v833
    %v3673 = vunpack.c.l.b16 %v834
    %v3674 = vunpack.c.h.b16 %v834
    %v3675 = vunpack.c.l.b16 %v835
    %v3676 = vunpack.c.h.b16 %v835
    %v3677 = vunpack.c.l.b16 %v836
    %v3678 = vunpack.c.l.b16 %v837
    %v3679 = vunpack.c.h.b16 %v837
    %v3680 = vunpack.c.l.b16 %v838
    %v3681 = vunpack.c.h.b16 %v838
    %v3682 = vunpack.c.l.b16 %v839
    %v3683 = vunpack.c.l.b16 %v840
    %v3684 = vunpack.c.h.b16 %v840
    %v3685 = vunpack.c.l.b16 %v841
    %v3686 = vunpack.c.h.b16 %v841
    %v3687 = vunpack.c.l.b16 %v842
    %v3688 = vunpack.c.l.b16 %v843
    %v3689 = vunpack.c.h.b16 %v843
    %v3690 = vunpack.c.l.b16 %v844
    %v3691 = vunpack.c.h.b16 %v844
    %v3692 = vunpack.c.l.b16 %v845
    %v3693 = vunpack.c.l.b16 %v846
    %v3694 = vunpack.c.h.b16 %v846
    %v3695 = vunpack.c.l.b16 %v847
    %v3696 = vunpack.c.h.b16 %v847
    %v3697 = vunpack.c.l.b16 %v848
    %v3698 = vunpack.c.l.b16 %v849
    %v3699 = vunpack.c.h.b16 %v849
    %v3700 = vunpack.c.l.b16 %v850
    %v3701 = vunpack.c.h.b16 %v850
    %v3702 = vunpack.c.l.b16 %v851
    %v3703 = vunpack.c.l.b16 %v852
    %v3704 = vunpack.c.h.b16 %v852
    %v3705 = vunpack.c.l.b16 %v853
    %v3706 = vunpack.c.h.b16 %v853
    %v3707 = vunpack.c.l.b16 %v854
    %v3708 = vunpack.c.l.b16 %v855
    %v3709 = vunpack.c.h.b16 %v855
    %v3710 = vunpack.c.l.b16 %v856
    %v3711 = vunpack.c.h.b16 %v856
    %v3712 = vunpack.c.l.b16 %v857
    %v3713 = vunpack.c.l.b16 %v858
    %v3714 = vunpack.c.h.b16 %v858
    %v3715 = vunpack.c.l.b16 %v859
    %v3716 = vunpack.c.h.b16 %v859
    %v3717 = vunpack.c.l.b16 %v860
    %v3718 = vunpack.c.l.b16 %v861
    %v3719 = vunpack.c.h.b16 %v861
    %v3720 = vunpack.c.l.b16 %v862
    %v3721 = vunpack.c.h.b16 %v862
    %v3722 = vunpack.c.l.b16 %v863
    %v3723 = vunpack.c.l.b16 %v864
    %v3724 = vunpack.c.h.b16 %v864
    %v3725 = vunpack.c.l.b16 %v865
    %v3726 = vunpack.c.h.b16 %v865
    %v3727 = vunpack.c.l.b16 %v866
    %v3728 = vunpack.c.l.b16 %v867
    %v3729 = vunpack.c.h.b16 %v867
    %v3730 = vunpack.c.l.b16 %v868
    %v3731 = vunpack.c.h.b16 %v868
    %v3732 = vunpack.c.l.b16 %v869
    %v3733 = vunpack.c.l.b16 %v870
    %v3734 = vunpack.c.h.b16 %v870
    %v3735 = vunpack.c.l.b16 %v871
    %v3736 = vunpack.c.h.b16 %v871
    %v3737 = vunpack.c.l.b16 %v872
    %v3738 = vunpack.c.l.b16 %v873
    %v3739 = vunpack.c.h.b16 %v873
    %v3740 = vunpack.c.l.b16 %v874
    %v3741 = vunpack.c.h.b16 %v874
    %v3742 = vunpack.c.l.b16 %v875
    %v3743 = vunpack.c.l.b16 %v876
    %v3744 = vunpack.c.h.b16 %v876
    %v3745 = vunpack.c.l.b16 %v877
    %v3746 = vunpack.c.h.b16 %v877
    %v3747 = vunpack.c.l.b16 %v878
    %v3748 = vunpack.c.l.b16 %v879
    %v3749 = vunpack.c.h.b16 %v879
    %v3750 = vunpack.c.l.b16 %v880
    %v3751 = vunpack.c.h.b16 %v880
    %v3752 = vunpack.c.l.b16 %v881
    %v3753 = vunpack.c.l.b16 %v882
    %v3754 = vunpack.c.h.b16 %v882
    %v3755 = vunpack.c.l.b16 %v883
    %v3756 = vunpack.c.h.b16 %v883
    %v3757 = vunpack.c.l.b16 %v884
    %v3758 = vunpack.c.l.b16 %v885
    %v3759 = vunpack.c.h.b16 %v885
    %v3760 = vunpack.c.l.b16 %v886
    %v3761 = vunpack.c.h.b16 %v886
    %v3762 = vunpack.c.l.b16 %v887
    %v3763 = vunpack.c.l.b16 %v888
    %v3764 = vunpack.c.h.b16 %v888
    %v3765 = vunpack.c.l.b16 %v889
    %v3766 = vunpack.c.h.b16 %v889
    %v3767 = vunpack.c.l.b16 %v890
    %v3768 = vunpack.c.l.b16 %v891
    %v3769 = vunpack.c.h.b16 %v891
    %v3770 = vunpack.c.l.b16 %v892
    %v3771 = vunpack.c.h.b16 %v892
    %v3772 = vunpack.c.l.b16 %v893
    %v3773 = vunpack.c.l.b16 %v894
    %v3774 = vunpack.c.h.b16 %v894
    %v3775 = vunpack.c.l.b16 %v895
    %v3776 = vunpack.c.h.b16 %v895
    %v3777 = vunpack.c.l.b16 %v896
    %v3778 = vunpack.c.l.b16 %v897
    %v3779 = vunpack.c.h.b16 %v897
    %v3780 = vunpack.c.l.b16 %v898
    %v3781 = vunpack.c.h.b16 %v898
    %v3782 = vunpack.c.l.b16 %v899
    %v3783 = vunpack.c.l.b16 %v900
    %v3784 = vunpack.c.h.b16 %v900
    %v3785 = vunpack.c.l.b16 %v901
    %v3786 = vunpack.c.h.b16 %v901
    %v3787 = vunpack.c.l.b16 %v902
    %v3788 = vunpack.c.l.b16 %v903
    %v3789 = vunpack.c.h.b16 %v903
    %v3790 = vunpack.c.l.b16 %v904
    %v3791 = vunpack.c.h.b16 %v904
    %v3792 = vunpack.c.l.b16 %v905
    %v3793 = vunpack.c.l.b16 %v906
    %v3794 = vunpack.c.h.b16 %v906
    %v3795 = vunpack.c.l.b16 %v907
    %v3796 = vunpack.c.h.b16 %v907
    %v3797 = vunpack.c.l.b16 %v908
    %v3798 = vunpack.c.l.b16 %v909
    %v3799 = vunpack.c.h.b16 %v909
    %v3800 = vunpack.c.l.b16 %v910
    %v3801 = vunpack.c.h.b16 %v910
    %v3802 = vunpack.c.l.b16 %v911
    %v3803 = vunpack.c.l.b16 %v912
    %v3804 = vunpack.c.h.b16 %v912
    %v3805 = vunpack.c.l.b16 %v913
    %v3806 = vunpack.c.h.b16 %v913
    %v3807 = vunpack.c.l.b16 %v914
    %v3808 = vunpack.c.l.b16 %v915
    %v3809 = vunpack.c.h.b16 %v915
    %v3810 = vunpack.c.l.b16 %v916
    %v3811 = vunpack.c.h.b16 %v916
    %v3812 = vunpack.c.l.b16 %v917
    %v3813 = vunpack.c.l.b16 %v918
    %v3814 = vunpack.c.h.b16 %v918
    %v3815 = vunpack.c.l.b16 %v919
    %v3816 = vunpack.c.h.b16 %v919
    %v3817 = vunpack.c.l.b16 %v920
    %v3818 = vunpack.c.l.b16 %v921
    %v3819 = vunpack.c.h.b16 %v921
    %v3820 = vunpack.c.l.b16 %v922
    %v3821 = vunpack.c.h.b16 %v922
    %v3822 = vunpack.c.l.b16 %v923
    %v3823 = vunpack.c.l.b16 %v924
    %v3824 = vunpack.c.h.b16 %v924
    %v3825 = vunpack.c.l.b16 %v925
    %v3826 = vunpack.c.h.b16 %v925
    %v3827 = vunpack.c.l.b16 %v926
    %v3828 = vunpack.c.l.b16 %v927
    %v3829 = vunpack.c.h.b16 %v927
    %v3830 = vunpack.c.l.b16 %v928
    %v3831 = vunpack.c.h.b16 %v928
    %v3832 = vunpack.c.l.b16 %v929
    %v3833 = vunpack.c.l.b16 %v930
    %v3834 = vunpack.c.h.b16 %v930
    %v3835 = vunpack.c.l.b16 %v931
    %v3836 = vunpack.c.h.b16 %v931
    %v3837 = vunpack.c.l.b16 %v932
    %v3838 = vunpack.c.l.b16 %v933
    %v3839 = vunpack.c.h.b16 %v933
    %v3840 = vunpack.c.l.b16 %v934
    %v3841 = vunpack.c.h.b16 %v934
    %v3842 = vunpack.c.l.b16 %v935
    %v3843 = vunpack.c.l.b16 %v936
    %v3844 = vunpack.c.h.b16 %v936
    %v3845 = vunpack.c.l.b16 %v937
    %v3846 = vunpack.c.h.b16 %v937
    %v3847 = vunpack.c.l.b16 %v938
    %v3848 = vunpack.c.l.b16 %v939
    %v3849 = vunpack.c.h.b16 %v939
    %v3850 = vunpack.c.l.b16 %v940
    %v3851 = vunpack.c.h.b16 %v940
    %v3852 = vunpack.c.l.b16 %v941
    %v3853 = vunpack.c.l.b16 %v942
    %v3854 = vunpack.c.h.b16 %v942
    %v3855 = vunpack.c.l.b16 %v943
    %v3856 = vunpack.c.h.b16 %v943
    %v3857 = vunpack.c.l.b16 %v944
    %v3858 = vunpack.c.l.b16 %v945
    %v3859 = vunpack.c.h.b16 %v945
    %v3860 = vunpack.c.l.b16 %v946
    %v3861 = vunpack.c.h.b16 %v946
    %v3862 = vunpack.c.l.b16 %v947
    %v3863 = vunpack.c.l.b16 %v948
    %v3864 = vunpack.c.h.b16 %v948
    %v3865 = vunpack.c.l.b16 %v949
    %v3866 = vunpack.c.h.b16 %v949
    %v3867 = vunpack.c.l.b16 %v950
    %v3868 = vunpack.c.l.b16 %v951
    %v3869 = vunpack.c.h.b16 %v951
    %v3870 = vunpack.c.l.b16 %v952
    %v3871 = vunpack.c.h.b16 %v952
    %v3872 = vunpack.c.l.b16 %v953
    %v3873 = vunpack.c.l.b16 %v954
    %v3874 = vunpack.c.h.b16 %v954
    %v3875 = vunpack.c.l.b16 %v955
    %v3876 = vunpack.c.h.b16 %v955
    %v3877 = vunpack.c.l.b16 %v956
    %v3878 = vunpack.c.l.b16 %v957
    %v3879 = vunpack.c.h.b16 %v957
    %v3880 = vunpack.c.l.b16 %v958
    %v3881 = vunpack.c.h.b16 %v958
    %v3882 = vunpack.c.l.b16 %v959
    %v3883 = vunpack.c.l.b16 %v960
    %v3884 = vunpack.c.h.b16 %v960
    %v3885 = vunpack.c.l.b16 %v961
    %v3886 = vunpack.c.h.b16 %v961
    %v3887 = vunpack.c.l.b16 %v962
    %v3888 = vunpack.c.l.b16 %v963
    %v3889 = vunpack.c.h.b16 %v963
    %v3890 = vunpack.c.l.b16 %v964
    %v3891 = vunpack.c.h.b16 %v964
    %v3892 = vunpack.c.l.b16 %v965
    %v3893 = vunpack.c.l.b16 %v966
    %v3894 = vunpack.c.h.b16 %v966
    %v3895 = vunpack.c.l.b16 %v967
    %v3896 = vunpack.c.h.b16 %v967
    %v3897 = vunpack.c.l.b16 %v968
    %v3898 = vunpack.c.l.b16 %v969
    %v3899 = vunpack.c.h.b16 %v969
    %v3900 = vunpack.c.l.b16 %v970
    %v3901 = vunpack.c.h.b16 %v970
    %v3902 = vunpack.c.l.b16 %v971
    %v3903 = vunpack.c.l.b16 %v972
    %v3904 = vunpack.c.h.b16 %v972
    %v3905 = vunpack.c.l.b16 %v973
    %v3906 = vunpack.c.h.b16 %v973
    %v3907 = vunpack.c.l.b16 %v974
    %v3908 = vunpack.c.l.b16 %v975
    %v3909 = vunpack.c.h.b16 %v975
    %v3910 = vunpack.c.l.b16 %v976
    %v3911 = vunpack.c.h.b16 %v976
    %v3912 = vunpack.c.l.b16 %v977
    %v3913 = vunpack.c.l.b16 %v978
    %v3914 = vunpack.c.h.b16 %v978
    %v3915 = vunpack.c.l.b16 %v979
    %v3916 = vunpack.c.h.b16 %v979
    %v3917 = vunpack.c.l.b16 %v980
    %v3918 = vunpack.c.l.b16 %v981
    %v3919 = vunpack.c.h.b16 %v981
    %v3920 = vunpack.c.l.b16 %v982
    %v3921 = vunpack.c.h.b16 %v982
    %v3922 = vunpack.c.l.b16 %v983
    %v3923 = vunpack.c.l.b16 %v984
    %v3924 = vunpack.c.h.b16 %v984
    %v3925 = vunpack.c.l.b16 %v985
    %v3926 = vunpack.c.h.b16 %v985
    %v3927 = vunpack.c.l.b16 %v986
    %v3928 = vunpack.c.l.b16 %v987
    %v3929 = vunpack.c.h.b16 %v987
    %v3930 = vunpack.c.l.b16 %v988
    %v3931 = vunpack.c.h.b16 %v988
    %v3932 = vunpack.c.l.b16 %v989
    %v3933 = vunpack.c.l.b16 %v990
    %v3934 = vunpack.c.h.b16 %v990
    %v3935 = vunpack.c.l.b16 %v991
    %v3936 = vunpack.c.h.b16 %v991
    %v3937 = vunpack.c.l.b16 %v992
    %v3938 = vunpack.c.l.b16 %v993
    %v3939 = vunpack.c.h.b16 %v993
    %v3940 = vunpack.c.l.b16 %v994
    %v3941 = vunpack.c.h.b16 %v994
    %v3942 = vunpack.c.l.b16 %v995
    %v3943 = vunpack.c.l.b16 %v996
    %v3944 = vunpack.c.h.b16 %v996
    %v3945 = vunpack.c.l.b16 %v997
    %v3946 = vunpack.c.h.b16 %v997
    %v3947 = vunpack.c.l.b16 %v998
    %v3948 = vunpack.c.l.b16 %v999
    %v3949 = vunpack.c.h.b16 %v999
    %v3950 = vunpack.c.l.b16 %v1000
    %v3951 = vunpack.c.h.b16 %v1000
    %v3952 = vunpack.c.l.b16 %v1001
    %v3953 = vunpack.c.l.b16 %v1002
    %v3954 = vunpack.c.h.b16 %v1002
    %v3955 = vunpack.c.l.b16 %v1003
    %v3956 = vunpack.c.h.b16 %v1003
    %v3957 = vunpack.c.l.b16 %v1004
    %v3958 = vunpack.c.l.b16 %v1005
    %v3959 = vunpack.c.h.b16 %v1005
    %v3960 = vunpack.c.l.b16 %v1006
    %v3961 = vunpack.c.h.b16 %v1006
    %v3962 = vunpack.c.l.b16 %v1007
    %v3963 = vunpack.c.l.b16 %v1008
    %v3964 = vunpack.c.h.b16 %v1008
    %v3965 = vunpack.c.l.b16 %v1009
    %v3966 = vunpack.c.h.b16 %v1009
    %v3967 = vunpack.c.l.b16 %v1010
    %v3968 = vunpack.c.l.b16 %v1011
    %v3969 = vunpack.c.h.b16 %v1011
    %v3970 = vunpack.c.l.b16 %v1012
    %v3971 = vunpack.c.h.b16 %v1012
    %v3972 = vunpack.c.l.b16 %v1013
    %v3973 = vunpack.c.l.b16 %v1014
    %v3974 = vunpack.c.h.b16 %v1014
    %v3975 = vunpack.c.l.b16 %v1015
    %v3976 = vunpack.c.h.b16 %v1015
    %v3977 = vunpack.c.l.b16 %v1016
    %v3978 = vunpack.c.l.b16 %v1017
    %v3979 = vunpack.c.h.b16 %v1017
    %v3980 = vunpack.c.l.b16 %v1018
    %v3981 = vunpack.c.h.b16 %v1018
    %v3982 = vunpack.c.l.b16 %v1019
    %v3983 = vunpack.c.l.b16 %v1020
    %v3984 = vunpack.c.h.b16 %v1020
    %v3985 = vunpack.c.l.b16 %v1021
    %v3986 = vunpack.c.h.b16 %v1021
    %v3987 = vunpack.c.l.b16 %v1022
    %v3988 = vunpack.c.l.b16 %v1023
    %v3989 = vunpack.c.h.b16 %v1023
    %v3990 = vunpack.c.l.b16 %v1024
    %v3991 = vunpack.c.h.b16 %v1024
    %v3992 = vunpack.c.l.b16 %v1025
    %v3993 = vunpack.c.l.b16 %v1026
    %v3994 = vunpack.c.h.b16 %v1026
    %v3995 = vunpack.c.l.b16 %v1027
    %v3996 = vunpack.c.h.b16 %v1027
    %v3997 = vunpack.c.l.b16 %v1028
    %v3998 = vunpack.c.l.b16 %v1029
    %v3999 = vunpack.c.h.b16 %v1029
    %v4000 = vunpack.c.l.b16 %v1030
    %v4001 = vunpack.c.h.b16 %v1030
    %v4002 = vunpack.c.l.b16 %v1031
    %v4003 = vunpack.c.l.b16 %v1032
    %v4004 = vunpack.c.h.b16 %v1032
    %v4005 = vunpack.c.l.b16 %v1033
    %v4006 = vunpack.c.h.b16 %v1033
    %v4007 = vunpack.c.l.b16 %v1034
    %v4008 = vunpack.c.l.b16 %v1035
    %v4009 = vunpack.c.h.b16 %v1035
    %v4010 = vunpack.c.l.b16 %v1036
    %v4011 = vunpack.c.h.b16 %v1036
    %v4012 = vunpack.c.l.b16 %v1037
    %v4013 = vunpack.c.l.b16 %v1038
    %v4014 = vunpack.c.h.b16 %v1038
    %v4015 = vunpack.c.l.b16 %v1039
    %v4016 = vunpack.c.h.b16 %v1039
    %v4017 = vunpack.c.l.b16 %v1040
    %v4018 = vunpack.c.l.b16 %v1041
    %v4019 = vunpack.c.h.b16 %v1041
    %v4020 = vunpack.c.l.b16 %v1042
    %v4021 = vunpack.c.h.b16 %v1042
    %v4022 = vunpack.c.l.b16 %v1043
    %v4023 = vunpack.c.l.b16 %v1044
    %v4024 = vunpack.c.h.b16 %v1044
    %v4025 = vunpack.c.l.b16 %v1045
    %v4026 = vunpack.c.h.b16 %v1045
    %v4027 = vunpack.c.l.b16 %v1046
    %v4028 = vunpack.c.l.b16 %v1047
    %v4029 = vunpack.c.h.b16 %v1047
    %v4030 = vunpack.c.l.b16 %v1048
    %v4031 = vunpack.c.h.b16 %v1048
    %v4032 = vunpack.c.l.b16 %v1049
    %v4033 = vunpack.c.l.b16 %v1050
    %v4034 = vunpack.c.h.b16 %v1050
    %v4035 = vunpack.c.l.b16 %v1051
    %v4036 = vunpack.c.h.b16 %v1051
    %v4037 = vunpack.c.l.b16 %v1052
    %v4038 = vunpack.c.l.b16 %v1053
    %v4039 = vunpack.c.h.b16 %v1053
    %v4040 = vunpack.c.l.b16 %v1054
    %v4041 = vunpack.c.h.b16 %v1054
    %v4042 = vunpack.c.l.b16 %v1055
    %v4043 = vunpack.c.l.b16 %v1056
    %v4044 = vunpack.c.h.b16 %v1056
    %v4045 = vunpack.c.l.b16 %v1057
    %v4046 = vunpack.c.h.b16 %v1057
    %v4047 = vunpack.c.l.b16 %v1058
    %v4048 = vunpack.c.l.b16 %v1059
    %v4049 = vunpack.c.h.b16 %v1059
    %v4050 = vunpack.c.l.b16 %v1060
    %v4051 = vunpack.c.h.b16 %v1060
    %v4052 = vunpack.c.l.b16 %v1061
    %v4053 = vunpack.c.l.b16 %v1062
    %v4054 = vunpack.c.h.b16 %v1062
    %v4055 = vunpack.c.l.b16 %v1063
    %v4056 = vunpack.c.h.b16 %v1063
    %v4057 = vunpack.c.l.b16 %v1064
    %v4058 = vunpack.c.l.b16 %v1065
    %v4059 = vunpack.c.h.b16 %v1065
    %v4060 = vunpack.c.l.b16 %v1066
    %v4061 = vunpack.c.h.b16 %v1066
    %v4062 = vunpack.c.l.b16 %v1067
    %v4063 = vunpack.c.l.b16 %v1068
    %v4064 = vunpack.c.h.b16 %v1068
    %v4065 = vunpack.c.l.b16 %v1069
    %v4066 = vunpack.c.h.b16 %v1069
    %v4067 = vunpack.c.l.b16 %v1070
    %v4068 = vunpack.c.l.b16 %v1071
    %v4069 = vunpack.c.h.b16 %v1071
    %v4070 = vunpack.c.l.b16 %v1072
    %v4071 = vunpack.c.h.b16 %v1072
    %v4072 = vunpack.c.l.b16 %v1073
    %v4073 = vunpack.c.l.b16 %v1074
    %v4074 = vunpack.c.h.b16 %v1074
    %v4075 = vunpack.c.l.b16 %v1075
    %v4076 = vunpack.c.h.b16 %v1075
    %v4077 = vunpack.c.l.b16 %v1076
    %v4078 = vunpack.c.l.b16 %v1077
    %v4079 = vunpack.c.h.b16 %v1077
    %v4080 = vunpack.c.l.b16 %v1078
    %v4081 = vunpack.c.h.b16 %v1078
    %v4082 = vunpack.c.l.b16 %v1079
    %v4083 = vunpack.c.l.b16 %v1080
    %v4084 = vunpack.c.h.b16 %v1080
    %v4085 = vunpack.c.l.b16 %v1081
    %v4086 = vunpack.c.h.b16 %v1081
    %v4087 = vunpack.c.l.b16 %v1082
    %v4088 = vunpack.c.l.b16 %v1083
    %v4089 = vunpack.c.h.b16 %v1083
    %v4090 = vunpack.c.l.b16 %v1084
    %v4091 = vunpack.c.h.b16 %v1084
    %v4092 = vunpack.c.l.b16 %v1085
    %v4093 = vunpack.c.l.b16 %v1086
    %v4094 = vunpack.c.h.b16 %v1086
    %v4095 = vunpack.c.l.b16 %v1087
    %v4096 = vunpack.c.h.b16 %v1087
    %v4097 = vunpack.c.l.b16 %v1088
    %v4098 = vunpack.c.l.b16 %v1089
    %v4099 = vunpack.c.h.b16 %v1089
    %v4100 = vunpack.c.l.b16 %v1090
    %v4101 = vunpack.c.h.b16 %v1090
    %v4102 = vunpack.c.l.b16 %v1091
    %v4103 = vunpack.c.l.b16 %v1092
    %v4104 = vunpack.c.h.b16 %v1092
    %v4105 = vunpack.c.l.b16 %v1093
    %v4106 = vunpack.c.h.b16 %v1093
    %v4107 = vunpack.c.l.b16 %v1094
    %v4108 = vunpack.c.l.b16 %v1095
    %v4109 = vunpack.c.h.b16 %v1095
    %v4110 = vunpack.c.l.b16 %v1096
    %v4111 = vunpack.c.h.b16 %v1096
    %v4112 = vunpack.c.l.b16 %v1097
    %v4113 = vunpack.c.l.b16 %v1098
    %v4114 = vunpack.c.h.b16 %v1098
    %v4115 = vunpack.c.l.b16 %v1099
    %v4116 = vunpack.c.h.b16 %v1099
    %v4117 = vunpack.c.l.b16 %v1100
    %v4118 = vunpack.c.l.b16 %v1101
    %v4119 = vunpack.c.h.b16 %v1101
    %v4120 = vunpack.c.l.b16 %v1102
    %v4121 = vunpack.c.h.b16 %v1102
    %v4122 = vunpack.c.l.b16 %v1103
    %v4123 = vunpack.c.l.b16 %v1104
    %v4124 = vunpack.c.h.b16 %v1104
    %v4125 = vunpack.c.l.b16 %v1105
    %v4126 = vunpack.c.h.b16 %v1105
    %v4127 = vunpack.c.l.b16 %v1106
    %v4128 = vunpack.c.l.b16 %v1107
    %v4129 = vunpack.c.h.b16 %v1107
    %v4130 = vunpack.c.l.b16 %v1108
    %v4131 = vunpack.c.h.b16 %v1108
    %v4132 = vunpack.c.l.b16 %v1109
    %v4133 = vunpack.c.l.b16 %v1110
    %v4134 = vunpack.c.h.b16 %v1110
    %v4135 = vunpack.c.l.b16 %v1111
    %v4136 = vunpack.c.h.b16 %v1111
    %v4137 = vunpack.c.l.b16 %v1112
    %v4138 = vunpack.c.l.b16 %v1113
    %v4139 = vunpack.c.h.b16 %v1113
    %v4140 = vunpack.c.l.b16 %v1114
    %v4141 = vunpack.c.h.b16 %v1114
    %v4142 = vunpack.c.l.b16 %v1115
    %v4143 = vunpack.c.l.b16 %v1116
    %v4144 = vunpack.c.h.b16 %v1116
    %v4145 = vunpack.c.l.b16 %v1117
    %v4146 = vunpack.c.h.b16 %v1117
    %v4147 = vunpack.c.l.b16 %v1118
    %v4148 = vunpack.c.l.b16 %v1119
    %v4149 = vunpack.c.h.b16 %v1119
    %v4150 = vunpack.c.l.b16 %v1120
    %v4151 = vunpack.c.h.b16 %v1120
    %v4152 = vunpack.c.l.b16 %v1121
    %v4153 = vunpack.c.l.b16 %v1122
    %v4154 = vunpack.c.h.b16 %v1122
    %v4155 = vunpack.c.l.b16 %v1123
    %v4156 = vunpack.c.h.b16 %v1123
    %v4157 = vunpack.c.l.b16 %v1124
    %v4158 = vunpack.c.l.b16 %v1125
    %v4159 = vunpack.c.h.b16 %v1125
    %v4160 = vunpack.c.l.b16 %v1126
    %v4161 = vunpack.c.h.b16 %v1126
    %v4162 = vunpack.c.l.b16 %v1127
    %v4163 = vunpack.c.l.b16 %v1128
    %v4164 = vunpack.c.h.b16 %v1128
    %v4165 = vunpack.c.l.b16 %v1129
    %v4166 = vunpack.c.h.b16 %v1129
    %v4167 = vunpack.c.l.b16 %v1130
    %v4168 = vunpack.c.l.b16 %v1131
    %v4169 = vunpack.c.h.b16 %v1131
    %v4170 = vunpack.c.l.b16 %v1132
    %v4171 = vunpack.c.h.b16 %v1132
    %v4172 = vunpack.c.l.b16 %v1133
    %v4173 = vunpack.c.l.b16 %v1134
    %v4174 = vunpack.c.h.b16 %v1134
    %v4175 = vunpack.c.l.b16 %v1135
    %v4176 = vunpack.c.h.b16 %v1135
    %v4177 = vunpack.c.l.b16 %v1136
    %v4178 = vunpack.c.l.b16 %v1137
    %v4179 = vunpack.c.h.b16 %v1137
    %v4180 = vunpack.c.l.b16 %v1138
    %v4181 = vunpack.c.h.b16 %v1138
    %v4182 = vunpack.c.l.b16 %v1139
    %v4183 = vunpack.c.l.b16 %v1140
    %v4184 = vunpack.c.h.b16 %v1140
    %v4185 = vunpack.c.l.b16 %v1141
    %v4186 = vunpack.c.h.b16 %v1141
    %v4187 = vunpack.c.l.b16 %v1142
    %v4188 = vunpack.c.l.b16 %v1143
    %v4189 = vunpack.c.h.b16 %v1143
    %v4190 = vunpack.c.l.b16 %v1144
    %v4191 = vunpack.c.h.b16 %v1144
    %v4192 = vunpack.c.l.b16 %v1145
    %v4193 = vunpack.c.l.b16 %v1146
    %v4194 = vunpack.c.h.b16 %v1146
    %v4195 = vunpack.c.l.b16 %v1147
    %v4196 = vunpack.c.h.b16 %v1147
    %v4197 = vunpack.c.l.b16 %v1148
    %v4198 = vunpack.c.l.b16 %v1149
    %v4199 = vunpack.c.h.b16 %v1149
    %v4200 = vunpack.c.l.b16 %v1150
    %v4201 = vunpack.c.h.b16 %v1150
    %v4202 = vunpack.c.l.b16 %v1151
    %v4203 = vunpack.c.l.b16 %v1152
    %v4204 = vunpack.c.h.b16 %v1152
    %v4205 = vunpack.c.l.b16 %v1153
    %v4206 = vunpack.c.h.b16 %v1153
    %v4207 = vunpack.c.l.b16 %v1154
    %v4208 = vunpack.c.l.b16 %v1155
    %v4209 = vunpack.c.h.b16 %v1155
    %v4210 = vunpack.c.l.b16 %v1156
    %v4211 = vunpack.c.h.b16 %v1156
    %v4212 = vunpack.c.l.b16 %v1157
    %v4213 = vunpack.c.l.b16 %v1158
    %v4214 = vunpack.c.h.b16 %v1158
    %v4215 = vunpack.c.l.b16 %v1159
    %v4216 = vunpack.c.h.b16 %v1159
    %v4217 = vunpack.c.l.b16 %v1160
    %v4218 = vunpack.c.l.b16 %v1161
    %v4219 = vunpack.c.h.b16 %v1161
    %v4220 = vunpack.c.l.b16 %v1162
    %v4221 = vunpack.c.h.b16 %v1162
    %v4222 = vunpack.c.l.b16 %v1163
    %v4223 = vunpack.c.l.b16 %v1164
    %v4224 = vunpack.c.h.b16 %v1164
    %v4225 = vunpack.c.l.b16 %v1165
    %v4226 = vunpack.c.h.b16 %v1165
    %v4227 = vunpack.c.l.b16 %v1166
    %v4228 = vunpack.c.l.b16 %v1167
    %v4229 = vunpack.c.h.b16 %v1167
    %v4230 = vunpack.c.l.b16 %v1168
    %v4231 = vunpack.c.h.b16 %v1168
    %v4232 = vunpack.c.l.b16 %v1169
    %v4233 = vunpack.c.l.b16 %v1170
    %v4234 = vunpack.c.h.b16 %v1170
    %v4235 = vunpack.c.l.b16 %v1171
    %v4236 = vunpack.c.h.b16 %v1171
    %v4237 = vunpack.c.l.b16 %v1172
    %v4238 = vunpack.c.l.b16 %v1173
    %v4239 = vunpack.c.h.b16 %v1173
    %v4240 = vunpack.c.l.b16 %v1174
    %v4241 = vunpack.c.h.b16 %v1174
    %v4242 = vunpack.c.l.b16 %v1175
    %v4243 = vunpack.c.l.b16 %v1176
    %v4244 = vunpack.c.h.b16 %v1176
    %v4245 = vunpack.c.l.b16 %v1177
    %v4246 = vunpack.c.h.b16 %v1177
    %v4247 = vunpack.c.l.b16 %v1178
    %v4248 = vunpack.c.l.b16 %v1179
    %v4249 = vunpack.c.h.b16 %v1179
    %v4250 = vunpack.c.l.b16 %v1180
    %v4251 = vunpack.c.h.b16 %v1180
    %v4252 = vunpack.c.l.b16 %v1181
    %v4253 = vunpack.c.l.b16 %v1182
    %v4254 = vunpack.c.h.b16 %v1182
    %v4255 = vunpack.c.l.b16 %v1183
    %v4256 = vunpack.c.h.b16 %v1183
    %v4257 = vunpack.c.l.b16 %v1184
    %v4258 = vunpack.c.l.b16 %v1185
    %v4259 = vunpack.c.h.b16 %v1185
    %v4260 = vunpack.c.l.b16 %v1186
    %v4261 = vunpack.c.h.b16 %v1186
    %v4262 = vunpack.c.l.b16 %v1187
    %v4263 = vunpack.c.l.b16 %v1188
    %v4264 = vunpack.c.h.b16 %v1188
    %v4265 = vunpack.c.l.b16 %v1189
    %v4266 = vunpack.c.h.b16 %v1189
    %v4267 = vunpack.c.l.b16 %v1190
    %v4268 = vunpack.c.l.b16 %v1191
    %v4269 = vunpack.c.h.b16 %v1191
    %v4270 = vunpack.c.l.b16 %v1192
    %v4271 = vunpack.c.h.b16 %v1192
    %v4272 = vunpack.c.l.b16 %v1193
    %v4273 = vunpack.c.l.b16 %v1194
    %v4274 = vunpack.c.h.b16 %v1194
    %v4275 = vunpack.c.l.b16 %v1195
    %v4276 = vunpack.c.h.b16 %v1195
    %v4277 = vunpack.c.l.b16 %v1196
    %v4278 = vunpack.c.l.b16 %v1197
    %v4279 = vunpack.c.h.b16 %v1197
    %v4280 = vunpack.c.l.b16 %v1198
    %v4281 = vunpack.c.h.b16 %v1198
    %v4282 = vunpack.c.l.b16 %v1199
    %v4283 = vunpack.c.l.b16 %v1200
    %v4284 = vunpack.c.h.b16 %v1200
    %v4285 = vunpack.c.l.b16 %v1201
    %v4286 = vunpack.c.h.b16 %v1201
    %v4287 = vunpack.c.l.b16 %v1202
    %v4288 = vunpack.c.l.b16 %v1203
    %v4289 = vunpack.c.h.b16 %v1203
    %v4290 = vunpack.c.l.b16 %v1204
    %v4291 = vunpack.c.h.b16 %v1204
    %v4292 = vunpack.c.l.b16 %v1205
    %v4293 = vunpack.c.l.b16 %v1206
    %v4294 = vunpack.c.h.b16 %v1206
    %v4295 = vunpack.c.l.b16 %v1207
    %v4296 = vunpack.c.h.b16 %v1207
    %v4297 = vunpack.c.l.b16 %v1208
    %v4298 = vunpack.c.l.b16 %v1209
    %v4299 = vunpack.c.h.b16 %v1209
    %v4300 = vunpack.c.l.b16 %v1210
    %v4301 = vunpack.c.h.b16 %v1210
    %v4302 = vunpack.c.l.b16 %v1211
    %v4303 = vunpack.c.l.b16 %v1212
    %v4304 = vunpack.c.h.b16 %v1212
    %v4305 = vunpack.c.l.b16 %v1213
    %v4306 = vunpack.c.h.b16 %v1213
    %v4307 = vunpack.c.l.b16 %v1214
    %v4308 = vunpack.c.l.b16 %v1215
    %v4309 = vunpack.c.h.b16 %v1215
    %v4310 = vunpack.c.l.b16 %v1216
    %v4311 = vunpack.c.h.b16 %v1216
    %v4312 = vunpack.c.l.b16 %v1217
    %v4313 = vunpack.c.l.b16 %v1218
    %v4314 = vunpack.c.h.b16 %v1218
    %v4315 = vunpack.c.l.b16 %v1219
    %v4316 = vunpack.c.h.b16 %v1219
    %v4317 = vunpack.c.l.b16 %v1220
    %v4318 = vunpack.c.l.b16 %v1221
    %v4319 = vunpack.c.h.b16 %v1221
    %v4320 = vunpack.c.l.b16 %v1222
    %v4321 = vunpack.c.h.b16 %v1222
    %v4322 = vunpack.c.l.b16 %v1223
    %v4323 = vunpack.c.l.b16 %v1224
    %v4324 = vunpack.c.h.b16 %v1224
    %v4325 = vunpack.c.l.b16 %v1225
    %v4326 = vunpack.c.h.b16 %v1225
    %v4327 = vunpack.c.l.b16 %v1226
    %v4328 = vunpack.c.l.b16 %v1227
    %v4329 = vunpack.c.h.b16 %v1227
    %v4330 = vunpack.c.l.b16 %v1228
    %v4331 = vunpack.c.h.b16 %v1228
    %v4332 = vunpack.c.l.b16 %v1229
    %v4333 = vunpack.c.l.b16 %v1230
    %v4334 = vunpack.c.h.b16 %v1230
    %v4335 = vunpack.c.l.b16 %v1231
    %v4336 = vunpack.c.h.b16 %v1231
    %v4337 = vunpack.c.l.b16 %v1232
    %v4338 = vunpack.c.l.b16 %v1233
    %v4339 = vunpack.c.h.b16 %v1233
    %v4340 = vunpack.c.l.b16 %v1234
    %v4341 = vunpack.c.h.b16 %v1234
    %v4342 = vunpack.c.l.b16 %v1235
    %v4343 = vunpack.c.l.b16 %v1236
    %v4344 = vunpack.c.h.b16 %v1236
    %v4345 = vunpack.c.l.b16 %v1237
    %v4346 = vunpack.c.h.b16 %v1237
    %v4347 = vunpack.c.l.b16 %v1238
    %v4348 = vunpack.c.l.b16 %v1239
    %v4349 = vunpack.c.h.b16 %v1239
    %v4350 = vunpack.c.l.b16 %v1240
    %v4351 = vunpack.c.h.b16 %v1240
    %v4352 = vunpack.c.l.b16 %v1241
    %v4353 = vunpack.c.l.b16 %v1242
    %v4354 = vunpack.c.h.b16 %v1242
    %v4355 = vunpack.c.l.b16 %v1243
    %v4356 = vunpack.c.h.b16 %v1243
    %v4357 = vunpack.c.l.b16 %v1244
    %v4358 = vunpack.c.l.b16 %v1245
    %v4359 = vunpack.c.h.b16 %v1245
    %v4360 = vunpack.c.l.b16 %v1246
    %v4361 = vunpack.c.h.b16 %v1246
    %v4362 = vunpack.c.l.b16 %v1247
    %v4363 = vunpack.c.l.b16 %v1248
    %v4364 = vunpack.c.h.b16 %v1248
    %v4365 = vunpack.c.l.b16 %v1249
    %v4366 = vunpack.c.h.b16 %v1249
    %v4367 = vunpack.c.l.b16 %v1250
    %v4368 = vunpack.c.l.b16 %v1251
    %v4369 = vunpack.c.h.b16 %v1251
    %v4370 = vunpack.c.l.b16 %v1252
    %v4371 = vunpack.c.h.b16 %v1252
    %v4372 = vunpack.c.l.b16 %v1253
    %v4373 = vunpack.c.l.b16 %v1254
    %v4374 = vunpack.c.h.b16 %v1254
    %v4375 = vunpack.c.l.b16 %v1255
    %v4376 = vunpack.c.h.b16 %v1255
    %v4377 = vunpack.c.l.b16 %v1256
    %v4378 = vunpack.c.l.b16 %v1257
    %v4379 = vunpack.c.h.b16 %v1257
    %v4380 = vunpack.c.l.b16 %v1258
    %v4381 = vunpack.c.h.b16 %v1258
    %v4382 = vunpack.c.l.b16 %v1259
    %v4383 = vunpack.c.l.b16 %v1260
    %v4384 = vunpack.c.h.b16 %v1260
    %v4385 = vunpack.c.l.b16 %v1261
    %v4386 = vunpack.c.h.b16 %v1261
    %v4387 = vunpack.c.l.b16 %v1262
    %v4388 = vunpack.c.l.b16 %v1263
    %v4389 = vunpack.c.h.b16 %v1263
    %v4390 = vunpack.c.l.b16 %v1264
    %v4391 = vunpack.c.h.b16 %v1264
    %v4392 = vunpack.c.l.b16 %v1265
    %v4393 = vunpack.c.l.b16 %v1266
    %v4394 = vunpack.c.h.b16 %v1266
    %v4395 = vunpack.c.l.b16 %v1267
    %v4396 = vunpack.c.h.b16 %v1267
    %v4397 = vunpack.c.l.b16 %v1268
    %v4398 = vunpack.c.l.b16 %v1269
    %v4399 = vunpack.c.h.b16 %v1269
    %v4400 = vunpack.c.l.b16 %v1270
    %v4401 = vunpack.c.h.b16 %v1270
    %v4402 = vunpack.c.l.b16 %v1271
    %v4403 = vunpack.c.l.b16 %v1272
    %v4404 = vunpack.c.h.b16 %v1272
    %v4405 = vunpack.c.l.b16 %v1273
    %v4406 = vunpack.c.h.b16 %v1273
    %v4407 = vunpack.c.l.b16 %v1274
    %v4408 = vunpack.c.l.b16 %v1275
    %v4409 = vunpack.c.h.b16 %v1275
    %v4410 = vunpack.c.l.b16 %v1276
    %v4411 = vunpack.c.h.b16 %v1276
    %v4412 = vunpack.c.l.b16 %v1277
    %v4413 = vunpack.c.l.b16 %v1278
    %v4414 = vunpack.c.h.b16 %v1278
    %v4415 = vunpack.c.l.b16 %v1279
    %v4416 = vunpack.c.h.b16 %v1279
    %v4417 = vunpack.c.l.b16 %v1280
    %v4418 = vunpack.c.l.b16 %v1281
    %v4419 = vunpack.c.h.b16 %v1281
    %v4420 = vunpack.c.l.b16 %v1282
    %v4421 = vunpack.c.h.b16 %v1282
    %v4422 = vunpack.c.l.b16 %v1283
    %v4423 = vunpack.c.l.b16 %v1284
    %v4424 = vunpack.c.h.b16 %v1284
    %v4425 = vunpack.c.l.b16 %v1285
    %v4426 = vunpack.c.h.b16 %v1285
    %v4427 = vunpack.c.l.b16 %v1286
    %v4428 = vunpack.c.l.b16 %v1287
    %v4429 = vunpack.c.h.b16 %v1287
    %v4430 = vunpack.c.l.b16 %v1288
    %v4431 = vunpack.c.h.b16 %v1288
    %v4432 = vunpack.c.l.b16 %v1289
    %v4433 = vunpack.c.l.b16 %v1290
    %v4434 = vunpack.c.h.b16 %v1290
    %v4435 = vunpack.c.l.b16 %v1291
    %v4436 = vunpack.c.h.b16 %v1291
    %v4437 = vunpack.c.l.b16 %v1292
    %v4438 = vunpack.c.l.b16 %v1293
    %v4439 = vunpack.c.h.b16 %v1293
    %v4440 = vunpack.c.l.b16 %v1294
    %v4441 = vunpack.c.h.b16 %v1294
    %v4442 = vunpack.c.l.b16 %v1295
    %v4443 = vunpack.c.l.b16 %v1296
    %v4444 = vunpack.c.h.b16 %v1296
    %v4445 = vunpack.c.l.b16 %v1297
    %v4446 = vunpack.c.h.b16 %v1297
    %v4447 = vunpack.c.l.b16 %v1298
    %v4448 = vunpack.c.l.b16 %v1299
    %v4449 = vunpack.c.h.b16 %v1299
    %v4450 = vunpack.c.l.b16 %v1300
    %v4451 = vunpack.c.h.b16 %v1300
    %v4452 = vunpack.c.l.b16 %v1301
    %v4453 = vunpack.c.l.b16 %v1302
    %v4454 = vunpack.c.h.b16 %v1302
    %v4455 = vunpack.c.l.b16 %v1303
    %v4456 = vunpack.c.h.b16 %v1303
    %v4457 = vunpack.c.l.b16 %v1304
    %v4458 = vunpack.c.l.b16 %v1305
    %v4459 = vunpack.c.h.b16 %v1305
    %v4460 = vunpack.c.l.b16 %v1306
    %v4461 = vunpack.c.h.b16 %v1306
    %v4462 = vunpack.c.l.b16 %v1307
    %v4463 = vunpack.c.l.b16 %v1308
    %v4464 = vunpack.c.h.b16 %v1308
    %v4465 = vunpack.c.l.b16 %v1309
    %v4466 = vunpack.c.h.b16 %v1309
    %v4467 = vunpack.c.l.b16 %v1310
    %v4468 = vunpack.c.l.b16 %v1311
    %v4469 = vunpack.c.h.b16 %v1311
    %v4470 = vunpack.c.l.b16 %v1312
    %v4471 = vunpack.c.h.b16 %v1312
    %v4472 = vunpack.c.l.b16 %v1313
    %v4473 = vunpack.c.l.b16 %v1314
    %v4474 = vunpack.c.h.b16 %v1314
    %v4475 = vunpack.c.l.b16 %v1315
    %v4476 = vunpack.c.h.b16 %v1315
    %v4477 = vunpack.c.l.b16 %v1316
    %v4478 = vunpack.c.l.b16 %v1317
    %v4479 = vunpack.c.h.b16 %v1317
    %v4480 = vunpack.c.l.b16 %v1318
    %v4481 = vunpack.c.h.b16 %v1318
    %v4482 = vunpack.c.l.b16 %v1319
    %v4483 = vunpack.c.l.b16 %v1320
    %v4484 = vunpack.c.h.b16 %v1320
    %v4485 = vunpack.c.l.b16 %v1321
    %v4486 = vunpack.c.h.b16 %v1321
    %v4487 = vunpack.c.l.b16 %v1322
    %v4488 = vunpack.c.l.b16 %v1323
    %v4489 = vunpack.c.h.b16 %v1323
    %v4490 = vunpack.c.l.b16 %v1324
    %v4491 = vunpack.c.h.b16 %v1324
    %v4492 = vunpack.c.l.b16 %v1325
    %v4493 = vunpack.c.l.b16 %v1326
    %v4494 = vunpack.c.h.b16 %v1326
    %v4495 = vunpack.c.l.b16 %v1327
    %v4496 = vunpack.c.h.b16 %v1327
    %v4497 = vunpack.c.l.b16 %v1328
    %v4498 = vunpack.c.l.b16 %v1329
    %v4499 = vunpack.c.h.b16 %v1329
    %v4500 = vunpack.c.l.b16 %v1330
    %v4501 = vunpack.c.h.b16 %v1330
    %v4502 = vunpack.c.l.b16 %v1331
    %v4503 = vunpack.c.l.b16 %v1332
    %v4504 = vunpack.c.h.b16 %v1332
    %v4505 = vunpack.c.l.b16 %v1333
    %v4506 = vunpack.c.h.b16 %v1333
    %v4507 = vunpack.c.l.b16 %v1334
    %v4508 = vunpack.c.l.b16 %v1335
    %v4509 = vunpack.c.h.b16 %v1335
    %v4510 = vunpack.c.l.b16 %v1336
    %v4511 = vunpack.c.h.b16 %v1336
    %v4512 = vunpack.c.l.b16 %v1337
    %v4513 = vunpack.c.l.b16 %v1338
    %v4514 = vunpack.c.h.b16 %v1338
    %v4515 = vunpack.c.l.b16 %v1339
    %v4516 = vunpack.c.h.b16 %v1339
    %v4517 = vunpack.c.l.b16 %v1340
    %v4518 = vunpack.c.l.b16 %v1341
    %v4519 = vunpack.c.h.b16 %v1341
    %v4520 = vunpack.c.l.b16 %v1342
    %v4521 = vunpack.c.h.b16 %v1342
    %v4522 = vunpack.c.l.b16 %v1343
    %v4523 = vunpack.c.l.b16 %v1344
    %v4524 = vunpack.c.h.b16 %v1344
    %v4525 = vunpack.c.l.b16 %v1345
    %v4526 = vunpack.c.h.b16 %v1345
    %v4527 = vunpack.c.l.b16 %v1346
    %v4528 = vunpack.c.l.b16 %v1347
    %v4529 = vunpack.c.h.b16 %v1347
    %v4530 = vunpack.c.l.b16 %v1348
    %v4531 = vunpack.c.h.b16 %v1348
    %v4532 = vunpack.c.l.b16 %v1349
    %v4533 = vunpack.c.l.b16 %v1350
    %v4534 = vunpack.c.h.b16 %v1350
    %v4535 = vunpack.c.l.b16 %v1351
    %v4536 = vunpack.c.h.b16 %v1351
    %v4537 = vunpack.c.l.b16 %v1352
    %v4538 = vunpack.c.l.b16 %v1353
    %v4539 = vunpack.c.h.b16 %v1353
    %v4540 = vunpack.c.l.b16 %v1354
    %v4541 = vunpack.c.h.b16 %v1354
    %v4542 = vunpack.c.l.b16 %v1355
    %v4543 = vunpack.c.l.b16 %v1356
    %v4544 = vunpack.c.h.b16 %v1356
    %v4545 = vunpack.c.l.b16 %v1357
    %v4546 = vunpack.c.h.b16 %v1357
    %v4547 = vunpack.c.l.b16 %v1358
    %v4548 = vunpack.c.l.b16 %v1359
    %v4549 = vunpack.c.h.b16 %v1359
    %v4550 = vunpack.c.l.b16 %v1360
    %v4551 = vunpack.c.h.b16 %v1360
    %v4552 = vunpack.c.l.b16 %v1361
    %v4553 = vunpack.c.l.b16 %v1362
    %v4554 = vunpack.c.h.b16 %v1362
    %v4555 = vunpack.c.l.b16 %v1363
    %v4556 = vunpack.c.h.b16 %v1363
    %v4557 = vunpack.c.l.b16 %v1364
    %v4558 = vunpack.c.l.b16 %v1365
    %v4559 = vunpack.c.h.b16 %v1365
    %v4560 = vunpack.c.l.b16 %v1366
    %v4561 = vunpack.c.h.b16 %v1366
    %v4562 = vunpack.c.l.b16 %v1367
    %v4563 = vunpack.c.l.b16 %v1368
    %v4564 = vunpack.c.h.b16 %v1368
    %v4565 = vunpack.c.l.b16 %v1369
    %v4566 = vunpack.c.h.b16 %v1369
    %v4567 = vunpack.c.l.b16 %v1370
    %v4568 = vunpack.c.l.b16 %v1371
    %v4569 = vunpack.c.h.b16 %v1371
    %v4570 = vunpack.c.l.b16 %v1372
    %v4571 = vunpack.c.h.b16 %v1372
    %v4572 = vunpack.c.l.b16 %v1373
    %v4573 = vunpack.c.l.b16 %v1374
    %v4574 = vunpack.c.h.b16 %v1374
    %v4575 = vunpack.c.l.b16 %v1375
    %v4576 = vunpack.c.h.b16 %v1375
    %v4577 = vunpack.c.l.b16 %v1376
    %v4578 = vunpack.c.l.b16 %v1377
    %v4579 = vunpack.c.h.b16 %v1377
    %v4580 = vunpack.c.l.b16 %v1378
    %v4581 = vunpack.c.h.b16 %v1378
    %v4582 = vunpack.c.l.b16 %v1379
    %v4583 = vunpack.c.l.b16 %v1380
    %v4584 = vunpack.c.h.b16 %v1380
    %v4585 = vunpack.c.l.b16 %v1381
    %v4586 = vunpack.c.h.b16 %v1381
    %v4587 = vunpack.c.l.b16 %v1382
    %v4588 = vunpack.c.l.b16 %v1383
    %v4589 = vunpack.c.h.b16 %v1383
    %v4590 = vunpack.c.l.b16 %v1384
    %v4591 = vunpack.c.h.b16 %v1384
    %v4592 = vunpack.c.l.b16 %v1385
    %v4593 = vunpack.c.l.b16 %v1386
    %v4594 = vunpack.c.h.b16 %v1386
    %v4595 = vunpack.c.l.b16 %v1387
    %v4596 = vunpack.c.h.b16 %v1387
    %v4597 = vunpack.c.l.b16 %v1388
    %v4598 = vunpack.c.l.b16 %v1389
    %v4599 = vunpack.c.h.b16 %v1389
    %v4600 = vunpack.c.l.b16 %v1390
    %v4601 = vunpack.c.h.b16 %v1390
    %v4602 = vunpack.c.l.b16 %v1391
    %v4603 = vunpack.c.l.b16 %v1392
    %v4604 = vunpack.c.h.b16 %v1392
    %v4605 = vunpack.c.l.b16 %v1393
    %v4606 = vunpack.c.h.b16 %v1393
    %v4607 = vunpack.c.l.b16 %v1394
    %v4608 = vunpack.c.l.b16 %v1395
    %v4609 = vunpack.c.h.b16 %v1395
    %v4610 = vunpack.c.l.b16 %v1396
    %v4611 = vunpack.c.h.b16 %v1396
    %v4612 = vunpack.c.l.b16 %v1397
    %v4613 = vunpack.c.l.b16 %v1398
    %v4614 = vunpack.c.h.b16 %v1398
    %v4615 = vunpack.c.l.b16 %v1399
    %v4616 = vunpack.c.h.b16 %v1399
    %v4617 = vunpack.c.l.b16 %v1400
    %v4618 = vunpack.c.l.b16 %v1401
    %v4619 = vunpack.c.h.b16 %v1401
    %v4620 = vunpack.c.l.b16 %v1402
    %v4621 = vunpack.c.h.b16 %v1402
    %v4622 = vunpack.c.l.b16 %v1403
    %v4623 = vunpack.c.l.b16 %v1404
    %v4624 = vunpack.c.h.b16 %v1404
    %v4625 = vunpack.c.l.b16 %v1405
    %v4626 = vunpack.c.h.b16 %v1405
    %v4627 = vunpack.c.l.b16 %v1406
    %v4628 = vunpack.c.l.b16 %v1407
    %v4629 = vunpack.c.h.b16 %v1407
    %v4630 = vunpack.c.l.b16 %v1408
    %v4631 = vunpack.c.h.b16 %v1408
    %v4632 = vunpack.c.l.b16 %v1409
    %v4633 = vunpack.c.l.b16 %v1410
    %v4634 = vunpack.c.h.b16 %v1410
    %v4635 = vunpack.c.l.b16 %v1411
    %v4636 = vunpack.c.h.b16 %v1411
    %v4637 = vunpack.c.l.b16 %v1412
    %v4638 = vunpack.c.l.b16 %v1413
    %v4639 = vunpack.c.h.b16 %v1413
    %v4640 = vunpack.c.l.b16 %v1414
    %v4641 = vunpack.c.h.b16 %v1414
    %v4642 = vunpack.c.l.b16 %v1415
    %v4643 = vunpack.c.l.b16 %v1416
    %v4644 = vunpack.c.h.b16 %v1416
    %v4645 = vunpack.c.l.b16 %v1417
    %v4646 = vunpack.c.h.b16 %v1417
    %v4647 = vunpack.c.l.b16 %v1418
    %v4648 = vunpack.c.l.b16 %v1419
    %v4649 = vunpack.c.h.b16 %v1419
    %v4650 = vunpack.c.l.b16 %v1420
    %v4651 = vunpack.c.h.b16 %v1420
    %v4652 = vunpack.c.l.b16 %v1421
    %v4653 = vunpack.c.l.b16 %v1422
    %v4654 = vunpack.c.h.b16 %v1422
    %v4655 = vunpack.c.l.b16 %v1423
    %v4656 = vunpack.c.h.b16 %v1423
    %v4657 = vunpack.c.l.b16 %v1424
    %v4658 = vunpack.c.l.b16 %v1425
    %v4659 = vunpack.c.h.b16 %v1425
    %v4660 = vunpack.c.l.b16 %v1426
    %v4661 = vunpack.c.h.b16 %v1426
    %v4662 = vunpack.c.l.b16 %v1427
    %v4663 = vunpack.c.l.b16 %v1428
    %v4664 = vunpack.c.h.b16 %v1428
    %v4665 = vunpack.c.l.b16 %v1429
    %v4666 = vunpack.c.h.b16 %v1429
    %v4667 = vunpack.c.l.b16 %v1430
    %v4668 = vunpack.c.l.b16 %v1431
    %v4669 = vunpack.c.h.b16 %v1431
    %v4670 = vunpack.c.l.b16 %v1432
    %v4671 = vunpack.c.h.b16 %v1432
    %v4672 = vunpack.c.l.b16 %v1433
    %v4673 = vunpack.c.l.b16 %v1434
    %v4674 = vunpack.c.h.b16 %v1434
    %v4675 = vunpack.c.l.b16 %v1435
    %v4676 = vunpack.c.h.b16 %v1435
    %v4677 = vunpack.c.l.b16 %v1436
    %v4678 = vunpack.c.l.b16 %v1437
    %v4679 = vunpack.c.h.b16 %v1437
    %v4680 = vunpack.c.l.b16 %v1438
    %v4681 = vunpack.c.h.b16 %v1438
    %v4682 = vunpack.c.l.b16 %v1439
    %v4683 = vunpack.c.l.b16 %v1440
    %v4684 = vunpack.c.h.b16 %v1440
    %v4685 = vunpack.c.l.b16 %v1441
    %v4686 = vunpack.c.h.b16 %v1441
    %v4687 = vunpack.c.l.b16 %v1442
    %v4688 = vunpack.c.l.b16 %v1443
    %v4689 = vunpack.c.h.b16 %v1443
    %v4690 = vunpack.c.l.b16 %v1444
    %v4691 = vunpack.c.h.b16 %v1444
    %v4692 = vunpack.c.l.b16 %v1445
    %v4693 = vunpack.c.l.b16 %v1446
    %v4694 = vunpack.c.h.b16 %v1446
    %v4695 = vunpack.c.l.b16 %v1447
    %v4696 = vunpack.c.h.b16 %v1447
    %v4697 = vunpack.c.l.b16 %v1448
    %v4698 = vunpack.c.l.b16 %v1449
    %v4699 = vunpack.c.h.b16 %v1449
    %v4700 = vunpack.c.l.b16 %v1450
    %v4701 = vunpack.c.h.b16 %v1450
    %v4702 = vunpack.c.l.b16 %v1451
    %v4703 = vunpack.c.l.b16 %v1452
    %v4704 = vunpack.c.h.b16 %v1452
    %v4705 = vunpack.c.l.b16 %v1453
    %v4706 = vunpack.c.h.b16 %v1453
    %v4707 = vunpack.c.l.b16 %v1454
    %v4708 = vunpack.c.l.b16 %v1455
    %v4709 = vunpack.c.h.b16 %v1455
    %v4710 = vunpack.c.l.b16 %v1456
    %v4711 = vunpack.c.h.b16 %v1456
    %v4712 = vunpack.c.l.b16 %v1457
    %v4713 = vunpack.c.l.b16 %v1458
    %v4714 = vunpack.c.h.b16 %v1458
    %v4715 = vunpack.c.l.b16 %v1459
    %v4716 = vunpack.c.h.b16 %v1459
    %v4717 = vunpack.c.l.b16 %v1460
    %v4718 = vunpack.c.l.b16 %v1461
    %v4719 = vunpack.c.h.b16 %v1461
    %v4720 = vunpack.c.l.b16 %v1462
    %v4721 = vunpack.c.h.b16 %v1462
    %v4722 = vunpack.c.l.b16 %v1463
    %v4723 = vunpack.c.l.b16 %v1464
    %v4724 = vunpack.c.h.b16 %v1464
    %v4725 = vunpack.c.l.b16 %v1465
    %v4726 = vunpack.c.h.b16 %v1465
    %v4727 = vunpack.c.l.b16 %v1466
    %v4728 = vunpack.c.l.b16 %v1467
    %v4729 = vunpack.c.h.b16 %v1467
    %v4730 = vunpack.c.l.b16 %v1468
    %v4731 = vunpack.c.h.b16 %v1468
    %v4732 = vunpack.c.l.b16 %v1469
    %v4733 = vunpack.c.l.b16 %v1470
    %v4734 = vunpack.c.h.b16 %v1470
    %v4735 = vunpack.c.l.b16 %v1471
    %v4736 = vunpack.c.h.b16 %v1471
    %v4737 = vunpack.c.l.b16 %v1472
    %v4738 = vunpack.c.l.b16 %v1473
    %v4739 = vunpack.c.h.b16 %v1473
    %v4740 = vunpack.c.l.b16 %v1474
    %v4741 = vunpack.c.h.b16 %v1474
    %v4742 = vunpack.c.l.b16 %v1475
    %v4743 = vunpack.c.l.b16 %v1476
    %v4744 = vunpack.c.h.b16 %v1476
    %v4745 = vunpack.c.l.b16 %v1477
    %v4746 = vunpack.c.h.b16 %v1477
    %v4747 = vunpack.c.l.b16 %v1478
    %v4748 = vunpack.c.l.b16 %v1479
    %v4749 = vunpack.c.h.b16 %v1479
    %v4750 = vunpack.c.l.b16 %v1480
    %v4751 = vunpack.c.h.b16 %v1480
    %v4752 = vunpack.c.l.b16 %v1481
    %v4753 = vunpack.c.l.b16 %v1482
    %v4754 = vunpack.c.h.b16 %v1482
    %v4755 = vunpack.c.l.b16 %v1483
    %v4756 = vunpack.c.h.b16 %v1483
    %v4757 = vunpack.c.l.b16 %v1484
    %v4758 = vunpack.c.l.b16 %v1485
    %v4759 = vunpack.c.h.b16 %v1485
    %v4760 = vunpack.c.l.b16 %v1486
    %v4761 = vunpack.c.h.b16 %v1486
    %v4762 = vunpack.c.l.b16 %v1487
    %v4763 = vunpack.c.l.b16 %v1488
    %v4764 = vunpack.c.h.b16 %v1488
    %v4765 = vunpack.c.l.b16 %v1489
    %v4766 = vunpack.c.h.b16 %v1489
    %v4767 = vunpack.c.l.b16 %v1490
    %v4768 = vunpack.c.l.b16 %v1491
    %v4769 = vunpack.c.h.b16 %v1491
    %v4770 = vunpack.c.l.b16 %v1492
    %v4771 = vunpack.c.h.b16 %v1492
    %v4772 = vunpack.c.l.b16 %v1493
    %v4773 = vunpack.c.l.b16 %v1494
    %v4774 = vunpack.c.h.b16 %v1494
    %v4775 = vunpack.c.l.b16 %v1495
    %v4776 = vunpack.c.h.b16 %v1495
    %v4777 = vunpack.c.l.b16 %v1496
    %v4778 = vunpack.c.l.b16 %v1497
    %v4779 = vunpack.c.h.b16 %v1497
    %v4780 = vunpack.c.l.b16 %v1498
    %v4781 = vunpack.c.h.b16 %v1498
    %v4782 = vunpack.c.l.b16 %v1499
    %v4783 = vunpack.c.l.b16 %v1500
    %v4784 = vunpack.c.h.b16 %v1500
    %v4785 = vunpack.c.l.b16 %v1501
    %v4786 = vunpack.c.h.b16 %v1501
    %v4787 = vunpack.c.l.b16 %v1502
    %v4788 = vunpack.c.l.b16 %v1503
    %v4789 = vunpack.c.h.b16 %v1503
    %v4790 = vunpack.c.l.b16 %v1504
    %v4791 = vunpack.c.h.b16 %v1504
    %v4792 = vunpack.c.l.b16 %v1505
    %v4793 = vunpack.c.l.b16 %v1506
    %v4794 = vunpack.c.h.b16 %v1506
    %v4795 = vunpack.c.l.b16 %v1507
    %v4796 = vunpack.c.h.b16 %v1507
    %v4797 = vunpack.c.l.b16 %v1508
    %v4798 = vunpack.c.l.b16 %v1509
    %v4799 = vunpack.c.h.b16 %v1509
    %v4800 = vunpack.c.l.b16 %v1510
    %v4801 = vunpack.c.h.b16 %v1510
    %v4802 = vunpack.c.l.b16 %v1511
    %v4803 = vunpack.c.l.b16 %v1512
    %v4804 = vunpack.c.h.b16 %v1512
    %v4805 = vunpack.c.l.b16 %v1513
    %v4806 = vunpack.c.h.b16 %v1513
    %v4807 = vunpack.c.l.b16 %v1514
    %v4808 = vunpack.c.l.b16 %v1515
    %v4809 = vunpack.c.h.b16 %v1515
    %v4810 = vunpack.c.l.b16 %v1516
    %v4811 = vunpack.c.h.b16 %v1516
    %v4812 = vunpack.c.l.b16 %v1517
    %v4813 = vunpack.c.l.b16 %v1518
    %v4814 = vunpack.c.h.b16 %v1518
    %v4815 = vunpack.c.l.b16 %v1519
    %v4816 = vunpack.c.h.b16 %v1519
    %v4817 = vunpack.c.l.b16 %v1520
    %v4818 = vunpack.c.l.b16 %v1521
    %v4819 = vunpack.c.h.b16 %v1521
    %v4820 = vunpack.c.l.b16 %v1522
    %v4821 = vunpack.c.h.b16 %v1522
    %v4822 = vunpack.c.l.b16 %v1523
    %v4823 = vunpack.c.l.b16 %v1524
    %v4824 = vunpack.c.h.b16 %v1524
    %v4825 = vunpack.c.l.b16 %v1525
    %v4826 = vunpack.c.h.b16 %v1525
    %v4827 = vunpack.c.l.b16 %v1526
    %v4828 = vunpack.c.l.b16 %v1527
    %v4829 = vunpack.c.h.b16 %v1527
    %v4830 = vunpack.c.l.b16 %v1528
    %v4831 = vunpack.c.h.b16 %v1528
    %v4832 = vunpack.c.l.b16 %v1529
    %v4833 = vunpack.c.l.b16 %v1530
    %v4834 = vunpack.c.h.b16 %v1530
    %v4835 = vunpack.c.l.b16 %v1531
    %v4836 = vunpack.c.h.b16 %v1531
    %v4837 = vunpack.c.l.b16 %v1532
    %v4838 = vunpack.c.l.b16 %v1533
    %v4839 = vunpack.c.h.b16 %v1533
    %v4840 = vunpack.c.l.b16 %v1534
    %v4841 = vunpack.c.h.b16 %v1534
    %v4842 = vunpack.c.l.b16 %v1535
    %v4843 = vunpack.c.l.b16 %v1536
    %v4844 = vunpack.c.h.b16 %v1536
    %v4845 = vunpack.c.l.b16 %v1537
    %v4846 = vunpack.c.h.b16 %v1537
    %v4847 = vunpack.c.l.b16 %v1538
    %v4848 = vunpack.c.l.b16 %v1539
    %v4849 = vunpack.c.h.b16 %v1539
    %v4850 = vunpack.c.l.b16 %v1540
    %v4851 = vunpack.c.h.b16 %v1540
    %v4852 = vunpack.c.l.b16 %v1541
    %v4853 = vunpack.c.l.b16 %v1542
    %v4854 = vunpack.c.h.b16 %v1542
    %v4855 = vunpack.c.l.b16 %v1543
    %v4856 = vunpack.c.h.b16 %v1543
    %v4857 = vunpack.c.l.b16 %v1544
    %v4858 = vunpack.c.l.b16 %v1545
    %v4859 = vunpack.c.h.b16 %v1545
    %v4860 = vunpack.c.l.b16 %v1546
    %v4861 = vunpack.c.h.b16 %v1546
    %v4862 = vunpack.c.l.b16 %v1547
    %v4863 = vunpack.c.l.b16 %v1548
    %v4864 = vunpack.c.h.b16 %v1548
    %v4865 = vunpack.c.l.b16 %v1549
    %v4866 = vunpack.c.h.b16 %v1549
    %v4867 = vunpack.c.l.b16 %v1550
    %v4868 = vunpack.c.l.b16 %v1551
    %v4869 = vunpack.c.h.b16 %v1551
    %v4870 = vunpack.c.l.b16 %v1552
    %v4871 = vunpack.c.h.b16 %v1552
    %v4872 = vunpack.c.l.b16 %v1553
    %v4873 = vunpack.c.l.b16 %v1554
    %v4874 = vunpack.c.h.b16 %v1554
    %v4875 = vunpack.c.l.b16 %v1555
    %v4876 = vunpack.c.h.b16 %v1555
    %v4877 = vunpack.c.l.b16 %v1556
    %v4878 = vunpack.c.l.b16 %v1557
    %v4879 = vunpack.c.h.b16 %v1557
    %v4880 = vunpack.c.l.b16 %v1558
    %v4881 = vunpack.c.h.b16 %v1558
    %v4882 = vunpack.c.l.b16 %v1559
    %v4883 = vunpack.c.l.b16 %v1560
    %v4884 = vunpack.c.h.b16 %v1560
    %v4885 = vunpack.c.l.b16 %v1561
    %v4886 = vunpack.c.h.b16 %v1561
    %v4887 = vunpack.c.l.b16 %v1562
    %v4888 = vunpack.c.l.b16 %v1563
    %v4889 = vunpack.c.h.b16 %v1563
    %v4890 = vunpack.c.l.b16 %v1564
    %v4891 = vunpack.c.h.b16 %v1564
    %v4892 = vunpack.c.l.b16 %v1565
    %v4893 = vunpack.c.l.b16 %v1566
    %v4894 = vunpack.c.h.b16 %v1566
    %v4895 = vunpack.c.l.b16 %v1567
    %v4896 = vunpack.c.h.b16 %v1567
    %v4897 = vunpack.c.l.b16 %v1568
    %v4898 = vunpack.c.l.b16 %v1569
    %v4899 = vunpack.c.h.b16 %v1569
    %v4900 = vunpack.c.l.b16 %v1570
    %v4901 = vunpack.c.h.b16 %v1570
    %v4902 = vunpack.c.l.b16 %v1571
    %v4903 = vunpack.c.l.b16 %v1572
    %v4904 = vunpack.c.h.b16 %v1572
    %v4905 = vunpack.c.l.b16 %v1573
    %v4906 = vunpack.c.h.b16 %v1573
    %v4907 = vunpack.c.l.b16 %v1574
    %v4908 = vunpack.c.l.b16 %v1575
    %v4909 = vunpack.c.h.b16 %v1575
    %v4910 = vunpack.c.l.b16 %v1576
    %v4911 = vunpack.c.h.b16 %v1576
    %v4912 = vunpack.c.l.b16 %v1577
    %v4913 = vunpack.c.l.b16 %v1578
    %v4914 = vunpack.c.h.b16 %v1578
    %v4915 = vunpack.c.l.b16 %v1579
    %v4916 = vunpack.c.h.b16 %v1579
    %v4917 = vunpack.c.l.b16 %v1580
    %v4918 = vunpack.c.l.b16 %v1581
    %v4919 = vunpack.c.h.b16 %v1581
    %v4920 = vunpack.c.l.b16 %v1582
    %v4921 = vunpack.c.h.b16 %v1582
    %v4922 = vunpack.c.l.b16 %v1583
    %v4923 = vunpack.c.l.b16 %v1584
    %v4924 = vunpack.c.h.b16 %v1584
    %v4925 = vunpack.c.l.b16 %v1585
    %v4926 = vunpack.c.h.b16 %v1585
    %v4927 = vunpack.c.l.b16 %v1586
    %v4928 = vunpack.c.l.b16 %v1587
    %v4929 = vunpack.c.h.b16 %v1587
    %v4930 = vunpack.c.l.b16 %v1588
    %v4931 = vunpack.c.h.b16 %v1588
    %v4932 = vunpack.c.l.b16 %v1589
    %v4933 = vunpack.c.l.b16 %v1590
    %v4934 = vunpack.c.h.b16 %v1590
    %v4935 = vunpack.c.l.b16 %v1591
    %v4936 = vunpack.c.h.b16 %v1591
    %v4937 = vunpack.c.l.b16 %v1592
    %v4938 = vunpack.c.l.b16 %v1593
    %v4939 = vunpack.c.h.b16 %v1593
    %v4940 = vunpack.c.l.b16 %v1594
    %v4941 = vunpack.c.h.b16 %v1594
    %v4942 = vunpack.c.l.b16 %v1595
    %v4943 = vunpack.c.l.b16 %v1596
    %v4944 = vunpack.c.h.b16 %v1596
    %v4945 = vunpack.c.l.b16 %v1597
    %v4946 = vunpack.c.h.b16 %v1597
    %v4947 = vunpack.c.l.b16 %v1598
    %v4948 = vunpack.c.l.b16 %v1599
    %v4949 = vunpack.c.h.b16 %v1599
    %v4950 = vunpack.c.l.b16 %v1600
    %v4951 = vunpack.c.h.b16 %v1600
    %v4952 = vunpack.c.l.b16 %v1601
    %v4953 = vunpack.c.l.b16 %v1602
    %v4954 = vunpack.c.h.b16 %v1602
    %v4955 = vunpack.c.l.b16 %v1603
    %v4956 = vunpack.c.h.b16 %v1603
    %v4957 = vunpack.c.l.b16 %v1604
    %v4958 = vunpack.c.l.b16 %v1605
    %v4959 = vunpack.c.h.b16 %v1605
    %v4960 = vunpack.c.l.b16 %v1606
    %v4961 = vunpack.c.h.b16 %v1606
    %v4962 = vunpack.c.l.b16 %v1607
    %v4963 = vunpack.c.l.b16 %v1608
    %v4964 = vunpack.c.h.b16 %v1608
    %v4965 = vunpack.c.l.b16 %v1609
    %v4966 = vunpack.c.h.b16 %v1609
    %v4967 = vunpack.c.l.b16 %v1610
    %v4968 = vunpack.c.l.b16 %v1611
    %v4969 = vunpack.c.h.b16 %v1611
    %v4970 = vunpack.c.l.b16 %v1612
    %v4971 = vunpack.c.h.b16 %v1612
    %v4972 = vunpack.c.l.b16 %v1613
    %v4973 = vunpack.c.l.b16 %v1614
    %v4974 = vunpack.c.h.b16 %v1614
    %v4975 = vunpack.c.l.b16 %v1615
    %v4976 = vunpack.c.h.b16 %v1615
    %v4977 = vunpack.c.l.b16 %v1616
    %v4978 = vunpack.c.l.b16 %v1617
    %v4979 = vunpack.c.h.b16 %v1617
    %v4980 = vunpack.c.l.b16 %v1618
    %v4981 = vunpack.c.h.b16 %v1618
    %v4982 = vunpack.c.l.b16 %v1619
    %v4983 = vunpack.c.l.b16 %v1620
    %v4984 = vunpack.c.h.b16 %v1620
    %v4985 = vunpack.c.l.b16 %v1621
    %v4986 = vunpack.c.h.b16 %v1621
    %v4987 = vunpack.c.l.b16 %v1622
    %v4988 = vunpack.c.l.b16 %v1623
    %v4989 = vunpack.c.h.b16 %v1623
    %v4990 = vunpack.c.l.b16 %v1624
    %v4991 = vunpack.c.h.b16 %v1624
    %v4992 = vunpack.c.l.b16 %v1625
    %v4993 = vunpack.c.l.b16 %v1626
    %v4994 = vunpack.c.h.b16 %v1626
    %v4995 = vunpack.c.l.b16 %v1627
    %v4996 = vunpack.c.h.b16 %v1627
    %v4997 = vunpack.c.l.b16 %v1628
    %v4998 = vunpack.c.l.b16 %v1629
    %v4999 = vunpack.c.h.b16 %v1629
    %v5000 = vunpack.c.l.b16 %v1630
    %v5001 = vunpack.c.h.b16 %v1630
    %v5002 = vunpack.c.l.b16 %v1631
    %v5003 = vunpack.c.l.b16 %v1632
    %v5004 = vunpack.c.h.b16 %v1632
    %v5005 = vunpack.c.l.b16 %v1633
    %v5006 = vunpack.c.h.b16 %v1633
    %v5007 = vunpack.c.l.b16 %v1634
    %v5008 = vunpack.c.l.b16 %v1635
    %v5009 = vunpack.c.h.b16 %v1635
    %v5010 = vunpack.c.l.b16 %v1636
    %v5011 = vunpack.c.h.b16 %v1636
    %v5012 = vunpack.c.l.b16 %v1637
    %v5013 = vunpack.c.l.b16 %v1638
    %v5014 = vunpack.c.h.b16 %v1638
    %v5015 = vunpack.c.l.b16 %v1639
    %v5016 = vunpack.c.h.b16 %v1639
    %v5017 = vunpack.c.l.b16 %v1640
    %v5018 = vunpack.c.l.b16 %v1641
    %v5019 = vunpack.c.h.b16 %v1641
    %v5020 = vunpack.c.l.b16 %v1642
    %v5021 = vunpack.c.h.b16 %v1642
    %v5022 = vunpack.c.l.b16 %v1643
    %v5023 = vunpack.c.l.b16 %v1644
    %v5024 = vunpack.c.h.b16 %v1644
    %v5025 = vunpack.c.l.b16 %v1645
    %v5026 = vunpack.c.h.b16 %v1645
    %v5027 = vunpack.c.l.b16 %v1646
    %v5028 = vunpack.c.l.b16 %v1647
    %v5029 = vunpack.c.h.b16 %v1647
    %v5030 = vunpack.c.l.b16 %v1648
    %v5031 = vunpack.c.h.b16 %v1648
    %v5032 = vunpack.c.l.b16 %v1649
    %v5033 = vunpack.c.l.b16 %v1650
    %v5034 = vunpack.c.h.b16 %v1650
    %v5035 = vunpack.c.l.b16 %v1651
    %v5036 = vunpack.c.h.b16 %v1651
    %v5037 = vunpack.c.l.b16 %v1652
    %v5038 = vunpack.c.l.b16 %v1653
    %v5039 = vunpack.c.h.b16 %v1653
    %v5040 = vunpack.c.l.b16 %v1654
    %v5041 = vunpack.c.h.b16 %v1654
    %v5042 = vunpack.c.l.b16 %v1655
    %v5043 = vunpack.c.l.b16 %v1656
    %v5044 = vunpack.c.h.b16 %v1656
    %v5045 = vunpack.c.l.b16 %v1657
    %v5046 = vunpack.c.h.b16 %v1657
    %v5047 = vunpack.c.l.b16 %v1658
    %v5048 = vunpack.c.l.b16 %v1659
    %v5049 = vunpack.c.h.b16 %v1659
    %v5050 = vunpack.c.l.b16 %v1660
    %v5051 = vunpack.c.h.b16 %v1660
    %v5052 = vunpack.c.l.b16 %v1661
    %v5053 = vunpack.c.l.b16 %v1662
    %v5054 = vunpack.c.h.b16 %v1662
    %v5055 = vunpack.c.l.b16 %v1663
    %v5056 = vunpack.c.h.b16 %v1663
    %v5057 = vunpack.c.l.b16 %v1664
    %v5058 = vunpack.c.l.b16 %v1665
    %v5059 = vunpack.c.h.b16 %v1665
    %v5060 = vunpack.c.l.b16 %v1666
    %v5061 = vunpack.c.h.b16 %v1666
    %v5062 = vunpack.c.l.b16 %v1667
    %v5063 = vunpack.c.l.b16 %v1668
    %v5064 = vunpack.c.h.b16 %v1668
    %v5065 = vunpack.c.l.b16 %v1669
    %v5066 = vunpack.c.h.b16 %v1669
    %v5067 = vunpack.c.l.b16 %v1670
    %v5068 = vunpack.c.l.b16 %v1671
    %v5069 = vunpack.c.h.b16 %v1671
    %v5070 = vunpack.c.l.b16 %v1672
    %v5071 = vunpack.c.h.b16 %v1672
    %v5072 = vunpack.c.l.b16 %v1673
    %v5073 = vunpack.c.l.b16 %v1674
    %v5074 = vunpack.c.h.b16 %v1674
    %v5075 = vunpack.c.l.b16 %v1675
    %v5076 = vunpack.c.h.b16 %v1675
    %v5077 = vunpack.c.l.b16 %v1676
    %v5078 = vunpack.c.l.b16 %v1677
    %v5079 = vunpack.c.h.b16 %v1677
    %v5080 = vunpack.c.l.b16 %v1678
    %v5081 = vunpack.c.h.b16 %v1678
    %v5082 = vunpack.c.l.b16 %v1679
    %v5083 = vunpack.c.l.b16 %v1680
    %v5084 = vunpack.c.h.b16 %v1680
    %v5085 = vunpack.c.l.b16 %v1681
    %v5086 = vunpack.c.h.b16 %v1681
    %v5087 = vunpack.c.l.b16 %v1682
    %v5088 = vunpack.c.l.b16 %v1683
    %v5089 = vunpack.c.h.b16 %v1683
    %v5090 = vunpack.c.l.b16 %v1684
    %v5091 = vunpack.c.h.b16 %v1684
    %v5092 = vunpack.c.l.b16 %v1685
    %v5093 = vunpack.c.l.b16 %v1686
    %v5094 = vunpack.c.h.b16 %v1686
    %v5095 = vunpack.c.l.b16 %v1687
    %v5096 = vunpack.c.h.b16 %v1687
    %v5097 = vunpack.c.l.b16 %v1688
    %v5098 = vunpack.c.l.b16 %v1689
    %v5099 = vunpack.c.h.b16 %v1689
    %v5100 = vunpack.c.l.b16 %v1690
    %v5101 = vunpack.c.h.b16 %v1690
    %v5102 = vunpack.c.l.b16 %v1691
    %v5103 = vunpack.c.l.b16 %v1692
    %v5104 = vunpack.c.h.b16 %v1692
    %v5105 = vunpack.c.l.b16 %v1693
    %v5106 = vunpack.c.h.b16 %v1693
    %v5107 = vunpack.c.l.b16 %v1694
    %v5108 = vunpack.c.l.b16 %v1695
    %v5109 = vunpack.c.h.b16 %v1695
    %v5110 = vunpack.c.l.b16 %v1696
    %v5111 = vunpack.c.h.b16 %v1696
    %v5112 = vunpack.c.l.b16 %v1697
    %v5113 = vunpack.c.l.b16 %v1698
    %v5114 = vunpack.c.h.b16 %v1698
    %v5115 = vunpack.c.l.b16 %v1699
    %v5116 = vunpack.c.h.b16 %v1699
    %v5117 = vunpack.c.l.b16 %v1700
    %v5118 = vunpack.c.l.b16 %v1701
    %v5119 = vunpack.c.h.b16 %v1701
    %v5120 = vunpack.c.l.b16 %v1702
    %v5121 = vunpack.c.h.b16 %v1702
    %v5122 = vunpack.c.l.b16 %v1703
    %v5123 = vunpack.c.l.b16 %v1704
    %v5124 = vunpack.c.h.b16 %v1704
    %v5125 = vunpack.c.l.b16 %v1705
    %v5126 = vunpack.c.h.b16 %v1705
    %v5127 = vunpack.c.l.b16 %v1706
    %v5128 = vunpack.c.l.b16 %v1707
    %v5129 = vunpack.c.h.b16 %v1707
    %v5130 = vunpack.c.l.b16 %v1708
    %v5131 = vunpack.c.h.b16 %v1708
    %v5132 = vunpack.c.l.b16 %v1709
    %v5133 = vunpack.c.l.b16 %v1710
    %v5134 = vunpack.c.h.b16 %v1710
    %v5135 = vunpack.c.l.b16 %v1711
    %v5136 = vunpack.c.h.b16 %v1711
    %v5137 = vunpack.c.l.b16 %v1712
    %v5138 = vunpack.c.l.b16 %v1713
    %v5139 = vunpack.c.h.b16 %v1713
    %v5140 = vunpack.c.l.b16 %v1714
    %v5141 = vunpack.c.h.b16 %v1714
    %v5142 = vunpack.c.l.b16 %v1715
    %v5143 = vunpack.c.l.b16 %v1716
    %v5144 = vunpack.c.h.b16 %v1716
    %v5145 = vunpack.c.l.b16 %v1717
    %v5146 = vunpack.c.h.b16 %v1717
    %v5147 = vunpack.c.l.b16 %v1718
    %v5148 = vunpack.c.l.b16 %v1719
    %v5149 = vunpack.c.h.b16 %v1719
    %v5150 = vunpack.c.l.b16 %v1720
    %v5151 = vunpack.c.h.b16 %v1720
    %v5152 = vunpack.c.l.b16 %v1721
    %v5153 = vunpack.c.l.b16 %v1722
    %v5154 = vunpack.c.h.b16 %v1722
    %v5155 = vunpack.c.l.b16 %v1723
    %v5156 = vunpack.c.h.b16 %v1723
    %v5157 = vunpack.c.l.b16 %v1724
    %v5158 = vunpack.c.l.b16 %v1725
    %v5159 = vunpack.c.h.b16 %v1725
    %v5160 = vunpack.c.l.b16 %v1726
    %v5161 = vunpack.c.h.b16 %v1726
    %v5162 = vunpack.c.l.b16 %v1727
    %v5163 = vunpack.c.l.b16 %v1728
    %v5164 = vunpack.c.h.b16 %v1728
    %v5165 = vunpack.c.l.b16 %v1729
    %v5166 = vunpack.c.h.b16 %v1729
    %v5167 = vunpack.c.l.b16 %v1730
    %v5168 = vunpack.c.l.b16 %v1731
    %v5169 = vunpack.c.h.b16 %v1731
    %v5170 = vunpack.c.l.b16 %v1732
    %v5171 = vunpack.c.h.b16 %v1732
    %v5172 = vunpack.c.l.b16 %v1733
    %v5173 = vunpack.c.l.b16 %v1734
    %v5174 = vunpack.c.h.b16 %v1734
    %v5175 = vunpack.c.l.b16 %v1735
    %v5176 = vunpack.c.h.b16 %v1735
    %v5177 = vunpack.c.l.b16 %v1736
    %v5178 = vunpack.c.l.b16 %v1737
    %v5179 = vunpack.c.h.b16 %v1737
    %v5180 = vunpack.c.l.b16 %v1738
    %v5181 = vunpack.c.h.b16 %v1738
    %v5182 = vunpack.c.l.b16 %v1739
    %v5183 = vunpack.c.l.b16 %v1740
    %v5184 = vunpack.c.h.b16 %v1740
    %v5185 = vunpack.c.l.b16 %v1741
    %v5186 = vunpack.c.h.b16 %v1741
    %v5187 = vunpack.c.l.b16 %v1742
    %v5188 = vunpack.c.l.b16 %v1743
    %v5189 = vunpack.c.h.b16 %v1743
    %v5190 = vunpack.c.l.b16 %v1744
    %v5191 = vunpack.c.h.b16 %v1744
    %v5192 = vunpack.c.l.b16 %v1745
    %v5193 = vunpack.c.l.b16 %v1746
    %v5194 = vunpack.c.h.b16 %v1746
    %v5195 = vunpack.c.l.b16 %v1747
    %v5196 = vunpack.c.h.b16 %v1747
    %v5197 = vunpack.c.l.b16 %v1748
    %v5198 = vunpack.c.l.b16 %v1749
    %v5199 = vunpack.c.h.b16 %v1749
    %v5200 = vunpack.c.l.b16 %v1750
    %v5201 = vunpack.c.h.b16 %v1750
    %v5202 = vunpack.c.l.b16 %v1751
    %v5203 = vunpack.c.l.b16 %v1752
    %v5204 = vunpack.c.h.b16 %v1752
    %v5205 = vunpack.c.l.b16 %v1753
    %v5206 = vunpack.c.h.b16 %v1753
    %v5207 = vunpack.c.l.b16 %v1754
    %v5208 = vunpack.c.l.b16 %v1755
    %v5209 = vunpack.c.h.b16 %v1755
    %v5210 = vunpack.c.l.b16 %v1756
    %v5211 = vunpack.c.h.b16 %v1756
    %v5212 = vunpack.c.l.b16 %v1757
    %v5213 = vunpack.c.l.b16 %v1758
    %v5214 = vunpack.c.h.b16 %v1758
    %v5215 = vunpack.c.l.b16 %v1759
    %v5216 = vunpack.c.h.b16 %v1759
    %v5217 = vunpack.c.l.b16 %v1760
    %v5218 = vunpack.c.l.b16 %v1761
    %v5219 = vunpack.c.h.b16 %v1761
    %v5220 = vunpack.c.l.b16 %v1762
    %v5221 = vunpack.c.h.b16 %v1762
    %v5222 = vunpack.c.l.b16 %v1763
    %v5223 = vpack.c.b16 %v3083, %v3078
    %v5224 = vpack.c.b16 %v3084, %v3079
    %v5225 = vpack.c.b16 %v3085, %v3080
    %v5226 = vpack.c.b16 %v3086, %v3081
    %v5227 = vpack.c.b16 %v3087, %v3082
    %v5228 = vpack.c.b16 %v3093, %v3088
    %v5229 = vpack.c.b16 %v3094, %v3089
    %v5230 = vpack.c.b16 %v3095, %v3090
    %v5231 = vpack.c.b16 %v3096, %v3091
    %v5232 = vpack.c.b16 %v3097, %v3092
    %v5233 = vpack.c.b16 %v3103, %v3098
    %v5234 = vpack.c.b16 %v3104, %v3099
    %v5235 = vpack.c.b16 %v3105, %v3100
    %v5236 = vpack.c.b16 %v3106, %v3101
    %v5237 = vpack.c.b16 %v3107, %v3102
    %v5238 = vpack.c.b16 %v3113, %v3108
    %v5239 = vpack.c.b16 %v3114, %v3109
    %v5240 = vpack.c.b16 %v3115, %v3110
    %v5241 = vpack.c.b16 %v3116, %v3111
    %v5242 = vpack.c.b16 %v3117, %v3112
    %v5243 = vpack.c.b16 %v3123, %v3118
    %v5244 = vpack.c.b16 %v3124, %v3119
    %v5245 = vpack.c.b16 %v3125, %v3120
    %v5246 = vpack.c.b16 %v3126, %v3121
    %v5247 = vpack.c.b16 %v3127, %v3122
    %v5248 = vpack.c.b16 %v3133, %v3128
    %v5249 = vpack.c.b16 %v3134, %v3129
    %v5250 = vpack.c.b16 %v3135, %v3130
    %v5251 = vpack.c.b16 %v3136, %v3131
    %v5252 = vpack.c.b16 %v3137, %v3132
    %v5253 = vpack.c.b16 %v3143, %v3138
    %v5254 = vpack.c.b16 %v3144, %v3139
    %v5255 = vpack.c.b16 %v3145, %v3140
    %v5256 = vpack.c.b16 %v3146, %v3141
    %v5257 = vpack.c.b16 %v3147, %v3142
    %v5258 = vpack.c.b16 %v3153, %v3148
    %v5259 = vpack.c.b16 %v3154, %v3149
    %v5260 = vpack.c.b16 %v3155, %v3150
    %v5261 = vpack.c.b16 %v3156, %v3151
    %v5262 = vpack.c.b16 %v3157, %v3152
    %v5263 = vpack.c.b16 %v3163, %v3158
    %v5264 = vpack.c.b16 %v3164, %v3159
    %v5265 = vpack.c.b16 %v3165, %v3160
    %v5266 = vpack.c.b16 %v3166, %v3161
    %v5267 = vpack.c.b16 %v3167, %v3162
    %v5268 = vpack.c.b16 %v3173, %v3168
    %v5269 = vpack.c.b16 %v3174, %v3169
    %v5270 = vpack.c.b16 %v3175, %v3170
    %v5271 = vpack.c.b16 %v3176, %v3171
    %v5272 = vpack.c.b16 %v3177, %v3172
    %v5273 = vpack.c.b16 %v3183, %v3178
    %v5274 = vpack.c.b16 %v3184, %v3179
    %v5275 = vpack.c.b16 %v3185, %v3180
    %v5276 = vpack.c.b16 %v3186, %v3181
    %v5277 = vpack.c.b16 %v3187, %v3182
    %v5278 = vpack.c.b16 %v3193, %v3188
    %v5279 = vpack.c.b16 %v3194, %v3189
    %v5280 = vpack.c.b16 %v3195, %v3190
    %v5281 = vpack.c.b16 %v3196, %v3191
    %v5282 = vpack.c.b16 %v3197, %v3192
    %v5283 = vpack.c.b16 %v3203, %v3198
    %v5284 = vpack.c.b16 %v3204, %v3199
    %v5285 = vpack.c.b16 %v3205, %v3200
    %v5286 = vpack.c.b16 %v3206, %v3201
    %v5287 = vpack.c.b16 %v3207, %v3202
    %v5288 = vpack.c.b16 %v3213, %v3208
    %v5289 = vpack.c.b16 %v3214, %v3209
    %v5290 = vpack.c.b16 %v3215, %v3210
    %v5291 = vpack.c.b16 %v3216, %v3211
    %v5292 = vpack.c.b16 %v3217, %v3212
    %v5293 = vpack.c.b16 %v3223, %v3218
    %v5294 = vpack.c.b16 %v3224, %v3219
    %v5295 = vpack.c.b16 %v3225, %v3220
    %v5296 = vpack.c.b16 %v3226, %v3221
    %v5297 = vpack.c.b16 %v3227, %v3222
    %v5298 = vpack.c.b16 %v3233, %v3228
    %v5299 = vpack.c.b16 %v3234, %v3229
    %v5300 = vpack.c.b16 %v3235, %v3230
    %v5301 = vpack.c.b16 %v3236, %v3231
    %v5302 = vpack.c.b16 %v3237, %v3232
    %v5303 = vpack.c.b16 %v3243, %v3238
    %v5304 = vpack.c.b16 %v3244, %v3239
    %v5305 = vpack.c.b16 %v3245, %v3240
    %v5306 = vpack.c.b16 %v3246, %v3241
    %v5307 = vpack.c.b16 %v3247, %v3242
    %v5308 = vpack.c.b16 %v3253, %v3248
    %v5309 = vpack.c.b16 %v3254, %v3249
    %v5310 = vpack.c.b16 %v3255, %v3250
    %v5311 = vpack.c.b16 %v3256, %v3251
    %v5312 = vpack.c.b16 %v3257, %v3252
    %v5313 = vpack.c.b16 %v3263, %v3258
    %v5314 = vpack.c.b16 %v3264, %v3259
    %v5315 = vpack.c.b16 %v3265, %v3260
    %v5316 = vpack.c.b16 %v3266, %v3261
    %v5317 = vpack.c.b16 %v3267, %v3262
    %v5318 = vpack.c.b16 %v3273, %v3268
    %v5319 = vpack.c.b16 %v3274, %v3269
    %v5320 = vpack.c.b16 %v3275, %v3270
    %v5321 = vpack.c.b16 %v3276, %v3271
    %v5322 = vpack.c.b16 %v3277, %v3272
    %v5323 = vpack.c.b16 %v3283, %v3278
    %v5324 = vpack.c.b16 %v3284, %v3279
    %v5325 = vpack.c.b16 %v3285, %v3280
    %v5326 = vpack.c.b16 %v3286, %v3281
    %v5327 = vpack.c.b16 %v3287, %v3282
    %v5328 = vpack.c.b16 %v3293, %v3288
    %v5329 = vpack.c.b16 %v3294, %v3289
    %v5330 = vpack.c.b16 %v3295, %v3290
    %v5331 = vpack.c.b16 %v3296, %v3291
    %v5332 = vpack.c.b16 %v3297, %v3292
    %v5333 = vpack.c.b16 %v3303, %v3298
    %v5334 = vpack.c.b16 %v3304, %v3299
    %v5335 = vpack.c.b16 %v3305, %v3300
    %v5336 = vpack.c.b16 %v3306, %v3301
    %v5337 = vpack.c.b16 %v3307, %v3302
    %v5338 = vpack.c.b16 %v3313, %v3308
    %v5339 = vpack.c.b16 %v3314, %v3309
    %v5340 = vpack.c.b16 %v3315, %v3310
    %v5341 = vpack.c.b16 %v3316, %v3311
    %v5342 = vpack.c.b16 %v3317, %v3312
    %v5343 = vpack.c.b16 %v3323, %v3318
    %v5344 = vpack.c.b16 %v3324, %v3319
    %v5345 = vpack.c.b16 %v3325, %v3320
    %v5346 = vpack.c.b16 %v3326, %v3321
    %v5347 = vpack.c.b16 %v3327, %v3322
    %v5348 = vpack.c.b16 %v3333, %v3328
    %v5349 = vpack.c.b16 %v3334, %v3329
    %v5350 = vpack.c.b16 %v3335, %v3330
    %v5351 = vpack.c.b16 %v3336, %v3331
    %v5352 = vpack.c.b16 %v3337, %v3332
    %v5353 = vpack.c.b16 %v3343, %v3338
    %v5354 = vpack.c.b16 %v3344, %v3339
    %v5355 = vpack.c.b16 %v3345, %v3340
    %v5356 = vpack.c.b16 %v3346, %v3341
    %v5357 = vpack.c.b16 %v3347, %v3342
    %v5358 = vpack.c.b16 %v3353, %v3348
    %v5359 = vpack.c.b16 %v3354, %v3349
    %v5360 = vpack.c.b16 %v3355, %v3350
    %v5361 = vpack.c.b16 %v3356, %v3351
    %v5362 = vpack.c.b16 %v3357, %v3352
    %v5363 = vpack.c.b16 %v3363, %v3358
    %v5364 = vpack.c.b16 %v3364, %v3359
    %v5365 = vpack.c.b16 %v3365, %v3360
    %v5366 = vpack.c.b16 %v3366, %v3361
    %v5367 = vpack.c.b16 %v3367, %v3362
    %v5368 = vpack.c.b16 %v3373, %v3368
    %v5369 = vpack.c.b16 %v3374, %v3369
    %v5370 = vpack.c.b16 %v3375, %v3370
    %v5371 = vpack.c.b16 %v3376, %v3371
    %v5372 = vpack.c.b16 %v3377, %v3372
    %v5373 = vpack.c.b16 %v3383, %v3378
    %v5374 = vpack.c.b16 %v3384, %v3379
    %v5375 = vpack.c.b16 %v3385, %v3380
    %v5376 = vpack.c.b16 %v3386, %v3381
    %v5377 = vpack.c.b16 %v3387, %v3382
    %v5378 = vpack.c.b16 %v3393, %v3388
    %v5379 = vpack.c.b16 %v3394, %v3389
    %v5380 = vpack.c.b16 %v3395, %v3390
    %v5381 = vpack.c.b16 %v3396, %v3391
    %v5382 = vpack.c.b16 %v3397, %v3392
    %v5383 = vpack.c.b16 %v3403, %v3398
    %v5384 = vpack.c.b16 %v3404, %v3399
    %v5385 = vpack.c.b16 %v3405, %v3400
    %v5386 = vpack.c.b16 %v3406, %v3401
    %v5387 = vpack.c.b16 %v3407, %v3402
    %v5388 = vpack.c.b16 %v3413, %v3408
    %v5389 = vpack.c.b16 %v3414, %v3409
    %v5390 = vpack.c.b16 %v3415, %v3410
    %v5391 = vpack.c.b16 %v3416, %v3411
    %v5392 = vpack.c.b16 %v3417, %v3412
    %v5393 = vpack.c.b16 %v3423, %v3418
    %v5394 = vpack.c.b16 %v3424, %v3419
    %v5395 = vpack.c.b16 %v3425, %v3420
    %v5396 = vpack.c.b16 %v3426, %v3421
    %v5397 = vpack.c.b16 %v3427, %v3422
    %v5398 = vpack.c.b16 %v3433, %v3428
    %v5399 = vpack.c.b16 %v3434, %v3429
    %v5400 = vpack.c.b16 %v3435, %v3430
    %v5401 = vpack.c.b16 %v3436, %v3431
    %v5402 = vpack.c.b16 %v3437, %v3432
    %v5403 = vpack.c.b16 %v3443, %v3438
    %v5404 = vpack.c.b16 %v3444, %v3439
    %v5405 = vpack.c.b16 %v3445, %v3440
    %v5406 = vpack.c.b16 %v3446, %v3441
    %v5407 = vpack.c.b16 %v3447, %v3442
    %v5408 = vpack.c.b16 %v3453, %v3448
    %v5409 = vpack.c.b16 %v3454, %v3449
    %v5410 = vpack.c.b16 %v3455, %v3450
    %v5411 = vpack.c.b16 %v3456, %v3451
    %v5412 = vpack.c.b16 %v3457, %v3452
    %v5413 = vpack.c.b16 %v3463, %v3458
    %v5414 = vpack.c.b16 %v3464, %v3459
    %v5415 = vpack.c.b16 %v3465, %v3460
    %v5416 = vpack.c.b16 %v3466, %v3461
    %v5417 = vpack.c.b16 %v3467, %v3462
    %v5418 = vpack.c.b16 %v3473, %v3468
    %v5419 = vpack.c.b16 %v3474, %v3469
    %v5420 = vpack.c.b16 %v3475, %v3470
    %v5421 = vpack.c.b16 %v3476, %v3471
    %v5422 = vpack.c.b16 %v3477, %v3472
    %v5423 = vpack.c.b16 %v3483, %v3478
    %v5424 = vpack.c.b16 %v3484, %v3479
    %v5425 = vpack.c.b16 %v3485, %v3480
    %v5426 = vpack.c.b16 %v3486, %v3481
    %v5427 = vpack.c.b16 %v3487, %v3482
    %v5428 = vpack.c.b16 %v3493, %v3488
    %v5429 = vpack.c.b16 %v3494, %v3489
    %v5430 = vpack.c.b16 %v3495, %v3490
    %v5431 = vpack.c.b16 %v3496, %v3491
    %v5432 = vpack.c.b16 %v3497, %v3492
    %v5433 = vpack.c.b16 %v3503, %v3498
    %v5434 = vpack.c.b16 %v3504, %v3499
    %v5435 = vpack.c.b16 %v3505, %v3500
    %v5436 = vpack.c.b16 %v3506, %v3501
    %v5437 = vpack.c.b16 %v3507, %v3502
    %v5438 = vpack.c.b16 %v3513, %v3508
    %v5439 = vpack.c.b16 %v3514, %v3509
    %v5440 = vpack.c.b16 %v3515, %v3510
    %v5441 = vpack.c.b16 %v3516, %v3511
    %v5442 = vpack.c.b16 %v3517, %v3512
    %v5443 = vpack.c.b16 %v3523, %v3518
    %v5444 = vpack.c.b16 %v3524, %v3519
    %v5445 = vpack.c.b16 %v3525, %v3520
    %v5446 = vpack.c.b16 %v3526, %v3521
    %v5447 = vpack.c.b16 %v3527, %v3522
    %v5448 = vpack.c.b16 %v3533, %v3528
    %v5449 = vpack.c.b16 %v3534, %v3529
    %v5450 = vpack.c.b16 %v3535, %v3530
    %v5451 = vpack.c.b16 %v3536, %v3531
    %v5452 = vpack.c.b16 %v3537, %v3532
    %v5453 = vpack.c.b16 %v3543, %v3538
    %v5454 = vpack.c.b16 %v3544, %v3539
    %v5455 = vpack.c.b16 %v3545, %v3540
    %v5456 = vpack.c.b16 %v3546, %v3541
    %v5457 = vpack.c.b16 %v3547, %v3542
    %v5458 = vpack.c.b16 %v3553, %v3548
    %v5459 = vpack.c.b16 %v3554, %v3549
    %v5460 = vpack.c.b16 %v3555, %v3550
    %v5461 = vpack.c.b16 %v3556, %v3551
    %v5462 = vpack.c.b16 %v3557, %v3552
    %v5463 = vpack.c.b16 %v3563, %v3558
    %v5464 = vpack.c.b16 %v3564, %v3559
    %v5465 = vpack.c.b16 %v3565, %v3560
    %v5466 = vpack.c.b16 %v3566, %v3561
    %v5467 = vpack.c.b16 %v3567, %v3562
    %v5468 = vpack.c.b16 %v3573, %v3568
    %v5469 = vpack.c.b16 %v3574, %v3569
    %v5470 = vpack.c.b16 %v3575, %v3570
    %v5471 = vpack.c.b16 %v3576, %v3571
    %v5472 = vpack.c.b16 %v3577, %v3572
    %v5473 = vpack.c.b16 %v3583, %v3578
    %v5474 = vpack.c.b16 %v3584, %v3579
    %v5475 = vpack.c.b16 %v3585, %v3580
    %v5476 = vpack.c.b16 %v3586, %v3581
    %v5477 = vpack.c.b16 %v3587, %v3582
    %v5478 = vpack.c.b16 %v3593, %v3588
    %v5479 = vpack.c.b16 %v3594, %v3589
    %v5480 = vpack.c.b16 %v3595, %v3590
    %v5481 = vpack.c.b16 %v3596, %v3591
    %v5482 = vpack.c.b16 %v3597, %v3592
    %v5483 = vpack.c.b16 %v3603, %v3598
    %v5484 = vpack.c.b16 %v3604, %v3599
    %v5485 = vpack.c.b16 %v3605, %v3600
    %v5486 = vpack.c.b16 %v3606, %v3601
    %v5487 = vpack.c.b16 %v3607, %v3602
    %v5488 = vpack.c.b16 %v3613, %v3608
    %v5489 = vpack.c.b16 %v3614, %v3609
    %v5490 = vpack.c.b16 %v3615, %v3610
    %v5491 = vpack.c.b16 %v3616, %v3611
    %v5492 = vpack.c.b16 %v3617, %v3612
    %v5493 = vpack.c.b16 %v3623, %v3618
    %v5494 = vpack.c.b16 %v3624, %v3619
    %v5495 = vpack.c.b16 %v3625, %v3620
    %v5496 = vpack.c.b16 %v3626, %v3621
    %v5497 = vpack.c.b16 %v3627, %v3622
    %v5498 = vpack.c.b16 %v3633, %v3628
    %v5499 = vpack.c.b16 %v3634, %v3629
    %v5500 = vpack.c.b16 %v3635, %v3630
    %v5501 = vpack.c.b16 %v3636, %v3631
    %v5502 = vpack.c.b16 %v3637, %v3632
    %v5503 = vpack.c.b16 %v3643, %v3638
    %v5504 = vpack.c.b16 %v3644, %v3639
    %v5505 = vpack.c.b16 %v3645, %v3640
    %v5506 = vpack.c.b16 %v3646, %v3641
    %v5507 = vpack.c.b16 %v3647, %v3642
    %v5508 = vpack.c.b16 %v3653, %v3648
    %v5509 = vpack.c.b16 %v3654, %v3649
    %v5510 = vpack.c.b16 %v3655, %v3650
    %v5511 = vpack.c.b16 %v3656, %v3651
    %v5512 = vpack.c.b16 %v3657, %v3652
    %v5513 = vpack.c.b16 %v3663, %v3658
    %v5514 = vpack.c.b16 %v3664, %v3659
    %v5515 = vpack.c.b16 %v3665, %v3660
    %v5516 = vpack.c.b16 %v3666, %v3661
    %v5517 = vpack.c.b16 %v3667, %v3662
    %v5518 = vpack.c.b16 %v3673, %v3668
    %v5519 = vpack.c.b16 %v3674, %v3669
    %v5520 = vpack.c.b16 %v3675, %v3670
    %v5521 = vpack.c.b16 %v3676, %v3671
    %v5522 = vpack.c.b16 %v3677, %v3672
    %v5523 = vpack.c.b16 %v3683, %v3678
    %v5524 = vpack.c.b16 %v3684, %v3679
    %v5525 = vpack.c.b16 %v3685, %v3680
    %v5526 = vpack.c.b16 %v3686, %v3681
    %v5527 = vpack.c.b16 %v3687, %v3682
    %v5528 = vpack.c.b16 %v3693, %v3688
    %v5529 = vpack.c.b16 %v3694, %v3689
    %v5530 = vpack.c.b16 %v3695, %v3690
    %v5531 = vpack.c.b16 %v3696, %v3691
    %v5532 = vpack.c.b16 %v3697, %v3692
    %v5533 = vpack.c.b16 %v3703, %v3698
    %v5534 = vpack.c.b16 %v3704, %v3699
    %v5535 = vpack.c.b16 %v3705, %v3700
    %v5536 = vpack.c.b16 %v3706, %v3701
    %v5537 = vpack.c.b16 %v3707, %v3702
    %v5538 = vpack.c.b16 %v3713, %v3708
    %v5539 = vpack.c.b16 %v3714, %v3709
    %v5540 = vpack.c.b16 %v3715, %v3710
    %v5541 = vpack.c.b16 %v3716, %v3711
    %v5542 = vpack.c.b16 %v3717, %v3712
    %v5543 = vpack.c.b16 %v3723, %v3718
    %v5544 = vpack.c.b16 %v3724, %v3719
    %v5545 = vpack.c.b16 %v3725, %v3720
    %v5546 = vpack.c.b16 %v3726, %v3721
    %v5547 = vpack.c.b16 %v3727, %v3722
    %v5548 = vpack.c.b16 %v3733, %v3728
    %v5549 = vpack.c.b16 %v3734, %v3729
    %v5550 = vpack.c.b16 %v3735, %v3730
    %v5551 = vpack.c.b16 %v3736, %v3731
    %v5552 = vpack.c.b16 %v3737, %v3732
    %v5553 = vpack.c.b16 %v3743, %v3738
    %v5554 = vpack.c.b16 %v3744, %v3739
    %v5555 = vpack.c.b16 %v3745, %v3740
    %v5556 = vpack.c.b16 %v3746, %v3741
    %v5557 = vpack.c.b16 %v3747, %v3742
    %v5558 = vpack.c.b16 %v3753, %v3748
    %v5559 = vpack.c.b16 %v3754, %v3749
    %v5560 = vpack.c.b16 %v3755, %v3750
    %v5561 = vpack.c.b16 %v3756, %v3751
    %v5562 = vpack.c.b16 %v3757, %v3752
    %v5563 = vpack.c.b16 %v3763, %v3758
    %v5564 = vpack.c.b16 %v3764, %v3759
    %v5565 = vpack.c.b16 %v3765, %v3760
    %v5566 = vpack.c.b16 %v3766, %v3761
    %v5567 = vpack.c.b16 %v3767, %v3762
    %v5568 = vpack.c.b16 %v3773, %v3768
    %v5569 = vpack.c.b16 %v3774, %v3769
    %v5570 = vpack.c.b16 %v3775, %v3770
    %v5571 = vpack.c.b16 %v3776, %v3771
    %v5572 = vpack.c.b16 %v3777, %v3772
    %v5573 = vpack.c.b16 %v3783, %v3778
    %v5574 = vpack.c.b16 %v3784, %v3779
    %v5575 = vpack.c.b16 %v3785, %v3780
    %v5576 = vpack.c.b16 %v3786, %v3781
    %v5577 = vpack.c.b16 %v3787, %v3782
    %v5578 = vpack.c.b16 %v3793, %v3788
    %v5579 = vpack.c.b16 %v3794, %v3789
    %v5580 = vpack.c.b16 %v3795, %v3790
    %v5581 = vpack.c.b16 %v3796, %v3791
    %v5582 = vpack.c.b16 %v3797, %v3792
    %v5583 = vpack.c.b16 %v3803, %v3798
    %v5584 = vpack.c.b16 %v3804, %v3799
    %v5585 = vpack.c.b16 %v3805, %v3800
    %v5586 = vpack.c.b16 %v3806, %v3801
    %v5587 = vpack.c.b16 %v3807, %v3802
    %v5588 = vpack.c.b16 %v3813, %v3808
    %v5589 = vpack.c.b16 %v3814, %v3809
    %v5590 = vpack.c.b16 %v3815, %v3810
    %v5591 = vpack.c.b16 %v3816, %v3811
    %v5592 = vpack.c.b16 %v3817, %v3812
    %v5593 = vpack.c.b16 %v3823, %v3818
    %v5594 = vpack.c.b16 %v3824, %v3819
    %v5595 = vpack.c.b16 %v3825, %v3820
    %v5596 = vpack.c.b16 %v3826, %v3821
    %v5597 = vpack.c.b16 %v3827, %v3822
    %v5598 = vpack.c.b16 %v3833, %v3828
    %v5599 = vpack.c.b16 %v3834, %v3829
    %v5600 = vpack.c.b16 %v3835, %v3830
    %v5601 = vpack.c.b16 %v3836, %v3831
    %v5602 = vpack.c.b16 %v3837, %v3832
    %v5603 = vpack.c.b16 %v3843, %v3838
    %v5604 = vpack.c.b16 %v3844, %v3839
    %v5605 = vpack.c.b16 %v3845, %v3840
    %v5606 = vpack.c.b16 %v3846, %v3841
    %v5607 = vpack.c.b16 %v3847, %v3842
    %v5608 = vpack.c.b16 %v3853, %v3848
    %v5609 = vpack.c.b16 %v3854, %v3849
    %v5610 = vpack.c.b16 %v3855, %v3850
    %v5611 = vpack.c.b16 %v3856, %v3851
    %v5612 = vpack.c.b16 %v3857, %v3852
    %v5613 = vpack.c.b16 %v3863, %v3858
    %v5614 = vpack.c.b16 %v3864, %v3859
    %v5615 = vpack.c.b16 %v3865, %v3860
    %v5616 = vpack.c.b16 %v3866, %v3861
    %v5617 = vpack.c.b16 %v3867, %v3862
    %v5618 = vpack.c.b16 %v3873, %v3868
    %v5619 = vpack.c.b16 %v3874, %v3869
    %v5620 = vpack.c.b16 %v3875, %v3870
    %v5621 = vpack.c.b16 %v3876, %v3871
    %v5622 = vpack.c.b16 %v3877, %v3872
    %v5623 = vpack.c.b16 %v3883, %v3878
    %v5624 = vpack.c.b16 %v3884, %v3879
    %v5625 = vpack.c.b16 %v3885, %v3880
    %v5626 = vpack.c.b16 %v3886, %v3881
    %v5627 = vpack.c.b16 %v3887, %v3882
    %v5628 = vpack.c.b16 %v3893, %v3888
    %v5629 = vpack.c.b16 %v3894, %v3889
    %v5630 = vpack.c.b16 %v3895, %v3890
    %v5631 = vpack.c.b16 %v3896, %v3891
    %v5632 = vpack.c.b16 %v3897, %v3892
    %v5633 = vpack.c.b16 %v3903, %v3898
    %v5634 = vpack.c.b16 %v3904, %v3899
    %v5635 = vpack.c.b16 %v3905, %v3900
    %v5636 = vpack.c.b16 %v3906, %v3901
    %v5637 = vpack.c.b16 %v3907, %v3902
    %v5638 = vpack.c.b16 %v3913, %v3908
    %v5639 = vpack.c.b16 %v3914, %v3909
    %v5640 = vpack.c.b16 %v3915, %v3910
    %v5641 = vpack.c.b16 %v3916, %v3911
    %v5642 = vpack.c.b16 %v3917, %v3912
    %v5643 = vpack.c.b16 %v3923, %v3918
    %v5644 = vpack.c.b16 %v3924, %v3919
    %v5645 = vpack.c.b16 %v3925, %v3920
    %v5646 = vpack.c.b16 %v3926, %v3921
    %v5647 = vpack.c.b16 %v3927, %v3922
    %v5648 = vpack.c.b16 %v3933, %v3928
    %v5649 = vpack.c.b16 %v3934, %v3929
    %v5650 = vpack.c.b16 %v3935, %v3930
    %v5651 = vpack.c.b16 %v3936, %v3931
    %v5652 = vpack.c.b16 %v3937, %v3932
    %v5653 = vpack.c.b16 %v3943, %v3938
    %v5654 = vpack.c.b16 %v3944, %v3939
    %v5655 = vpack.c.b16 %v3945, %v3940
    %v5656 = vpack.c.b16 %v3946, %v3941
    %v5657 = vpack.c.b16 %v3947, %v3942
    %v5658 = vpack.c.b16 %v3953, %v3948
    %v5659 = vpack.c.b16 %v3954, %v3949
    %v5660 = vpack.c.b16 %v3955, %v3950
    %v5661 = vpack.c.b16 %v3956, %v3951
    %v5662 = vpack.c.b16 %v3957, %v3952
    %v5663 = vpack.c.b16 %v3963, %v3958
    %v5664 = vpack.c.b16 %v3964, %v3959
    %v5665 = vpack.c.b16 %v3965, %v3960
    %v5666 = vpack.c.b16 %v3966, %v3961
    %v5667 = vpack.c.b16 %v3967, %v3962
    %v5668 = vpack.c.b16 %v3973, %v3968
    %v5669 = vpack.c.b16 %v3974, %v3969
    %v5670 = vpack.c.b16 %v3975, %v3970
    %v5671 = vpack.c.b16 %v3976, %v3971
    %v5672 = vpack.c.b16 %v3977, %v3972
    %v5673 = vpack.c.b16 %v3983, %v3978
    %v5674 = vpack.c.b16 %v3984, %v3979
    %v5675 = vpack.c.b16 %v3985, %v3980
    %v5676 = vpack.c.b16 %v3986, %v3981
    %v5677 = vpack.c.b16 %v3987, %v3982
    %v5678 = vpack.c.b16 %v3993, %v3988
    %v5679 = vpack.c.b16 %v3994, %v3989
    %v5680 = vpack.c.b16 %v3995, %v3990
    %v5681 = vpack.c.b16 %v3996, %v3991
    %v5682 = vpack.c.b16 %v3997, %v3992
    %v5683 = vpack.c.b16 %v4003, %v3998
    %v5684 = vpack.c.b16 %v4004, %v3999
    %v5685 = vpack.c.b16 %v4005, %v4000
    %v5686 = vpack.c.b16 %v4006, %v4001
    %v5687 = vpack.c.b16 %v4007, %v4002
    %v5688 = vpack.c.b16 %v4013, %v4008
    %v5689 = vpack.c.b16 %v4014, %v4009
    %v5690 = vpack.c.b16 %v4015, %v4010
    %v5691 = vpack.c.b16 %v4016, %v4011
    %v5692 = vpack.c.b16 %v4017, %v4012
    %v5693 = vpack.c.b16 %v4023, %v4018
    %v5694 = vpack.c.b16 %v4024, %v4019
    %v5695 = vpack.c.b16 %v4025, %v4020
    %v5696 = vpack.c.b16 %v4026, %v4021
    %v5697 = vpack.c.b16 %v4027, %v4022
    %v5698 = vpack.c.b16 %v4033, %v4028
    %v5699 = vpack.c.b16 %v4034, %v4029
    %v5700 = vpack.c.b16 %v4035, %v4030
    %v5701 = vpack.c.b16 %v4036, %v4031
    %v5702 = vpack.c.b16 %v4037, %v4032
    %v5703 = vpack.c.b16 %v4043, %v4038
    %v5704 = vpack.c.b16 %v4044, %v4039
    %v5705 = vpack.c.b16 %v4045, %v4040
    %v5706 = vpack.c.b16 %v4046, %v4041
    %v5707 = vpack.c.b16 %v4047, %v4042
    %v5708 = vpack.c.b16 %v4053, %v4048
    %v5709 = vpack.c.b16 %v4054, %v4049
    %v5710 = vpack.c.b16 %v4055, %v4050
    %v5711 = vpack.c.b16 %v4056, %v4051
    %v5712 = vpack.c.b16 %v4057, %v4052
    %v5713 = vpack.c.b16 %v4063, %v4058
    %v5714 = vpack.c.b16 %v4064, %v4059
    %v5715 = vpack.c.b16 %v4065, %v4060
    %v5716 = vpack.c.b16 %v4066, %v4061
    %v5717 = vpack.c.b16 %v4067, %v4062
    %v5718 = vpack.c.b16 %v4073, %v4068
    %v5719 = vpack.c.b16 %v4074, %v4069
    %v5720 = vpack.c.b16 %v4075, %v4070
    %v5721 = vpack.c.b16 %v4076, %v4071
    %v5722 = vpack.c.b16 %v4077, %v4072
    %v5723 = vpack.c.b16 %v4083, %v4078
    %v5724 = vpack.c.b16 %v4084, %v4079
    %v5725 = vpack.c.b16 %v4085, %v4080
    %v5726 = vpack.c.b16 %v4086, %v4081
    %v5727 = vpack.c.b16 %v4087, %v4082
    %v5728 = vpack.c.b16 %v4093, %v4088
    %v5729 = vpack.c.b16 %v4094, %v4089
    %v5730 = vpack.c.b16 %v4095, %v4090
    %v5731 = vpack.c.b16 %v4096, %v4091
    %v5732 = vpack.c.b16 %v4097, %v4092
    %v5733 = vpack.c.b16 %v4103, %v4098
    %v5734 = vpack.c.b16 %v4104, %v4099
    %v5735 = vpack.c.b16 %v4105, %v4100
    %v5736 = vpack.c.b16 %v4106, %v4101
    %v5737 = vpack.c.b16 %v4107, %v4102
    %v5738 = vpack.c.b16 %v4113, %v4108
    %v5739 = vpack.c.b16 %v4114, %v4109
    %v5740 = vpack.c.b16 %v4115, %v4110
    %v5741 = vpack.c.b16 %v4116, %v4111
    %v5742 = vpack.c.b16 %v4117, %v4112
    %v5743 = vpack.c.b16 %v4123, %v4118
    %v5744 = vpack.c.b16 %v4124, %v4119
    %v5745 = vpack.c.b16 %v4125, %v4120
    %v5746 = vpack.c.b16 %v4126, %v4121
    %v5747 = vpack.c.b16 %v4127, %v4122
    %v5748 = vpack.c.b16 %v4133, %v4128
    %v5749 = vpack.c.b16 %v4134, %v4129
    %v5750 = vpack.c.b16 %v4135, %v4130
    %v5751 = vpack.c.b16 %v4136, %v4131
    %v5752 = vpack.c.b16 %v4137, %v4132
    %v5753 = vpack.c.b16 %v4143, %v4138
    %v5754 = vpack.c.b16 %v4144, %v4139
    %v5755 = vpack.c.b16 %v4145, %v4140
    %v5756 = vpack.c.b16 %v4146, %v4141
    %v5757 = vpack.c.b16 %v4147, %v4142
    %v5758 = vpack.c.b16 %v4153, %v4148
    %v5759 = vpack.c.b16 %v4154, %v4149
    %v5760 = vpack.c.b16 %v4155, %v4150
    %v5761 = vpack.c.b16 %v4156, %v4151
    %v5762 = vpack.c.b16 %v4157, %v4152
    %v5763 = vpack.c.b16 %v4163, %v4158
    %v5764 = vpack.c.b16 %v4164, %v4159
    %v5765 = vpack.c.b16 %v4165, %v4160
    %v5766 = vpack.c.b16 %v4166, %v4161
    %v5767 = vpack.c.b16 %v4167, %v4162
    %v5768 = vpack.c.b16 %v4173, %v4168
    %v5769 = vpack.c.b16 %v4174, %v4169
    %v5770 = vpack.c.b16 %v4175, %v4170
    %v5771 = vpack.c.b16 %v4176, %v4171
    %v5772 = vpack.c.b16 %v4177, %v4172
    %v5773 = vpack.c.b16 %v4183, %v4178
    %v5774 = vpack.c.b16 %v4184, %v4179
    %v5775 = vpack.c.b16 %v4185, %v4180
    %v5776 = vpack.c.b16 %v4186, %v4181
    %v5777 = vpack.c.b16 %v4187, %v4182
    %v5778 = vpack.c.b16 %v4193, %v4188
    %v5779 = vpack.c.b16 %v4194, %v4189
    %v5780 = vpack.c.b16 %v4195, %v4190
    %v5781 = vpack.c.b16 %v4196, %v4191
    %v5782 = vpack.c.b16 %v4197, %v4192
    %v5783 = vpack.c.b16 %v4203, %v4198
    %v5784 = vpack.c.b16 %v4204, %v4199
    %v5785 = vpack.c.b16 %v4205, %v4200
    %v5786 = vpack.c.b16 %v4206, %v4201
    %v5787 = vpack.c.b16 %v4207, %v4202
    %v5788 = vpack.c.b16 %v4213, %v4208
    %v5789 = vpack.c.b16 %v4214, %v4209
    %v5790 = vpack.c.b16 %v4215, %v4210
    %v5791 = vpack.c.b16 %v4216, %v4211
    %v5792 = vpack.c.b16 %v4217, %v4212
    %v5793 = vpack.c.b16 %v4223, %v4218
    %v5794 = vpack.c.b16 %v4224, %v4219
    %v5795 = vpack.c.b16 %v4225, %v4220
    %v5796 = vpack.c.b16 %v4226, %v4221
    %v5797 = vpack.c.b16 %v4227, %v4222
    %v5798 = vpack.c.b16 %v4233, %v4228
    %v5799 = vpack.c.b16 %v4234, %v4229
    %v5800 = vpack.c.b16 %v4235, %v4230
    %v5801 = vpack.c.b16 %v4236, %v4231
    %v5802 = vpack.c.b16 %v4237, %v4232
    %v5803 = vpack.c.b16 %v4243, %v4238
    %v5804 = vpack.c.b16 %v4244, %v4239
    %v5805 = vpack.c.b16 %v4245, %v4240
    %v5806 = vpack.c.b16 %v4246, %v4241
    %v5807 = vpack.c.b16 %v4247, %v4242
    %v5808 = vpack.c.b16 %v4253, %v4248
    %v5809 = vpack.c.b16 %v4254, %v4249
    %v5810 = vpack.c.b16 %v4255, %v4250
    %v5811 = vpack.c.b16 %v4256, %v4251
    %v5812 = vpack.c.b16 %v4257, %v4252
    %v5813 = vpack.c.b16 %v4263, %v4258
    %v5814 = vpack.c.b16 %v4264, %v4259
    %v5815 = vpack.c.b16 %v4265, %v4260
    %v5816 = vpack.c.b16 %v4266, %v4261
    %v5817 = vpack.c.b16 %v4267, %v4262
    %v5818 = vpack.c.b16 %v4273, %v4268
    %v5819 = vpack.c.b16 %v4274, %v4269
    %v5820 = vpack.c.b16 %v4275, %v4270
    %v5821 = vpack.c.b16 %v4276, %v4271
    %v5822 = vpack.c.b16 %v4277, %v4272
    %v5823 = vpack.c.b16 %v4283, %v4278
    %v5824 = vpack.c.b16 %v4284, %v4279
    %v5825 = vpack.c.b16 %v4285, %v4280
    %v5826 = vpack.c.b16 %v4286, %v4281
    %v5827 = vpack.c.b16 %v4287, %v4282
    %v5828 = vpack.c.b16 %v4293, %v4288
    %v5829 = vpack.c.b16 %v4294, %v4289
    %v5830 = vpack.c.b16 %v4295, %v4290
    %v5831 = vpack.c.b16 %v4296, %v4291
    %v5832 = vpack.c.b16 %v4297, %v4292
    %v5833 = vpack.c.b16 %v4303, %v4298
    %v5834 = vpack.c.b16 %v4304, %v4299
    %v5835 = vpack.c.b16 %v4305, %v4300
    %v5836 = vpack.c.b16 %v4306, %v4301
    %v5837 = vpack.c.b16 %v4307, %v4302
    %v5838 = vpack.c.b16 %v4313, %v4308
    %v5839 = vpack.c.b16 %v4314, %v4309
    %v5840 = vpack.c.b16 %v4315, %v4310
    %v5841 = vpack.c.b16 %v4316, %v4311
    %v5842 = vpack.c.b16 %v4317, %v4312
    %v5843 = vpack.c.b16 %v4323, %v4318
    %v5844 = vpack.c.b16 %v4324, %v4319
    %v5845 = vpack.c.b16 %v4325, %v4320
    %v5846 = vpack.c.b16 %v4326, %v4321
    %v5847 = vpack.c.b16 %v4327, %v4322
    %v5848 = vpack.c.b16 %v4333, %v4328
    %v5849 = vpack.c.b16 %v4334, %v4329
    %v5850 = vpack.c.b16 %v4335, %v4330
    %v5851 = vpack.c.b16 %v4336, %v4331
    %v5852 = vpack.c.b16 %v4337, %v4332
    %v5853 = vpack.c.b16 %v4343, %v4338
    %v5854 = vpack.c.b16 %v4344, %v4339
    %v5855 = vpack.c.b16 %v4345, %v4340
    %v5856 = vpack.c.b16 %v4346, %v4341
    %v5857 = vpack.c.b16 %v4347, %v4342
    %v5858 = vpack.c.b16 %v4353, %v4348
    %v5859 = vpack.c.b16 %v4354, %v4349
    %v5860 = vpack.c.b16 %v4355, %v4350
    %v5861 = vpack.c.b16 %v4356, %v4351
    %v5862 = vpack.c.b16 %v4357, %v4352
    %v5863 = vpack.c.b16 %v4363, %v4358
    %v5864 = vpack.c.b16 %v4364, %v4359
    %v5865 = vpack.c.b16 %v4365, %v4360
    %v5866 = vpack.c.b16 %v4366, %v4361
    %v5867 = vpack.c.b16 %v4367, %v4362
    %v5868 = vpack.c.b16 %v4373, %v4368
    %v5869 = vpack.c.b16 %v4374, %v4369
    %v5870 = vpack.c.b16 %v4375, %v4370
    %v5871 = vpack.c.b16 %v4376, %v4371
    %v5872 = vpack.c.b16 %v4377, %v4372
    %v5873 = vpack.c.b16 %v4383, %v4378
    %v5874 = vpack.c.b16 %v4384, %v4379
    %v5875 = vpack.c.b16 %v4385, %v4380
    %v5876 = vpack.c.b16 %v4386, %v4381
    %v5877 = vpack.c.b16 %v4387, %v4382
    %v5878 = vpack.c.b16 %v4393, %v4388
    %v5879 = vpack.c.b16 %v4394, %v4389
    %v5880 = vpack.c.b16 %v4395, %v4390
    %v5881 = vpack.c.b16 %v4396, %v4391
    %v5882 = vpack.c.b16 %v4397, %v4392
    %v5883 = vpack.c.b16 %v4403, %v4398
    %v5884 = vpack.c.b16 %v4404, %v4399
    %v5885 = vpack.c.b16 %v4405, %v4400
    %v5886 = vpack.c.b16 %v4406, %v4401
    %v5887 = vpack.c.b16 %v4407, %v4402
    %v5888 = vpack.c.b16 %v4413, %v4408
    %v5889 = vpack.c.b16 %v4414, %v4409
    %v5890 = vpack.c.b16 %v4415, %v4410
    %v5891 = vpack.c.b16 %v4416, %v4411
    %v5892 = vpack.c.b16 %v4417, %v4412
    %v5893 = vpack.c.b16 %v4423, %v4418
    %v5894 = vpack.c.b16 %v4424, %v4419
    %v5895 = vpack.c.b16 %v4425, %v4420
    %v5896 = vpack.c.b16 %v4426, %v4421
    %v5897 = vpack.c.b16 %v4427, %v4422
    %v5898 = vpack.c.b16 %v4433, %v4428
    %v5899 = vpack.c.b16 %v4434, %v4429
    %v5900 = vpack.c.b16 %v4435, %v4430
    %v5901 = vpack.c.b16 %v4436, %v4431
    %v5902 = vpack.c.b16 %v4437, %v4432
    %v5903 = vpack.c.b16 %v4443, %v4438
    %v5904 = vpack.c.b16 %v4444, %v4439
    %v5905 = vpack.c.b16 %v4445, %v4440
    %v5906 = vpack.c.b16 %v4446, %v4441
    %v5907 = vpack.c.b16 %v4447, %v4442
    %v5908 = vpack.c.b16 %v4453, %v4448
    %v5909 = vpack.c.b16 %v4454, %v4449
    %v5910 = vpack.c.b16 %v4455, %v4450
    %v5911 = vpack.c.b16 %v4456, %v4451
    %v5912 = vpack.c.b16 %v4457, %v4452
    %v5913 = vpack.c.b16 %v4463, %v4458
    %v5914 = vpack.c.b16 %v4464, %v4459
    %v5915 = vpack.c.b16 %v4465, %v4460
    %v5916 = vpack.c.b16 %v4466, %v4461
    %v5917 = vpack.c.b16 %v4467, %v4462
    %v5918 = vpack.c.b16 %v4473, %v4468
    %v5919 = vpack.c.b16 %v4474, %v4469
    %v5920 = vpack.c.b16 %v4475, %v4470
    %v5921 = vpack.c.b16 %v4476, %v4471
    %v5922 = vpack.c.b16 %v4477, %v4472
    %v5923 = vpack.c.b16 %v4483, %v4478
    %v5924 = vpack.c.b16 %v4484, %v4479
    %v5925 = vpack.c.b16 %v4485, %v4480
    %v5926 = vpack.c.b16 %v4486, %v4481
    %v5927 = vpack.c.b16 %v4487, %v4482
    %v5928 = vpack.c.b16 %v4493, %v4488
    %v5929 = vpack.c.b16 %v4494, %v4489
    %v5930 = vpack.c.b16 %v4495, %v4490
    %v5931 = vpack.c.b16 %v4496, %v4491
    %v5932 = vpack.c.b16 %v4497, %v4492
    %v5933 = vpack.c.b16 %v4503, %v4498
    %v5934 = vpack.c.b16 %v4504, %v4499
    %v5935 = vpack.c.b16 %v4505, %v4500
    %v5936 = vpack.c.b16 %v4506, %v4501
    %v5937 = vpack.c.b16 %v4507, %v4502
    %v5938 = vpack.c.b16 %v4513, %v4508
    %v5939 = vpack.c.b16 %v4514, %v4509
    %v5940 = vpack.c.b16 %v4515, %v4510
    %v5941 = vpack.c.b16 %v4516, %v4511
    %v5942 = vpack.c.b16 %v4517, %v4512
    %v5943 = vpack.c.b16 %v4523, %v4518
    %v5944 = vpack.c.b16 %v4524, %v4519
    %v5945 = vpack.c.b16 %v4525, %v4520
    %v5946 = vpack.c.b16 %v4526, %v4521
    %v5947 = vpack.c.b16 %v4527, %v4522
    %v5948 = vpack.c.b16 %v4533, %v4528
    %v5949 = vpack.c.b16 %v4534, %v4529
    %v5950 = vpack.c.b16 %v4535, %v4530
    %v5951 = vpack.c.b16 %v4536, %v4531
    %v5952 = vpack.c.b16 %v4537, %v4532
    %v5953 = vpack.c.b16 %v4543, %v4538
    %v5954 = vpack.c.b16 %v4544, %v4539
    %v5955 = vpack.c.b16 %v4545, %v4540
    %v5956 = vpack.c.b16 %v4546, %v4541
    %v5957 = vpack.c.b16 %v4547, %v4542
    %v5958 = vpack.c.b16 %v4553, %v4548
    %v5959 = vpack.c.b16 %v4554, %v4549
    %v5960 = vpack.c.b16 %v4555, %v4550
    %v5961 = vpack.c.b16 %v4556, %v4551
    %v5962 = vpack.c.b16 %v4557, %v4552
    %v5963 = vpack.c.b16 %v4563, %v4558
    %v5964 = vpack.c.b16 %v4564, %v4559
    %v5965 = vpack.c.b16 %v4565, %v4560
    %v5966 = vpack.c.b16 %v4566, %v4561
    %v5967 = vpack.c.b16 %v4567, %v4562
    %v5968 = vpack.c.b16 %v4573, %v4568
    %v5969 = vpack.c.b16 %v4574, %v4569
    %v5970 = vpack.c.b16 %v4575, %v4570
    %v5971 = vpack.c.b16 %v4576, %v4571
    %v5972 = vpack.c.b16 %v4577, %v4572
    %v5973 = vpack.c.b16 %v4583, %v4578
    %v5974 = vpack.c.b16 %v4584, %v4579
    %v5975 = vpack.c.b16 %v4585, %v4580
    %v5976 = vpack.c.b16 %v4586, %v4581
    %v5977 = vpack.c.b16 %v4587, %v4582
    %v5978 = vpack.c.b16 %v4593, %v4588
    %v5979 = vpack.c.b16 %v4594, %v4589
    %v5980 = vpack.c.b16 %v4595, %v4590
    %v5981 = vpack.c.b16 %v4596, %v4591
    %v5982 = vpack.c.b16 %v4597, %v4592
    %v5983 = vpack.c.b16 %v4603, %v4598
    %v5984 = vpack.c.b16 %v4604, %v4599
    %v5985 = vpack.c.b16 %v4605, %v4600
    %v5986 = vpack.c.b16 %v4606, %v4601
    %v5987 = vpack.c.b16 %v4607, %v4602
    %v5988 = vpack.c.b16 %v4613, %v4608
    %v5989 = vpack.c.b16 %v4614, %v4609
    %v5990 = vpack.c.b16 %v4615, %v4610
    %v5991 = vpack.c.b16 %v4616, %v4611
    %v5992 = vpack.c.b16 %v4617, %v4612
    %v5993 = vpack.c.b16 %v4623, %v4618
    %v5994 = vpack.c.b16 %v4624, %v4619
    %v5995 = vpack.c.b16 %v4625, %v4620
    %v5996 = vpack.c.b16 %v4626, %v4621
    %v5997 = vpack.c.b16 %v4627, %v4622
    %v5998 = vpack.c.b16 %v4633, %v4628
    %v5999 = vpack.c.b16 %v4634, %v4629
    %v6000 = vpack.c.b16 %v4635, %v4630
    %v6001 = vpack.c.b16 %v4636, %v4631
    %v6002 = vpack.c.b16 %v4637, %v4632
    %v6003 = vpack.c.b16 %v4643, %v4638
    %v6004 = vpack.c.b16 %v4644, %v4639
    %v6005 = vpack.c.b16 %v4645, %v4640
    %v6006 = vpack.c.b16 %v4646, %v4641
    %v6007 = vpack.c.b16 %v4647, %v4642
    %v6008 = vpack.c.b16 %v4653, %v4648
    %v6009 = vpack.c.b16 %v4654, %v4649
    %v6010 = vpack.c.b16 %v4655, %v4650
    %v6011 = vpack.c.b16 %v4656, %v4651
    %v6012 = vpack.c.b16 %v4657, %v4652
    %v6013 = vpack.c.b16 %v4663, %v4658
    %v6014 = vpack.c.b16 %v4664, %v4659
    %v6015 = vpack.c.b16 %v4665, %v4660
    %v6016 = vpack.c.b16 %v4666, %v4661
    %v6017 = vpack.c.b16 %v4667, %v4662
    %v6018 = vpack.c.b16 %v4673, %v4668
    %v6019 = vpack.c.b16 %v4674, %v4669
    %v6020 = vpack.c.b16 %v4675, %v4670
    %v6021 = vpack.c.b16 %v4676, %v4671
    %v6022 = vpack.c.b16 %v4677, %v4672
    %v6023 = vpack.c.b16 %v4683, %v4678
    %v6024 = vpack.c.b16 %v4684, %v4679
    %v6025 = vpack.c.b16 %v4685, %v4680
    %v6026 = vpack.c.b16 %v4686, %v4681
    %v6027 = vpack.c.b16 %v4687, %v4682
    %v6028 = vpack.c.b16 %v4693, %v4688
    %v6029 = vpack.c.b16 %v4694, %v4689
    %v6030 = vpack.c.b16 %v4695, %v4690
    %v6031 = vpack.c.b16 %v4696, %v4691
    %v6032 = vpack.c.b16 %v4697, %v4692
    %v6033 = vpack.c.b16 %v4703, %v4698
    %v6034 = vpack.c.b16 %v4704, %v4699
    %v6035 = vpack.c.b16 %v4705, %v4700
    %v6036 = vpack.c.b16 %v4706, %v4701
    %v6037 = vpack.c.b16 %v4707, %v4702
    %v6038 = vpack.c.b16 %v4713, %v4708
    %v6039 = vpack.c.b16 %v4714, %v4709
    %v6040 = vpack.c.b16 %v4715, %v4710
    %v6041 = vpack.c.b16 %v4716, %v4711
    %v6042 = vpack.c.b16 %v4717, %v4712
    %v6043 = vpack.c.b16 %v4723, %v4718
    %v6044 = vpack.c.b16 %v4724, %v4719
    %v6045 = vpack.c.b16 %v4725, %v4720
    %v6046 = vpack.c.b16 %v4726, %v4721
    %v6047 = vpack.c.b16 %v4727, %v4722
    %v6048 = vpack.c.b16 %v4733, %v4728
    %v6049 = vpack.c.b16 %v4734, %v4729
    %v6050 = vpack.c.b16 %v4735, %v4730
    %v6051 = vpack.c.b16 %v4736, %v4731
    %v6052 = vpack.c.b16 %v4737, %v4732
    %v6053 = vpack.c.b16 %v4743, %v4738
    %v6054 = vpack.c.b16 %v4744, %v4739
    %v6055 = vpack.c.b16 %v4745, %v4740
    %v6056 = vpack.c.b16 %v4746, %v4741
    %v6057 = vpack.c.b16 %v4747, %v4742
    %v6058 = vpack.c.b16 %v4753, %v4748
    %v6059 = vpack.c.b16 %v4754, %v4749
    %v6060 = vpack.c.b16 %v4755, %v4750
    %v6061 = vpack.c.b16 %v4756, %v4751
    %v6062 = vpack.c.b16 %v4757, %v4752
    %v6063 = vpack.c.b16 %v4763, %v4758
    %v6064 = vpack.c.b16 %v4764, %v4759
    %v6065 = vpack.c.b16 %v4765, %v4760
    %v6066 = vpack.c.b16 %v4766, %v4761
    %v6067 = vpack.c.b16 %v4767, %v4762
    %v6068 = vpack.c.b16 %v4773, %v4768
    %v6069 = vpack.c.b16 %v4774, %v4769
    %v6070 = vpack.c.b16 %v4775, %v4770
    %v6071 = vpack.c.b16 %v4776, %v4771
    %v6072 = vpack.c.b16 %v4777, %v4772
    %v6073 = vpack.c.b16 %v4783, %v4778
    %v6074 = vpack.c.b16 %v4784, %v4779
    %v6075 = vpack.c.b16 %v4785, %v4780
    %v6076 = vpack.c.b16 %v4786, %v4781
    %v6077 = vpack.c.b16 %v4787, %v4782
    %v6078 = vpack.c.b16 %v4793, %v4788
    %v6079 = vpack.c.b16 %v4794, %v4789
    %v6080 = vpack.c.b16 %v4795, %v4790
    %v6081 = vpack.c.b16 %v4796, %v4791
    %v6082 = vpack.c.b16 %v4797, %v4792
    %v6083 = vpack.c.b16 %v4803, %v4798
    %v6084 = vpack.c.b16 %v4804, %v4799
    %v6085 = vpack.c.b16 %v4805, %v4800
    %v6086 = vpack.c.b16 %v4806, %v4801
    %v6087 = vpack.c.b16 %v4807, %v4802
    %v6088 = vpack.c.b16 %v4813, %v4808
    %v6089 = vpack.c.b16 %v4814, %v4809
    %v6090 = vpack.c.b16 %v4815, %v4810
    %v6091 = vpack.c.b16 %v4816, %v4811
    %v6092 = vpack.c.b16 %v4817, %v4812
    %v6093 = vpack.c.b16 %v4823, %v4818
    %v6094 = vpack.c.b16 %v4824, %v4819
    %v6095 = vpack.c.b16 %v4825, %v4820
    %v6096 = vpack.c.b16 %v4826, %v4821
    %v6097 = vpack.c.b16 %v4827, %v4822
    %v6098 = vpack.c.b16 %v4833, %v4828
    %v6099 = vpack.c.b16 %v4834, %v4829
    %v6100 = vpack.c.b16 %v4835, %v4830
    %v6101 = vpack.c.b16 %v4836, %v4831
    %v6102 = vpack.c.b16 %v4837, %v4832
    %v6103 = vpack.c.b16 %v4843, %v4838
    %v6104 = vpack.c.b16 %v4844, %v4839
    %v6105 = vpack.c.b16 %v4845, %v4840
    %v6106 = vpack.c.b16 %v4846, %v4841
    %v6107 = vpack.c.b16 %v4847, %v4842
    %v6108 = vpack.c.b16 %v4853, %v4848
    %v6109 = vpack.c.b16 %v4854, %v4849
    %v6110 = vpack.c.b16 %v4855, %v4850
    %v6111 = vpack.c.b16 %v4856, %v4851
    %v6112 = vpack.c.b16 %v4857, %v4852
    %v6113 = vpack.c.b16 %v4863, %v4858
    %v6114 = vpack.c.b16 %v4864, %v4859
    %v6115 = vpack.c.b16 %v4865, %v4860
    %v6116 = vpack.c.b16 %v4866, %v4861
    %v6117 = vpack.c.b16 %v4867, %v4862
    %v6118 = vpack.c.b16 %v4873, %v4868
    %v6119 = vpack.c.b16 %v4874, %v4869
    %v6120 = vpack.c.b16 %v4875, %v4870
    %v6121 = vpack.c.b16 %v4876, %v4871
    %v6122 = vpack.c.b16 %v4877, %v4872
    %v6123 = vpack.c.b16 %v4883, %v4878
    %v6124 = vpack.c.b16 %v4884, %v4879
    %v6125 = vpack.c.b16 %v4885, %v4880
    %v6126 = vpack.c.b16 %v4886, %v4881
    %v6127 = vpack.c.b16 %v4887, %v4882
    %v6128 = vpack.c.b16 %v4893, %v4888
    %v6129 = vpack.c.b16 %v4894, %v4889
    %v6130 = vpack.c.b16 %v4895, %v4890
    %v6131 = vpack.c.b16 %v4896, %v4891
    %v6132 = vpack.c.b16 %v4897, %v4892
    %v6133 = vpack.c.b16 %v4903, %v4898
    %v6134 = vpack.c.b16 %v4904, %v4899
    %v6135 = vpack.c.b16 %v4905, %v4900
    %v6136 = vpack.c.b16 %v4906, %v4901
    %v6137 = vpack.c.b16 %v4907, %v4902
    %v6138 = vpack.c.b16 %v4913, %v4908
    %v6139 = vpack.c.b16 %v4914, %v4909
    %v6140 = vpack.c.b16 %v4915, %v4910
    %v6141 = vpack.c.b16 %v4916, %v4911
    %v6142 = vpack.c.b16 %v4917, %v4912
    %v6143 = vpack.c.b16 %v4923, %v4918
    %v6144 = vpack.c.b16 %v4924, %v4919
    %v6145 = vpack.c.b16 %v4925, %v4920
    %v6146 = vpack.c.b16 %v4926, %v4921
    %v6147 = vpack.c.b16 %v4927, %v4922
    %v6148 = vpack.c.b16 %v4933, %v4928
    %v6149 = vpack.c.b16 %v4934, %v4929
    %v6150 = vpack.c.b16 %v4935, %v4930
    %v6151 = vpack.c.b16 %v4936, %v4931
    %v6152 = vpack.c.b16 %v4937, %v4932
    %v6153 = vpack.c.b16 %v4943, %v4938
    %v6154 = vpack.c.b16 %v4944, %v4939
    %v6155 = vpack.c.b16 %v4945, %v4940
    %v6156 = vpack.c.b16 %v4946, %v4941
    %v6157 = vpack.c.b16 %v4947, %v4942
    %v6158 = vpack.c.b16 %v4953, %v4948
    %v6159 = vpack.c.b16 %v4954, %v4949
    %v6160 = vpack.c.b16 %v4955, %v4950
    %v6161 = vpack.c.b16 %v4956, %v4951
    %v6162 = vpack.c.b16 %v4957, %v4952
    %v6163 = vpack.c.b16 %v4963, %v4958
    %v6164 = vpack.c.b16 %v4964, %v4959
    %v6165 = vpack.c.b16 %v4965, %v4960
    %v6166 = vpack.c.b16 %v4966, %v4961
    %v6167 = vpack.c.b16 %v4967, %v4962
    %v6168 = vpack.c.b16 %v4973, %v4968
    %v6169 = vpack.c.b16 %v4974, %v4969
    %v6170 = vpack.c.b16 %v4975, %v4970
    %v6171 = vpack.c.b16 %v4976, %v4971
    %v6172 = vpack.c.b16 %v4977, %v4972
    %v6173 = vpack.c.b16 %v4983, %v4978
    %v6174 = vpack.c.b16 %v4984, %v4979
    %v6175 = vpack.c.b16 %v4985, %v4980
    %v6176 = vpack.c.b16 %v4986, %v4981
    %v6177 = vpack.c.b16 %v4987, %v4982
    %v6178 = vpack.c.b16 %v4993, %v4988
    %v6179 = vpack.c.b16 %v4994, %v4989
    %v6180 = vpack.c.b16 %v4995, %v4990
    %v6181 = vpack.c.b16 %v4996, %v4991
    %v6182 = vpack.c.b16 %v4997, %v4992
    %v6183 = vpack.c.b16 %v5003, %v4998
    %v6184 = vpack.c.b16 %v5004, %v4999
    %v6185 = vpack.c.b16 %v5005, %v5000
    %v6186 = vpack.c.b16 %v5006, %v5001
    %v6187 = vpack.c.b16 %v5007, %v5002
    %v6188 = vpack.c.b16 %v5013, %v5008
    %v6189 = vpack.c.b16 %v5014, %v5009
    %v6190 = vpack.c.b16 %v5015, %v5010
    %v6191 = vpack.c.b16 %v5016, %v5011
    %v6192 = vpack.c.b16 %v5017, %v5012
    %v6193 = vpack.c.b16 %v5023, %v5018
    %v6194 = vpack.c.b16 %v5024, %v5019
    %v6195 = vpack.c.b16 %v5025, %v5020
    %v6196 = vpack.c.b16 %v5026, %v5021
    %v6197 = vpack.c.b16 %v5027, %v5022
    %v6198 = vpack.c.b16 %v5033, %v5028
    %v6199 = vpack.c.b16 %v5034, %v5029
    %v6200 = vpack.c.b16 %v5035, %v5030
    %v6201 = vpack.c.b16 %v5036, %v5031
    %v6202 = vpack.c.b16 %v5037, %v5032
    %v6203 = vpack.c.b16 %v5043, %v5038
    %v6204 = vpack.c.b16 %v5044, %v5039
    %v6205 = vpack.c.b16 %v5045, %v5040
    %v6206 = vpack.c.b16 %v5046, %v5041
    %v6207 = vpack.c.b16 %v5047, %v5042
    %v6208 = vpack.c.b16 %v5053, %v5048
    %v6209 = vpack.c.b16 %v5054, %v5049
    %v6210 = vpack.c.b16 %v5055, %v5050
    %v6211 = vpack.c.b16 %v5056, %v5051
    %v6212 = vpack.c.b16 %v5057, %v5052
    %v6213 = vpack.c.b16 %v5063, %v5058
    %v6214 = vpack.c.b16 %v5064, %v5059
    %v6215 = vpack.c.b16 %v5065, %v5060
    %v6216 = vpack.c.b16 %v5066, %v5061
    %v6217 = vpack.c.b16 %v5067, %v5062
    %v6218 = vpack.c.b16 %v5073, %v5068
    %v6219 = vpack.c.b16 %v5074, %v5069
    %v6220 = vpack.c.b16 %v5075, %v5070
    %v6221 = vpack.c.b16 %v5076, %v5071
    %v6222 = vpack.c.b16 %v5077, %v5072
    %v6223 = vpack.c.b16 %v5083, %v5078
    %v6224 = vpack.c.b16 %v5084, %v5079
    %v6225 = vpack.c.b16 %v5085, %v5080
    %v6226 = vpack.c.b16 %v5086, %v5081
    %v6227 = vpack.c.b16 %v5087, %v5082
    %v6228 = vpack.c.b16 %v5093, %v5088
    %v6229 = vpack.c.b16 %v5094, %v5089
    %v6230 = vpack.c.b16 %v5095, %v5090
    %v6231 = vpack.c.b16 %v5096, %v5091
    %v6232 = vpack.c.b16 %v5097, %v5092
    %v6233 = vpack.c.b16 %v5103, %v5098
    %v6234 = vpack.c.b16 %v5104, %v5099
    %v6235 = vpack.c.b16 %v5105, %v5100
    %v6236 = vpack.c.b16 %v5106, %v5101
    %v6237 = vpack.c.b16 %v5107, %v5102
    %v6238 = vpack.c.b16 %v5113, %v5108
    %v6239 = vpack.c.b16 %v5114, %v5109
    %v6240 = vpack.c.b16 %v5115, %v5110
    %v6241 = vpack.c.b16 %v5116, %v5111
    %v6242 = vpack.c.b16 %v5117, %v5112
    %v6243 = vpack.c.b16 %v5123, %v5118
    %v6244 = vpack.c.b16 %v5124, %v5119
    %v6245 = vpack.c.b16 %v5125, %v5120
    %v6246 = vpack.c.b16 %v5126, %v5121
    %v6247 = vpack.c.b16 %v5127, %v5122
    %v6248 = vpack.c.b16 %v5133, %v5128
    %v6249 = vpack.c.b16 %v5134, %v5129
    %v6250 = vpack.c.b16 %v5135, %v5130
    %v6251 = vpack.c.b16 %v5136, %v5131
    %v6252 = vpack.c.b16 %v5137, %v5132
    %v6253 = vpack.c.b16 %v5143, %v5138
    %v6254 = vpack.c.b16 %v5144, %v5139
    %v6255 = vpack.c.b16 %v5145, %v5140
    %v6256 = vpack.c.b16 %v5146, %v5141
    %v6257 = vpack.c.b16 %v5147, %v5142
    %v6258 = vpack.c.b16 %v5153, %v5148
    %v6259 = vpack.c.b16 %v5154, %v5149
    %v6260 = vpack.c.b16 %v5155, %v5150
    %v6261 = vpack.c.b16 %v5156, %v5151
    %v6262 = vpack.c.b16 %v5157, %v5152
    %v6263 = vpack.c.b16 %v5163, %v5158
    %v6264 = vpack.c.b16 %v5164, %v5159
    %v6265 = vpack.c.b16 %v5165, %v5160
    %v6266 = vpack.c.b16 %v5166, %v5161
    %v6267 = vpack.c.b16 %v5167, %v5162
    %v6268 = vpack.c.b16 %v5173, %v5168
    %v6269 = vpack.c.b16 %v5174, %v5169
    %v6270 = vpack.c.b16 %v5175, %v5170
    %v6271 = vpack.c.b16 %v5176, %v5171
    %v6272 = vpack.c.b16 %v5177, %v5172
    %v6273 = vpack.c.b16 %v5183, %v5178
    %v6274 = vpack.c.b16 %v5184, %v5179
    %v6275 = vpack.c.b16 %v5185, %v5180
    %v6276 = vpack.c.b16 %v5186, %v5181
    %v6277 = vpack.c.b16 %v5187, %v5182
    %v6278 = vpack.c.b16 %v5193, %v5188
    %v6279 = vpack.c.b16 %v5194, %v5189
    %v6280 = vpack.c.b16 %v5195, %v5190
    %v6281 = vpack.c.b16 %v5196, %v5191
    %v6282 = vpack.c.b16 %v5197, %v5192
    %v6283 = vpack.c.b16 %v5203, %v5198
    %v6284 = vpack.c.b16 %v5204, %v5199
    %v6285 = vpack.c.b16 %v5205, %v5200
    %v6286 = vpack.c.b16 %v5206, %v5201
    %v6287 = vpack.c.b16 %v5207, %v5202
    %v6288 = vpack.c.b16 %v5213, %v5208
    %v6289 = vpack.c.b16 %v5214, %v5209
    %v6290 = vpack.c.b16 %v5215, %v5210
    %v6291 = vpack.c.b16 %v5216, %v5211
    %v6292 = vpack.c.b16 %v5217, %v5212
    %v6293 = vpack.c.b16 %v5218, %v5218
    %v6294 = vpack.c.b16 %v5219, %v5219
    %v6295 = vpack.c.b16 %v5220, %v5220
    %v6296 = vpack.c.b16 %v5221, %v5221
    %v6297 = vpack.c.b16 %v5222, %v5222
    %vm7368 = vcmask 850944
    %v7370 = vsel %vm7368, %v462, 0
    %vm7372 = vcmask 1043456
    %v7374 = vsel %vm7372, %v6293, 0
    %v7377 = vsel %vm7372, %v6294, 0
    %v7380 = vsel %vm7372, %v6295, 0
    %v7383 = vsel %vm7372, %v6296, 0
    %v7386 = vsel %vm7372, %v6297, 0
    %7388 = vmatprep.subr.bf16.mxu0 %v5224
    %7389 = vmatpush1.bf16.msra.mxu0 %v5223
    %7390 = vmatprep.subr.bf16.mxu0 %v5229
    %7391 = vmatpush1.bf16.msra.mxu0 %v5228
    %7392 = vmatprep.subr.bf16.mxu0 %v5234
    %7393 = vmatpush1.bf16.msra.mxu0 %v5233
    %7394 = vmatprep.subr.bf16.mxu0 %v5239
    %7395 = vmatpush1.bf16.msra.mxu0 %v5238
    %7396 = vmatprep.subr.bf16.mxu0 %v5244
    %7397 = vmatpush1.bf16.msra.mxu0 %v5243
    %7398 = vmatprep.subr.bf16.mxu0 %v5249
    %7399 = vmatpush1.bf16.msra.mxu0 %v5248
    %7400 = vmatprep.subr.bf16.mxu0 %v5254
    %7401 = vmatpush1.bf16.msra.mxu0 %v5253
    %7402 = vmatprep.subr.bf16.mxu0 %v5259
    %7403 = vmatpush1.bf16.msra.mxu0 %v5258
    %7404 = vmatprep.subr.bf16.mxu0 %v5264
    %7405 = vmatpush1.bf16.msra.mxu0 %v5263
    %7406 = vmatprep.subr.bf16.mxu0 %v5269
    %7407 = vmatpush1.bf16.msra.mxu0 %v5268
    %7408 = vmatprep.subr.bf16.mxu0 %v5274
    %7409 = vmatpush1.bf16.msra.mxu0 %v5273
    %7410 = vmatprep.subr.bf16.mxu0 %v5279
    %7411 = vmatpush1.bf16.msra.mxu0 %v5278
    %7412 = vmatprep.subr.bf16.mxu0 %v5284
    %7413 = vmatpush1.bf16.msra.mxu0 %v5283
    %7414 = vmatprep.subr.bf16.mxu0 %v5289
    %7415 = vmatpush1.bf16.msra.mxu0 %v5288
    %7416 = vmatprep.subr.bf16.mxu0 %v5294
    %7417 = vmatpush1.bf16.msra.mxu0 %v5293
    %7418 = vmatprep.subr.bf16.mxu0 %v5299
    %7419 = vmatpush1.bf16.msra.mxu0 %v5298
    %7420 = vmatprep.mubr.bf16.mxu0 %v437
    %7421 = vmatmul.mubr.bf16.gmra.mrb[0].mxu0 %v436
    %v7422 = vpop.f32.mrb[0].mxu0
    %v7423 = vadd.f32 %v1769, %v7422
    %v7424 = vpop.f32.mrb[0].mxu0
    %v7425 = vadd.f32 %v1773, %v7424
    %v7426 = vpop.f32.mrb[0].mxu0
    %v7427 = vpop.f32.mrb[0].mxu0
    %7428 = vdwg.mxu0
    %7429 = vmatprep.subr.bf16.mxu0 %v5304
    %7430 = vmatpush1.bf16.msra.mxu0 %v5303
    %7431 = vmatprep.subr.bf16.mxu0 %v5309
    %7432 = vmatpush1.bf16.msra.mxu0 %v5308
    %7433 = vmatprep.subr.bf16.mxu0 %v5314
    %7434 = vmatpush1.bf16.msra.mxu0 %v5313
    %7435 = vmatprep.subr.bf16.mxu0 %v5319
    %7436 = vmatpush1.bf16.msra.mxu0 %v5318
    %7437 = vmatprep.subr.bf16.mxu0 %v5324
    %7438 = vmatpush1.bf16.msra.mxu0 %v5323
    %7439 = vmatprep.subr.bf16.mxu0 %v5329
    %7440 = vmatpush1.bf16.msra.mxu0 %v5328
    %7441 = vmatprep.subr.bf16.mxu0 %v5334
    %7442 = vmatpush1.bf16.msra.mxu0 %v5333
    %7443 = vmatprep.subr.bf16.mxu0 %v5339
    %7444 = vmatpush1.bf16.msra.mxu0 %v5338
    %7445 = vmatprep.subr.bf16.mxu0 %v5344
    %7446 = vmatpush1.bf16.msra.mxu0 %v5343
    %7447 = vmatprep.subr.bf16.mxu0 %v5349
    %7448 = vmatpush1.bf16.msra.mxu0 %v5348
    %7449 = vmatprep.subr.bf16.mxu0 %v5354
    %7450 = vmatpush1.bf16.msra.mxu0 %v5353
    %7451 = vmatprep.subr.bf16.mxu0 %v5359
    %7452 = vmatpush1.bf16.msra.mxu0 %v5358
    %7453 = vmatprep.subr.bf16.mxu0 %v5364
    %7454 = vmatpush1.bf16.msra.mxu0 %v5363
    %7455 = vmatprep.subr.bf16.mxu0 %v5369
    %7456 = vmatpush1.bf16.msra.mxu0 %v5368
    %7457 = vmatprep.subr.bf16.mxu0 %v5374
    %7458 = vmatpush1.bf16.msra.mxu0 %v5373
    %7459 = vmatprep.subr.bf16.mxu0 %v5379
    %7460 = vmatpush1.bf16.msra.mxu0 %v5378
    %7461 = vmatprep.mubr.bf16.mxu0 %v439
    %7462 = vmatmul.mubr.bf16.gmra.mrb[0].mxu0 %v438
    %v7463 = vpop.f32.mrb[0].mxu0
    %v7464 = vadd.f32 %v7423, %v7463
    %v7465 = vpop.f32.mrb[0].mxu0
    %v7466 = vadd.f32 %v7425, %v7465
    %v7467 = vpop.f32.mrb[0].mxu0
    %v7468 = vpop.f32.mrb[0].mxu0
    %7469 = vdwg.mxu0
    %7470 = vmatprep.subr.bf16.mxu0 %v5384
    %7471 = vmatpush1.bf16.msra.mxu0 %v5383
    %7472 = vmatprep.subr.bf16.mxu0 %v5389
    %7473 = vmatpush1.bf16.msra.mxu0 %v5388
    %7474 = vmatprep.subr.bf16.mxu0 %v5394
    %7475 = vmatpush1.bf16.msra.mxu0 %v5393
    %7476 = vmatprep.subr.bf16.mxu0 %v5399
    %7477 = vmatpush1.bf16.msra.mxu0 %v5398
    %7478 = vmatprep.subr.bf16.mxu0 %v5404
    %7479 = vmatpush1.bf16.msra.mxu0 %v5403
    %7480 = vmatprep.subr.bf16.mxu0 %v5409
    %7481 = vmatpush1.bf16.msra.mxu0 %v5408
    %7482 = vmatprep.subr.bf16.mxu0 %v5414
    %7483 = vmatpush1.bf16.msra.mxu0 %v5413
    %7484 = vmatprep.subr.bf16.mxu0 %v5419
    %7485 = vmatpush1.bf16.msra.mxu0 %v5418
    %7486 = vmatprep.subr.bf16.mxu0 %v5424
    %7487 = vmatpush1.bf16.msra.mxu0 %v5423
    %7488 = vmatprep.subr.bf16.mxu0 %v5429
    %7489 = vmatpush1.bf16.msra.mxu0 %v5428
    %7490 = vmatprep.subr.bf16.mxu0 %v5434
    %7491 = vmatpush1.bf16.msra.mxu0 %v5433
    %7492 = vmatprep.subr.bf16.mxu0 %v5439
    %7493 = vmatpush1.bf16.msra.mxu0 %v5438
    %7494 = vmatprep.subr.bf16.mxu0 %v5444
    %7495 = vmatpush1.bf16.msra.mxu0 %v5443
    %7496 = vmatprep.subr.bf16.mxu0 %v5449
    %7497 = vmatpush1.bf16.msra.mxu0 %v5448
    %7498 = vmatprep.subr.bf16.mxu0 %v5454
    %7499 = vmatpush1.bf16.msra.mxu0 %v5453
    %7500 = vmatprep.subr.bf16.mxu0 %v5459
    %7501 = vmatpush1.bf16.msra.mxu0 %v5458
    %7502 = vmatprep.mubr.bf16.mxu0 %v441
    %7503 = vmatmul.mubr.bf16.gmra.mrb[0].mxu0 %v440
    %v7504 = vpop.f32.mrb[0].mxu0
    %v7505 = vadd.f32 %v7464, %v7504
    %v7506 = vpop.f32.mrb[0].mxu0
    %v7507 = vadd.f32 %v7466, %v7506
    %v7508 = vpop.f32.mrb[0].mxu0
    %v7509 = vpop.f32.mrb[0].mxu0
    %7510 = vdwg.mxu0
    %7511 = vmatprep.subr.bf16.mxu0 %v5464
    %7512 = vmatpush1.bf16.msra.mxu0 %v5463
    %7513 = vmatprep.subr.bf16.mxu0 %v5469
    %7514 = vmatpush1.bf16.msra.mxu0 %v5468
    %7515 = vmatprep.subr.bf16.mxu0 %v5474
    %7516 = vmatpush1.bf16.msra.mxu0 %v5473
    %7517 = vmatprep.subr.bf16.mxu0 %v5479
    %7518 = vmatpush1.bf16.msra.mxu0 %v5478
    %7519 = vmatprep.subr.bf16.mxu0 %v5484
    %7520 = vmatpush1.bf16.msra.mxu0 %v5483
    %7521 = vmatprep.subr.bf16.mxu0 %v5489
    %7522 = vmatpush1.bf16.msra.mxu0 %v5488
    %7523 = vmatprep.subr.bf16.mxu0 %v5494
    %7524 = vmatpush1.bf16.msra.mxu0 %v5493
    %7525 = vmatprep.subr.bf16.mxu0 %v5499
    %7526 = vmatpush1.bf16.msra.mxu0 %v5498
    %7527 = vmatprep.subr.bf16.mxu0 %v5504
    %7528 = vmatpush1.bf16.msra.mxu0 %v5503
    %7529 = vmatprep.subr.bf16.mxu0 %v5509
    %7530 = vmatpush1.bf16.msra.mxu0 %v5508
    %7531 = vmatprep.subr.bf16.mxu0 %v5514
    %7532 = vmatpush1.bf16.msra.mxu0 %v5513
    %7533 = vmatprep.subr.bf16.mxu0 %v5519
    %7534 = vmatpush1.bf16.msra.mxu0 %v5518
    %7535 = vmatprep.subr.bf16.mxu0 %v5524
    %7536 = vmatpush1.bf16.msra.mxu0 %v5523
    %7537 = vmatprep.subr.bf16.mxu0 %v5529
    %7538 = vmatpush1.bf16.msra.mxu0 %v5528
    %7539 = vmatprep.subr.bf16.mxu0 %v5534
    %7540 = vmatpush1.bf16.msra.mxu0 %v5533
    %7541 = vmatprep.subr.bf16.mxu0 %v5539
    %7542 = vmatpush1.bf16.msra.mxu0 %v5538
    %7543 = vmatprep.mubr.bf16.mxu0 %v443
    %7544 = vmatmul.mubr.bf16.gmra.mrb[0].mxu0 %v442
    %v7545 = vpop.f32.mrb[0].mxu0
    %v7546 = vadd.f32 %v7505, %v7545
    %v7547 = vpop.f32.mrb[0].mxu0
    %v7548 = vadd.f32 %v7507, %v7547
    %v7549 = vpop.f32.mrb[0].mxu0
    %v7550 = vpop.f32.mrb[0].mxu0
    %7551 = vdwg.mxu0
    %7552 = vmatprep.subr.bf16.mxu0 %v5544
    %7553 = vmatpush1.bf16.msra.mxu0 %v5543
    %7554 = vmatprep.subr.bf16.mxu0 %v5549
    %7555 = vmatpush1.bf16.msra.mxu0 %v5548
    %7556 = vmatprep.subr.bf16.mxu0 %v5554
    %7557 = vmatpush1.bf16.msra.mxu0 %v5553
    %7558 = vmatprep.subr.bf16.mxu0 %v5559
    %7559 = vmatpush1.bf16.msra.mxu0 %v5558
    %7560 = vmatprep.subr.bf16.mxu0 %v5564
    %7561 = vmatpush1.bf16.msra.mxu0 %v5563
    %7562 = vmatprep.subr.bf16.mxu0 %v5569
    %7563 = vmatpush1.bf16.msra.mxu0 %v5568
    %7564 = vmatprep.subr.bf16.mxu0 %v5574
    %7565 = vmatpush1.bf16.msra.mxu0 %v5573
    %7566 = vmatprep.subr.bf16.mxu0 %v5579
    %7567 = vmatpush1.bf16.msra.mxu0 %v5578
    %7568 = vmatprep.subr.bf16.mxu0 %v5584
    %7569 = vmatpush1.bf16.msra.mxu0 %v5583
    %7570 = vmatprep.subr.bf16.mxu0 %v5589
    %7571 = vmatpush1.bf16.msra.mxu0 %v5588
    %7572 = vmatprep.subr.bf16.mxu0 %v5594
    %7573 = vmatpush1.bf16.msra.mxu0 %v5593
    %7574 = vmatprep.subr.bf16.mxu0 %v5599
    %7575 = vmatpush1.bf16.msra.mxu0 %v5598
    %7576 = vmatprep.subr.bf16.mxu0 %v5604
    %7577 = vmatpush1.bf16.msra.mxu0 %v5603
    %7578 = vmatprep.subr.bf16.mxu0 %v5609
    %7579 = vmatpush1.bf16.msra.mxu0 %v5608
    %7580 = vmatprep.subr.bf16.mxu0 %v5614
    %7581 = vmatpush1.bf16.msra.mxu0 %v5613
    %7582 = vmatprep.subr.bf16.mxu0 %v5619
    %7583 = vmatpush1.bf16.msra.mxu0 %v5618
    %7584 = vmatprep.mubr.bf16.mxu0 %v445
    %7585 = vmatmul.mubr.bf16.gmra.mrb[0].mxu0 %v444
    %v7586 = vpop.f32.mrb[0].mxu0
    %v7587 = vadd.f32 %v7546, %v7586
    %v7588 = vpop.f32.mrb[0].mxu0
    %v7589 = vadd.f32 %v7548, %v7588
    %v7590 = vpop.f32.mrb[0].mxu0
    %v7591 = vpop.f32.mrb[0].mxu0
    %7592 = vdwg.mxu0
    %7593 = vmatprep.subr.bf16.mxu0 %v5624
    %7594 = vmatpush1.bf16.msra.mxu0 %v5623
    %7595 = vmatprep.subr.bf16.mxu0 %v5629
    %7596 = vmatpush1.bf16.msra.mxu0 %v5628
    %7597 = vmatprep.subr.bf16.mxu0 %v5634
    %7598 = vmatpush1.bf16.msra.mxu0 %v5633
    %7599 = vmatprep.subr.bf16.mxu0 %v5639
    %7600 = vmatpush1.bf16.msra.mxu0 %v5638
    %7601 = vmatprep.subr.bf16.mxu0 %v5644
    %7602 = vmatpush1.bf16.msra.mxu0 %v5643
    %7603 = vmatprep.subr.bf16.mxu0 %v5649
    %7604 = vmatpush1.bf16.msra.mxu0 %v5648
    %7605 = vmatprep.subr.bf16.mxu0 %v5654
    %7606 = vmatpush1.bf16.msra.mxu0 %v5653
    %7607 = vmatprep.subr.bf16.mxu0 %v5659
    %7608 = vmatpush1.bf16.msra.mxu0 %v5658
    %7609 = vmatprep.subr.bf16.mxu0 %v5664
    %7610 = vmatpush1.bf16.msra.mxu0 %v5663
    %7611 = vmatprep.subr.bf16.mxu0 %v5669
    %7612 = vmatpush1.bf16.msra.mxu0 %v5668
    %7613 = vmatprep.subr.bf16.mxu0 %v5674
    %7614 = vmatpush1.bf16.msra.mxu0 %v5673
    %7615 = vmatprep.subr.bf16.mxu0 %v5679
    %7616 = vmatpush1.bf16.msra.mxu0 %v5678
    %7617 = vmatprep.subr.bf16.mxu0 %v5684
    %7618 = vmatpush1.bf16.msra.mxu0 %v5683
    %7619 = vmatprep.subr.bf16.mxu0 %v5689
    %7620 = vmatpush1.bf16.msra.mxu0 %v5688
    %7621 = vmatprep.subr.bf16.mxu0 %v5694
    %7622 = vmatpush1.bf16.msra.mxu0 %v5693
    %7623 = vmatprep.subr.bf16.mxu0 %v5699
    %7624 = vmatpush1.bf16.msra.mxu0 %v5698
    %7625 = vmatprep.mubr.bf16.mxu0 %v447
    %7626 = vmatmul.mubr.bf16.gmra.mrb[0].mxu0 %v446
    %v7627 = vpop.f32.mrb[0].mxu0
    %v7628 = vadd.f32 %v7587, %v7627
    %v7629 = vpop.f32.mrb[0].mxu0
    %v7630 = vadd.f32 %v7589, %v7629
    %v7631 = vpop.f32.mrb[0].mxu0
    %v7632 = vpop.f32.mrb[0].mxu0
    %7633 = vdwg.mxu0
    %7634 = vmatprep.subr.bf16.mxu0 %v5704
    %7635 = vmatpush1.bf16.msra.mxu0 %v5703
    %7636 = vmatprep.subr.bf16.mxu0 %v5709
    %7637 = vmatpush1.bf16.msra.mxu0 %v5708
    %7638 = vmatprep.subr.bf16.mxu0 %v5714
    %7639 = vmatpush1.bf16.msra.mxu0 %v5713
    %7640 = vmatprep.subr.bf16.mxu0 %v5719
    %7641 = vmatpush1.bf16.msra.mxu0 %v5718
    %7642 = vmatprep.subr.bf16.mxu0 %v5724
    %7643 = vmatpush1.bf16.msra.mxu0 %v5723
    %7644 = vmatprep.subr.bf16.mxu0 %v5729
    %7645 = vmatpush1.bf16.msra.mxu0 %v5728
    %7646 = vmatprep.subr.bf16.mxu0 %v5734
    %7647 = vmatpush1.bf16.msra.mxu0 %v5733
    %7648 = vmatprep.subr.bf16.mxu0 %v5739
    %7649 = vmatpush1.bf16.msra.mxu0 %v5738
    %7650 = vmatprep.subr.bf16.mxu0 %v5744
    %7651 = vmatpush1.bf16.msra.mxu0 %v5743
    %7652 = vmatprep.subr.bf16.mxu0 %v5749
    %7653 = vmatpush1.bf16.msra.mxu0 %v5748
    %7654 = vmatprep.subr.bf16.mxu0 %v5754
    %7655 = vmatpush1.bf16.msra.mxu0 %v5753
    %7656 = vmatprep.subr.bf16.mxu0 %v5759
    %7657 = vmatpush1.bf16.msra.mxu0 %v5758
    %7658 = vmatprep.subr.bf16.mxu0 %v5764
    %7659 = vmatpush1.bf16.msra.mxu0 %v5763
    %7660 = vmatprep.subr.bf16.mxu0 %v5769
    %7661 = vmatpush1.bf16.msra.mxu0 %v5768
    %7662 = vmatprep.subr.bf16.mxu0 %v5774
    %7663 = vmatpush1.bf16.msra.mxu0 %v5773
    %7664 = vmatprep.subr.bf16.mxu0 %v5779
    %7665 = vmatpush1.bf16.msra.mxu0 %v5778
    %7666 = vmatprep.mubr.bf16.mxu0 %v449
    %7667 = vmatmul.mubr.bf16.gmra.mrb[0].mxu0 %v448
    %v7668 = vpop.f32.mrb[0].mxu0
    %v7669 = vadd.f32 %v7628, %v7668
    %v7670 = vpop.f32.mrb[0].mxu0
    %v7671 = vadd.f32 %v7630, %v7670
    %v7672 = vpop.f32.mrb[0].mxu0
    %v7673 = vpop.f32.mrb[0].mxu0
    %7674 = vdwg.mxu0
    %7675 = vmatprep.subr.bf16.mxu0 %v5784
    %7676 = vmatpush1.bf16.msra.mxu0 %v5783
    %7677 = vmatprep.subr.bf16.mxu0 %v5789
    %7678 = vmatpush1.bf16.msra.mxu0 %v5788
    %7679 = vmatprep.subr.bf16.mxu0 %v5794
    %7680 = vmatpush1.bf16.msra.mxu0 %v5793
    %7681 = vmatprep.subr.bf16.mxu0 %v5799
    %7682 = vmatpush1.bf16.msra.mxu0 %v5798
    %7683 = vmatprep.subr.bf16.mxu0 %v5804
    %7684 = vmatpush1.bf16.msra.mxu0 %v5803
    %7685 = vmatprep.subr.bf16.mxu0 %v5809
    %7686 = vmatpush1.bf16.msra.mxu0 %v5808
    %7687 = vmatprep.subr.bf16.mxu0 %v5814
    %7688 = vmatpush1.bf16.msra.mxu0 %v5813
    %7689 = vmatprep.subr.bf16.mxu0 %v5819
    %7690 = vmatpush1.bf16.msra.mxu0 %v5818
    %7691 = vmatprep.subr.bf16.mxu0 %v5824
    %7692 = vmatpush1.bf16.msra.mxu0 %v5823
    %7693 = vmatprep.subr.bf16.mxu0 %v5829
    %7694 = vmatpush1.bf16.msra.mxu0 %v5828
    %7695 = vmatprep.subr.bf16.mxu0 %v5834
    %7696 = vmatpush1.bf16.msra.mxu0 %v5833
    %7697 = vmatprep.subr.bf16.mxu0 %v5839
    %7698 = vmatpush1.bf16.msra.mxu0 %v5838
    %7699 = vmatprep.subr.bf16.mxu0 %v5844
    %7700 = vmatpush1.bf16.msra.mxu0 %v5843
    %7701 = vmatprep.subr.bf16.mxu0 %v5849
    %7702 = vmatpush1.bf16.msra.mxu0 %v5848
    %7703 = vmatprep.subr.bf16.mxu0 %v5854
    %7704 = vmatpush1.bf16.msra.mxu0 %v5853
    %7705 = vmatprep.subr.bf16.mxu0 %v5859
    %7706 = vmatpush1.bf16.msra.mxu0 %v5858
    %7707 = vmatprep.mubr.bf16.mxu0 %v451
    %7708 = vmatmul.mubr.bf16.gmra.mrb[0].mxu0 %v450
    %v7709 = vpop.f32.mrb[0].mxu0
    %v7710 = vadd.f32 %v7669, %v7709
    %v7711 = vpop.f32.mrb[0].mxu0
    %v7712 = vadd.f32 %v7671, %v7711
    %v7713 = vpop.f32.mrb[0].mxu0
    %v7714 = vpop.f32.mrb[0].mxu0
    %7715 = vdwg.mxu0
    %7716 = vmatprep.subr.bf16.mxu0 %v5864
    %7717 = vmatpush1.bf16.msra.mxu0 %v5863
    %7718 = vmatprep.subr.bf16.mxu0 %v5869
    %7719 = vmatpush1.bf16.msra.mxu0 %v5868
    %7720 = vmatprep.subr.bf16.mxu0 %v5874
    %7721 = vmatpush1.bf16.msra.mxu0 %v5873
    %7722 = vmatprep.subr.bf16.mxu0 %v5879
    %7723 = vmatpush1.bf16.msra.mxu0 %v5878
    %7724 = vmatprep.subr.bf16.mxu0 %v5884
    %7725 = vmatpush1.bf16.msra.mxu0 %v5883
    %7726 = vmatprep.subr.bf16.mxu0 %v5889
    %7727 = vmatpush1.bf16.msra.mxu0 %v5888
    %7728 = vmatprep.subr.bf16.mxu0 %v5894
    %7729 = vmatpush1.bf16.msra.mxu0 %v5893
    %7730 = vmatprep.subr.bf16.mxu0 %v5899
    %7731 = vmatpush1.bf16.msra.mxu0 %v5898
    %7732 = vmatprep.subr.bf16.mxu0 %v5904
    %7733 = vmatpush1.bf16.msra.mxu0 %v5903
    %7734 = vmatprep.subr.bf16.mxu0 %v5909
    %7735 = vmatpush1.bf16.msra.mxu0 %v5908
    %7736 = vmatprep.subr.bf16.mxu0 %v5914
    %7737 = vmatpush1.bf16.msra.mxu0 %v5913
    %7738 = vmatprep.subr.bf16.mxu0 %v5919
    %7739 = vmatpush1.bf16.msra.mxu0 %v5918
    %7740 = vmatprep.subr.bf16.mxu0 %v5924
    %7741 = vmatpush1.bf16.msra.mxu0 %v5923
    %7742 = vmatprep.subr.bf16.mxu0 %v5929
    %7743 = vmatpush1.bf16.msra.mxu0 %v5928
    %7744 = vmatprep.subr.bf16.mxu0 %v5934
    %7745 = vmatpush1.bf16.msra.mxu0 %v5933
    %7746 = vmatprep.subr.bf16.mxu0 %v5939
    %7747 = vmatpush1.bf16.msra.mxu0 %v5938
    %7748 = vmatprep.mubr.bf16.mxu0 %v453
    %7749 = vmatmul.mubr.bf16.gmra.mrb[0].mxu0 %v452
    %v7750 = vpop.f32.mrb[0].mxu0
    %v7751 = vadd.f32 %v7710, %v7750
    %v7752 = vpop.f32.mrb[0].mxu0
    %v7753 = vadd.f32 %v7712, %v7752
    %v7754 = vpop.f32.mrb[0].mxu0
    %v7755 = vpop.f32.mrb[0].mxu0
    %7756 = vdwg.mxu0
    %7757 = vmatprep.subr.bf16.mxu0 %v5944
    %7758 = vmatpush1.bf16.msra.mxu0 %v5943
    %7759 = vmatprep.subr.bf16.mxu0 %v5949
    %7760 = vmatpush1.bf16.msra.mxu0 %v5948
    %7761 = vmatprep.subr.bf16.mxu0 %v5954
    %7762 = vmatpush1.bf16.msra.mxu0 %v5953
    %7763 = vmatprep.subr.bf16.mxu0 %v5959
    %7764 = vmatpush1.bf16.msra.mxu0 %v5958
    %7765 = vmatprep.subr.bf16.mxu0 %v5964
    %7766 = vmatpush1.bf16.msra.mxu0 %v5963
    %7767 = vmatprep.subr.bf16.mxu0 %v5969
    %7768 = vmatpush1.bf16.msra.mxu0 %v5968
    %7769 = vmatprep.subr.bf16.mxu0 %v5974
    %7770 = vmatpush1.bf16.msra.mxu0 %v5973
    %7771 = vmatprep.subr.bf16.mxu0 %v5979
    %7772 = vmatpush1.bf16.msra.mxu0 %v5978
    %7773 = vmatprep.subr.bf16.mxu0 %v5984
    %7774 = vmatpush1.bf16.msra.mxu0 %v5983
    %7775 = vmatprep.subr.bf16.mxu0 %v5989
    %7776 = vmatpush1.bf16.msra.mxu0 %v5988
    %7777 = vmatprep.subr.bf16.mxu0 %v5994
    %7778 = vmatpush1.bf16.msra.mxu0 %v5993
    %7779 = vmatprep.subr.bf16.mxu0 %v5999
    %7780 = vmatpush1.bf16.msra.mxu0 %v5998
    %7781 = vmatprep.subr.bf16.mxu0 %v6004
    %7782 = vmatpush1.bf16.msra.mxu0 %v6003
    %7783 = vmatprep.subr.bf16.mxu0 %v6009
    %7784 = vmatpush1.bf16.msra.mxu0 %v6008
    %7785 = vmatprep.subr.bf16.mxu0 %v6014
    %7786 = vmatpush1.bf16.msra.mxu0 %v6013
    %7787 = vmatprep.subr.bf16.mxu0 %v6019
    %7788 = vmatpush1.bf16.msra.mxu0 %v6018
    %7789 = vmatprep.mubr.bf16.mxu0 %v455
    %7790 = vmatmul.mubr.bf16.gmra.mrb[0].mxu0 %v454
    %v7791 = vpop.f32.mrb[0].mxu0
    %v7792 = vadd.f32 %v7751, %v7791
    %v7793 = vpop.f32.mrb[0].mxu0
    %v7794 = vadd.f32 %v7753, %v7793
    %v7795 = vpop.f32.mrb[0].mxu0
    %v7796 = vpop.f32.mrb[0].mxu0
    %7797 = vdwg.mxu0
    %7798 = vmatprep.subr.bf16.mxu0 %v6024
    %7799 = vmatpush1.bf16.msra.mxu0 %v6023
    %7800 = vmatprep.subr.bf16.mxu0 %v6029
    %7801 = vmatpush1.bf16.msra.mxu0 %v6028
    %7802 = vmatprep.subr.bf16.mxu0 %v6034
    %7803 = vmatpush1.bf16.msra.mxu0 %v6033
    %7804 = vmatprep.subr.bf16.mxu0 %v6039
    %7805 = vmatpush1.bf16.msra.mxu0 %v6038
    %7806 = vmatprep.subr.bf16.mxu0 %v6044
    %7807 = vmatpush1.bf16.msra.mxu0 %v6043
    %7808 = vmatprep.subr.bf16.mxu0 %v6049
    %7809 = vmatpush1.bf16.msra.mxu0 %v6048
    %7810 = vmatprep.subr.bf16.mxu0 %v6054
    %7811 = vmatpush1.bf16.msra.mxu0 %v6053
    %7812 = vmatprep.subr.bf16.mxu0 %v6059
    %7813 = vmatpush1.bf16.msra.mxu0 %v6058
    %7814 = vmatprep.subr.bf16.mxu0 %v6064
    %7815 = vmatpush1.bf16.msra.mxu0 %v6063
    %7816 = vmatprep.subr.bf16.mxu0 %v6069
    %7817 = vmatpush1.bf16.msra.mxu0 %v6068
    %7818 = vmatprep.subr.bf16.mxu0 %v6074
    %7819 = vmatpush1.bf16.msra.mxu0 %v6073
    %7820 = vmatprep.subr.bf16.mxu0 %v6079
    %7821 = vmatpush1.bf16.msra.mxu0 %v6078
    %7822 = vmatprep.subr.bf16.mxu0 %v6084
    %7823 = vmatpush1.bf16.msra.mxu0 %v6083
    %7824 = vmatprep.subr.bf16.mxu0 %v6089
    %7825 = vmatpush1.bf16.msra.mxu0 %v6088
    %7826 = vmatprep.subr.bf16.mxu0 %v6094
    %7827 = vmatpush1.bf16.msra.mxu0 %v6093
    %7828 = vmatprep.subr.bf16.mxu0 %v6099
    %7829 = vmatpush1.bf16.msra.mxu0 %v6098
    %7830 = vmatprep.mubr.bf16.mxu0 %v457
    %7831 = vmatmul.mubr.bf16.gmra.mrb[0].mxu0 %v456
    %v7832 = vpop.f32.mrb[0].mxu0
    %v7833 = vadd.f32 %v7792, %v7832
    %v7834 = vpop.f32.mrb[0].mxu0
    %v7835 = vadd.f32 %v7794, %v7834
    %v7836 = vpop.f32.mrb[0].mxu0
    %v7837 = vpop.f32.mrb[0].mxu0
    %7838 = vdwg.mxu0
    %7839 = vmatprep.subr.bf16.mxu0 %v6104
    %7840 = vmatpush1.bf16.msra.mxu0 %v6103
    %7841 = vmatprep.subr.bf16.mxu0 %v6109
    %7842 = vmatpush1.bf16.msra.mxu0 %v6108
    %7843 = vmatprep.subr.bf16.mxu0 %v6114
    %7844 = vmatpush1.bf16.msra.mxu0 %v6113
    %7845 = vmatprep.subr.bf16.mxu0 %v6119
    %7846 = vmatpush1.bf16.msra.mxu0 %v6118
    %7847 = vmatprep.subr.bf16.mxu0 %v6124
    %7848 = vmatpush1.bf16.msra.mxu0 %v6123
    %7849 = vmatprep.subr.bf16.mxu0 %v6129
    %7850 = vmatpush1.bf16.msra.mxu0 %v6128
    %7851 = vmatprep.subr.bf16.mxu0 %v6134
    %7852 = vmatpush1.bf16.msra.mxu0 %v6133
    %7853 = vmatprep.subr.bf16.mxu0 %v6139
    %7854 = vmatpush1.bf16.msra.mxu0 %v6138
    %7855 = vmatprep.subr.bf16.mxu0 %v6144
    %7856 = vmatpush1.bf16.msra.mxu0 %v6143
    %7857 = vmatprep.subr.bf16.mxu0 %v6149
    %7858 = vmatpush1.bf16.msra.mxu0 %v6148
    %7859 = vmatprep.subr.bf16.mxu0 %v6154
    %7860 = vmatpush1.bf16.msra.mxu0 %v6153
    %7861 = vmatprep.subr.bf16.mxu0 %v6159
    %7862 = vmatpush1.bf16.msra.mxu0 %v6158
    %7863 = vmatprep.subr.bf16.mxu0 %v6164
    %7864 = vmatpush1.bf16.msra.mxu0 %v6163
    %7865 = vmatprep.subr.bf16.mxu0 %v6169
    %7866 = vmatpush1.bf16.msra.mxu0 %v6168
    %7867 = vmatprep.subr.bf16.mxu0 %v6174
    %7868 = vmatpush1.bf16.msra.mxu0 %v6173
    %7869 = vmatprep.subr.bf16.mxu0 %v6179
    %7870 = vmatpush1.bf16.msra.mxu0 %v6178
    %7871 = vmatprep.mubr.bf16.mxu0 %v459
    %7872 = vmatmul.mubr.bf16.gmra.mrb[0].mxu0 %v458
    %v7873 = vpop.f32.mrb[0].mxu0
    %v7874 = vadd.f32 %v7833, %v7873
    %v7875 = vpop.f32.mrb[0].mxu0
    %v7876 = vadd.f32 %v7835, %v7875
    %v7877 = vpop.f32.mrb[0].mxu0
    %v7878 = vpop.f32.mrb[0].mxu0
    %7879 = vdwg.mxu0
    %7880 = vmatprep.subr.bf16.mxu0 %v6184
    %7881 = vmatpush1.bf16.msra.mxu0 %v6183
    %7882 = vmatprep.subr.bf16.mxu0 %v6189
    %7883 = vmatpush1.bf16.msra.mxu0 %v6188
    %7884 = vmatprep.subr.bf16.mxu0 %v6194
    %7885 = vmatpush1.bf16.msra.mxu0 %v6193
    %7886 = vmatprep.subr.bf16.mxu0 %v6199
    %7887 = vmatpush1.bf16.msra.mxu0 %v6198
    %7888 = vmatprep.subr.bf16.mxu0 %v6204
    %7889 = vmatpush1.bf16.msra.mxu0 %v6203
    %7890 = vmatprep.subr.bf16.mxu0 %v6209
    %7891 = vmatpush1.bf16.msra.mxu0 %v6208
    %7892 = vmatprep.subr.bf16.mxu0 %v6214
    %7893 = vmatpush1.bf16.msra.mxu0 %v6213
    %7894 = vmatprep.subr.bf16.mxu0 %v6219
    %7895 = vmatpush1.bf16.msra.mxu0 %v6218
    %7896 = vmatprep.subr.bf16.mxu0 %v6224
    %7897 = vmatpush1.bf16.msra.mxu0 %v6223
    %7898 = vmatprep.subr.bf16.mxu0 %v6229
    %7899 = vmatpush1.bf16.msra.mxu0 %v6228
    %7900 = vmatprep.subr.bf16.mxu0 %v6234
    %7901 = vmatpush1.bf16.msra.mxu0 %v6233
    %7902 = vmatprep.subr.bf16.mxu0 %v6239
    %7903 = vmatpush1.bf16.msra.mxu0 %v6238
    %7904 = vmatprep.subr.bf16.mxu0 %v6244
    %7905 = vmatpush1.bf16.msra.mxu0 %v6243
    %7906 = vmatprep.subr.bf16.mxu0 %v6249
    %7907 = vmatpush1.bf16.msra.mxu0 %v6248
    %7908 = vmatprep.subr.bf16.mxu0 %v6254
    %7909 = vmatpush1.bf16.msra.mxu0 %v6253
    %7910 = vmatprep.subr.bf16.mxu0 %v6259
    %7911 = vmatpush1.bf16.msra.mxu0 %v6258
    %7912 = vmatprep.mubr.bf16.mxu0 %v461
    %7913 = vmatmul.mubr.bf16.gmra.mrb[0].mxu0 %v460
    %v7914 = vpop.f32.mrb[0].mxu0
    %v7915 = vadd.f32 %v7874, %v7914
    %v7916 = vpop.f32.mrb[0].mxu0
    %v7917 = vadd.f32 %v7876, %v7916
    %v7918 = vpop.f32.mrb[0].mxu0
    %v7919 = vpop.f32.mrb[0].mxu0
    %7920 = vdwg.mxu0
    %7921 = vmatprep.subr.bf16.mxu0 %v6264
    %7922 = vmatpush1.bf16.msra.mxu0 %v6263
    %7923 = vmatprep.subr.bf16.mxu0 %v6269
    %7924 = vmatpush1.bf16.msra.mxu0 %v6268
    %7925 = vmatprep.subr.bf16.mxu0 %v6274
    %7926 = vmatpush1.bf16.msra.mxu0 %v6273
    %7927 = vmatprep.subr.bf16.mxu0 %v6279
    %7928 = vmatpush1.bf16.msra.mxu0 %v6278
    %7929 = vmatprep.subr.bf16.mxu0 %v6284
    %7930 = vmatpush1.bf16.msra.mxu0 %v6283
    %7931 = vmatprep.subr.bf16.mxu0 %v6289
    %7932 = vmatpush1.bf16.msra.mxu0 %v6288
    %7933 = vmatprep.subr.bf16.mxu0 %v7377
    %7934 = vmatpush1.bf16.msra.mxu0 %v7374
    %7935 = vmatprep.subr.bf16.mxu0 0
    %7936 = vmatpush1.bf16.msra.mxu0 0
    %7937 = vmatprep.subr.bf16.mxu0 0
    %7938 = vmatpush1.bf16.msra.mxu0 0
    %7939 = vmatprep.subr.bf16.mxu0 0
    %7940 = vmatpush1.bf16.msra.mxu0 0
    %7941 = vmatprep.subr.bf16.mxu0 0
    %7942 = vmatpush1.bf16.msra.mxu0 0
    %7943 = vmatprep.subr.bf16.mxu0 0
    %7944 = vmatpush1.bf16.msra.mxu0 0
    %7945 = vmatprep.subr.bf16.mxu0 0
    %7946 = vmatpush1.bf16.msra.mxu0 0
    %7947 = vmatprep.subr.bf16.mxu0 0
    %7948 = vmatpush1.bf16.msra.mxu0 0
    %7949 = vmatprep.subr.bf16.mxu0 0
    %7950 = vmatpush1.bf16.msra.mxu0 0
    %7951 = vmatprep.subr.bf16.mxu0 0
    %7952 = vmatpush1.bf16.msra.mxu0 0
    %7953 = vmatprep.mubr.bf16.mxu0 0
    %7954 = vmatmul.mubr.bf16.gmra.mrb[0].mxu0 %v7370
    %v7955 = vpop.f32.mrb[0].mxu0
    %v7956 = vadd.f32 %v7915, %v7955
    %v7957 = vpop.f32.mrb[0].mxu0
    %v7958 = vadd.f32 %v7917, %v7957
    %v7959 = vpop.f32.mrb[0].mxu0
    %v7960 = vpop.f32.mrb[0].mxu0
    %7961 = vdwg.mxu0
    %7962 = vmatprep.subr.bf16.mxu0 %v5226
    %7963 = vmatpush1.bf16.msra.mxu0 %v5225
    %7964 = vmatprep.subr.bf16.mxu0 %v5231
    %7965 = vmatpush1.bf16.msra.mxu0 %v5230
    %7966 = vmatprep.subr.bf16.mxu0 %v5236
    %7967 = vmatpush1.bf16.msra.mxu0 %v5235
    %7968 = vmatprep.subr.bf16.mxu0 %v5241
    %7969 = vmatpush1.bf16.msra.mxu0 %v5240
    %7970 = vmatprep.subr.bf16.mxu0 %v5246
    %7971 = vmatpush1.bf16.msra.mxu0 %v5245
    %7972 = vmatprep.subr.bf16.mxu0 %v5251
    %7973 = vmatpush1.bf16.msra.mxu0 %v5250
    %7974 = vmatprep.subr.bf16.mxu0 %v5256
    %7975 = vmatpush1.bf16.msra.mxu0 %v5255
    %7976 = vmatprep.subr.bf16.mxu0 %v5261
    %7977 = vmatpush1.bf16.msra.mxu0 %v5260
    %7978 = vmatprep.subr.bf16.mxu0 %v5266
    %7979 = vmatpush1.bf16.msra.mxu0 %v5265
    %7980 = vmatprep.subr.bf16.mxu0 %v5271
    %7981 = vmatpush1.bf16.msra.mxu0 %v5270
    %7982 = vmatprep.subr.bf16.mxu0 %v5276
    %7983 = vmatpush1.bf16.msra.mxu0 %v5275
    %7984 = vmatprep.subr.bf16.mxu0 %v5281
    %7985 = vmatpush1.bf16.msra.mxu0 %v5280
    %7986 = vmatprep.subr.bf16.mxu0 %v5286
    %7987 = vmatpush1.bf16.msra.mxu0 %v5285
    %7988 = vmatprep.subr.bf16.mxu0 %v5291
    %7989 = vmatpush1.bf16.msra.mxu0 %v5290
    %7990 = vmatprep.subr.bf16.mxu0 %v5296
    %7991 = vmatpush1.bf16.msra.mxu0 %v5295
    %7992 = vmatprep.subr.bf16.mxu0 %v5301
    %7993 = vmatpush1.bf16.msra.mxu0 %v5300
    %7994 = vmatprep.mubr.bf16.mxu0 %v437
    %7995 = vmatmul.mubr.bf16.gmra.mrb[0].mxu0 %v436
    %v7996 = vpop.f32.mrb[0].mxu0
    %v7997 = vadd.f32 %v1777, %v7996
    %v7998 = vpop.f32.mrb[0].mxu0
    %v7999 = vadd.f32 %v1781, %v7998
    %v8000 = vpop.f32.mrb[0].mxu0
    %v8001 = vpop.f32.mrb[0].mxu0
    %8002 = vdwg.mxu0
    %8003 = vmatprep.subr.bf16.mxu0 %v5306
    %8004 = vmatpush1.bf16.msra.mxu0 %v5305
    %8005 = vmatprep.subr.bf16.mxu0 %v5311
    %8006 = vmatpush1.bf16.msra.mxu0 %v5310
    %8007 = vmatprep.subr.bf16.mxu0 %v5316
    %8008 = vmatpush1.bf16.msra.mxu0 %v5315
    %8009 = vmatprep.subr.bf16.mxu0 %v5321
    %8010 = vmatpush1.bf16.msra.mxu0 %v5320
    %8011 = vmatprep.subr.bf16.mxu0 %v5326
    %8012 = vmatpush1.bf16.msra.mxu0 %v5325
    %8013 = vmatprep.subr.bf16.mxu0 %v5331
    %8014 = vmatpush1.bf16.msra.mxu0 %v5330
    %8015 = vmatprep.subr.bf16.mxu0 %v5336
    %8016 = vmatpush1.bf16.msra.mxu0 %v5335
    %8017 = vmatprep.subr.bf16.mxu0 %v5341
    %8018 = vmatpush1.bf16.msra.mxu0 %v5340
    %8019 = vmatprep.subr.bf16.mxu0 %v5346
    %8020 = vmatpush1.bf16.msra.mxu0 %v5345
    %8021 = vmatprep.subr.bf16.mxu0 %v5351
    %8022 = vmatpush1.bf16.msra.mxu0 %v5350
    %8023 = vmatprep.subr.bf16.mxu0 %v5356
    %8024 = vmatpush1.bf16.msra.mxu0 %v5355
    %8025 = vmatprep.subr.bf16.mxu0 %v5361
    %8026 = vmatpush1.bf16.msra.mxu0 %v5360
    %8027 = vmatprep.subr.bf16.mxu0 %v5366
    %8028 = vmatpush1.bf16.msra.mxu0 %v5365
    %8029 = vmatprep.subr.bf16.mxu0 %v5371
    %8030 = vmatpush1.bf16.msra.mxu0 %v5370
    %8031 = vmatprep.subr.bf16.mxu0 %v5376
    %8032 = vmatpush1.bf16.msra.mxu0 %v5375
    %8033 = vmatprep.subr.bf16.mxu0 %v5381
    %8034 = vmatpush1.bf16.msra.mxu0 %v5380
    %8035 = vmatprep.mubr.bf16.mxu0 %v439
    %8036 = vmatmul.mubr.bf16.gmra.mrb[0].mxu0 %v438
    %v8037 = vpop.f32.mrb[0].mxu0
    %v8038 = vadd.f32 %v7997, %v8037
    %v8039 = vpop.f32.mrb[0].mxu0
    %v8040 = vadd.f32 %v7999, %v8039
    %v8041 = vpop.f32.mrb[0].mxu0
    %v8042 = vpop.f32.mrb[0].mxu0
    %8043 = vdwg.mxu0
    %8044 = vmatprep.subr.bf16.mxu0 %v5386
    %8045 = vmatpush1.bf16.msra.mxu0 %v5385
    %8046 = vmatprep.subr.bf16.mxu0 %v5391
    %8047 = vmatpush1.bf16.msra.mxu0 %v5390
    %8048 = vmatprep.subr.bf16.mxu0 %v5396
    %8049 = vmatpush1.bf16.msra.mxu0 %v5395
    %8050 = vmatprep.subr.bf16.mxu0 %v5401
    %8051 = vmatpush1.bf16.msra.mxu0 %v5400
    %8052 = vmatprep.subr.bf16.mxu0 %v5406
    %8053 = vmatpush1.bf16.msra.mxu0 %v5405
    %8054 = vmatprep.subr.bf16.mxu0 %v5411
    %8055 = vmatpush1.bf16.msra.mxu0 %v5410
    %8056 = vmatprep.subr.bf16.mxu0 %v5416
    %8057 = vmatpush1.bf16.msra.mxu0 %v5415
    %8058 = vmatprep.subr.bf16.mxu0 %v5421
    %8059 = vmatpush1.bf16.msra.mxu0 %v5420
    %8060 = vmatprep.subr.bf16.mxu0 %v5426
    %8061 = vmatpush1.bf16.msra.mxu0 %v5425
    %8062 = vmatprep.subr.bf16.mxu0 %v5431
    %8063 = vmatpush1.bf16.msra.mxu0 %v5430
    %8064 = vmatprep.subr.bf16.mxu0 %v5436
    %8065 = vmatpush1.bf16.msra.mxu0 %v5435
    %8066 = vmatprep.subr.bf16.mxu0 %v5441
    %8067 = vmatpush1.bf16.msra.mxu0 %v5440
    %8068 = vmatprep.subr.bf16.mxu0 %v5446
    %8069 = vmatpush1.bf16.msra.mxu0 %v5445
    %8070 = vmatprep.subr.bf16.mxu0 %v5451
    %8071 = vmatpush1.bf16.msra.mxu0 %v5450
    %8072 = vmatprep.subr.bf16.mxu0 %v5456
    %8073 = vmatpush1.bf16.msra.mxu0 %v5455
    %8074 = vmatprep.subr.bf16.mxu0 %v5461
    %8075 = vmatpush1.bf16.msra.mxu0 %v5460
    %8076 = vmatprep.mubr.bf16.mxu0 %v441
    %8077 = vmatmul.mubr.bf16.gmra.mrb[0].mxu0 %v440
    %v8078 = vpop.f32.mrb[0].mxu0
    %v8079 = vadd.f32 %v8038, %v8078
    %v8080 = vpop.f32.mrb[0].mxu0
    %v8081 = vadd.f32 %v8040, %v8080
    %v8082 = vpop.f32.mrb[0].mxu0
    %v8083 = vpop.f32.mrb[0].mxu0
    %8084 = vdwg.mxu0
    %8085 = vmatprep.subr.bf16.mxu0 %v5466
    %8086 = vmatpush1.bf16.msra.mxu0 %v5465
    %8087 = vmatprep.subr.bf16.mxu0 %v5471
    %8088 = vmatpush1.bf16.msra.mxu0 %v5470
    %8089 = vmatprep.subr.bf16.mxu0 %v5476
    %8090 = vmatpush1.bf16.msra.mxu0 %v5475
    %8091 = vmatprep.subr.bf16.mxu0 %v5481
    %8092 = vmatpush1.bf16.msra.mxu0 %v5480
    %8093 = vmatprep.subr.bf16.mxu0 %v5486
    %8094 = vmatpush1.bf16.msra.mxu0 %v5485
    %8095 = vmatprep.subr.bf16.mxu0 %v5491
    %8096 = vmatpush1.bf16.msra.mxu0 %v5490
    %8097 = vmatprep.subr.bf16.mxu0 %v5496
    %8098 = vmatpush1.bf16.msra.mxu0 %v5495
    %8099 = vmatprep.subr.bf16.mxu0 %v5501
    %8100 = vmatpush1.bf16.msra.mxu0 %v5500
    %8101 = vmatprep.subr.bf16.mxu0 %v5506
    %8102 = vmatpush1.bf16.msra.mxu0 %v5505
    %8103 = vmatprep.subr.bf16.mxu0 %v5511
    %8104 = vmatpush1.bf16.msra.mxu0 %v5510
    %8105 = vmatprep.subr.bf16.mxu0 %v5516
    %8106 = vmatpush1.bf16.msra.mxu0 %v5515
    %8107 = vmatprep.subr.bf16.mxu0 %v5521
    %8108 = vmatpush1.bf16.msra.mxu0 %v5520
    %8109 = vmatprep.subr.bf16.mxu0 %v5526
    %8110 = vmatpush1.bf16.msra.mxu0 %v5525
    %8111 = vmatprep.subr.bf16.mxu0 %v5531
    %8112 = vmatpush1.bf16.msra.mxu0 %v5530
    %8113 = vmatprep.subr.bf16.mxu0 %v5536
    %8114 = vmatpush1.bf16.msra.mxu0 %v5535
    %8115 = vmatprep.subr.bf16.mxu0 %v5541
    %8116 = vmatpush1.bf16.msra.mxu0 %v5540
    %8117 = vmatprep.mubr.bf16.mxu0 %v443
    %8118 = vmatmul.mubr.bf16.gmra.mrb[0].mxu0 %v442
    %v8119 = vpop.f32.mrb[0].mxu0
    %v8120 = vadd.f32 %v8079, %v8119
    %v8121 = vpop.f32.mrb[0].mxu0
    %v8122 = vadd.f32 %v8081, %v8121
    %v8123 = vpop.f32.mrb[0].mxu0
    %v8124 = vpop.f32.mrb[0].mxu0
    %8125 = vdwg.mxu0
    %8126 = vmatprep.subr.bf16.mxu0 %v5546
    %8127 = vmatpush1.bf16.msra.mxu0 %v5545
    %8128 = vmatprep.subr.bf16.mxu0 %v5551
    %8129 = vmatpush1.bf16.msra.mxu0 %v5550
    %8130 = vmatprep.subr.bf16.mxu0 %v5556
    %8131 = vmatpush1.bf16.msra.mxu0 %v5555
    %8132 = vmatprep.subr.bf16.mxu0 %v5561
    %8133 = vmatpush1.bf16.msra.mxu0 %v5560
    %8134 = vmatprep.subr.bf16.mxu0 %v5566
    %8135 = vmatpush1.bf16.msra.mxu0 %v5565
    %8136 = vmatprep.subr.bf16.mxu0 %v5571
    %8137 = vmatpush1.bf16.msra.mxu0 %v5570
    %8138 = vmatprep.subr.bf16.mxu0 %v5576
    %8139 = vmatpush1.bf16.msra.mxu0 %v5575
    %8140 = vmatprep.subr.bf16.mxu0 %v5581
    %8141 = vmatpush1.bf16.msra.mxu0 %v5580
    %8142 = vmatprep.subr.bf16.mxu0 %v5586
    %8143 = vmatpush1.bf16.msra.mxu0 %v5585
    %8144 = vmatprep.subr.bf16.mxu0 %v5591
    %8145 = vmatpush1.bf16.msra.mxu0 %v5590
    %8146 = vmatprep.subr.bf16.mxu0 %v5596
    %8147 = vmatpush1.bf16.msra.mxu0 %v5595
    %8148 = vmatprep.subr.bf16.mxu0 %v5601
    %8149 = vmatpush1.bf16.msra.mxu0 %v5600
    %8150 = vmatprep.subr.bf16.mxu0 %v5606
    %8151 = vmatpush1.bf16.msra.mxu0 %v5605
    %8152 = vmatprep.subr.bf16.mxu0 %v5611
    %8153 = vmatpush1.bf16.msra.mxu0 %v5610
    %8154 = vmatprep.subr.bf16.mxu0 %v5616
    %8155 = vmatpush1.bf16.msra.mxu0 %v5615
    %8156 = vmatprep.subr.bf16.mxu0 %v5621
    %8157 = vmatpush1.bf16.msra.mxu0 %v5620
    %8158 = vmatprep.mubr.bf16.mxu0 %v445
    %8159 = vmatmul.mubr.bf16.gmra.mrb[0].mxu0 %v444
    %v8160 = vpop.f32.mrb[0].mxu0
    %v8161 = vadd.f32 %v8120, %v8160
    %v8162 = vpop.f32.mrb[0].mxu0
    %v8163 = vadd.f32 %v8122, %v8162
    %v8164 = vpop.f32.mrb[0].mxu0
    %v8165 = vpop.f32.mrb[0].mxu0
    %8166 = vdwg.mxu0
    %8167 = vmatprep.subr.bf16.mxu0 %v5626
    %8168 = vmatpush1.bf16.msra.mxu0 %v5625
    %8169 = vmatprep.subr.bf16.mxu0 %v5631
    %8170 = vmatpush1.bf16.msra.mxu0 %v5630
    %8171 = vmatprep.subr.bf16.mxu0 %v5636
    %8172 = vmatpush1.bf16.msra.mxu0 %v5635
    %8173 = vmatprep.subr.bf16.mxu0 %v5641
    %8174 = vmatpush1.bf16.msra.mxu0 %v5640
    %8175 = vmatprep.subr.bf16.mxu0 %v5646
    %8176 = vmatpush1.bf16.msra.mxu0 %v5645
    %8177 = vmatprep.subr.bf16.mxu0 %v5651
    %8178 = vmatpush1.bf16.msra.mxu0 %v5650
    %8179 = vmatprep.subr.bf16.mxu0 %v5656
    %8180 = vmatpush1.bf16.msra.mxu0 %v5655
    %8181 = vmatprep.subr.bf16.mxu0 %v5661
    %8182 = vmatpush1.bf16.msra.mxu0 %v5660
    %8183 = vmatprep.subr.bf16.mxu0 %v5666
    %8184 = vmatpush1.bf16.msra.mxu0 %v5665
    %8185 = vmatprep.subr.bf16.mxu0 %v5671
    %8186 = vmatpush1.bf16.msra.mxu0 %v5670
    %8187 = vmatprep.subr.bf16.mxu0 %v5676
    %8188 = vmatpush1.bf16.msra.mxu0 %v5675
    %8189 = vmatprep.subr.bf16.mxu0 %v5681
    %8190 = vmatpush1.bf16.msra.mxu0 %v5680
    %8191 = vmatprep.subr.bf16.mxu0 %v5686
    %8192 = vmatpush1.bf16.msra.mxu0 %v5685
    %8193 = vmatprep.subr.bf16.mxu0 %v5691
    %8194 = vmatpush1.bf16.msra.mxu0 %v5690
    %8195 = vmatprep.subr.bf16.mxu0 %v5696
    %8196 = vmatpush1.bf16.msra.mxu0 %v5695
    %8197 = vmatprep.subr.bf16.mxu0 %v5701
    %8198 = vmatpush1.bf16.msra.mxu0 %v5700
    %8199 = vmatprep.mubr.bf16.mxu0 %v447
    %8200 = vmatmul.mubr.bf16.gmra.mrb[0].mxu0 %v446
    %v8201 = vpop.f32.mrb[0].mxu0
    %v8202 = vadd.f32 %v8161, %v8201
    %v8203 = vpop.f32.mrb[0].mxu0
    %v8204 = vadd.f32 %v8163, %v8203
    %v8205 = vpop.f32.mrb[0].mxu0
    %v8206 = vpop.f32.mrb[0].mxu0
    %8207 = vdwg.mxu0
    %8208 = vmatprep.subr.bf16.mxu0 %v5706
    %8209 = vmatpush1.bf16.msra.mxu0 %v5705
    %8210 = vmatprep.subr.bf16.mxu0 %v5711
    %8211 = vmatpush1.bf16.msra.mxu0 %v5710
    %8212 = vmatprep.subr.bf16.mxu0 %v5716
    %8213 = vmatpush1.bf16.msra.mxu0 %v5715
    %8214 = vmatprep.subr.bf16.mxu0 %v5721
    %8215 = vmatpush1.bf16.msra.mxu0 %v5720
    %8216 = vmatprep.subr.bf16.mxu0 %v5726
    %8217 = vmatpush1.bf16.msra.mxu0 %v5725
    %8218 = vmatprep.subr.bf16.mxu0 %v5731
    %8219 = vmatpush1.bf16.msra.mxu0 %v5730
    %8220 = vmatprep.subr.bf16.mxu0 %v5736
    %8221 = vmatpush1.bf16.msra.mxu0 %v5735
    %8222 = vmatprep.subr.bf16.mxu0 %v5741
    %8223 = vmatpush1.bf16.msra.mxu0 %v5740
    %8224 = vmatprep.subr.bf16.mxu0 %v5746
    %8225 = vmatpush1.bf16.msra.mxu0 %v5745
    %8226 = vmatprep.subr.bf16.mxu0 %v5751
    %8227 = vmatpush1.bf16.msra.mxu0 %v5750
    %8228 = vmatprep.subr.bf16.mxu0 %v5756
    %8229 = vmatpush1.bf16.msra.mxu0 %v5755
    %8230 = vmatprep.subr.bf16.mxu0 %v5761
    %8231 = vmatpush1.bf16.msra.mxu0 %v5760
    %8232 = vmatprep.subr.bf16.mxu0 %v5766
    %8233 = vmatpush1.bf16.msra.mxu0 %v5765
    %8234 = vmatprep.subr.bf16.mxu0 %v5771
    %8235 = vmatpush1.bf16.msra.mxu0 %v5770
    %8236 = vmatprep.subr.bf16.mxu0 %v5776
    %8237 = vmatpush1.bf16.msra.mxu0 %v5775
    %8238 = vmatprep.subr.bf16.mxu0 %v5781
    %8239 = vmatpush1.bf16.msra.mxu0 %v5780
    %8240 = vmatprep.mubr.bf16.mxu0 %v449
    %8241 = vmatmul.mubr.bf16.gmra.mrb[0].mxu0 %v448
    %v8242 = vpop.f32.mrb[0].mxu0
    %v8243 = vadd.f32 %v8202, %v8242
    %v8244 = vpop.f32.mrb[0].mxu0
    %v8245 = vadd.f32 %v8204, %v8244
    %v8246 = vpop.f32.mrb[0].mxu0
    %v8247 = vpop.f32.mrb[0].mxu0
    %8248 = vdwg.mxu0
    %8249 = vmatprep.subr.bf16.mxu0 %v5786
    %8250 = vmatpush1.bf16.msra.mxu0 %v5785
    %8251 = vmatprep.subr.bf16.mxu0 %v5791
    %8252 = vmatpush1.bf16.msra.mxu0 %v5790
    %8253 = vmatprep.subr.bf16.mxu0 %v5796
    %8254 = vmatpush1.bf16.msra.mxu0 %v5795
    %8255 = vmatprep.subr.bf16.mxu0 %v5801
    %8256 = vmatpush1.bf16.msra.mxu0 %v5800
    %8257 = vmatprep.subr.bf16.mxu0 %v5806
    %8258 = vmatpush1.bf16.msra.mxu0 %v5805
    %8259 = vmatprep.subr.bf16.mxu0 %v5811
    %8260 = vmatpush1.bf16.msra.mxu0 %v5810
    %8261 = vmatprep.subr.bf16.mxu0 %v5816
    %8262 = vmatpush1.bf16.msra.mxu0 %v5815
    %8263 = vmatprep.subr.bf16.mxu0 %v5821
    %8264 = vmatpush1.bf16.msra.mxu0 %v5820
    %8265 = vmatprep.subr.bf16.mxu0 %v5826
    %8266 = vmatpush1.bf16.msra.mxu0 %v5825
    %8267 = vmatprep.subr.bf16.mxu0 %v5831
    %8268 = vmatpush1.bf16.msra.mxu0 %v5830
    %8269 = vmatprep.subr.bf16.mxu0 %v5836
    %8270 = vmatpush1.bf16.msra.mxu0 %v5835
    %8271 = vmatprep.subr.bf16.mxu0 %v5841
    %8272 = vmatpush1.bf16.msra.mxu0 %v5840
    %8273 = vmatprep.subr.bf16.mxu0 %v5846
    %8274 = vmatpush1.bf16.msra.mxu0 %v5845
    %8275 = vmatprep.subr.bf16.mxu0 %v5851
    %8276 = vmatpush1.bf16.msra.mxu0 %v5850
    %8277 = vmatprep.subr.bf16.mxu0 %v5856
    %8278 = vmatpush1.bf16.msra.mxu0 %v5855
    %8279 = vmatprep.subr.bf16.mxu0 %v5861
    %8280 = vmatpush1.bf16.msra.mxu0 %v5860
    %8281 = vmatprep.mubr.bf16.mxu0 %v451
    %8282 = vmatmul.mubr.bf16.gmra.mrb[0].mxu0 %v450
    %v8283 = vpop.f32.mrb[0].mxu0
    %v8284 = vadd.f32 %v8243, %v8283
    %v8285 = vpop.f32.mrb[0].mxu0
    %v8286 = vadd.f32 %v8245, %v8285
    %v8287 = vpop.f32.mrb[0].mxu0
    %v8288 = vpop.f32.mrb[0].mxu0
    %8289 = vdwg.mxu0
    %8290 = vmatprep.subr.bf16.mxu0 %v5866
    %8291 = vmatpush1.bf16.msra.mxu0 %v5865
    %8292 = vmatprep.subr.bf16.mxu0 %v5871
    %8293 = vmatpush1.bf16.msra.mxu0 %v5870
    %8294 = vmatprep.subr.bf16.mxu0 %v5876
    %8295 = vmatpush1.bf16.msra.mxu0 %v5875
    %8296 = vmatprep.subr.bf16.mxu0 %v5881
    %8297 = vmatpush1.bf16.msra.mxu0 %v5880
    %8298 = vmatprep.subr.bf16.mxu0 %v5886
    %8299 = vmatpush1.bf16.msra.mxu0 %v5885
    %8300 = vmatprep.subr.bf16.mxu0 %v5891
    %8301 = vmatpush1.bf16.msra.mxu0 %v5890
    %8302 = vmatprep.subr.bf16.mxu0 %v5896
    %8303 = vmatpush1.bf16.msra.mxu0 %v5895
    %8304 = vmatprep.subr.bf16.mxu0 %v5901
    %8305 = vmatpush1.bf16.msra.mxu0 %v5900
    %8306 = vmatprep.subr.bf16.mxu0 %v5906
    %8307 = vmatpush1.bf16.msra.mxu0 %v5905
    %8308 = vmatprep.subr.bf16.mxu0 %v5911
    %8309 = vmatpush1.bf16.msra.mxu0 %v5910
    %8310 = vmatprep.subr.bf16.mxu0 %v5916
    %8311 = vmatpush1.bf16.msra.mxu0 %v5915
    %8312 = vmatprep.subr.bf16.mxu0 %v5921
    %8313 = vmatpush1.bf16.msra.mxu0 %v5920
    %8314 = vmatprep.subr.bf16.mxu0 %v5926
    %8315 = vmatpush1.bf16.msra.mxu0 %v5925
    %8316 = vmatprep.subr.bf16.mxu0 %v5931
    %8317 = vmatpush1.bf16.msra.mxu0 %v5930
    %8318 = vmatprep.subr.bf16.mxu0 %v5936
    %8319 = vmatpush1.bf16.msra.mxu0 %v5935
    %8320 = vmatprep.subr.bf16.mxu0 %v5941
    %8321 = vmatpush1.bf16.msra.mxu0 %v5940
    %8322 = vmatprep.mubr.bf16.mxu0 %v453
    %8323 = vmatmul.mubr.bf16.gmra.mrb[0].mxu0 %v452
    %v8324 = vpop.f32.mrb[0].mxu0
    %v8325 = vadd.f32 %v8284, %v8324
    %v8326 = vpop.f32.mrb[0].mxu0
    %v8327 = vadd.f32 %v8286, %v8326
    %v8328 = vpop.f32.mrb[0].mxu0
    %v8329 = vpop.f32.mrb[0].mxu0
    %8330 = vdwg.mxu0
    %8331 = vmatprep.subr.bf16.mxu0 %v5946
    %8332 = vmatpush1.bf16.msra.mxu0 %v5945
    %8333 = vmatprep.subr.bf16.mxu0 %v5951
    %8334 = vmatpush1.bf16.msra.mxu0 %v5950
    %8335 = vmatprep.subr.bf16.mxu0 %v5956
    %8336 = vmatpush1.bf16.msra.mxu0 %v5955
    %8337 = vmatprep.subr.bf16.mxu0 %v5961
    %8338 = vmatpush1.bf16.msra.mxu0 %v5960
    %8339 = vmatprep.subr.bf16.mxu0 %v5966
    %8340 = vmatpush1.bf16.msra.mxu0 %v5965
    %8341 = vmatprep.subr.bf16.mxu0 %v5971
    %8342 = vmatpush1.bf16.msra.mxu0 %v5970
    %8343 = vmatprep.subr.bf16.mxu0 %v5976
    %8344 = vmatpush1.bf16.msra.mxu0 %v5975
    %8345 = vmatprep.subr.bf16.mxu0 %v5981
    %8346 = vmatpush1.bf16.msra.mxu0 %v5980
    %8347 = vmatprep.subr.bf16.mxu0 %v5986
    %8348 = vmatpush1.bf16.msra.mxu0 %v5985
    %8349 = vmatprep.subr.bf16.mxu0 %v5991
    %8350 = vmatpush1.bf16.msra.mxu0 %v5990
    %8351 = vmatprep.subr.bf16.mxu0 %v5996
    %8352 = vmatpush1.bf16.msra.mxu0 %v5995
    %8353 = vmatprep.subr.bf16.mxu0 %v6001
    %8354 = vmatpush1.bf16.msra.mxu0 %v6000
    %8355 = vmatprep.subr.bf16.mxu0 %v6006
    %8356 = vmatpush1.bf16.msra.mxu0 %v6005
    %8357 = vmatprep.subr.bf16.mxu0 %v6011
    %8358 = vmatpush1.bf16.msra.mxu0 %v6010
    %8359 = vmatprep.subr.bf16.mxu0 %v6016
    %8360 = vmatpush1.bf16.msra.mxu0 %v6015
    %8361 = vmatprep.subr.bf16.mxu0 %v6021
    %8362 = vmatpush1.bf16.msra.mxu0 %v6020
    %8363 = vmatprep.mubr.bf16.mxu0 %v455
    %8364 = vmatmul.mubr.bf16.gmra.mrb[0].mxu0 %v454
    %v8365 = vpop.f32.mrb[0].mxu0
    %v8366 = vadd.f32 %v8325, %v8365
    %v8367 = vpop.f32.mrb[0].mxu0
    %v8368 = vadd.f32 %v8327, %v8367
    %v8369 = vpop.f32.mrb[0].mxu0
    %v8370 = vpop.f32.mrb[0].mxu0
    %8371 = vdwg.mxu0
    %8372 = vmatprep.subr.bf16.mxu0 %v6026
    %8373 = vmatpush1.bf16.msra.mxu0 %v6025
    %8374 = vmatprep.subr.bf16.mxu0 %v6031
    %8375 = vmatpush1.bf16.msra.mxu0 %v6030
    %8376 = vmatprep.subr.bf16.mxu0 %v6036
    %8377 = vmatpush1.bf16.msra.mxu0 %v6035
    %8378 = vmatprep.subr.bf16.mxu0 %v6041
    %8379 = vmatpush1.bf16.msra.mxu0 %v6040
    %8380 = vmatprep.subr.bf16.mxu0 %v6046
    %8381 = vmatpush1.bf16.msra.mxu0 %v6045
    %8382 = vmatprep.subr.bf16.mxu0 %v6051
    %8383 = vmatpush1.bf16.msra.mxu0 %v6050
    %8384 = vmatprep.subr.bf16.mxu0 %v6056
    %8385 = vmatpush1.bf16.msra.mxu0 %v6055
    %8386 = vmatprep.subr.bf16.mxu0 %v6061
    %8387 = vmatpush1.bf16.msra.mxu0 %v6060
    %8388 = vmatprep.subr.bf16.mxu0 %v6066
    %8389 = vmatpush1.bf16.msra.mxu0 %v6065
    %8390 = vmatprep.subr.bf16.mxu0 %v6071
    %8391 = vmatpush1.bf16.msra.mxu0 %v6070
    %8392 = vmatprep.subr.bf16.mxu0 %v6076
    %8393 = vmatpush1.bf16.msra.mxu0 %v6075
    %8394 = vmatprep.subr.bf16.mxu0 %v6081
    %8395 = vmatpush1.bf16.msra.mxu0 %v6080
    %8396 = vmatprep.subr.bf16.mxu0 %v6086
    %8397 = vmatpush1.bf16.msra.mxu0 %v6085
    %8398 = vmatprep.subr.bf16.mxu0 %v6091
    %8399 = vmatpush1.bf16.msra.mxu0 %v6090
    %8400 = vmatprep.subr.bf16.mxu0 %v6096
    %8401 = vmatpush1.bf16.msra.mxu0 %v6095
    %8402 = vmatprep.subr.bf16.mxu0 %v6101
    %8403 = vmatpush1.bf16.msra.mxu0 %v6100
    %8404 = vmatprep.mubr.bf16.mxu0 %v457
    %8405 = vmatmul.mubr.bf16.gmra.mrb[0].mxu0 %v456
    %v8406 = vpop.f32.mrb[0].mxu0
    %v8407 = vadd.f32 %v8366, %v8406
    %v8408 = vpop.f32.mrb[0].mxu0
    %v8409 = vadd.f32 %v8368, %v8408
    %v8410 = vpop.f32.mrb[0].mxu0
    %v8411 = vpop.f32.mrb[0].mxu0
    %8412 = vdwg.mxu0
    %8413 = vmatprep.subr.bf16.mxu0 %v6106
    %8414 = vmatpush1.bf16.msra.mxu0 %v6105
    %8415 = vmatprep.subr.bf16.mxu0 %v6111
    %8416 = vmatpush1.bf16.msra.mxu0 %v6110
    %8417 = vmatprep.subr.bf16.mxu0 %v6116
    %8418 = vmatpush1.bf16.msra.mxu0 %v6115
    %8419 = vmatprep.subr.bf16.mxu0 %v6121
    %8420 = vmatpush1.bf16.msra.mxu0 %v6120
    %8421 = vmatprep.subr.bf16.mxu0 %v6126
    %8422 = vmatpush1.bf16.msra.mxu0 %v6125
    %8423 = vmatprep.subr.bf16.mxu0 %v6131
    %8424 = vmatpush1.bf16.msra.mxu0 %v6130
    %8425 = vmatprep.subr.bf16.mxu0 %v6136
    %8426 = vmatpush1.bf16.msra.mxu0 %v6135
    %8427 = vmatprep.subr.bf16.mxu0 %v6141
    %8428 = vmatpush1.bf16.msra.mxu0 %v6140
    %8429 = vmatprep.subr.bf16.mxu0 %v6146
    %8430 = vmatpush1.bf16.msra.mxu0 %v6145
    %8431 = vmatprep.subr.bf16.mxu0 %v6151
    %8432 = vmatpush1.bf16.msra.mxu0 %v6150
    %8433 = vmatprep.subr.bf16.mxu0 %v6156
    %8434 = vmatpush1.bf16.msra.mxu0 %v6155
    %8435 = vmatprep.subr.bf16.mxu0 %v6161
    %8436 = vmatpush1.bf16.msra.mxu0 %v6160
    %8437 = vmatprep.subr.bf16.mxu0 %v6166
    %8438 = vmatpush1.bf16.msra.mxu0 %v6165
    %8439 = vmatprep.subr.bf16.mxu0 %v6171
    %8440 = vmatpush1.bf16.msra.mxu0 %v6170
    %8441 = vmatprep.subr.bf16.mxu0 %v6176
    %8442 = vmatpush1.bf16.msra.mxu0 %v6175
    %8443 = vmatprep.subr.bf16.mxu0 %v6181
    %8444 = vmatpush1.bf16.msra.mxu0 %v6180
    %8445 = vmatprep.mubr.bf16.mxu0 %v459
    %8446 = vmatmul.mubr.bf16.gmra.mrb[0].mxu0 %v458
    %v8447 = vpop.f32.mrb[0].mxu0
    %v8448 = vadd.f32 %v8407, %v8447
    %v8449 = vpop.f32.mrb[0].mxu0
    %v8450 = vadd.f32 %v8409, %v8449
    %v8451 = vpop.f32.mrb[0].mxu0
    %v8452 = vpop.f32.mrb[0].mxu0
    %8453 = vdwg.mxu0
    %8454 = vmatprep.subr.bf16.mxu0 %v6186
    %8455 = vmatpush1.bf16.msra.mxu0 %v6185
    %8456 = vmatprep.subr.bf16.mxu0 %v6191
    %8457 = vmatpush1.bf16.msra.mxu0 %v6190
    %8458 = vmatprep.subr.bf16.mxu0 %v6196
    %8459 = vmatpush1.bf16.msra.mxu0 %v6195
    %8460 = vmatprep.subr.bf16.mxu0 %v6201
    %8461 = vmatpush1.bf16.msra.mxu0 %v6200
    %8462 = vmatprep.subr.bf16.mxu0 %v6206
    %8463 = vmatpush1.bf16.msra.mxu0 %v6205
    %8464 = vmatprep.subr.bf16.mxu0 %v6211
    %8465 = vmatpush1.bf16.msra.mxu0 %v6210
    %8466 = vmatprep.subr.bf16.mxu0 %v6216
    %8467 = vmatpush1.bf16.msra.mxu0 %v6215
    %8468 = vmatprep.subr.bf16.mxu0 %v6221
    %8469 = vmatpush1.bf16.msra.mxu0 %v6220
    %8470 = vmatprep.subr.bf16.mxu0 %v6226
    %8471 = vmatpush1.bf16.msra.mxu0 %v6225
    %8472 = vmatprep.subr.bf16.mxu0 %v6231
    %8473 = vmatpush1.bf16.msra.mxu0 %v6230
    %8474 = vmatprep.subr.bf16.mxu0 %v6236
    %8475 = vmatpush1.bf16.msra.mxu0 %v6235
    %8476 = vmatprep.subr.bf16.mxu0 %v6241
    %8477 = vmatpush1.bf16.msra.mxu0 %v6240
    %8478 = vmatprep.subr.bf16.mxu0 %v6246
    %8479 = vmatpush1.bf16.msra.mxu0 %v6245
    %8480 = vmatprep.subr.bf16.mxu0 %v6251
    %8481 = vmatpush1.bf16.msra.mxu0 %v6250
    %8482 = vmatprep.subr.bf16.mxu0 %v6256
    %8483 = vmatpush1.bf16.msra.mxu0 %v6255
    %8484 = vmatprep.subr.bf16.mxu0 %v6261
    %8485 = vmatpush1.bf16.msra.mxu0 %v6260
    %8486 = vmatprep.mubr.bf16.mxu0 %v461
    %8487 = vmatmul.mubr.bf16.gmra.mrb[0].mxu0 %v460
    %v8488 = vpop.f32.mrb[0].mxu0
    %v8489 = vadd.f32 %v8448, %v8488
    %v8490 = vpop.f32.mrb[0].mxu0
    %v8491 = vadd.f32 %v8450, %v8490
    %v8492 = vpop.f32.mrb[0].mxu0
    %v8493 = vpop.f32.mrb[0].mxu0
    %8494 = vdwg.mxu0
    %8495 = vmatprep.subr.bf16.mxu0 %v6266
    %8496 = vmatpush1.bf16.msra.mxu0 %v6265
    %8497 = vmatprep.subr.bf16.mxu0 %v6271
    %8498 = vmatpush1.bf16.msra.mxu0 %v6270
    %8499 = vmatprep.subr.bf16.mxu0 %v6276
    %8500 = vmatpush1.bf16.msra.mxu0 %v6275
    %8501 = vmatprep.subr.bf16.mxu0 %v6281
    %8502 = vmatpush1.bf16.msra.mxu0 %v6280
    %8503 = vmatprep.subr.bf16.mxu0 %v6286
    %8504 = vmatpush1.bf16.msra.mxu0 %v6285
    %8505 = vmatprep.subr.bf16.mxu0 %v6291
    %8506 = vmatpush1.bf16.msra.mxu0 %v6290
    %8507 = vmatprep.subr.bf16.mxu0 %v7383
    %8508 = vmatpush1.bf16.msra.mxu0 %v7380
    %8509 = vmatprep.subr.bf16.mxu0 0
    %8510 = vmatpush1.bf16.msra.mxu0 0
    %8511 = vmatprep.subr.bf16.mxu0 0
    %8512 = vmatpush1.bf16.msra.mxu0 0
    %8513 = vmatprep.subr.bf16.mxu0 0
    %8514 = vmatpush1.bf16.msra.mxu0 0
    %8515 = vmatprep.subr.bf16.mxu0 0
    %8516 = vmatpush1.bf16.msra.mxu0 0
    %8517 = vmatprep.subr.bf16.mxu0 0
    %8518 = vmatpush1.bf16.msra.mxu0 0
    %8519 = vmatprep.subr.bf16.mxu0 0
    %8520 = vmatpush1.bf16.msra.mxu0 0
    %8521 = vmatprep.subr.bf16.mxu0 0
    %8522 = vmatpush1.bf16.msra.mxu0 0
    %8523 = vmatprep.subr.bf16.mxu0 0
    %8524 = vmatpush1.bf16.msra.mxu0 0
    %8525 = vmatprep.subr.bf16.mxu0 0
    %8526 = vmatpush1.bf16.msra.mxu0 0
    %8527 = vmatprep.mubr.bf16.mxu0 0
    %8528 = vmatmul.mubr.bf16.gmra.mrb[0].mxu0 %v7370
    %v8529 = vpop.f32.mrb[0].mxu0
    %v8530 = vadd.f32 %v8489, %v8529
    %v8531 = vpop.f32.mrb[0].mxu0
    %v8532 = vadd.f32 %v8491, %v8531
    %v8533 = vpop.f32.mrb[0].mxu0
    %v8534 = vpop.f32.mrb[0].mxu0
    %8535 = vdwg.mxu0
    %8536 = vmatprep.subr.bf16.mxu0 0
    %8537 = vmatpush1.bf16.msra.mxu0 %v5227
    %8538 = vmatprep.subr.bf16.mxu0 0
    %8539 = vmatpush1.bf16.msra.mxu0 %v5232
    %8540 = vmatprep.subr.bf16.mxu0 0
    %8541 = vmatpush1.bf16.msra.mxu0 %v5237
    %8542 = vmatprep.subr.bf16.mxu0 0
    %8543 = vmatpush1.bf16.msra.mxu0 %v5242
    %8544 = vmatprep.subr.bf16.mxu0 0
    %8545 = vmatpush1.bf16.msra.mxu0 %v5247
    %8546 = vmatprep.subr.bf16.mxu0 0
    %8547 = vmatpush1.bf16.msra.mxu0 %v5252
    %8548 = vmatprep.subr.bf16.mxu0 0
    %8549 = vmatpush1.bf16.msra.mxu0 %v5257
    %8550 = vmatprep.subr.bf16.mxu0 0
    %8551 = vmatpush1.bf16.msra.mxu0 %v5262
    %8552 = vmatprep.subr.bf16.mxu0 0
    %8553 = vmatpush1.bf16.msra.mxu0 %v5267
    %8554 = vmatprep.subr.bf16.mxu0 0
    %8555 = vmatpush1.bf16.msra.mxu0 %v5272
    %8556 = vmatprep.subr.bf16.mxu0 0
    %8557 = vmatpush1.bf16.msra.mxu0 %v5277
    %8558 = vmatprep.subr.bf16.mxu0 0
    %8559 = vmatpush1.bf16.msra.mxu0 %v5282
    %8560 = vmatprep.subr.bf16.mxu0 0
    %8561 = vmatpush1.bf16.msra.mxu0 %v5287
    %8562 = vmatprep.subr.bf16.mxu0 0
    %8563 = vmatpush1.bf16.msra.mxu0 %v5292
    %8564 = vmatprep.subr.bf16.mxu0 0
    %8565 = vmatpush1.bf16.msra.mxu0 %v5297
    %8566 = vmatprep.subr.bf16.mxu0 0
    %8567 = vmatpush1.bf16.msra.mxu0 %v5302
    %8568 = vmatprep.mubr.bf16.mxu0 %v437
    %8569 = vmatmul.mubr.bf16.gmra.mrb[0].mxu0 %v436
    %v8570 = vpop.f32.mrb[0].mxu0
    %v8571 = vadd.f32 %v1785, %v8570
    %v8572 = vpop.f32.mrb[0].mxu0
    %v8573 = vpop.f32.mrb[0].mxu0
    %v8574 = vpop.f32.mrb[0].mxu0
    %8575 = vdwg.mxu0
    %8576 = vmatprep.subr.bf16.mxu0 0
    %8577 = vmatpush1.bf16.msra.mxu0 %v5307
    %8578 = vmatprep.subr.bf16.mxu0 0
    %8579 = vmatpush1.bf16.msra.mxu0 %v5312
    %8580 = vmatprep.subr.bf16.mxu0 0
    %8581 = vmatpush1.bf16.msra.mxu0 %v5317
    %8582 = vmatprep.subr.bf16.mxu0 0
    %8583 = vmatpush1.bf16.msra.mxu0 %v5322
    %8584 = vmatprep.subr.bf16.mxu0 0
    %8585 = vmatpush1.bf16.msra.mxu0 %v5327
    %8586 = vmatprep.subr.bf16.mxu0 0
    %8587 = vmatpush1.bf16.msra.mxu0 %v5332
    %8588 = vmatprep.subr.bf16.mxu0 0
    %8589 = vmatpush1.bf16.msra.mxu0 %v5337
    %8590 = vmatprep.subr.bf16.mxu0 0
    %8591 = vmatpush1.bf16.msra.mxu0 %v5342
    %8592 = vmatprep.subr.bf16.mxu0 0
    %8593 = vmatpush1.bf16.msra.mxu0 %v5347
    %8594 = vmatprep.subr.bf16.mxu0 0
    %8595 = vmatpush1.bf16.msra.mxu0 %v5352
    %8596 = vmatprep.subr.bf16.mxu0 0
    %8597 = vmatpush1.bf16.msra.mxu0 %v5357
    %8598 = vmatprep.subr.bf16.mxu0 0
    %8599 = vmatpush1.bf16.msra.mxu0 %v5362
    %8600 = vmatprep.subr.bf16.mxu0 0
    %8601 = vmatpush1.bf16.msra.mxu0 %v5367
    %8602 = vmatprep.subr.bf16.mxu0 0
    %8603 = vmatpush1.bf16.msra.mxu0 %v5372
    %8604 = vmatprep.subr.bf16.mxu0 0
    %8605 = vmatpush1.bf16.msra.mxu0 %v5377
    %8606 = vmatprep.subr.bf16.mxu0 0
    %8607 = vmatpush1.bf16.msra.mxu0 %v5382
    %8608 = vmatprep.mubr.bf16.mxu0 %v439
    %8609 = vmatmul.mubr.bf16.gmra.mrb[0].mxu0 %v438
    %v8610 = vpop.f32.mrb[0].mxu0
    %v8611 = vadd.f32 %v8571, %v8610
    %v8612 = vpop.f32.mrb[0].mxu0
    %v8613 = vpop.f32.mrb[0].mxu0
    %v8614 = vpop.f32.mrb[0].mxu0
    %8615 = vdwg.mxu0
    %8616 = vmatprep.subr.bf16.mxu0 0
    %8617 = vmatpush1.bf16.msra.mxu0 %v5387
    %8618 = vmatprep.subr.bf16.mxu0 0
    %8619 = vmatpush1.bf16.msra.mxu0 %v5392
    %8620 = vmatprep.subr.bf16.mxu0 0
    %8621 = vmatpush1.bf16.msra.mxu0 %v5397
    %8622 = vmatprep.subr.bf16.mxu0 0
    %8623 = vmatpush1.bf16.msra.mxu0 %v5402
    %8624 = vmatprep.subr.bf16.mxu0 0
    %8625 = vmatpush1.bf16.msra.mxu0 %v5407
    %8626 = vmatprep.subr.bf16.mxu0 0
    %8627 = vmatpush1.bf16.msra.mxu0 %v5412
    %8628 = vmatprep.subr.bf16.mxu0 0
    %8629 = vmatpush1.bf16.msra.mxu0 %v5417
    %8630 = vmatprep.subr.bf16.mxu0 0
    %8631 = vmatpush1.bf16.msra.mxu0 %v5422
    %8632 = vmatprep.subr.bf16.mxu0 0
    %8633 = vmatpush1.bf16.msra.mxu0 %v5427
    %8634 = vmatprep.subr.bf16.mxu0 0
    %8635 = vmatpush1.bf16.msra.mxu0 %v5432
    %8636 = vmatprep.subr.bf16.mxu0 0
    %8637 = vmatpush1.bf16.msra.mxu0 %v5437
    %8638 = vmatprep.subr.bf16.mxu0 0
    %8639 = vmatpush1.bf16.msra.mxu0 %v5442
    %8640 = vmatprep.subr.bf16.mxu0 0
    %8641 = vmatpush1.bf16.msra.mxu0 %v5447
    %8642 = vmatprep.subr.bf16.mxu0 0
    %8643 = vmatpush1.bf16.msra.mxu0 %v5452
    %8644 = vmatprep.subr.bf16.mxu0 0
    %8645 = vmatpush1.bf16.msra.mxu0 %v5457
    %8646 = vmatprep.subr.bf16.mxu0 0
    %8647 = vmatpush1.bf16.msra.mxu0 %v5462
    %8648 = vmatprep.mubr.bf16.mxu0 %v441
    %8649 = vmatmul.mubr.bf16.gmra.mrb[0].mxu0 %v440
    %v8650 = vpop.f32.mrb[0].mxu0
    %v8651 = vadd.f32 %v8611, %v8650
    %v8652 = vpop.f32.mrb[0].mxu0
    %v8653 = vpop.f32.mrb[0].mxu0
    %v8654 = vpop.f32.mrb[0].mxu0
    %8655 = vdwg.mxu0
    %8656 = vmatprep.subr.bf16.mxu0 0
    %8657 = vmatpush1.bf16.msra.mxu0 %v5467
    %8658 = vmatprep.subr.bf16.mxu0 0
    %8659 = vmatpush1.bf16.msra.mxu0 %v5472
    %8660 = vmatprep.subr.bf16.mxu0 0
    %8661 = vmatpush1.bf16.msra.mxu0 %v5477
    %8662 = vmatprep.subr.bf16.mxu0 0
    %8663 = vmatpush1.bf16.msra.mxu0 %v5482
    %8664 = vmatprep.subr.bf16.mxu0 0
    %8665 = vmatpush1.bf16.msra.mxu0 %v5487
    %8666 = vmatprep.subr.bf16.mxu0 0
    %8667 = vmatpush1.bf16.msra.mxu0 %v5492
    %8668 = vmatprep.subr.bf16.mxu0 0
    %8669 = vmatpush1.bf16.msra.mxu0 %v5497
    %8670 = vmatprep.subr.bf16.mxu0 0
    %8671 = vmatpush1.bf16.msra.mxu0 %v5502
    %8672 = vmatprep.subr.bf16.mxu0 0
    %8673 = vmatpush1.bf16.msra.mxu0 %v5507
    %8674 = vmatprep.subr.bf16.mxu0 0
    %8675 = vmatpush1.bf16.msra.mxu0 %v5512
    %8676 = vmatprep.subr.bf16.mxu0 0
    %8677 = vmatpush1.bf16.msra.mxu0 %v5517
    %8678 = vmatprep.subr.bf16.mxu0 0
    %8679 = vmatpush1.bf16.msra.mxu0 %v5522
    %8680 = vmatprep.subr.bf16.mxu0 0
    %8681 = vmatpush1.bf16.msra.mxu0 %v5527
    %8682 = vmatprep.subr.bf16.mxu0 0
    %8683 = vmatpush1.bf16.msra.mxu0 %v5532
    %8684 = vmatprep.subr.bf16.mxu0 0
    %8685 = vmatpush1.bf16.msra.mxu0 %v5537
    %8686 = vmatprep.subr.bf16.mxu0 0
    %8687 = vmatpush1.bf16.msra.mxu0 %v5542
    %8688 = vmatprep.mubr.bf16.mxu0 %v443
    %8689 = vmatmul.mubr.bf16.gmra.mrb[0].mxu0 %v442
    %v8690 = vpop.f32.mrb[0].mxu0
    %v8691 = vadd.f32 %v8651, %v8690
    %v8692 = vpop.f32.mrb[0].mxu0
    %v8693 = vpop.f32.mrb[0].mxu0
    %v8694 = vpop.f32.mrb[0].mxu0
    %8695 = vdwg.mxu0
    %8696 = vmatprep.subr.bf16.mxu0 0
    %8697 = vmatpush1.bf16.msra.mxu0 %v5547
    %8698 = vmatprep.subr.bf16.mxu0 0
    %8699 = vmatpush1.bf16.msra.mxu0 %v5552
    %8700 = vmatprep.subr.bf16.mxu0 0
    %8701 = vmatpush1.bf16.msra.mxu0 %v5557
    %8702 = vmatprep.subr.bf16.mxu0 0
    %8703 = vmatpush1.bf16.msra.mxu0 %v5562
    %8704 = vmatprep.subr.bf16.mxu0 0
    %8705 = vmatpush1.bf16.msra.mxu0 %v5567
    %8706 = vmatprep.subr.bf16.mxu0 0
    %8707 = vmatpush1.bf16.msra.mxu0 %v5572
    %8708 = vmatprep.subr.bf16.mxu0 0
    %8709 = vmatpush1.bf16.msra.mxu0 %v5577
    %8710 = vmatprep.subr.bf16.mxu0 0
    %8711 = vmatpush1.bf16.msra.mxu0 %v5582
    %8712 = vmatprep.subr.bf16.mxu0 0
    %8713 = vmatpush1.bf16.msra.mxu0 %v5587
    %8714 = vmatprep.subr.bf16.mxu0 0
    %8715 = vmatpush1.bf16.msra.mxu0 %v5592
    %8716 = vmatprep.subr.bf16.mxu0 0
    %8717 = vmatpush1.bf16.msra.mxu0 %v5597
    %8718 = vmatprep.subr.bf16.mxu0 0
    %8719 = vmatpush1.bf16.msra.mxu0 %v5602
    %8720 = vmatprep.subr.bf16.mxu0 0
    %8721 = vmatpush1.bf16.msra.mxu0 %v5607
    %8722 = vmatprep.subr.bf16.mxu0 0
    %8723 = vmatpush1.bf16.msra.mxu0 %v5612
    %8724 = vmatprep.subr.bf16.mxu0 0
    %8725 = vmatpush1.bf16.msra.mxu0 %v5617
    %8726 = vmatprep.subr.bf16.mxu0 0
    %8727 = vmatpush1.bf16.msra.mxu0 %v5622
    %8728 = vmatprep.mubr.bf16.mxu0 %v445
    %8729 = vmatmul.mubr.bf16.gmra.mrb[0].mxu0 %v444
    %v8730 = vpop.f32.mrb[0].mxu0
    %v8731 = vadd.f32 %v8691, %v8730
    %v8732 = vpop.f32.mrb[0].mxu0
    %v8733 = vpop.f32.mrb[0].mxu0
    %v8734 = vpop.f32.mrb[0].mxu0
    %8735 = vdwg.mxu0
    %8736 = vmatprep.subr.bf16.mxu0 0
    %8737 = vmatpush1.bf16.msra.mxu0 %v5627
    %8738 = vmatprep.subr.bf16.mxu0 0
    %8739 = vmatpush1.bf16.msra.mxu0 %v5632
    %8740 = vmatprep.subr.bf16.mxu0 0
    %8741 = vmatpush1.bf16.msra.mxu0 %v5637
    %8742 = vmatprep.subr.bf16.mxu0 0
    %8743 = vmatpush1.bf16.msra.mxu0 %v5642
    %8744 = vmatprep.subr.bf16.mxu0 0
    %8745 = vmatpush1.bf16.msra.mxu0 %v5647
    %8746 = vmatprep.subr.bf16.mxu0 0
    %8747 = vmatpush1.bf16.msra.mxu0 %v5652
    %8748 = vmatprep.subr.bf16.mxu0 0
    %8749 = vmatpush1.bf16.msra.mxu0 %v5657
    %8750 = vmatprep.subr.bf16.mxu0 0
    %8751 = vmatpush1.bf16.msra.mxu0 %v5662
    %8752 = vmatprep.subr.bf16.mxu0 0
    %8753 = vmatpush1.bf16.msra.mxu0 %v5667
    %8754 = vmatprep.subr.bf16.mxu0 0
    %8755 = vmatpush1.bf16.msra.mxu0 %v5672
    %8756 = vmatprep.subr.bf16.mxu0 0
    %8757 = vmatpush1.bf16.msra.mxu0 %v5677
    %8758 = vmatprep.subr.bf16.mxu0 0
    %8759 = vmatpush1.bf16.msra.mxu0 %v5682
    %8760 = vmatprep.subr.bf16.mxu0 0
    %8761 = vmatpush1.bf16.msra.mxu0 %v5687
    %8762 = vmatprep.subr.bf16.mxu0 0
    %8763 = vmatpush1.bf16.msra.mxu0 %v5692
    %8764 = vmatprep.subr.bf16.mxu0 0
    %8765 = vmatpush1.bf16.msra.mxu0 %v5697
    %8766 = vmatprep.subr.bf16.mxu0 0
    %8767 = vmatpush1.bf16.msra.mxu0 %v5702
    %8768 = vmatprep.mubr.bf16.mxu0 %v447
    %8769 = vmatmul.mubr.bf16.gmra.mrb[0].mxu0 %v446
    %v8770 = vpop.f32.mrb[0].mxu0
    %v8771 = vadd.f32 %v8731, %v8770
    %v8772 = vpop.f32.mrb[0].mxu0
    %v8773 = vpop.f32.mrb[0].mxu0
    %v8774 = vpop.f32.mrb[0].mxu0
    %8775 = vdwg.mxu0
    %8776 = vmatprep.subr.bf16.mxu0 0
    %8777 = vmatpush1.bf16.msra.mxu0 %v5707
    %8778 = vmatprep.subr.bf16.mxu0 0
    %8779 = vmatpush1.bf16.msra.mxu0 %v5712
    %8780 = vmatprep.subr.bf16.mxu0 0
    %8781 = vmatpush1.bf16.msra.mxu0 %v5717
    %8782 = vmatprep.subr.bf16.mxu0 0
    %8783 = vmatpush1.bf16.msra.mxu0 %v5722
    %8784 = vmatprep.subr.bf16.mxu0 0
    %8785 = vmatpush1.bf16.msra.mxu0 %v5727
    %8786 = vmatprep.subr.bf16.mxu0 0
    %8787 = vmatpush1.bf16.msra.mxu0 %v5732
    %8788 = vmatprep.subr.bf16.mxu0 0
    %8789 = vmatpush1.bf16.msra.mxu0 %v5737
    %8790 = vmatprep.subr.bf16.mxu0 0
    %8791 = vmatpush1.bf16.msra.mxu0 %v5742
    %8792 = vmatprep.subr.bf16.mxu0 0
    %8793 = vmatpush1.bf16.msra.mxu0 %v5747
    %8794 = vmatprep.subr.bf16.mxu0 0
    %8795 = vmatpush1.bf16.msra.mxu0 %v5752
    %8796 = vmatprep.subr.bf16.mxu0 0
    %8797 = vmatpush1.bf16.msra.mxu0 %v5757
    %8798 = vmatprep.subr.bf16.mxu0 0
    %8799 = vmatpush1.bf16.msra.mxu0 %v5762
    %8800 = vmatprep.subr.bf16.mxu0 0
    %8801 = vmatpush1.bf16.msra.mxu0 %v5767
    %8802 = vmatprep.subr.bf16.mxu0 0
    %8803 = vmatpush1.bf16.msra.mxu0 %v5772
    %8804 = vmatprep.subr.bf16.mxu0 0
    %8805 = vmatpush1.bf16.msra.mxu0 %v5777
    %8806 = vmatprep.subr.bf16.mxu0 0
    %8807 = vmatpush1.bf16.msra.mxu0 %v5782
    %8808 = vmatprep.mubr.bf16.mxu0 %v449
    %8809 = vmatmul.mubr.bf16.gmra.mrb[0].mxu0 %v448
    %v8810 = vpop.f32.mrb[0].mxu0
    %v8811 = vadd.f32 %v8771, %v8810
    %v8812 = vpop.f32.mrb[0].mxu0
    %v8813 = vpop.f32.mrb[0].mxu0
    %v8814 = vpop.f32.mrb[0].mxu0
    %8815 = vdwg.mxu0
    %8816 = vmatprep.subr.bf16.mxu0 0
    %8817 = vmatpush1.bf16.msra.mxu0 %v5787
    %8818 = vmatprep.subr.bf16.mxu0 0
    %8819 = vmatpush1.bf16.msra.mxu0 %v5792
    %8820 = vmatprep.subr.bf16.mxu0 0
    %8821 = vmatpush1.bf16.msra.mxu0 %v5797
    %8822 = vmatprep.subr.bf16.mxu0 0
    %8823 = vmatpush1.bf16.msra.mxu0 %v5802
    %8824 = vmatprep.subr.bf16.mxu0 0
    %8825 = vmatpush1.bf16.msra.mxu0 %v5807
    %8826 = vmatprep.subr.bf16.mxu0 0
    %8827 = vmatpush1.bf16.msra.mxu0 %v5812
    %8828 = vmatprep.subr.bf16.mxu0 0
    %8829 = vmatpush1.bf16.msra.mxu0 %v5817
    %8830 = vmatprep.subr.bf16.mxu0 0
    %8831 = vmatpush1.bf16.msra.mxu0 %v5822
    %8832 = vmatprep.subr.bf16.mxu0 0
    %8833 = vmatpush1.bf16.msra.mxu0 %v5827
    %8834 = vmatprep.subr.bf16.mxu0 0
    %8835 = vmatpush1.bf16.msra.mxu0 %v5832
    %8836 = vmatprep.subr.bf16.mxu0 0
    %8837 = vmatpush1.bf16.msra.mxu0 %v5837
    %8838 = vmatprep.subr.bf16.mxu0 0
    %8839 = vmatpush1.bf16.msra.mxu0 %v5842
    %8840 = vmatprep.subr.bf16.mxu0 0
    %8841 = vmatpush1.bf16.msra.mxu0 %v5847
    %8842 = vmatprep.subr.bf16.mxu0 0
    %8843 = vmatpush1.bf16.msra.mxu0 %v5852
    %8844 = vmatprep.subr.bf16.mxu0 0
    %8845 = vmatpush1.bf16.msra.mxu0 %v5857
    %8846 = vmatprep.subr.bf16.mxu0 0
    %8847 = vmatpush1.bf16.msra.mxu0 %v5862
    %8848 = vmatprep.mubr.bf16.mxu0 %v451
    %8849 = vmatmul.mubr.bf16.gmra.mrb[0].mxu0 %v450
    %v8850 = vpop.f32.mrb[0].mxu0
    %v8851 = vadd.f32 %v8811, %v8850
    %v8852 = vpop.f32.mrb[0].mxu0
    %v8853 = vpop.f32.mrb[0].mxu0
    %v8854 = vpop.f32.mrb[0].mxu0
    %8855 = vdwg.mxu0
    %8856 = vmatprep.subr.bf16.mxu0 0
    %8857 = vmatpush1.bf16.msra.mxu0 %v5867
    %8858 = vmatprep.subr.bf16.mxu0 0
    %8859 = vmatpush1.bf16.msra.mxu0 %v5872
    %8860 = vmatprep.subr.bf16.mxu0 0
    %8861 = vmatpush1.bf16.msra.mxu0 %v5877
    %8862 = vmatprep.subr.bf16.mxu0 0
    %8863 = vmatpush1.bf16.msra.mxu0 %v5882
    %8864 = vmatprep.subr.bf16.mxu0 0
    %8865 = vmatpush1.bf16.msra.mxu0 %v5887
    %8866 = vmatprep.subr.bf16.mxu0 0
    %8867 = vmatpush1.bf16.msra.mxu0 %v5892
    %8868 = vmatprep.subr.bf16.mxu0 0
    %8869 = vmatpush1.bf16.msra.mxu0 %v5897
    %8870 = vmatprep.subr.bf16.mxu0 0
    %8871 = vmatpush1.bf16.msra.mxu0 %v5902
    %8872 = vmatprep.subr.bf16.mxu0 0
    %8873 = vmatpush1.bf16.msra.mxu0 %v5907
    %8874 = vmatprep.subr.bf16.mxu0 0
    %8875 = vmatpush1.bf16.msra.mxu0 %v5912
    %8876 = vmatprep.subr.bf16.mxu0 0
    %8877 = vmatpush1.bf16.msra.mxu0 %v5917
    %8878 = vmatprep.subr.bf16.mxu0 0
    %8879 = vmatpush1.bf16.msra.mxu0 %v5922
    %8880 = vmatprep.subr.bf16.mxu0 0
    %8881 = vmatpush1.bf16.msra.mxu0 %v5927
    %8882 = vmatprep.subr.bf16.mxu0 0
    %8883 = vmatpush1.bf16.msra.mxu0 %v5932
    %8884 = vmatprep.subr.bf16.mxu0 0
    %8885 = vmatpush1.bf16.msra.mxu0 %v5937
    %8886 = vmatprep.subr.bf16.mxu0 0
    %8887 = vmatpush1.bf16.msra.mxu0 %v5942
    %8888 = vmatprep.mubr.bf16.mxu0 %v453
    %8889 = vmatmul.mubr.bf16.gmra.mrb[0].mxu0 %v452
    %v8890 = vpop.f32.mrb[0].mxu0
    %v8891 = vadd.f32 %v8851, %v8890
    %v8892 = vpop.f32.mrb[0].mxu0
    %v8893 = vpop.f32.mrb[0].mxu0
    %v8894 = vpop.f32.mrb[0].mxu0
    %8895 = vdwg.mxu0
    %8896 = vmatprep.subr.bf16.mxu0 0
    %8897 = vmatpush1.bf16.msra.mxu0 %v5947
    %8898 = vmatprep.subr.bf16.mxu0 0
    %8899 = vmatpush1.bf16.msra.mxu0 %v5952
    %8900 = vmatprep.subr.bf16.mxu0 0
    %8901 = vmatpush1.bf16.msra.mxu0 %v5957
    %8902 = vmatprep.subr.bf16.mxu0 0
    %8903 = vmatpush1.bf16.msra.mxu0 %v5962
    %8904 = vmatprep.subr.bf16.mxu0 0
    %8905 = vmatpush1.bf16.msra.mxu0 %v5967
    %8906 = vmatprep.subr.bf16.mxu0 0
    %8907 = vmatpush1.bf16.msra.mxu0 %v5972
    %8908 = vmatprep.subr.bf16.mxu0 0
    %8909 = vmatpush1.bf16.msra.mxu0 %v5977
    %8910 = vmatprep.subr.bf16.mxu0 0
    %8911 = vmatpush1.bf16.msra.mxu0 %v5982
    %8912 = vmatprep.subr.bf16.mxu0 0
    %8913 = vmatpush1.bf16.msra.mxu0 %v5987
    %8914 = vmatprep.subr.bf16.mxu0 0
    %8915 = vmatpush1.bf16.msra.mxu0 %v5992
    %8916 = vmatprep.subr.bf16.mxu0 0
    %8917 = vmatpush1.bf16.msra.mxu0 %v5997
    %8918 = vmatprep.subr.bf16.mxu0 0
    %8919 = vmatpush1.bf16.msra.mxu0 %v6002
    %8920 = vmatprep.subr.bf16.mxu0 0
    %8921 = vmatpush1.bf16.msra.mxu0 %v6007
    %8922 = vmatprep.subr.bf16.mxu0 0
    %8923 = vmatpush1.bf16.msra.mxu0 %v6012
    %8924 = vmatprep.subr.bf16.mxu0 0
    %8925 = vmatpush1.bf16.msra.mxu0 %v6017
    %8926 = vmatprep.subr.bf16.mxu0 0
    %8927 = vmatpush1.bf16.msra.mxu0 %v6022
    %8928 = vmatprep.mubr.bf16.mxu0 %v455
    %8929 = vmatmul.mubr.bf16.gmra.mrb[0].mxu0 %v454
    %v8930 = vpop.f32.mrb[0].mxu0
    %v8931 = vadd.f32 %v8891, %v8930
    %v8932 = vpop.f32.mrb[0].mxu0
    %v8933 = vpop.f32.mrb[0].mxu0
    %v8934 = vpop.f32.mrb[0].mxu0
    %8935 = vdwg.mxu0
    %8936 = vmatprep.subr.bf16.mxu0 0
    %8937 = vmatpush1.bf16.msra.mxu0 %v6027
    %8938 = vmatprep.subr.bf16.mxu0 0
    %8939 = vmatpush1.bf16.msra.mxu0 %v6032
    %8940 = vmatprep.subr.bf16.mxu0 0
    %8941 = vmatpush1.bf16.msra.mxu0 %v6037
    %8942 = vmatprep.subr.bf16.mxu0 0
    %8943 = vmatpush1.bf16.msra.mxu0 %v6042
    %8944 = vmatprep.subr.bf16.mxu0 0
    %8945 = vmatpush1.bf16.msra.mxu0 %v6047
    %8946 = vmatprep.subr.bf16.mxu0 0
    %8947 = vmatpush1.bf16.msra.mxu0 %v6052
    %8948 = vmatprep.subr.bf16.mxu0 0
    %8949 = vmatpush1.bf16.msra.mxu0 %v6057
    %8950 = vmatprep.subr.bf16.mxu0 0
    %8951 = vmatpush1.bf16.msra.mxu0 %v6062
    %8952 = vmatprep.subr.bf16.mxu0 0
    %8953 = vmatpush1.bf16.msra.mxu0 %v6067
    %8954 = vmatprep.subr.bf16.mxu0 0
    %8955 = vmatpush1.bf16.msra.mxu0 %v6072
    %8956 = vmatprep.subr.bf16.mxu0 0
    %8957 = vmatpush1.bf16.msra.mxu0 %v6077
    %8958 = vmatprep.subr.bf16.mxu0 0
    %8959 = vmatpush1.bf16.msra.mxu0 %v6082
    %8960 = vmatprep.subr.bf16.mxu0 0
    %8961 = vmatpush1.bf16.msra.mxu0 %v6087
    %8962 = vmatprep.subr.bf16.mxu0 0
    %8963 = vmatpush1.bf16.msra.mxu0 %v6092
    %8964 = vmatprep.subr.bf16.mxu0 0
    %8965 = vmatpush1.bf16.msra.mxu0 %v6097
    %8966 = vmatprep.subr.bf16.mxu0 0
    %8967 = vmatpush1.bf16.msra.mxu0 %v6102
    %8968 = vmatprep.mubr.bf16.mxu0 %v457
    %8969 = vmatmul.mubr.bf16.gmra.mrb[0].mxu0 %v456
    %v8970 = vpop.f32.mrb[0].mxu0
    %v8971 = vadd.f32 %v8931, %v8970
    %v8972 = vpop.f32.mrb[0].mxu0
    %v8973 = vpop.f32.mrb[0].mxu0
    %v8974 = vpop.f32.mrb[0].mxu0
    %8975 = vdwg.mxu0
    %8976 = vmatprep.subr.bf16.mxu0 0
    %8977 = vmatpush1.bf16.msra.mxu0 %v6107
    %8978 = vmatprep.subr.bf16.mxu0 0
    %8979 = vmatpush1.bf16.msra.mxu0 %v6112
    %8980 = vmatprep.subr.bf16.mxu0 0
    %8981 = vmatpush1.bf16.msra.mxu0 %v6117
    %8982 = vmatprep.subr.bf16.mxu0 0
    %8983 = vmatpush1.bf16.msra.mxu0 %v6122
    %8984 = vmatprep.subr.bf16.mxu0 0
    %8985 = vmatpush1.bf16.msra.mxu0 %v6127
    %8986 = vmatprep.subr.bf16.mxu0 0
    %8987 = vmatpush1.bf16.msra.mxu0 %v6132
    %8988 = vmatprep.subr.bf16.mxu0 0
    %8989 = vmatpush1.bf16.msra.mxu0 %v6137
    %8990 = vmatprep.subr.bf16.mxu0 0
    %8991 = vmatpush1.bf16.msra.mxu0 %v6142
    %8992 = vmatprep.subr.bf16.mxu0 0
    %8993 = vmatpush1.bf16.msra.mxu0 %v6147
    %8994 = vmatprep.subr.bf16.mxu0 0
    %8995 = vmatpush1.bf16.msra.mxu0 %v6152
    %8996 = vmatprep.subr.bf16.mxu0 0
    %8997 = vmatpush1.bf16.msra.mxu0 %v6157
    %8998 = vmatprep.subr.bf16.mxu0 0
    %8999 = vmatpush1.bf16.msra.mxu0 %v6162
    %9000 = vmatprep.subr.bf16.mxu0 0
    %9001 = vmatpush1.bf16.msra.mxu0 %v6167
    %9002 = vmatprep.subr.bf16.mxu0 0
    %9003 = vmatpush1.bf16.msra.mxu0 %v6172
    %9004 = vmatprep.subr.bf16.mxu0 0
    %9005 = vmatpush1.bf16.msra.mxu0 %v6177
    %9006 = vmatprep.subr.bf16.mxu0 0
    %9007 = vmatpush1.bf16.msra.mxu0 %v6182
    %9008 = vmatprep.mubr.bf16.mxu0 %v459
    %9009 = vmatmul.mubr.bf16.gmra.mrb[0].mxu0 %v458
    %v9010 = vpop.f32.mrb[0].mxu0
    %v9011 = vadd.f32 %v8971, %v9010
    %v9012 = vpop.f32.mrb[0].mxu0
    %v9013 = vpop.f32.mrb[0].mxu0
    %v9014 = vpop.f32.mrb[0].mxu0
    %9015 = vdwg.mxu0
    %9016 = vmatprep.subr.bf16.mxu0 0
    %9017 = vmatpush1.bf16.msra.mxu0 %v6187
    %9018 = vmatprep.subr.bf16.mxu0 0
    %9019 = vmatpush1.bf16.msra.mxu0 %v6192
    %9020 = vmatprep.subr.bf16.mxu0 0
    %9021 = vmatpush1.bf16.msra.mxu0 %v6197
    %9022 = vmatprep.subr.bf16.mxu0 0
    %9023 = vmatpush1.bf16.msra.mxu0 %v6202
    %9024 = vmatprep.subr.bf16.mxu0 0
    %9025 = vmatpush1.bf16.msra.mxu0 %v6207
    %9026 = vmatprep.subr.bf16.mxu0 0
    %9027 = vmatpush1.bf16.msra.mxu0 %v6212
    %9028 = vmatprep.subr.bf16.mxu0 0
    %9029 = vmatpush1.bf16.msra.mxu0 %v6217
    %9030 = vmatprep.subr.bf16.mxu0 0
    %9031 = vmatpush1.bf16.msra.mxu0 %v6222
    %9032 = vmatprep.subr.bf16.mxu0 0
    %9033 = vmatpush1.bf16.msra.mxu0 %v6227
    %9034 = vmatprep.subr.bf16.mxu0 0
    %9035 = vmatpush1.bf16.msra.mxu0 %v6232
    %9036 = vmatprep.subr.bf16.mxu0 0
    %9037 = vmatpush1.bf16.msra.mxu0 %v6237
    %9038 = vmatprep.subr.bf16.mxu0 0
    %9039 = vmatpush1.bf16.msra.mxu0 %v6242
    %9040 = vmatprep.subr.bf16.mxu0 0
    %9041 = vmatpush1.bf16.msra.mxu0 %v6247
    %9042 = vmatprep.subr.bf16.mxu0 0
    %9043 = vmatpush1.bf16.msra.mxu0 %v6252
    %9044 = vmatprep.subr.bf16.mxu0 0
    %9045 = vmatpush1.bf16.msra.mxu0 %v6257
    %9046 = vmatprep.subr.bf16.mxu0 0
    %9047 = vmatpush1.bf16.msra.mxu0 %v6262
    %9048 = vmatprep.mubr.bf16.mxu0 %v461
    %9049 = vmatmul.mubr.bf16.gmra.mrb[0].mxu0 %v460
    %v9050 = vpop.f32.mrb[0].mxu0
    %v9051 = vadd.f32 %v9011, %v9050
    %v9052 = vpop.f32.mrb[0].mxu0
    %v9053 = vpop.f32.mrb[0].mxu0
    %v9054 = vpop.f32.mrb[0].mxu0
    %9055 = vdwg.mxu0
    %9056 = vmatprep.subr.bf16.mxu0 0
    %9057 = vmatpush1.bf16.msra.mxu0 %v6267
    %9058 = vmatprep.subr.bf16.mxu0 0
    %9059 = vmatpush1.bf16.msra.mxu0 %v6272
    %9060 = vmatprep.subr.bf16.mxu0 0
    %9061 = vmatpush1.bf16.msra.mxu0 %v6277
    %9062 = vmatprep.subr.bf16.mxu0 0
    %9063 = vmatpush1.bf16.msra.mxu0 %v6282
    %9064 = vmatprep.subr.bf16.mxu0 0
    %9065 = vmatpush1.bf16.msra.mxu0 %v6287
    %9066 = vmatprep.subr.bf16.mxu0 0
    %9067 = vmatpush1.bf16.msra.mxu0 %v6292
    %9068 = vmatprep.subr.bf16.mxu0 0
    %9069 = vmatpush1.bf16.msra.mxu0 %v7386
    %9070 = vmatprep.subr.bf16.mxu0 0
    %9071 = vmatpush1.bf16.msra.mxu0 0
    %9072 = vmatprep.subr.bf16.mxu0 0
    %9073 = vmatpush1.bf16.msra.mxu0 0
    %9074 = vmatprep.subr.bf16.mxu0 0
    %9075 = vmatpush1.bf16.msra.mxu0 0
    %9076 = vmatprep.subr.bf16.mxu0 0
    %9077 = vmatpush1.bf16.msra.mxu0 0
    %9078 = vmatprep.subr.bf16.mxu0 0
    %9079 = vmatpush1.bf16.msra.mxu0 0
    %9080 = vmatprep.subr.bf16.mxu0 0
    %9081 = vmatpush1.bf16.msra.mxu0 0
    %9082 = vmatprep.subr.bf16.mxu0 0
    %9083 = vmatpush1.bf16.msra.mxu0 0
    %9084 = vmatprep.subr.bf16.mxu0 0
    %9085 = vmatpush1.bf16.msra.mxu0 0
    %9086 = vmatprep.subr.bf16.mxu0 0
    %9087 = vmatpush1.bf16.msra.mxu0 0
    %9088 = vmatprep.mubr.bf16.mxu0 0
    %9089 = vmatmul.mubr.bf16.gmra.mrb[0].mxu0 %v7370
    %v9090 = vpop.f32.mrb[0].mxu0
    %v9091 = vadd.f32 %v9051, %v9090
    %v9092 = vpop.f32.mrb[0].mxu0
    %v9093 = vpop.f32.mrb[0].mxu0
    %v9094 = vpop.f32.mrb[0].mxu0
    %9095 = vdwg.mxu0
    %v9096 = vmax.f32 %v7956, 0.0
    %v9097 = vmax.f32 %v7958, 0.0
    %v9098 = vmax.f32 %v8530, 0.0
    %v9099 = vmax.f32 %v8532, 0.0
    %v9100 = vmax.f32 %v9091, 0.0
    %v9101 = vpack.c.bf16 %v9096, %v9096
    %v9102 = vpack.c.bf16 %v9097, %v9097
    %v9103 = vpack.c.bf16 %v9098, %v9098
    %v9104 = vpack.c.bf16 %v9099, %v9099
    %v9105 = vpack.c.bf16 %v9100, %v9100
    %v9106 = vld [vmem:[#allocation6] sm:$0xff]
    %v9107 = vld [vmem:[#allocation6 + $0x8] sm:$0xff]
    %v9108 = vld [vmem:[#allocation6 + $0x10] sm:$0xff]
    %v9109 = vld [vmem:[#allocation6 + $0x18] sm:$0xff]
    %v9110 = vld [vmem:[#allocation6 + $0x20] sm:$0xff]
    %v9111 = vld [vmem:[#allocation6 + $0x28] sm:$0xff]
    %v9112 = vld [vmem:[#allocation6 + $0x30] sm:$0xff]
    %v9113 = vld [vmem:[#allocation6 + $0x38] sm:$0xff]
    %v9114 = vld [vmem:[#allocation6 + $0x40] sm:$0xff]
    %v9115 = vld [vmem:[#allocation6 + $0x48] sm:$0xff]
    %v9116 = vld [vmem:[#allocation6 + $0x50] sm:$0xff]
    %v9117 = vld [vmem:[#allocation6 + $0x58] sm:$0xff]
    %v9118 = vld [vmem:[#allocation6 + $0x60] sm:$0xff]
    %v9119 = vld [vmem:[#allocation6 + $0x68] sm:$0xff]
    %v9120 = vld [vmem:[#allocation6 + $0x70] sm:$0xff]
    %v9121 = vld [vmem:[#allocation6 + $0x78] sm:$0xff]
    %v9122 = vld [vmem:[#allocation6 + $0x80] sm:$0xff]
    %v9123 = vld [vmem:[#allocation6 + $0x88] sm:$0xff]
    %v9124 = vld [vmem:[#allocation6 + $0x90] sm:$0xff]
    %v9125 = vld [vmem:[#allocation6 + $0x98] sm:$0xff]
    %v9126 = vld [vmem:[#allocation6 + $0xa0] sm:$0xff]
    %v9127 = vld [vmem:[#allocation6 + $0xa8] sm:$0xff]
    %v9128 = vld [vmem:[#allocation6 + $0xb0] sm:$0xff]
    %v9129 = vld [vmem:[#allocation6 + $0xb8] sm:$0xff]
    %v9130 = vld [vmem:[#allocation6 + $0xc0] sm:$0xff]
    %v9131 = vld [vmem:[#allocation6 + $0xc8] sm:$0xff]
    %v9132 = vld [vmem:[#allocation6 + $0xd0] sm:$0xff]
    %v9133 = vld [vmem:[#allocation6 + $0xd8] sm:$0xff]
    %v9134 = vld [vmem:[#allocation6 + $0xe0] sm:$0xff]
    %v9135 = vld [vmem:[#allocation6 + $0xe8] sm:$0xff]
    %v9136 = vld [vmem:[#allocation6 + $0xf0] sm:$0xff]
    %v9137 = vld [vmem:[#allocation6 + $0xf8] sm:$0xff]
    %v9138 = vld [vmem:[#allocation6 + $0x100] sm:$0xff]
    %v9139 = vld [vmem:[#allocation6 + $0x108] sm:$0xff]
    %v9140 = vld [vmem:[#allocation6 + $0x110] sm:$0xff]
    %v9141 = vld [vmem:[#allocation6 + $0x118] sm:$0xff]
    %v9142 = vld [vmem:[#allocation6 + $0x120] sm:$0xff]
    %v9143 = vld [vmem:[#allocation6 + $0x128] sm:$0xff]
    %v9144 = vld [vmem:[#allocation6 + $0x130] sm:$0xff]
    %v9145 = vld [vmem:[#allocation6 + $0x138] sm:$0xff]
    %v9146 = vld [vmem:[#allocation6 + $0x140] sm:$0xff]
    %v9147 = vld [vmem:[#allocation6 + $0x148] sm:$0xff]
    %v9148 = vld [vmem:[#allocation6 + $0x150] sm:$0xff]
    %v9149 = vld [vmem:[#allocation6 + $0x158] sm:$0xff]
    %v9150 = vld [vmem:[#allocation6 + $0x160] sm:$0xff]
    %v9151 = vld [vmem:[#allocation6 + $0x168] sm:$0xff]
    %v9152 = vld [vmem:[#allocation6 + $0x170] sm:$0xff]
    %v9153 = vld [vmem:[#allocation6 + $0x178] sm:$0xff]
    %v9154 = vld [vmem:[#allocation6 + $0x180] sm:$0xff]
    %v9155 = vld [vmem:[#allocation6 + $0x188] sm:$0xff]
    %v9156 = vld [vmem:[#allocation6 + $0x190] sm:$0xff]
    %v9157 = vld [vmem:[#allocation6 + $0x198] sm:$0xff]
    %v9158 = vld [vmem:[#allocation6 + $0x1a0] sm:$0xff]
    %v9159 = vld [vmem:[#allocation6 + $0x1a8] sm:$0xff]
    %v9160 = vld [vmem:[#allocation6 + $0x1b0] sm:$0xff]
    %v9161 = vld [vmem:[#allocation6 + $0x1b8] sm:$0xff]
    %v9162 = vld [vmem:[#allocation6 + $0x1c0] sm:$0xff]
    %v9163 = vld [vmem:[#allocation6 + $0x1c8] sm:$0xff]
    %v9164 = vld [vmem:[#allocation6 + $0x1d0] sm:$0xff]
    %v9165 = vld [vmem:[#allocation6 + $0x1d8] sm:$0xff]
    %v9166 = vld [vmem:[#allocation6 + $0x1e0] sm:$0xff]
    %v9167 = vld [vmem:[#allocation6 + $0x1e8] sm:$0xff]
    %v9168 = vld [vmem:[#allocation6 + $0x1f0] sm:$0xff]
    %v9169 = vld [vmem:[#allocation6 + $0x1f8] sm:$0xff]
    %v9170 = vld [vmem:[#allocation6 + $0x200] sm:$0xff]
    %v9171 = vld [vmem:[#allocation6 + $0x208] sm:$0xff]
    %v9172 = vld [vmem:[#allocation6 + $0x210] sm:$0xff]
    %v9173 = vld [vmem:[#allocation6 + $0x218] sm:$0xff]
    %v9174 = vld [vmem:[#allocation6 + $0x220] sm:$0xff]
    %v9175 = vld [vmem:[#allocation6 + $0x228] sm:$0xff]
    %v9176 = vld [vmem:[#allocation6 + $0x230] sm:$0xff]
    %v9177 = vld [vmem:[#allocation6 + $0x238] sm:$0xff]
    %v9178 = vld [vmem:[#allocation6 + $0x240] sm:$0xff]
    %v9179 = vld [vmem:[#allocation6 + $0x248] sm:$0xff]
    %v9180 = vld [vmem:[#allocation6 + $0x250] sm:$0xff]
    %v9181 = vld [vmem:[#allocation6 + $0x258] sm:$0xff]
    %v9182 = vld [vmem:[#allocation6 + $0x260] sm:$0xff]
    %v9183 = vld [vmem:[#allocation6 + $0x268] sm:$0xff]
    %v9184 = vld [vmem:[#allocation6 + $0x270] sm:$0xff]
    %v9185 = vld [vmem:[#allocation6 + $0x278] sm:$0xff]
    %v9186 = vld [vmem:[#allocation7] sm:$0x3]
    %v9188 = vlaneseq
    %v9189 = vshrl.u32 %v9188, 7
    %v9190 = vsub.s32 0, %v9189
    %v9191 = vrot.slane %v9186, %v9190
    %v9192 = vlaneseq
    %v9193 = vshrl.u32 %v9192, 7
    %v9194 = vsub.s32 1, %v9193
    %v9195 = vrot.slane %v9186, %v9194
    %v9278 = vunpack.c.l.b16 %v9106
    %v9279 = vunpack.c.h.b16 %v9106
    %v9280 = vunpack.c.l.b16 %v9107
    %v9281 = vunpack.c.h.b16 %v9107
    %v9282 = vunpack.c.l.b16 %v9108
    %v9283 = vunpack.c.h.b16 %v9108
    %v9284 = vunpack.c.l.b16 %v9109
    %v9285 = vunpack.c.h.b16 %v9109
    %v9286 = vunpack.c.l.b16 %v9110
    %v9287 = vunpack.c.h.b16 %v9110
    %v9288 = vunpack.c.l.b16 %v9111
    %v9289 = vunpack.c.h.b16 %v9111
    %v9290 = vunpack.c.l.b16 %v9112
    %v9291 = vunpack.c.h.b16 %v9112
    %v9292 = vunpack.c.l.b16 %v9113
    %v9293 = vunpack.c.h.b16 %v9113
    %v9294 = vunpack.c.l.b16 %v9114
    %v9295 = vunpack.c.h.b16 %v9114
    %v9296 = vunpack.c.l.b16 %v9115
    %v9297 = vunpack.c.h.b16 %v9115
    %v9298 = vunpack.c.l.b16 %v9116
    %v9299 = vunpack.c.h.b16 %v9116
    %v9300 = vunpack.c.l.b16 %v9117
    %v9301 = vunpack.c.h.b16 %v9117
    %v9302 = vunpack.c.l.b16 %v9118
    %v9303 = vunpack.c.h.b16 %v9118
    %v9304 = vunpack.c.l.b16 %v9119
    %v9305 = vunpack.c.h.b16 %v9119
    %v9306 = vunpack.c.l.b16 %v9120
    %v9307 = vunpack.c.h.b16 %v9120
    %v9308 = vunpack.c.l.b16 %v9121
    %v9309 = vunpack.c.h.b16 %v9121
    %v9310 = vunpack.c.l.b16 %v9122
    %v9311 = vunpack.c.h.b16 %v9122
    %v9312 = vunpack.c.l.b16 %v9123
    %v9313 = vunpack.c.h.b16 %v9123
    %v9314 = vunpack.c.l.b16 %v9124
    %v9315 = vunpack.c.h.b16 %v9124
    %v9316 = vunpack.c.l.b16 %v9125
    %v9317 = vunpack.c.h.b16 %v9125
    %v9318 = vunpack.c.l.b16 %v9126
    %v9319 = vunpack.c.h.b16 %v9126
    %v9320 = vunpack.c.l.b16 %v9127
    %v9321 = vunpack.c.h.b16 %v9127
    %v9322 = vunpack.c.l.b16 %v9128
    %v9323 = vunpack.c.h.b16 %v9128
    %v9324 = vunpack.c.l.b16 %v9129
    %v9325 = vunpack.c.h.b16 %v9129
    %v9326 = vunpack.c.l.b16 %v9130
    %v9327 = vunpack.c.h.b16 %v9130
    %v9328 = vunpack.c.l.b16 %v9131
    %v9329 = vunpack.c.h.b16 %v9131
    %v9330 = vunpack.c.l.b16 %v9132
    %v9331 = vunpack.c.h.b16 %v9132
    %v9332 = vunpack.c.l.b16 %v9133
    %v9333 = vunpack.c.h.b16 %v9133
    %v9334 = vunpack.c.l.b16 %v9134
    %v9335 = vunpack.c.h.b16 %v9134
    %v9336 = vunpack.c.l.b16 %v9135
    %v9337 = vunpack.c.h.b16 %v9135
    %v9338 = vunpack.c.l.b16 %v9136
    %v9339 = vunpack.c.h.b16 %v9136
    %v9340 = vunpack.c.l.b16 %v9137
    %v9341 = vunpack.c.h.b16 %v9137
    %v9342 = vunpack.c.l.b16 %v9138
    %v9343 = vunpack.c.h.b16 %v9138
    %v9344 = vunpack.c.l.b16 %v9139
    %v9345 = vunpack.c.h.b16 %v9139
    %v9346 = vunpack.c.l.b16 %v9140
    %v9347 = vunpack.c.h.b16 %v9140
    %v9348 = vunpack.c.l.b16 %v9141
    %v9349 = vunpack.c.h.b16 %v9141
    %v9350 = vunpack.c.l.b16 %v9142
    %v9351 = vunpack.c.h.b16 %v9142
    %v9352 = vunpack.c.l.b16 %v9143
    %v9353 = vunpack.c.h.b16 %v9143
    %v9354 = vunpack.c.l.b16 %v9144
    %v9355 = vunpack.c.h.b16 %v9144
    %v9356 = vunpack.c.l.b16 %v9145
    %v9357 = vunpack.c.h.b16 %v9145
    %v9358 = vunpack.c.l.b16 %v9146
    %v9359 = vunpack.c.h.b16 %v9146
    %v9360 = vunpack.c.l.b16 %v9147
    %v9361 = vunpack.c.h.b16 %v9147
    %v9362 = vunpack.c.l.b16 %v9148
    %v9363 = vunpack.c.h.b16 %v9148
    %v9364 = vunpack.c.l.b16 %v9149
    %v9365 = vunpack.c.h.b16 %v9149
    %v9366 = vunpack.c.l.b16 %v9150
    %v9367 = vunpack.c.h.b16 %v9150
    %v9368 = vunpack.c.l.b16 %v9151
    %v9369 = vunpack.c.h.b16 %v9151
    %v9370 = vunpack.c.l.b16 %v9152
    %v9371 = vunpack.c.h.b16 %v9152
    %v9372 = vunpack.c.l.b16 %v9153
    %v9373 = vunpack.c.h.b16 %v9153
    %v9374 = vunpack.c.l.b16 %v9154
    %v9375 = vunpack.c.h.b16 %v9154
    %v9376 = vunpack.c.l.b16 %v9155
    %v9377 = vunpack.c.h.b16 %v9155
    %v9378 = vunpack.c.l.b16 %v9156
    %v9379 = vunpack.c.h.b16 %v9156
    %v9380 = vunpack.c.l.b16 %v9157
    %v9381 = vunpack.c.h.b16 %v9157
    %v9382 = vunpack.c.l.b16 %v9158
    %v9383 = vunpack.c.h.b16 %v9158
    %v9384 = vunpack.c.l.b16 %v9159
    %v9385 = vunpack.c.h.b16 %v9159
    %v9386 = vunpack.c.l.b16 %v9160
    %v9387 = vunpack.c.h.b16 %v9160
    %v9388 = vunpack.c.l.b16 %v9161
    %v9389 = vunpack.c.h.b16 %v9161
    %v9390 = vunpack.c.l.b16 %v9162
    %v9391 = vunpack.c.h.b16 %v9162
    %v9392 = vunpack.c.l.b16 %v9163
    %v9393 = vunpack.c.h.b16 %v9163
    %v9394 = vunpack.c.l.b16 %v9164
    %v9395 = vunpack.c.h.b16 %v9164
    %v9396 = vunpack.c.l.b16 %v9165
    %v9397 = vunpack.c.h.b16 %v9165
    %v9398 = vunpack.c.l.b16 %v9166
    %v9399 = vunpack.c.h.b16 %v9166
    %v9400 = vunpack.c.l.b16 %v9167
    %v9401 = vunpack.c.h.b16 %v9167
    %v9402 = vunpack.c.l.b16 %v9168
    %v9403 = vunpack.c.h.b16 %v9168
    %v9404 = vunpack.c.l.b16 %v9169
    %v9405 = vunpack.c.h.b16 %v9169
    %v9406 = vunpack.c.l.b16 %v9170
    %v9407 = vunpack.c.h.b16 %v9170
    %v9408 = vunpack.c.l.b16 %v9171
    %v9409 = vunpack.c.h.b16 %v9171
    %v9410 = vunpack.c.l.b16 %v9172
    %v9411 = vunpack.c.h.b16 %v9172
    %v9412 = vunpack.c.l.b16 %v9173
    %v9413 = vunpack.c.h.b16 %v9173
    %v9414 = vunpack.c.l.b16 %v9174
    %v9415 = vunpack.c.h.b16 %v9174
    %v9416 = vunpack.c.l.b16 %v9175
    %v9417 = vunpack.c.h.b16 %v9175
    %v9418 = vunpack.c.l.b16 %v9176
    %v9419 = vunpack.c.h.b16 %v9176
    %v9420 = vunpack.c.l.b16 %v9177
    %v9421 = vunpack.c.h.b16 %v9177
    %v9422 = vunpack.c.l.b16 %v9178
    %v9423 = vunpack.c.h.b16 %v9178
    %v9424 = vunpack.c.l.b16 %v9179
    %v9425 = vunpack.c.h.b16 %v9179
    %v9426 = vunpack.c.l.b16 %v9180
    %v9427 = vunpack.c.h.b16 %v9180
    %v9428 = vunpack.c.l.b16 %v9181
    %v9429 = vunpack.c.h.b16 %v9181
    %v9430 = vunpack.c.l.b16 %v9182
    %v9431 = vunpack.c.h.b16 %v9182
    %v9432 = vunpack.c.l.b16 %v9183
    %v9433 = vunpack.c.h.b16 %v9183
    %v9434 = vunpack.c.l.b16 %v9184
    %v9435 = vunpack.c.h.b16 %v9184
    %v9436 = vunpack.c.l.b16 %v9185
    %v9437 = vunpack.c.h.b16 %v9185
    %v9438 = vpack.c.b16 %v9280, %v9278
    %v9439 = vpack.c.b16 %v9281, %v9279
    %v9440 = vpack.c.b16 %v9284, %v9282
    %v9441 = vpack.c.b16 %v9285, %v9283
    %v9442 = vpack.c.b16 %v9288, %v9286
    %v9443 = vpack.c.b16 %v9289, %v9287
    %v9444 = vpack.c.b16 %v9292, %v9290
    %v9445 = vpack.c.b16 %v9293, %v9291
    %v9446 = vpack.c.b16 %v9296, %v9294
    %v9447 = vpack.c.b16 %v9297, %v9295
    %v9448 = vpack.c.b16 %v9300, %v9298
    %v9449 = vpack.c.b16 %v9301, %v9299
    %v9450 = vpack.c.b16 %v9304, %v9302
    %v9451 = vpack.c.b16 %v9305, %v9303
    %v9452 = vpack.c.b16 %v9308, %v9306
    %v9453 = vpack.c.b16 %v9309, %v9307
    %v9454 = vpack.c.b16 %v9312, %v9310
    %v9455 = vpack.c.b16 %v9313, %v9311
    %v9456 = vpack.c.b16 %v9316, %v9314
    %v9457 = vpack.c.b16 %v9317, %v9315
    %v9458 = vpack.c.b16 %v9320, %v9318
    %v9459 = vpack.c.b16 %v9321, %v9319
    %v9460 = vpack.c.b16 %v9324, %v9322
    %v9461 = vpack.c.b16 %v9325, %v9323
    %v9462 = vpack.c.b16 %v9328, %v9326
    %v9463 = vpack.c.b16 %v9329, %v9327
    %v9464 = vpack.c.b16 %v9332, %v9330
    %v9465 = vpack.c.b16 %v9333, %v9331
    %v9466 = vpack.c.b16 %v9336, %v9334
    %v9467 = vpack.c.b16 %v9337, %v9335
    %v9468 = vpack.c.b16 %v9340, %v9338
    %v9469 = vpack.c.b16 %v9341, %v9339
    %v9470 = vpack.c.b16 %v9344, %v9342
    %v9471 = vpack.c.b16 %v9345, %v9343
    %v9472 = vpack.c.b16 %v9348, %v9346
    %v9473 = vpack.c.b16 %v9349, %v9347
    %v9474 = vpack.c.b16 %v9352, %v9350
    %v9475 = vpack.c.b16 %v9353, %v9351
    %v9476 = vpack.c.b16 %v9356, %v9354
    %v9477 = vpack.c.b16 %v9357, %v9355
    %v9478 = vpack.c.b16 %v9360, %v9358
    %v9479 = vpack.c.b16 %v9361, %v9359
    %v9480 = vpack.c.b16 %v9364, %v9362
    %v9481 = vpack.c.b16 %v9365, %v9363
    %v9482 = vpack.c.b16 %v9368, %v9366
    %v9483 = vpack.c.b16 %v9369, %v9367
    %v9484 = vpack.c.b16 %v9372, %v9370
    %v9485 = vpack.c.b16 %v9373, %v9371
    %v9486 = vpack.c.b16 %v9376, %v9374
    %v9487 = vpack.c.b16 %v9377, %v9375
    %v9488 = vpack.c.b16 %v9380, %v9378
    %v9489 = vpack.c.b16 %v9381, %v9379
    %v9490 = vpack.c.b16 %v9384, %v9382
    %v9491 = vpack.c.b16 %v9385, %v9383
    %v9492 = vpack.c.b16 %v9388, %v9386
    %v9493 = vpack.c.b16 %v9389, %v9387
    %v9494 = vpack.c.b16 %v9392, %v9390
    %v9495 = vpack.c.b16 %v9393, %v9391
    %v9496 = vpack.c.b16 %v9396, %v9394
    %v9497 = vpack.c.b16 %v9397, %v9395
    %v9498 = vpack.c.b16 %v9400, %v9398
    %v9499 = vpack.c.b16 %v9401, %v9399
    %v9500 = vpack.c.b16 %v9404, %v9402
    %v9501 = vpack.c.b16 %v9405, %v9403
    %v9502 = vpack.c.b16 %v9408, %v9406
    %v9503 = vpack.c.b16 %v9409, %v9407
    %v9504 = vpack.c.b16 %v9412, %v9410
    %v9505 = vpack.c.b16 %v9413, %v9411
    %v9506 = vpack.c.b16 %v9416, %v9414
    %v9507 = vpack.c.b16 %v9417, %v9415
    %v9508 = vpack.c.b16 %v9420, %v9418
    %v9509 = vpack.c.b16 %v9421, %v9419
    %v9510 = vpack.c.b16 %v9424, %v9422
    %v9511 = vpack.c.b16 %v9425, %v9423
    %v9512 = vpack.c.b16 %v9428, %v9426
    %v9513 = vpack.c.b16 %v9429, %v9427
    %v9514 = vpack.c.b16 %v9432, %v9430
    %v9515 = vpack.c.b16 %v9433, %v9431
    %v9516 = vpack.c.b16 %v9436, %v9434
    %v9517 = vpack.c.b16 %v9437, %v9435
    %9598 = vmatprep.subr.bf16.mxu0 %v9439
    %9599 = vmatpush1.bf16.msra.mxu0 %v9438
    %9600 = vmatprep.subr.bf16.mxu0 %v9441
    %9601 = vmatpush1.bf16.msra.mxu0 %v9440
    %9602 = vmatprep.subr.bf16.mxu0 %v9443
    %9603 = vmatpush1.bf16.msra.mxu0 %v9442
    %9604 = vmatprep.subr.bf16.mxu0 %v9445
    %9605 = vmatpush1.bf16.msra.mxu0 %v9444
    %9606 = vmatprep.subr.bf16.mxu0 %v9447
    %9607 = vmatpush1.bf16.msra.mxu0 %v9446
    %9608 = vmatprep.subr.bf16.mxu0 %v9449
    %9609 = vmatpush1.bf16.msra.mxu0 %v9448
    %9610 = vmatprep.subr.bf16.mxu0 %v9451
    %9611 = vmatpush1.bf16.msra.mxu0 %v9450
    %9612 = vmatprep.subr.bf16.mxu0 %v9453
    %9613 = vmatpush1.bf16.msra.mxu0 %v9452
    %9614 = vmatprep.subr.bf16.mxu0 %v9455
    %9615 = vmatpush1.bf16.msra.mxu0 %v9454
    %9616 = vmatprep.subr.bf16.mxu0 %v9457
    %9617 = vmatpush1.bf16.msra.mxu0 %v9456
    %9618 = vmatprep.subr.bf16.mxu0 %v9459
    %9619 = vmatpush1.bf16.msra.mxu0 %v9458
    %9620 = vmatprep.subr.bf16.mxu0 %v9461
    %9621 = vmatpush1.bf16.msra.mxu0 %v9460
    %9622 = vmatprep.subr.bf16.mxu0 %v9463
    %9623 = vmatpush1.bf16.msra.mxu0 %v9462
    %9624 = vmatprep.subr.bf16.mxu0 %v9465
    %9625 = vmatpush1.bf16.msra.mxu0 %v9464
    %9626 = vmatprep.subr.bf16.mxu0 %v9467
    %9627 = vmatpush1.bf16.msra.mxu0 %v9466
    %9628 = vmatprep.subr.bf16.mxu0 %v9469
    %9629 = vmatpush1.bf16.msra.mxu0 %v9468
    %9630 = vmatprep.mubr.bf16.mxu0 %v9102
    %9631 = vmatmul.mubr.bf16.gmra.mrb[0].mxu0 %v9101
    %v9632 = vpop.f32.mrb[0].mxu0
    %v9633 = vadd.f32 %v9191, %v9632
    %v9634 = vpop.f32.mrb[0].mxu0
    %v9635 = vadd.f32 %v9195, %v9634
    %v9636 = vpop.f32.mrb[0].mxu0
    %v9637 = vpop.f32.mrb[0].mxu0
    %9638 = vdwg.mxu0
    %9639 = vmatprep.subr.bf16.mxu0 %v9471
    %9640 = vmatpush1.bf16.msra.mxu0 %v9470
    %9641 = vmatprep.subr.bf16.mxu0 %v9473
    %9642 = vmatpush1.bf16.msra.mxu0 %v9472
    %9643 = vmatprep.subr.bf16.mxu0 %v9475
    %9644 = vmatpush1.bf16.msra.mxu0 %v9474
    %9645 = vmatprep.subr.bf16.mxu0 %v9477
    %9646 = vmatpush1.bf16.msra.mxu0 %v9476
    %9647 = vmatprep.subr.bf16.mxu0 %v9479
    %9648 = vmatpush1.bf16.msra.mxu0 %v9478
    %9649 = vmatprep.subr.bf16.mxu0 %v9481
    %9650 = vmatpush1.bf16.msra.mxu0 %v9480
    %9651 = vmatprep.subr.bf16.mxu0 %v9483
    %9652 = vmatpush1.bf16.msra.mxu0 %v9482
    %9653 = vmatprep.subr.bf16.mxu0 %v9485
    %9654 = vmatpush1.bf16.msra.mxu0 %v9484
    %9655 = vmatprep.subr.bf16.mxu0 %v9487
    %9656 = vmatpush1.bf16.msra.mxu0 %v9486
    %9657 = vmatprep.subr.bf16.mxu0 %v9489
    %9658 = vmatpush1.bf16.msra.mxu0 %v9488
    %9659 = vmatprep.subr.bf16.mxu0 %v9491
    %9660 = vmatpush1.bf16.msra.mxu0 %v9490
    %9661 = vmatprep.subr.bf16.mxu0 %v9493
    %9662 = vmatpush1.bf16.msra.mxu0 %v9492
    %9663 = vmatprep.subr.bf16.mxu0 %v9495
    %9664 = vmatpush1.bf16.msra.mxu0 %v9494
    %9665 = vmatprep.subr.bf16.mxu0 %v9497
    %9666 = vmatpush1.bf16.msra.mxu0 %v9496
    %9667 = vmatprep.subr.bf16.mxu0 %v9499
    %9668 = vmatpush1.bf16.msra.mxu0 %v9498
    %9669 = vmatprep.subr.bf16.mxu0 %v9501
    %9670 = vmatpush1.bf16.msra.mxu0 %v9500
    %9671 = vmatprep.mubr.bf16.mxu0 %v9104
    %9672 = vmatmul.mubr.bf16.gmra.mrb[0].mxu0 %v9103
    %v9673 = vpop.f32.mrb[0].mxu0
    %v9674 = vadd.f32 %v9633, %v9673
    %v9675 = vpop.f32.mrb[0].mxu0
    %v9676 = vadd.f32 %v9635, %v9675
    %v9677 = vpop.f32.mrb[0].mxu0
    %v9678 = vpop.f32.mrb[0].mxu0
    %9679 = vdwg.mxu0
    %9680 = vmatprep.subr.bf16.mxu0 %v9503
    %9681 = vmatpush1.bf16.msra.mxu0 %v9502
    %9682 = vmatprep.subr.bf16.mxu0 %v9505
    %9683 = vmatpush1.bf16.msra.mxu0 %v9504
    %9684 = vmatprep.subr.bf16.mxu0 %v9507
    %9685 = vmatpush1.bf16.msra.mxu0 %v9506
    %9686 = vmatprep.subr.bf16.mxu0 %v9509
    %9687 = vmatpush1.bf16.msra.mxu0 %v9508
    %9688 = vmatprep.subr.bf16.mxu0 %v9511
    %9689 = vmatpush1.bf16.msra.mxu0 %v9510
    %9690 = vmatprep.subr.bf16.mxu0 %v9513
    %9691 = vmatpush1.bf16.msra.mxu0 %v9512
    %9692 = vmatprep.subr.bf16.mxu0 %v9515
    %9693 = vmatpush1.bf16.msra.mxu0 %v9514
    %9694 = vmatprep.subr.bf16.mxu0 %v9517
    %9695 = vmatpush1.bf16.msra.mxu0 %v9516
    %9696 = vmatprep.subr.bf16.mxu0 0
    %9697 = vmatpush1.bf16.msra.mxu0 0
    %9698 = vmatprep.subr.bf16.mxu0 0
    %9699 = vmatpush1.bf16.msra.mxu0 0
    %9700 = vmatprep.subr.bf16.mxu0 0
    %9701 = vmatpush1.bf16.msra.mxu0 0
    %9702 = vmatprep.subr.bf16.mxu0 0
    %9703 = vmatpush1.bf16.msra.mxu0 0
    %9704 = vmatprep.subr.bf16.mxu0 0
    %9705 = vmatpush1.bf16.msra.mxu0 0
    %9706 = vmatprep.subr.bf16.mxu0 0
    %9707 = vmatpush1.bf16.msra.mxu0 0
    %9708 = vmatprep.subr.bf16.mxu0 0
    %9709 = vmatpush1.bf16.msra.mxu0 0
    %9710 = vmatprep.subr.bf16.mxu0 0
    %9711 = vmatpush1.bf16.msra.mxu0 0
    %9712 = vmatprep.mubr.bf16.mxu0 0
    %9713 = vmatmul.mubr.bf16.gmra.mrb[0].mxu0 %v9105
    %v9714 = vpop.f32.mrb[0].mxu0
    %v9715 = vadd.f32 %v9674, %v9714
    %v9716 = vpop.f32.mrb[0].mxu0
    %v9717 = vadd.f32 %v9676, %v9716
    %v9718 = vpop.f32.mrb[0].mxu0
    %v9719 = vpop.f32.mrb[0].mxu0
    %9720 = vdwg.mxu0
    %v9721 = vmax.f32 %v9715, 0.0
    %v9722 = vmax.f32 %v9717, 0.0
    %v9723 = vpack.c.bf16 %v9721, %v9721
    %v9724 = vpack.c.bf16 %v9722, %v9722
    %v9725 = vld [vmem:[#allocation9] sm:$0xf]
    %v9726 = vld [vmem:[#allocation9 + $0x4] sm:$0xf]
    %v9727 = vld [vmem:[#allocation9 + $0x8] sm:$0xf]
    %v9728 = vld [vmem:[#allocation9 + $0xc] sm:$0xf]
    %v9729 = vld [vmem:[#allocation9 + $0x10] sm:$0xf]
    %v9730 = vld [vmem:[#allocation9 + $0x14] sm:$0xf]
    %v9731 = vld [vmem:[#allocation9 + $0x18] sm:$0xf]
    %v9732 = vld [vmem:[#allocation9 + $0x1c] sm:$0xf]
    %v9733 = vld [vmem:[#allocation9 + $0x20] sm:$0xf]
    %v9734 = vld [vmem:[#allocation9 + $0x24] sm:$0xf]
    %v9735 = vld [vmem:[#allocation9 + $0x28] sm:$0xf]
    %v9736 = vld [vmem:[#allocation9 + $0x2c] sm:$0xf]
    %v9737 = vld [vmem:[#allocation9 + $0x30] sm:$0xf]
    %v9738 = vld [vmem:[#allocation9 + $0x34] sm:$0xf]
    %v9739 = vld [vmem:[#allocation9 + $0x38] sm:$0xf]
    %v9740 = vld [vmem:[#allocation9 + $0x3c] sm:$0xf]
    %v9741 = vld [vmem:[#allocation9 + $0x40] sm:$0xf]
    %v9742 = vld [vmem:[#allocation9 + $0x44] sm:$0xf]
    %v9743 = vld [vmem:[#allocation9 + $0x48] sm:$0xf]
    %v9744 = vld [vmem:[#allocation9 + $0x4c] sm:$0xf]
    %v9745 = vld [vmem:[#allocation9 + $0x50] sm:$0xf]
    %v9746 = vld [vmem:[#allocation9 + $0x54] sm:$0xf]
    %v9747 = vld [vmem:[#allocation9 + $0x58] sm:$0xf]
    %v9748 = vld [vmem:[#allocation9 + $0x5c] sm:$0xf]
    %v9749 = vld [vmem:[#allocation9 + $0x60] sm:$0xf]
    %v9750 = vld [vmem:[#allocation9 + $0x64] sm:$0xf]
    %v9751 = vld [vmem:[#allocation9 + $0x68] sm:$0xf]
    %v9752 = vld [vmem:[#allocation9 + $0x6c] sm:$0xf]
    %v9753 = vld [vmem:[#allocation9 + $0x70] sm:$0xf]
    %v9754 = vld [vmem:[#allocation9 + $0x74] sm:$0xf]
    %v9755 = vld [vmem:[#allocation9 + $0x78] sm:$0xf]
    %v9756 = vld [vmem:[#allocation9 + $0x7c] sm:$0xf]
    %v9757 = vld [vmem:[#allocation10] sm:$0x1]
    %v9759 = vlaneseq
    %v9760 = vshrl.u32 %v9759, 7
    %v9761 = vsub.s32 0, %v9760
    %v9762 = vrot.slane %v9757, %v9761
    %v9796 = vunpack.c.l.b16 %v9725
    %v9797 = vunpack.c.l.b16 %v9726
    %v9798 = vunpack.c.l.b16 %v9727
    %v9799 = vunpack.c.l.b16 %v9728
    %v9800 = vunpack.c.l.b16 %v9729
    %v9801 = vunpack.c.l.b16 %v9730
    %v9802 = vunpack.c.l.b16 %v9731
    %v9803 = vunpack.c.l.b16 %v9732
    %v9804 = vunpack.c.l.b16 %v9733
    %v9805 = vunpack.c.l.b16 %v9734
    %v9806 = vunpack.c.l.b16 %v9735
    %v9807 = vunpack.c.l.b16 %v9736
    %v9808 = vunpack.c.l.b16 %v9737
    %v9809 = vunpack.c.l.b16 %v9738
    %v9810 = vunpack.c.l.b16 %v9739
    %v9811 = vunpack.c.l.b16 %v9740
    %v9812 = vunpack.c.l.b16 %v9741
    %v9813 = vunpack.c.l.b16 %v9742
    %v9814 = vunpack.c.l.b16 %v9743
    %v9815 = vunpack.c.l.b16 %v9744
    %v9816 = vunpack.c.l.b16 %v9745
    %v9817 = vunpack.c.l.b16 %v9746
    %v9818 = vunpack.c.l.b16 %v9747
    %v9819 = vunpack.c.l.b16 %v9748
    %v9820 = vunpack.c.l.b16 %v9749
    %v9821 = vunpack.c.l.b16 %v9750
    %v9822 = vunpack.c.l.b16 %v9751
    %v9823 = vunpack.c.l.b16 %v9752
    %v9824 = vunpack.c.l.b16 %v9753
    %v9825 = vunpack.c.l.b16 %v9754
    %v9826 = vunpack.c.l.b16 %v9755
    %v9827 = vunpack.c.l.b16 %v9756
    %v9828 = vpack.c.b16 %v9797, %v9796
    %v9829 = vpack.c.b16 %v9799, %v9798
    %v9830 = vpack.c.b16 %v9801, %v9800
    %v9831 = vpack.c.b16 %v9803, %v9802
    %v9832 = vpack.c.b16 %v9805, %v9804
    %v9833 = vpack.c.b16 %v9807, %v9806
    %v9834 = vpack.c.b16 %v9809, %v9808
    %v9835 = vpack.c.b16 %v9811, %v9810
    %v9836 = vpack.c.b16 %v9813, %v9812
    %v9837 = vpack.c.b16 %v9815, %v9814
    %v9838 = vpack.c.b16 %v9817, %v9816
    %v9839 = vpack.c.b16 %v9819, %v9818
    %v9840 = vpack.c.b16 %v9821, %v9820
    %v9841 = vpack.c.b16 %v9823, %v9822
    %v9842 = vpack.c.b16 %v9825, %v9824
    %v9843 = vpack.c.b16 %v9827, %v9826
    %9860 = vmatprep.subr.bf16.mxu0 0
    %9861 = vmatpush1.bf16.msra.mxu0 %v9828
    %9862 = vmatprep.subr.bf16.mxu0 0
    %9863 = vmatpush1.bf16.msra.mxu0 %v9829
    %9864 = vmatprep.subr.bf16.mxu0 0
    %9865 = vmatpush1.bf16.msra.mxu0 %v9830
    %9866 = vmatprep.subr.bf16.mxu0 0
    %9867 = vmatpush1.bf16.msra.mxu0 %v9831
    %9868 = vmatprep.subr.bf16.mxu0 0
    %9869 = vmatpush1.bf16.msra.mxu0 %v9832
    %9870 = vmatprep.subr.bf16.mxu0 0
    %9871 = vmatpush1.bf16.msra.mxu0 %v9833
    %9872 = vmatprep.subr.bf16.mxu0 0
    %9873 = vmatpush1.bf16.msra.mxu0 %v9834
    %9874 = vmatprep.subr.bf16.mxu0 0
    %9875 = vmatpush1.bf16.msra.mxu0 %v9835
    %9876 = vmatprep.subr.bf16.mxu0 0
    %9877 = vmatpush1.bf16.msra.mxu0 %v9836
    %9878 = vmatprep.subr.bf16.mxu0 0
    %9879 = vmatpush1.bf16.msra.mxu0 %v9837
    %9880 = vmatprep.subr.bf16.mxu0 0
    %9881 = vmatpush1.bf16.msra.mxu0 %v9838
    %9882 = vmatprep.subr.bf16.mxu0 0
    %9883 = vmatpush1.bf16.msra.mxu0 %v9839
    %9884 = vmatprep.subr.bf16.mxu0 0
    %9885 = vmatpush1.bf16.msra.mxu0 %v9840
    %9886 = vmatprep.subr.bf16.mxu0 0
    %9887 = vmatpush1.bf16.msra.mxu0 %v9841
    %9888 = vmatprep.subr.bf16.mxu0 0
    %9889 = vmatpush1.bf16.msra.mxu0 %v9842
    %9890 = vmatprep.subr.bf16.mxu0 0
    %9891 = vmatpush1.bf16.msra.mxu0 %v9843
    %9892 = vmatprep.mubr.bf16.mxu0 %v9724
    %9893 = vmatmul.mubr.bf16.gmra.mrb[0].mxu0 %v9723
    %v9894 = vpop.f32.mrb[0].mxu0
    %v9895 = vadd.f32 %v9762, %v9894
    %v9896 = vpop.f32.mrb[0].mxu0
    %v9897 = vpop.f32.mrb[0].mxu0
    %v9898 = vpop.f32.mrb[0].mxu0
    %9899 = vdwg.mxu0
    %v9900 = vmax.f32 %v9895, 0.0
    %v9901 = vpack.c.bf16 %v9900, %v9900
    %v9902 = vld [vmem:[#allocation12] sm:$0xf]
    %v9903 = vld [vmem:[#allocation12 + $0x4] sm:$0xf]
    %v9904 = vld [vmem:[#allocation12 + $0x8] sm:$0xf]
    %v9905 = vld [vmem:[#allocation12 + $0xc] sm:$0xf]
    %v9906 = vld [vmem:[#allocation12 + $0x10] sm:$0xf]
    %v9907 = vld [vmem:[#allocation12 + $0x14] sm:$0xf]
    %v9908 = vld [vmem:[#allocation12 + $0x18] sm:$0xf]
    %v9909 = vld [vmem:[#allocation12 + $0x1c] sm:$0xf]
    %v9910 = vld [vmem:[#allocation12 + $0x20] sm:$0xf]
    %v9911 = vld [vmem:[#allocation12 + $0x24] sm:$0xf]
    %v9912 = vld [vmem:[#allocation12 + $0x28] sm:$0xf]
    %v9913 = vld [vmem:[#allocation12 + $0x2c] sm:$0xf]
    %v9914 = vld [vmem:[#allocation12 + $0x30] sm:$0xf]
    %v9915 = vld [vmem:[#allocation12 + $0x34] sm:$0xf]
    %v9916 = vld [vmem:[#allocation12 + $0x38] sm:$0xf]
    %v9917 = vld [vmem:[#allocation12 + $0x3c] sm:$0xf]
    %v9918 = vld [vmem:[#allocation12 + $0x40] sm:$0xf]
    %v9919 = vld [vmem:[#allocation12 + $0x44] sm:$0xf]
    %v9920 = vld [vmem:[#allocation12 + $0x48] sm:$0xf]
    %v9921 = vld [vmem:[#allocation12 + $0x4c] sm:$0xf]
    %v9922 = vld [vmem:[#allocation12 + $0x50] sm:$0xf]
    %v9923 = vld [vmem:[#allocation12 + $0x54] sm:$0xf]
    %v9924 = vld [vmem:[#allocation12 + $0x58] sm:$0xf]
    %v9925 = vld [vmem:[#allocation12 + $0x5c] sm:$0xf]
    %v9926 = vld [vmem:[#allocation12 + $0x60] sm:$0xf]
    %v9927 = vld [vmem:[#allocation12 + $0x64] sm:$0xf]
    %v9928 = vld [vmem:[#allocation12 + $0x68] sm:$0xf]
    %v9929 = vld [vmem:[#allocation12 + $0x6c] sm:$0xf]
    %v9930 = vld [vmem:[#allocation12 + $0x70] sm:$0xf]
    %v9931 = vld [vmem:[#allocation12 + $0x74] sm:$0xf]
    %v9932 = vld [vmem:[#allocation12 + $0x78] sm:$0xf]
    %v9933 = vld [vmem:[#allocation12 + $0x7c] sm:$0xf]
    %v9934 = vld [vmem:[#allocation13] sm:$0x1]
    %v9936 = vlaneseq
    %v9937 = vshrl.u32 %v9936, 7
    %v9938 = vsub.s32 0, %v9937
    %v9939 = vrot.slane %v9934, %v9938
    %v9973 = vunpack.c.l.b16 %v9902
    %v9974 = vunpack.c.l.b16 %v9903
    %v9975 = vunpack.c.l.b16 %v9904
    %v9976 = vunpack.c.l.b16 %v9905
    %v9977 = vunpack.c.l.b16 %v9906
    %v9978 = vunpack.c.l.b16 %v9907
    %v9979 = vunpack.c.l.b16 %v9908
    %v9980 = vunpack.c.l.b16 %v9909
    %v9981 = vunpack.c.l.b16 %v9910
    %v9982 = vunpack.c.l.b16 %v9911
    %v9983 = vunpack.c.l.b16 %v9912
    %v9984 = vunpack.c.l.b16 %v9913
    %v9985 = vunpack.c.l.b16 %v9914
    %v9986 = vunpack.c.l.b16 %v9915
    %v9987 = vunpack.c.l.b16 %v9916
    %v9988 = vunpack.c.l.b16 %v9917
    %v9989 = vunpack.c.l.b16 %v9918
    %v9990 = vunpack.c.l.b16 %v9919
    %v9991 = vunpack.c.l.b16 %v9920
    %v9992 = vunpack.c.l.b16 %v9921
    %v9993 = vunpack.c.l.b16 %v9922
    %v9994 = vunpack.c.l.b16 %v9923
    %v9995 = vunpack.c.l.b16 %v9924
    %v9996 = vunpack.c.l.b16 %v9925
    %v9997 = vunpack.c.l.b16 %v9926
    %v9998 = vunpack.c.l.b16 %v9927
    %v9999 = vunpack.c.l.b16 %v9928
    %v10000 = vunpack.c.l.b16 %v9929
    %v10001 = vunpack.c.l.b16 %v9930
    %v10002 = vunpack.c.l.b16 %v9931
    %v10003 = vunpack.c.l.b16 %v9932
    %v10004 = vunpack.c.l.b16 %v9933
    %v10005 = vpack.c.b16 %v9974, %v9973
    %v10006 = vpack.c.b16 %v9976, %v9975
    %v10007 = vpack.c.b16 %v9978, %v9977
    %v10008 = vpack.c.b16 %v9980, %v9979
    %v10009 = vpack.c.b16 %v9982, %v9981
    %v10010 = vpack.c.b16 %v9984, %v9983
    %v10011 = vpack.c.b16 %v9986, %v9985
    %v10012 = vpack.c.b16 %v9988, %v9987
    %v10013 = vpack.c.b16 %v9990, %v9989
    %v10014 = vpack.c.b16 %v9992, %v9991
    %v10015 = vpack.c.b16 %v9994, %v9993
    %v10016 = vpack.c.b16 %v9996, %v9995
    %v10017 = vpack.c.b16 %v9998, %v9997
    %v10018 = vpack.c.b16 %v10000, %v9999
    %v10019 = vpack.c.b16 %v10002, %v10001
    %v10020 = vpack.c.b16 %v10004, %v10003
    %10037 = vmatprep.subr.bf16.mxu0 0
    %10038 = vmatpush1.bf16.msra.mxu0 %v10005
    %10039 = vmatprep.subr.bf16.mxu0 0
    %10040 = vmatpush1.bf16.msra.mxu0 %v10006
    %10041 = vmatprep.subr.bf16.mxu0 0
    %10042 = vmatpush1.bf16.msra.mxu0 %v10007
    %10043 = vmatprep.subr.bf16.mxu0 0
    %10044 = vmatpush1.bf16.msra.mxu0 %v10008
    %10045 = vmatprep.subr.bf16.mxu0 0
    %10046 = vmatpush1.bf16.msra.mxu0 %v10009
    %10047 = vmatprep.subr.bf16.mxu0 0
    %10048 = vmatpush1.bf16.msra.mxu0 %v10010
    %10049 = vmatprep.subr.bf16.mxu0 0
    %10050 = vmatpush1.bf16.msra.mxu0 %v10011
    %10051 = vmatprep.subr.bf16.mxu0 0
    %10052 = vmatpush1.bf16.msra.mxu0 %v10012
    %10053 = vmatprep.subr.bf16.mxu0 0
    %10054 = vmatpush1.bf16.msra.mxu0 %v10013
    %10055 = vmatprep.subr.bf16.mxu0 0
    %10056 = vmatpush1.bf16.msra.mxu0 %v10014
    %10057 = vmatprep.subr.bf16.mxu0 0
    %10058 = vmatpush1.bf16.msra.mxu0 %v10015
    %10059 = vmatprep.subr.bf16.mxu0 0
    %10060 = vmatpush1.bf16.msra.mxu0 %v10016
    %10061 = vmatprep.subr.bf16.mxu0 0
    %10062 = vmatpush1.bf16.msra.mxu0 %v10017
    %10063 = vmatprep.subr.bf16.mxu0 0
    %10064 = vmatpush1.bf16.msra.mxu0 %v10018
    %10065 = vmatprep.subr.bf16.mxu0 0
    %10066 = vmatpush1.bf16.msra.mxu0 %v10019
    %10067 = vmatprep.subr.bf16.mxu0 0
    %10068 = vmatpush1.bf16.msra.mxu0 %v10020
    %10069 = vmatprep.mubr.bf16.mxu0 %v476
    %10070 = vmatmul.mubr.bf16.gmra.mrb[0].mxu0 %v475
    %v10071 = vpop.f32.mrb[0].mxu0
    %v10072 = vadd.f32 %v9939, %v10071
    %v10073 = vpop.f32.mrb[0].mxu0
    %v10074 = vpop.f32.mrb[0].mxu0
    %v10075 = vpop.f32.mrb[0].mxu0
    %10076 = vdwg.mxu0
    %v10077 = vmax.f32 %v10072, 0.0
    %v10078 = vpack.c.bf16 %v10077, %v10077
    %v10079 = vld [vmem:[#allocation15] sm:$0xf]
    %v10080 = vld [vmem:[#allocation15 + $0x4] sm:$0xf]
    %v10081 = vld [vmem:[#allocation15 + $0x8] sm:$0xf]
    %v10082 = vld [vmem:[#allocation15 + $0xc] sm:$0xf]
    %v10083 = vld [vmem:[#allocation15 + $0x10] sm:$0xf]
    %v10084 = vld [vmem:[#allocation15 + $0x14] sm:$0xf]
    %v10085 = vld [vmem:[#allocation15 + $0x18] sm:$0xf]
    %v10086 = vld [vmem:[#allocation15 + $0x1c] sm:$0xf]
    %v10087 = vld [vmem:[#allocation15 + $0x20] sm:$0xf]
    %v10088 = vld [vmem:[#allocation15 + $0x24] sm:$0xf]
    %v10089 = vld [vmem:[#allocation15 + $0x28] sm:$0xf]
    %v10090 = vld [vmem:[#allocation15 + $0x2c] sm:$0xf]
    %v10091 = vld [vmem:[#allocation15 + $0x30] sm:$0xf]
    %v10092 = vld [vmem:[#allocation15 + $0x34] sm:$0xf]
    %v10093 = vld [vmem:[#allocation15 + $0x38] sm:$0xf]
    %v10094 = vld [vmem:[#allocation15 + $0x3c] sm:$0xf]
    %v10095 = vld [vmem:[#allocation16] sm:$0x1]
    %v10097 = vlaneseq
    %v10098 = vshrl.u32 %v10097, 7
    %v10099 = vsub.s32 0, %v10098
    %v10100 = vrot.slane %v10095, %v10099
    %v10118 = vunpack.c.l.b16 %v10079
    %v10119 = vunpack.c.l.b16 %v10080
    %v10120 = vunpack.c.l.b16 %v10081
    %v10121 = vunpack.c.l.b16 %v10082
    %v10122 = vunpack.c.l.b16 %v10083
    %v10123 = vunpack.c.l.b16 %v10084
    %v10124 = vunpack.c.l.b16 %v10085
    %v10125 = vunpack.c.l.b16 %v10086
    %v10126 = vunpack.c.l.b16 %v10087
    %v10127 = vunpack.c.l.b16 %v10088
    %v10128 = vunpack.c.l.b16 %v10089
    %v10129 = vunpack.c.l.b16 %v10090
    %v10130 = vunpack.c.l.b16 %v10091
    %v10131 = vunpack.c.l.b16 %v10092
    %v10132 = vunpack.c.l.b16 %v10093
    %v10133 = vunpack.c.l.b16 %v10094
    %v10134 = vpack.c.b16 %v10119, %v10118
    %v10135 = vpack.c.b16 %v10121, %v10120
    %v10136 = vpack.c.b16 %v10123, %v10122
    %v10137 = vpack.c.b16 %v10125, %v10124
    %v10138 = vpack.c.b16 %v10127, %v10126
    %v10139 = vpack.c.b16 %v10129, %v10128
    %v10140 = vpack.c.b16 %v10131, %v10130
    %v10141 = vpack.c.b16 %v10133, %v10132
    %10150 = vmatprep.subr.bf16.mxu0 0
    %10151 = vmatpush1.bf16.msra.mxu0 %v10134
    %10152 = vmatprep.subr.bf16.mxu0 0
    %10153 = vmatpush1.bf16.msra.mxu0 %v10135
    %10154 = vmatprep.subr.bf16.mxu0 0
    %10155 = vmatpush1.bf16.msra.mxu0 %v10136
    %10156 = vmatprep.subr.bf16.mxu0 0
    %10157 = vmatpush1.bf16.msra.mxu0 %v10137
    %10158 = vmatprep.subr.bf16.mxu0 0
    %10159 = vmatpush1.bf16.msra.mxu0 %v10138
    %10160 = vmatprep.subr.bf16.mxu0 0
    %10161 = vmatpush1.bf16.msra.mxu0 %v10139
    %10162 = vmatprep.subr.bf16.mxu0 0
    %10163 = vmatpush1.bf16.msra.mxu0 %v10140
    %10164 = vmatprep.subr.bf16.mxu0 0
    %10165 = vmatpush1.bf16.msra.mxu0 %v10141
    %10166 = vmatprep.subr.bf16.mxu0 0
    %10167 = vmatpush1.bf16.msra.mxu0 0
    %10168 = vmatprep.subr.bf16.mxu0 0
    %10169 = vmatpush1.bf16.msra.mxu0 0
    %10170 = vmatprep.subr.bf16.mxu0 0
    %10171 = vmatpush1.bf16.msra.mxu0 0
    %10172 = vmatprep.subr.bf16.mxu0 0
    %10173 = vmatpush1.bf16.msra.mxu0 0
    %10174 = vmatprep.subr.bf16.mxu0 0
    %10175 = vmatpush1.bf16.msra.mxu0 0
    %10176 = vmatprep.subr.bf16.mxu0 0
    %10177 = vmatpush1.bf16.msra.mxu0 0
    %10178 = vmatprep.subr.bf16.mxu0 0
    %10179 = vmatpush1.bf16.msra.mxu0 0
    %10180 = vmatprep.subr.bf16.mxu0 0
    %10181 = vmatpush1.bf16.msra.mxu0 0
    %10182 = vmatprep.mubr.bf16.mxu0 0
    %10183 = vmatmul.mubr.bf16.gmra.mrb[0].mxu0 %v10078
    %v10184 = vpop.f32.mrb[0].mxu0
    %v10185 = vadd.f32 %v10100, %v10184
    %v10186 = vpop.f32.mrb[0].mxu0
    %v10187 = vpop.f32.mrb[0].mxu0
    %v10188 = vpop.f32.mrb[0].mxu0
    %10189 = vdwg.mxu0
    %v10190 = vmax.f32 %v10185, 0.0
    %v10191 = vpack.c.bf16 %v10190, %v10190
    %v10192 = vld [vmem:[#allocation18] sm:$0xf]
    %v10193 = vld [vmem:[#allocation18 + $0x4] sm:$0xf]
    %v10194 = vld [vmem:[#allocation18 + $0x8] sm:$0xf]
    %v10195 = vld [vmem:[#allocation18 + $0xc] sm:$0xf]
    %v10196 = vld [vmem:[#allocation18 + $0x10] sm:$0xf]
    %v10197 = vld [vmem:[#allocation18 + $0x14] sm:$0xf]
    %v10198 = vld [vmem:[#allocation18 + $0x18] sm:$0xf]
    %v10199 = vld [vmem:[#allocation18 + $0x1c] sm:$0xf]
    %v10200 = vld [vmem:[#allocation18 + $0x20] sm:$0xf]
    %v10201 = vld [vmem:[#allocation18 + $0x24] sm:$0xf]
    %v10202 = vld [vmem:[#allocation18 + $0x28] sm:$0xf]
    %v10203 = vld [vmem:[#allocation18 + $0x2c] sm:$0xf]
    %v10204 = vld [vmem:[#allocation18 + $0x30] sm:$0xf]
    %v10205 = vld [vmem:[#allocation18 + $0x34] sm:$0xf]
    %v10206 = vld [vmem:[#allocation18 + $0x38] sm:$0xf]
    %v10207 = vld [vmem:[#allocation18 + $0x3c] sm:$0xf]
    %v10208 = vld [vmem:[#allocation19] sm:$0xf]
    %v10209 = vld [vmem:[#allocation19 + $0x4] sm:$0xf]
    %v10210 = vld [vmem:[#allocation19 + $0x8] sm:$0xf]
    %v10211 = vld [vmem:[#allocation19 + $0xc] sm:$0xf]
    %v10212 = vld [vmem:[#allocation19 + $0x10] sm:$0xf]
    %v10213 = vld [vmem:[#allocation19 + $0x14] sm:$0xf]
    %v10214 = vld [vmem:[#allocation19 + $0x18] sm:$0xf]
    %v10215 = vld [vmem:[#allocation19 + $0x1c] sm:$0xf]
    %v10216 = vld [vmem:[#allocation19 + $0x20] sm:$0xf]
    %v10217 = vld [vmem:[#allocation19 + $0x24] sm:$0xf]
    %v10218 = vld [vmem:[#allocation19 + $0x28] sm:$0xf]
    %v10219 = vld [vmem:[#allocation19 + $0x2c] sm:$0xf]
    %v10220 = vld [vmem:[#allocation19 + $0x30] sm:$0xf]
    %v10221 = vld [vmem:[#allocation19 + $0x34] sm:$0xf]
    %v10222 = vld [vmem:[#allocation19 + $0x38] sm:$0xf]
    %v10223 = vld [vmem:[#allocation19 + $0x3c] sm:$0xf]
    %v10240 = vunpack.c.l.b16 %v10208
    %v10241 = vunpack.c.l.b16 %v10209
    %v10242 = vunpack.c.l.b16 %v10210
    %v10243 = vunpack.c.l.b16 %v10211
    %v10244 = vunpack.c.l.b16 %v10212
    %v10245 = vunpack.c.l.b16 %v10213
    %v10246 = vunpack.c.l.b16 %v10214
    %v10247 = vunpack.c.l.b16 %v10215
    %v10248 = vunpack.c.l.b16 %v10216
    %v10249 = vunpack.c.l.b16 %v10217
    %v10250 = vunpack.c.l.b16 %v10218
    %v10251 = vunpack.c.l.b16 %v10219
    %v10252 = vunpack.c.l.b16 %v10220
    %v10253 = vunpack.c.l.b16 %v10221
    %v10254 = vunpack.c.l.b16 %v10222
    %v10255 = vunpack.c.l.b16 %v10223
    %v10256 = vpack.c.b16 %v10241, %v10240
    %v10257 = vpack.c.b16 %v10243, %v10242
    %v10258 = vpack.c.b16 %v10245, %v10244
    %v10259 = vpack.c.b16 %v10247, %v10246
    %v10260 = vpack.c.b16 %v10249, %v10248
    %v10261 = vpack.c.b16 %v10251, %v10250
    %v10262 = vpack.c.b16 %v10253, %v10252
    %v10263 = vpack.c.b16 %v10255, %v10254
    %10272 = vmatprep.subr.bf16.mxu0 0
    %10273 = vmatpush1.bf16.msra.mxu0 %v10256
    %10274 = vmatprep.subr.bf16.mxu0 0
    %10275 = vmatpush1.bf16.msra.mxu0 %v10257
    %10276 = vmatprep.subr.bf16.mxu0 0
    %10277 = vmatpush1.bf16.msra.mxu0 %v10258
    %10278 = vmatprep.subr.bf16.mxu0 0
    %10279 = vmatpush1.bf16.msra.mxu0 %v10259
    %10280 = vmatprep.subr.bf16.mxu0 0
    %10281 = vmatpush1.bf16.msra.mxu0 %v10260
    %10282 = vmatprep.subr.bf16.mxu0 0
    %10283 = vmatpush1.bf16.msra.mxu0 %v10261
    %10284 = vmatprep.subr.bf16.mxu0 0
    %10285 = vmatpush1.bf16.msra.mxu0 %v10262
    %10286 = vmatprep.subr.bf16.mxu0 0
    %10287 = vmatpush1.bf16.msra.mxu0 %v10263
    %10288 = vmatprep.subr.bf16.mxu0 0
    %10289 = vmatpush1.bf16.msra.mxu0 0
    %10290 = vmatprep.subr.bf16.mxu0 0
    %10291 = vmatpush1.bf16.msra.mxu0 0
    %10292 = vmatprep.subr.bf16.mxu0 0
    %10293 = vmatpush1.bf16.msra.mxu0 0
    %10294 = vmatprep.subr.bf16.mxu0 0
    %10295 = vmatpush1.bf16.msra.mxu0 0
    %10296 = vmatprep.subr.bf16.mxu0 0
    %10297 = vmatpush1.bf16.msra.mxu0 0
    %10298 = vmatprep.subr.bf16.mxu0 0
    %10299 = vmatpush1.bf16.msra.mxu0 0
    %10300 = vmatprep.subr.bf16.mxu0 0
    %10301 = vmatpush1.bf16.msra.mxu0 0
    %10302 = vmatprep.subr.bf16.mxu0 0
    %10303 = vmatpush1.bf16.msra.mxu0 0
    %10304 = vmatprep.mubr.bf16.mxu0 0
    %10305 = vmatmul.mubr.bf16.gmra.mrb[0].mxu0 %v10191
    %v10306 = vpop.f32.mrb[0].mxu0
    %v10307 = vadd.f32 0.0, %v10306
    %v10308 = vpop.f32.mrb[0].mxu0
    %v10309 = vpop.f32.mrb[0].mxu0
    %v10310 = vpop.f32.mrb[0].mxu0
    %10311 = vdwg.mxu0
    %v10328 = vunpack.c.l.b16 %v10192
    %v10329 = vunpack.c.l.b16 %v10193
    %v10330 = vunpack.c.l.b16 %v10194
    %v10331 = vunpack.c.l.b16 %v10195
    %v10332 = vunpack.c.l.b16 %v10196
    %v10333 = vunpack.c.l.b16 %v10197
    %v10334 = vunpack.c.l.b16 %v10198
    %v10335 = vunpack.c.l.b16 %v10199
    %v10336 = vunpack.c.l.b16 %v10200
    %v10337 = vunpack.c.l.b16 %v10201
    %v10338 = vunpack.c.l.b16 %v10202
    %v10339 = vunpack.c.l.b16 %v10203
    %v10340 = vunpack.c.l.b16 %v10204
    %v10341 = vunpack.c.l.b16 %v10205
    %v10342 = vunpack.c.l.b16 %v10206
    %v10343 = vunpack.c.l.b16 %v10207
    %v10344 = vpack.c.b16 %v10329, %v10328
    %v10345 = vpack.c.b16 %v10331, %v10330
    %v10346 = vpack.c.b16 %v10333, %v10332
    %v10347 = vpack.c.b16 %v10335, %v10334
    %v10348 = vpack.c.b16 %v10337, %v10336
    %v10349 = vpack.c.b16 %v10339, %v10338
    %v10350 = vpack.c.b16 %v10341, %v10340
    %v10351 = vpack.c.b16 %v10343, %v10342
    %10360 = vmatprep.subr.bf16.mxu0 0
    %10361 = vmatpush1.bf16.msra.mxu0 %v10344
    %10362 = vmatprep.subr.bf16.mxu0 0
    %10363 = vmatpush1.bf16.msra.mxu0 %v10345
    %10364 = vmatprep.subr.bf16.mxu0 0
    %10365 = vmatpush1.bf16.msra.mxu0 %v10346
    %10366 = vmatprep.subr.bf16.mxu0 0
    %10367 = vmatpush1.bf16.msra.mxu0 %v10347
    %10368 = vmatprep.subr.bf16.mxu0 0
    %10369 = vmatpush1.bf16.msra.mxu0 %v10348
    %10370 = vmatprep.subr.bf16.mxu0 0
    %10371 = vmatpush1.bf16.msra.mxu0 %v10349
    %10372 = vmatprep.subr.bf16.mxu0 0
    %10373 = vmatpush1.bf16.msra.mxu0 %v10350
    %10374 = vmatprep.subr.bf16.mxu0 0
    %10375 = vmatpush1.bf16.msra.mxu0 %v10351
    %10376 = vmatprep.subr.bf16.mxu0 0
    %10377 = vmatpush1.bf16.msra.mxu0 0
    %10378 = vmatprep.subr.bf16.mxu0 0
    %10379 = vmatpush1.bf16.msra.mxu0 0
    %10380 = vmatprep.subr.bf16.mxu0 0
    %10381 = vmatpush1.bf16.msra.mxu0 0
    %10382 = vmatprep.subr.bf16.mxu0 0
    %10383 = vmatpush1.bf16.msra.mxu0 0
    %10384 = vmatprep.subr.bf16.mxu0 0
    %10385 = vmatpush1.bf16.msra.mxu0 0
    %10386 = vmatprep.subr.bf16.mxu0 0
    %10387 = vmatpush1.bf16.msra.mxu0 0
    %10388 = vmatprep.subr.bf16.mxu0 0
    %10389 = vmatpush1.bf16.msra.mxu0 0
    %10390 = vmatprep.subr.bf16.mxu0 0
    %10391 = vmatpush1.bf16.msra.mxu0 0
    %10392 = vmatprep.mubr.bf16.mxu0 0
    %10393 = vmatmul.mubr.bf16.gmra.mrb[0].mxu0 %v9901
    %v10394 = vpop.f32.mrb[0].mxu0
    %v10395 = vadd.f32 %v10307, %v10394
    %v10396 = vpop.f32.mrb[0].mxu0
    %v10397 = vpop.f32.mrb[0].mxu0
    %v10398 = vpop.f32.mrb[0].mxu0
    %10399 = vdwg.mxu0
    %v10400 = vld [vmem:[#allocation21] sm:$0x1]
    %v10402 = vlaneseq
    %v10403 = vshrl.u32 %v10402, 7
    %v10404 = vsub.s32 0, %v10403
    %v10405 = vrot.slane %v10400, %v10404
    %v10407 = vadd.f32 %v10395, %v10405
    %v10408 = vmax.f32 %v10407, 0.0
    %v10409 = vpack.c.bf16 %v10408, %v10408
    %v10410 = vld [vmem:[#allocation22] sm:$0xf]
    %v10411 = vld [vmem:[#allocation22 + $0x4] sm:$0xf]
    %v10412 = vld [vmem:[#allocation22 + $0x8] sm:$0xf]
    %v10413 = vld [vmem:[#allocation22 + $0xc] sm:$0xf]
    %v10414 = vld [vmem:[#allocation22 + $0x10] sm:$0xf]
    %v10415 = vld [vmem:[#allocation22 + $0x14] sm:$0xf]
    %v10416 = vld [vmem:[#allocation22 + $0x18] sm:$0xf]
    %v10417 = vld [vmem:[#allocation22 + $0x1c] sm:$0xf]
    %v10418 = vld [vmem:[#allocation22 + $0x20] sm:$0xf]
    %v10419 = vld [vmem:[#allocation22 + $0x24] sm:$0xf]
    %v10420 = vld [vmem:[#allocation22 + $0x28] sm:$0xf]
    %v10421 = vld [vmem:[#allocation22 + $0x2c] sm:$0xf]
    %v10422 = vld [vmem:[#allocation22 + $0x30] sm:$0xf]
    %v10423 = vld [vmem:[#allocation22 + $0x34] sm:$0xf]
    %v10424 = vld [vmem:[#allocation22 + $0x38] sm:$0xf]
    %v10425 = vld [vmem:[#allocation22 + $0x3c] sm:$0xf]
    %v10426 = vld [vmem:[#allocation24] sm:$0x1]
    %v10428 = vlaneseq
    %v10429 = vshrl.u32 %v10428, 7
    %v10430 = vsub.s32 0, %v10429
    %v10431 = vrot.slane %v10426, %v10430
    %v10449 = vunpack.c.l.b16 %v10410
    %v10450 = vunpack.c.l.b16 %v10411
    %v10451 = vunpack.c.l.b16 %v10412
    %v10452 = vunpack.c.l.b16 %v10413
    %v10453 = vunpack.c.l.b16 %v10414
    %v10454 = vunpack.c.l.b16 %v10415
    %v10455 = vunpack.c.l.b16 %v10416
    %v10456 = vunpack.c.l.b16 %v10417
    %v10457 = vunpack.c.l.b16 %v10418
    %v10458 = vunpack.c.l.b16 %v10419
    %v10459 = vunpack.c.l.b16 %v10420
    %v10460 = vunpack.c.l.b16 %v10421
    %v10461 = vunpack.c.l.b16 %v10422
    %v10462 = vunpack.c.l.b16 %v10423
    %v10463 = vunpack.c.l.b16 %v10424
    %v10464 = vunpack.c.l.b16 %v10425
    %v10465 = vpack.c.b16 %v10450, %v10449
    %v10466 = vpack.c.b16 %v10452, %v10451
    %v10467 = vpack.c.b16 %v10454, %v10453
    %v10468 = vpack.c.b16 %v10456, %v10455
    %v10469 = vpack.c.b16 %v10458, %v10457
    %v10470 = vpack.c.b16 %v10460, %v10459
    %v10471 = vpack.c.b16 %v10462, %v10461
    %v10472 = vpack.c.b16 %v10464, %v10463
    %10481 = vmatprep.subr.bf16.mxu0 0
    %10482 = vmatpush1.bf16.msra.mxu0 %v10465
    %10483 = vmatprep.subr.bf16.mxu0 0
    %10484 = vmatpush1.bf16.msra.mxu0 %v10466
    %10485 = vmatprep.subr.bf16.mxu0 0
    %10486 = vmatpush1.bf16.msra.mxu0 %v10467
    %10487 = vmatprep.subr.bf16.mxu0 0
    %10488 = vmatpush1.bf16.msra.mxu0 %v10468
    %10489 = vmatprep.subr.bf16.mxu0 0
    %10490 = vmatpush1.bf16.msra.mxu0 %v10469
    %10491 = vmatprep.subr.bf16.mxu0 0
    %10492 = vmatpush1.bf16.msra.mxu0 %v10470
    %10493 = vmatprep.subr.bf16.mxu0 0
    %10494 = vmatpush1.bf16.msra.mxu0 %v10471
    %10495 = vmatprep.subr.bf16.mxu0 0
    %10496 = vmatpush1.bf16.msra.mxu0 %v10472
    %10497 = vmatprep.subr.bf16.mxu0 0
    %10498 = vmatpush1.bf16.msra.mxu0 0
    %10499 = vmatprep.subr.bf16.mxu0 0
    %10500 = vmatpush1.bf16.msra.mxu0 0
    %10501 = vmatprep.subr.bf16.mxu0 0
    %10502 = vmatpush1.bf16.msra.mxu0 0
    %10503 = vmatprep.subr.bf16.mxu0 0
    %10504 = vmatpush1.bf16.msra.mxu0 0
    %10505 = vmatprep.subr.bf16.mxu0 0
    %10506 = vmatpush1.bf16.msra.mxu0 0
    %10507 = vmatprep.subr.bf16.mxu0 0
    %10508 = vmatpush1.bf16.msra.mxu0 0
    %10509 = vmatprep.subr.bf16.mxu0 0
    %10510 = vmatpush1.bf16.msra.mxu0 0
    %10511 = vmatprep.subr.bf16.mxu0 0
    %10512 = vmatpush1.bf16.msra.mxu0 0
    %10513 = vmatprep.mubr.bf16.mxu0 0
    %10514 = vmatmul.mubr.bf16.gmra.mrb[0].mxu0 %v10409
    %v10515 = vpop.f32.mrb[0].mxu0
    %v10516 = vadd.f32 %v10431, %v10515
    %v10517 = vpop.f32.mrb[0].mxu0
    %v10518 = vpop.f32.mrb[0].mxu0
    %v10519 = vpop.f32.mrb[0].mxu0
    %10520 = vdwg.mxu0
    %v10521 = vmax.f32 %v10516, 0.0
    %v10522 = vpack.c.bf16 %v10521, %v10521
    %v10523 = vld [vmem:[#allocation25] sm:$0xf]
    %v10524 = vld [vmem:[#allocation25 + $0x4] sm:$0xf]
    %v10525 = vld [vmem:[#allocation25 + $0x8] sm:$0xf]
    %v10526 = vld [vmem:[#allocation25 + $0xc] sm:$0xf]
    %v10527 = vld [vmem:[#allocation25 + $0x10] sm:$0xf]
    %v10528 = vld [vmem:[#allocation25 + $0x14] sm:$0xf]
    %v10529 = vld [vmem:[#allocation25 + $0x18] sm:$0xf]
    %v10530 = vld [vmem:[#allocation25 + $0x1c] sm:$0xf]
    %v10531 = vld [vmem:[#allocation25 + $0x20] sm:$0xf]
    %v10532 = vld [vmem:[#allocation25 + $0x24] sm:$0xf]
    %v10533 = vld [vmem:[#allocation25 + $0x28] sm:$0xf]
    %v10534 = vld [vmem:[#allocation25 + $0x2c] sm:$0xf]
    %v10535 = vld [vmem:[#allocation25 + $0x30] sm:$0xf]
    %v10536 = vld [vmem:[#allocation25 + $0x34] sm:$0xf]
    %v10537 = vld [vmem:[#allocation25 + $0x38] sm:$0xf]
    %v10538 = vld [vmem:[#allocation25 + $0x3c] sm:$0xf]
    %v10539 = vld [vmem:[#allocation27] sm:$0x1]
    %v10541 = vlaneseq
    %v10542 = vshrl.u32 %v10541, 7
    %v10543 = vsub.s32 0, %v10542
    %v10544 = vrot.slane %v10539, %v10543
    %v10562 = vunpack.c.l.b16 %v10523
    %v10563 = vunpack.c.l.b16 %v10524
    %v10564 = vunpack.c.l.b16 %v10525
    %v10565 = vunpack.c.l.b16 %v10526
    %v10566 = vunpack.c.l.b16 %v10527
    %v10567 = vunpack.c.l.b16 %v10528
    %v10568 = vunpack.c.l.b16 %v10529
    %v10569 = vunpack.c.l.b16 %v10530
    %v10570 = vunpack.c.l.b16 %v10531
    %v10571 = vunpack.c.l.b16 %v10532
    %v10572 = vunpack.c.l.b16 %v10533
    %v10573 = vunpack.c.l.b16 %v10534
    %v10574 = vunpack.c.l.b16 %v10535
    %v10575 = vunpack.c.l.b16 %v10536
    %v10576 = vunpack.c.l.b16 %v10537
    %v10577 = vunpack.c.l.b16 %v10538
    %v10578 = vpack.c.b16 %v10563, %v10562
    %v10579 = vpack.c.b16 %v10565, %v10564
    %v10580 = vpack.c.b16 %v10567, %v10566
    %v10581 = vpack.c.b16 %v10569, %v10568
    %v10582 = vpack.c.b16 %v10571, %v10570
    %v10583 = vpack.c.b16 %v10573, %v10572
    %v10584 = vpack.c.b16 %v10575, %v10574
    %v10585 = vpack.c.b16 %v10577, %v10576
    %10594 = vmatprep.subr.bf16.mxu0 0
    %10595 = vmatpush1.bf16.msra.mxu0 %v10578
    %10596 = vmatprep.subr.bf16.mxu0 0
    %10597 = vmatpush1.bf16.msra.mxu0 %v10579
    %10598 = vmatprep.subr.bf16.mxu0 0
    %10599 = vmatpush1.bf16.msra.mxu0 %v10580
    %10600 = vmatprep.subr.bf16.mxu0 0
    %10601 = vmatpush1.bf16.msra.mxu0 %v10581
    %10602 = vmatprep.subr.bf16.mxu0 0
    %10603 = vmatpush1.bf16.msra.mxu0 %v10582
    %10604 = vmatprep.subr.bf16.mxu0 0
    %10605 = vmatpush1.bf16.msra.mxu0 %v10583
    %10606 = vmatprep.subr.bf16.mxu0 0
    %10607 = vmatpush1.bf16.msra.mxu0 %v10584
    %10608 = vmatprep.subr.bf16.mxu0 0
    %10609 = vmatpush1.bf16.msra.mxu0 %v10585
    %10610 = vmatprep.subr.bf16.mxu0 0
    %10611 = vmatpush1.bf16.msra.mxu0 0
    %10612 = vmatprep.subr.bf16.mxu0 0
    %10613 = vmatpush1.bf16.msra.mxu0 0
    %10614 = vmatprep.subr.bf16.mxu0 0
    %10615 = vmatpush1.bf16.msra.mxu0 0
    %10616 = vmatprep.subr.bf16.mxu0 0
    %10617 = vmatpush1.bf16.msra.mxu0 0
    %10618 = vmatprep.subr.bf16.mxu0 0
    %10619 = vmatpush1.bf16.msra.mxu0 0
    %10620 = vmatprep.subr.bf16.mxu0 0
    %10621 = vmatpush1.bf16.msra.mxu0 0
    %10622 = vmatprep.subr.bf16.mxu0 0
    %10623 = vmatpush1.bf16.msra.mxu0 0
    %10624 = vmatprep.subr.bf16.mxu0 0
    %10625 = vmatpush1.bf16.msra.mxu0 0
    %10626 = vmatprep.mubr.bf16.mxu0 0
    %10627 = vmatmul.mubr.bf16.gmra.mrb[0].mxu0 %v10522
    %v10628 = vpop.f32.mrb[0].mxu0
    %v10629 = vadd.f32 %v10544, %v10628
    %v10630 = vpop.f32.mrb[0].mxu0
    %v10631 = vpop.f32.mrb[0].mxu0
    %v10632 = vpop.f32.mrb[0].mxu0
    %10633 = vdwg.mxu0
    %v10634 = vmax.f32 %v10629, 0.0
    %v10635 = vpack.c.bf16 %v10634, %v10634
    %10636 = vst [vmem:[%s19] sm:$0x1] %v10635
    // Predicated region
    $region146: #{tabtab_forward.1} parent=1 // pred_check
      _
    $region147: #{tabtab_forward.1} parent=1 // pred_check_branch
      %10638 = sbr.rel (0) target = $region149
    $region148: #{tabtab_forward.1} parent=1 // pred_region
      _
    $region149: #{tabtab_forward.1} parent=1 // pred_fallthru
      _
    // Predicated region
    $region150: #{tabtab_forward.1} parent=1 // pred_check
      _
    $region151: #{tabtab_forward.1} parent=1 // pred_check_branch
      %10640 = sbr.rel (0) target = $region153
    $region152: #{tabtab_forward.1} parent=1 // pred_region
      _
    $region153: #{tabtab_forward.1} parent=1 // pred_fallthru
      _
    %10641 = vsyncpa [#allocation3], 1
    %10642 = vsyncpa [#allocation5], 1
    %10643 = vsyncpa [#allocation8], 1
    %10644 = vsyncpa [#allocation11], 1
    %10645 = vsyncpa [#allocation14], 1
    %10646 = vsyncpa [#allocation17], 1
    %10647 = vsyncpa [#allocation20], 1
    %10648 = vsyncpa [#allocation23], 1
    %10649 = vsyncpa [#allocation26], 1

</llo_original>
